<compile_context>
chip_gen: v5e
topology: v5e:2x2
jax: 0.10.0
libtpu: 0.0.40
codegen_flags: <defaults>
</compile_context>

<pallas_src>
import functools

import jax
import jax.numpy as jnp
from jax.experimental import pallas as pl
from jax.experimental.pallas import tpu as pltpu

IN_FEATURES = 512
OUT_FEATURES = 51
OUT_PAD = 128  # lane-dense padded output head; sliced back to 51 in the wrapper


def simple_rnn_kernel(x_ref, w0_ref, bias0_ref, wcat_hbm, b1_ref, wout_hbm,
                      bout_ref,
                      out_ref, h_out_ref, c_out_ref,
                      wcat_vmem, wout_vmem, pre0_ref, dma_sems,
                      *, hidden_size, batch_pad, steps):
    H = hidden_size
    BP = batch_pad

    # Start DMAs for the weights NOT needed by the pre0 matmul; they complete
    # under it (no grid => no auto pipelining, so this is manual overlap).
    cp_wcat = pltpu.make_async_copy(wcat_hbm, wcat_vmem, dma_sems.at[0])
    cp_wout = pltpu.make_async_copy(wout_hbm, wout_vmem, dma_sems.at[1])
    cp_wcat.start()
    cp_wout.start()

    # Composed input path (Linear(512,H) o layer-0 input projection) for ALL
    # timesteps in one MXU matmul, staged to tile-aligned VMEM scratch:
    # (T*BP, 512) @ (512, 4H) -> f32.
    pre0_ref[...] = (jnp.dot(x_ref[...], w0_ref[...],
                             preferred_element_type=jnp.float32)
                     + bias0_ref[...])

    # Hoisted layer-1 bias broadcast (JAX does not CSE broadcast_in_dim).
    b1_b = jnp.broadcast_to(b1_ref[...], (BP, 4 * H))

    def cell(gates, c_prev):
        # Gate columns were reordered in the wrapper to [i, f, o, g]:
        # one 3H-wide sigmoid + one H-wide tanh per cell.
        sig = jax.nn.sigmoid(gates[:, 0:3 * H])
        i = sig[:, 0 * H:1 * H]
        f = sig[:, 1 * H:2 * H]
        o = sig[:, 2 * H:3 * H]
        g = jnp.tanh(gates[:, 3 * H:4 * H])
        c_new = f * c_prev + i * g
        h_new = o * jnp.tanh(c_new)
        return h_new, c_new

    # hidden=None in PyTorch -> LSTM starts from zeros; state stays in vregs.
    c0 = jnp.zeros((BP, H), jnp.float32)
    c1 = jnp.zeros((BP, H), jnp.float32)
    h1 = jnp.zeros((BP, H), jnp.float32)

    # Prologue (no matmul needed): h0(-1)=0  =>  g0(0) = pre0[0].
    h0, c0 = cell(pre0_ref[0:BP, :], c0)

    # Wait for the fused recurrent weight right before its first use.
    cp_wcat.wait()

    # TODO(synk): nn.Dropout(0.5) and LSTM inter-layer dropout(0.8) are
    # eval-mode identities and are omitted (inference forward semantics).
    #
    # Skewed recurrence: at loop iteration t, h0 == h0(t), h1 == h1(t-1).
    for t in range(steps):  # static unroll; T is small and fixed
        # H=128-lane-aligned concat: layout-only merge of two vreg-aligned
        # halves; single bf16 cast of the fused LHS.
        x_lhs = jnp.concatenate([h0, h1], axis=-1).astype(jnp.bfloat16)
        y = jnp.dot(x_lhs, wcat_vmem[...], preferred_element_type=jnp.float32)
        # Layer 1, step t:  g1(t) = h0(t)@w_ih1 + h1(t-1)@w_hh1 + b1.
        h1, c1 = cell(y[:, 4 * H:8 * H] + b1_b, c1)
        # Layer 0, step t+1: g0(t+1) = pre0(t+1) + h0(t)@w_hh0.
        if t + 1 < steps:
            g0 = pre0_ref[(t + 1) * BP:(t + 2) * BP, :] + y[:, 0:4 * H]
            h0, c0 = cell(g0, c0)

    # Output Linear once, on the final h1 (lane-dense 128-wide store).
    cp_wout.wait()
    out_ref[...] = (jnp.dot(h1.astype(jnp.bfloat16), wout_vmem[...],
                            preferred_element_type=jnp.float32)
                    + bout_ref[...])
    h_out_ref[0] = h0
    h_out_ref[1] = h1
    c_out_ref[0] = c0
    c_out_ref[1] = c1


def simple_rnn_forward(x_btf, params, *, hidden_size, steps=10):
    """x_btf: (B, steps, 512)   (== inputs.view(-1, 10, 512) in PyTorch)."""
    (w_inp, b_inp, w_ih0, w_hh0, b0, w_ih1, w_hh1, b1, w_out, b_out) = params
    B = x_btf.shape[0]
    H = hidden_size
    BP = ((B + 7) // 8) * 8  # pad batch to the 8-row sublane tile

    def reorder(m):
        # Permute gate columns [i, f, g, o] -> [i, f, o, g] (exact permutation).
        return jnp.concatenate(
            [m[..., 0:H], m[..., H:2 * H], m[..., 3 * H:4 * H],
             m[..., 2 * H:3 * H]], axis=-1)

    # Compose the input Linear with layer-0's input projection (exact: no
    # nonlinearity between them). Compose in f32, then cast operands to bf16.
    w0_big = reorder(w_inp @ w_ih0).astype(jnp.bfloat16)                # (512, 4H)
    bias0 = reorder(b_inp @ w_ih0 + b0).astype(jnp.float32)             # (1, 4H)
    # Skew-fused recurrent weight: X = [h0(t), h1(t-1)] (BP, 2H) against
    #   [[w_hh0, w_ih1],
    #    [  0  , w_hh1]]   -> columns [ g0(t+1) recurrent | g1(t) ]
    w_cat = jnp.concatenate([
        jnp.concatenate([reorder(w_hh0), reorder(w_ih1)], axis=1),
        jnp.concatenate([jnp.zeros((H, 4 * H), w_hh1.dtype),
                         reorder(w_hh1)], axis=1),
    ], axis=0).astype(jnp.bfloat16)                                     # (2H, 8H)
    b1_r = reorder(b1).astype(jnp.float32)                              # (1, 4H)
    # Pad output head 51 -> 128 for a lane-dense store.
    w_out_p = jnp.pad(w_out, ((0, 0), (0, OUT_PAD - OUT_FEATURES))).astype(
        jnp.bfloat16)                                                   # (H, 128)
    b_out_p = jnp.pad(b_out, ((0, 0), (0, OUT_PAD - OUT_FEATURES))).astype(
        jnp.float32)                                                    # (1, 128)

    # Time-major, batch padded to BP rows per timestep (tile-aligned pre0
    # staging): row block [t*BP, (t+1)*BP) is timestep t; rows >= B are zero.
    x_tbf = jnp.transpose(x_btf, (1, 0, 2))                             # (T, B, 512)
    x_pad = jnp.pad(x_tbf, ((0, 0), (0, BP - B), (0, 0)))
    x_flat = x_pad.reshape(steps * BP, IN_FEATURES).astype(jnp.bfloat16)

    vmem = lambda: pl.BlockSpec(memory_space=pltpu.MemorySpace.VMEM)
    anyspec = lambda: pl.BlockSpec(memory_space=pl.ANY)

    out_p, h_n, c_n = pl.pallas_call(
        functools.partial(simple_rnn_kernel, hidden_size=H, batch_pad=BP,
                          steps=steps),
        out_shape=(
            jax.ShapeDtypeStruct((BP, OUT_PAD), jnp.float32),
            jax.ShapeDtypeStruct((2, BP, H), jnp.float32),
            jax.ShapeDtypeStruct((2, BP, H), jnp.float32),
        ),
        in_specs=[vmem(),     # x_flat      (needed immediately for pre0)
                  vmem(),     # w0_big      (needed immediately for pre0)
                  vmem(),     # bias0
                  anyspec(),  # w_cat       (manual DMA, overlapped with pre0)
                  vmem(),     # b1
                  anyspec(),  # w_out_p     (manual DMA, waited after the loop)
                  vmem()],    # b_out_p
        out_specs=(vmem(), vmem(), vmem()),
        scratch_shapes=(
            pltpu.VMEM((2 * H, 8 * H), jnp.bfloat16),       # w_cat staging
            pltpu.VMEM((H, OUT_PAD), jnp.bfloat16),         # w_out staging
            pltpu.VMEM((steps * BP, 4 * H), jnp.float32),   # pre0 staging
            pltpu.SemaphoreType.DMA((2,)),
        ),
    )(x_flat, w0_big, bias0, w_cat, b1_r, w_out_p, b_out_p)

    return out_p[:B, :OUT_FEATURES], (h_n[:, :B, :], c_n[:, :B, :])


def reference_forward(x_btf, params, *, hidden_size, steps=10):
    """Pure-JAX f32 reference mirroring the PyTorch module (eval mode)."""
    (w_inp, b_inp, w_ih0, w_hh0, b0, w_ih1, w_hh1, b1, w_out, b_out) = params
    B = x_btf.shape[0]
    H = hidden_size
    x_tbf = jnp.transpose(x_btf, (1, 0, 2))
    h = [jnp.zeros((B, H), jnp.float32) for _ in range(2)]
    c = [jnp.zeros((B, H), jnp.float32) for _ in range(2)]

    def cell(inp, hh, cc, w_ih, w_hh, b):
        g = inp @ w_ih + hh @ w_hh + b
        i = jax.nn.sigmoid(g[:, 0 * H:1 * H])
        f = jax.nn.sigmoid(g[:, 1 * H:2 * H])
        gg = jnp.tanh(g[:, 2 * H:3 * H])
        o = jax.nn.sigmoid(g[:, 3 * H:4 * H])
        cn = f * cc + i * gg
        hn = o * jnp.tanh(cn)
        return hn, cn

    out = None
    for t in range(steps):
        z = x_tbf[t] @ w_inp + b_inp
        h[0], c[0] = cell(z, h[0], c[0], w_ih0, w_hh0, b0)
        h[1], c[1] = cell(h[0], h[1], c[1], w_ih1, w_hh1, b1)
        out = h[1] @ w_out + b_out
    return out, (jnp.stack(h), jnp.stack(c))


def init_params(key, hidden_size):
    H = hidden_size
    ks = jax.random.split(key, 10)
    u = lambda k, shape, fan_in: jax.random.uniform(
        k, shape, jnp.float32, -1.0 / jnp.sqrt(fan_in), 1.0 / jnp.sqrt(fan_in))
    w_inp = u(ks[0], (IN_FEATURES, H), IN_FEATURES)
    b_inp = u(ks[1], (1, H), IN_FEATURES)
    w_ih0 = u(ks[2], (H, 4 * H), H)
    w_hh0 = u(ks[3], (H, 4 * H), H)
    b0 = u(ks[4], (1, 4 * H), H)        # b_ih + b_hh folded together
    w_ih1 = u(ks[5], (H, 4 * H), H)
    w_hh1 = u(ks[6], (H, 4 * H), H)
    b1 = u(ks[7], (1, 4 * H), H)
    w_out = u(ks[8], (H, OUT_FEATURES), H)
    b_out = u(ks[9], (1, OUT_FEATURES), H)
    return (w_inp, b_inp, w_ih0, w_hh0, b0, w_ih1, w_hh1, b1, w_out, b_out)


if __name__ == "__main__":
    B, T, H = 2, 10, 128
    key = jax.random.PRNGKey(0)
    k_x, k_p = jax.random.split(key)
    x = jax.random.normal(k_x, (B, T, IN_FEATURES), jnp.float32)
    params = init_params(k_p, H)

    out, (h_n, c_n) = simple_rnn_forward(x, params, hidden_size=H, steps=T)
    out = jax.block_until_ready(out)

    ref_out, (ref_h, ref_c) = reference_forward(x, params, hidden_size=H, steps=T)
    assert out.shape == (B, OUT_FEATURES)
    assert h_n.shape == (2, B, H) and c_n.shape == (2, B, H)
    # Kernel uses bf16 MXU operands (f32 accumulation/state); compare against
    # the pure-f32 reference with a bf16-appropriate tolerance.
    assert jnp.allclose(out, ref_out, rtol=2e-2, atol=2e-2), "output mismatch"
    assert jnp.allclose(h_n, ref_h, rtol=2e-2, atol=2e-2), "h_n mismatch"
    assert jnp.allclose(c_n, ref_c, rtol=2e-2, atol=2e-2), "c_n mismatch"
    print("KERNEL_OK")
</pallas_src>

<mosaic_0001>
module attributes {stable_mosaic.version = 11 : i64} {
  func.func @simple_rnn_kernel(%arg0: memref<80x512xbf16, #tpu.memory_space<vmem>>, %arg1: memref<512x512xbf16, #tpu.memory_space<vmem>>, %arg2: memref<1x512xf32, #tpu.memory_space<vmem>>, %arg3: memref<256x1024xbf16, #tpu.memory_space<any>>, %arg4: memref<1x512xf32, #tpu.memory_space<vmem>>, %arg5: memref<128x128xbf16, #tpu.memory_space<any>>, %arg6: memref<1x128xf32, #tpu.memory_space<vmem>>, %arg7: memref<8x128xf32, #tpu.memory_space<vmem>>, %arg8: memref<2x8x128xf32, #tpu.memory_space<vmem>>, %arg9: memref<2x8x128xf32, #tpu.memory_space<vmem>>, %arg10: memref<256x1024xbf16, #tpu.memory_space<vmem>>, %arg11: memref<128x128xbf16, #tpu.memory_space<vmem>>, %arg12: memref<80x512xf32, #tpu.memory_space<vmem>>, %arg13: memref<2x!tpu.dma_semaphore, #tpu.memory_space<semaphore_mem>>) attributes {dimension_semantics = [], scalar_prefetch = 0 : i64, scratch_operands = 4 : i64, tpu.core_type = #tpu.core_type<tc>} {
    %c0_i32 = arith.constant 0 : i32
    %0 = tpu.memref_slice %arg13[%c0_i32] : memref<2x!tpu.dma_semaphore, #tpu.memory_space<semaphore_mem>> -> memref<1x!tpu.dma_semaphore, #tpu.memory_space<semaphore_mem>>
    %1 = tpu.memref_squeeze %0 : memref<1x!tpu.dma_semaphore, #tpu.memory_space<semaphore_mem>> -> memref<!tpu.dma_semaphore, #tpu.memory_space<semaphore_mem>>
    tpu.enqueue_dma source(%arg3 : memref<256x1024xbf16, #tpu.memory_space<any>>) target(%arg10 : memref<256x1024xbf16, #tpu.memory_space<vmem>>) target_semaphore(%1 : memref<!tpu.dma_semaphore, #tpu.memory_space<semaphore_mem>>)
    %c1_i32 = arith.constant 1 : i32
    %2 = tpu.memref_slice %arg13[%c1_i32] : memref<2x!tpu.dma_semaphore, #tpu.memory_space<semaphore_mem>> -> memref<1x!tpu.dma_semaphore, #tpu.memory_space<semaphore_mem>>
    %3 = tpu.memref_squeeze %2 : memref<1x!tpu.dma_semaphore, #tpu.memory_space<semaphore_mem>> -> memref<!tpu.dma_semaphore, #tpu.memory_space<semaphore_mem>>
    tpu.enqueue_dma source(%arg5 : memref<128x128xbf16, #tpu.memory_space<any>>) target(%arg11 : memref<128x128xbf16, #tpu.memory_space<vmem>>) target_semaphore(%3 : memref<!tpu.dma_semaphore, #tpu.memory_space<semaphore_mem>>)
    %c0 = arith.constant 0 : index
    %c0_0 = arith.constant 0 : index
    %4 = vector.load %arg0[%c0, %c0_0] : memref<80x512xbf16, #tpu.memory_space<vmem>>, vector<80x512xbf16>
    %c0_1 = arith.constant 0 : index
    %c0_2 = arith.constant 0 : index
    %5 = vector.load %arg1[%c0_1, %c0_2] : memref<512x512xbf16, #tpu.memory_space<vmem>>, vector<512x512xbf16>
    %cst = arith.constant dense<0.000000e+00> : vector<80x512xf32>
    %6 = tpu.matmul %4, %5, %cst {dimension_numbers = #tpu.dot_dimension_numbers<[1], [0], [0], [1], [0, 0, 1, 1], [], []>} : vector<80x512xbf16>, vector<512x512xbf16>, vector<80x512xf32> -> vector<80x512xf32>
    %c0_3 = arith.constant 0 : index
    %c0_4 = arith.constant 0 : index
    %7 = vector.load %arg2[%c0_3, %c0_4] : memref<1x512xf32, #tpu.memory_space<vmem>>, vector<1x512xf32>
    %8 = vector.broadcast %7 : vector<1x512xf32> to vector<80x512xf32>
    %9 = arith.addf %6, %8 : vector<80x512xf32>
    %c0_5 = arith.constant 0 : index
    %c0_6 = arith.constant 0 : index
    %10 = vector.load %arg12[%c0_5, %c0_6] : memref<80x512xf32, #tpu.memory_space<vmem>>, vector<80x512xf32>
    tpu.vector_store %arg12[%c0_5, %c0_6], %9 {strides = array<i32>} : memref<80x512xf32, #tpu.memory_space<vmem>>, vector<80x512xf32>,
    %c0_7 = arith.constant 0 : index
    %c0_8 = arith.constant 0 : index
    %11 = vector.load %arg4[%c0_7, %c0_8] : memref<1x512xf32, #tpu.memory_space<vmem>>, vector<1x512xf32>
    %12 = vector.shape_cast %11 : vector<1x512xf32> to vector<1x512xf32>
    %13 = vector.broadcast %12 : vector<1x512xf32> to vector<8x512xf32>
    %cst_9 = arith.constant 0.000000e+00 : f32
    %14 = vector.broadcast %cst_9 : f32 to vector<8x128xf32>
    %cst_10 = arith.constant 0.000000e+00 : f32
    %15 = vector.broadcast %cst_10 : f32 to vector<8x128xf32>
    %cst_11 = arith.constant 0.000000e+00 : f32
    %16 = vector.broadcast %cst_11 : f32 to vector<8x128xf32>
    %c0_12 = arith.constant 0 : index
    %c0_13 = arith.constant 0 : index
    %17 = vector.load %arg12[%c0_12, %c0_13] : memref<80x512xf32, #tpu.memory_space<vmem>>, vector<8x512xf32>
    %18 = vector.extract_strided_slice %17 {offsets = [0, 0], sizes = [8, 384], strides = [1, 1]} : vector<8x512xf32> to vector<8x384xf32>
    %19 = arith.negf %18 : vector<8x384xf32>
    %20 = math.exp %19 : vector<8x384xf32>
    %cst_14 = arith.constant 1.000000e+00 : f32
    %21 = vector.broadcast %cst_14 : f32 to vector<8x384xf32>
    %22 = arith.addf %21, %20 : vector<8x384xf32>
    %23 = arith.divf %21, %22 : vector<8x384xf32>
    %24 = vector.extract_strided_slice %23 {offsets = [0, 0], sizes = [8, 128], strides = [1, 1]} : vector<8x384xf32> to vector<8x128xf32>
    %25 = vector.extract_strided_slice %23 {offsets = [0, 128], sizes = [8, 128], strides = [1, 1]} : vector<8x384xf32> to vector<8x128xf32>
    %26 = vector.extract_strided_slice %23 {offsets = [0, 256], sizes = [8, 128], strides = [1, 1]} : vector<8x384xf32> to vector<8x128xf32>
    %27 = vector.extract_strided_slice %17 {offsets = [0, 384], sizes = [8, 128], strides = [1, 1]} : vector<8x512xf32> to vector<8x128xf32>
    %28 = math.tanh %27 : vector<8x128xf32>
    %29 = arith.mulf %25, %14 : vector<8x128xf32>
    %30 = arith.mulf %24, %28 : vector<8x128xf32>
    %31 = arith.addf %29, %30 : vector<8x128xf32>
    %32 = math.tanh %31 : vector<8x128xf32>
    %33 = arith.mulf %26, %32 : vector<8x128xf32>
    %c0_i32_15 = arith.constant 0 : i32
    %34 = tpu.memref_slice %arg13[%c0_i32_15] : memref<2x!tpu.dma_semaphore, #tpu.memory_space<semaphore_mem>> -> memref<1x!tpu.dma_semaphore, #tpu.memory_space<semaphore_mem>>
    %35 = tpu.memref_squeeze %34 : memref<1x!tpu.dma_semaphore, #tpu.memory_space<semaphore_mem>> -> memref<!tpu.dma_semaphore, #tpu.memory_space<semaphore_mem>>
    tpu.wait_dma2 semaphore(%35 : memref<!tpu.dma_semaphore, #tpu.memory_space<semaphore_mem>>) src(%arg3 : memref<256x1024xbf16, #tpu.memory_space<any>>) dst(%arg10 : memref<256x1024xbf16, #tpu.memory_space<vmem>>)
    %36 = tpu.concatenate %33, %16 in 1 : vector<8x128xf32>, vector<8x128xf32> -> vector<8x256xf32>
    %37 = arith.truncf %36 : vector<8x256xf32> to vector<8x256xbf16>
    %c0_16 = arith.constant 0 : index
    %c0_17 = arith.constant 0 : index
    %38 = vector.load %arg10[%c0_16, %c0_17] : memref<256x1024xbf16, #tpu.memory_space<vmem>>, vector<256x1024xbf16>
    %cst_18 = arith.constant dense<0.000000e+00> : vector<8x1024xf32>
    %39 = tpu.matmul %37, %38, %cst_18 {dimension_numbers = #tpu.dot_dimension_numbers<[1], [0], [0], [1], [0, 0, 1, 1], [], []>} : vector<8x256xbf16>, vector<256x1024xbf16>, vector<8x1024xf32> -> vector<8x1024xf32>
    %40 = vector.extract_strided_slice %39 {offsets = [0, 512], sizes = [8, 512], strides = [1, 1]} : vector<8x1024xf32> to vector<8x512xf32>
    %41 = arith.addf %40, %13 : vector<8x512xf32>
    %42 = vector.extract_strided_slice %41 {offsets = [0, 0], sizes = [8, 384], strides = [1, 1]} : vector<8x512xf32> to vector<8x384xf32>
    %43 = arith.negf %42 : vector<8x384xf32>
    %44 = math.exp %43 : vector<8x384xf32>
    %cst_19 = arith.constant 1.000000e+00 : f32
    %45 = vector.broadcast %cst_19 : f32 to vector<8x384xf32>
    %46 = arith.addf %45, %44 : vector<8x384xf32>
    %47 = arith.divf %45, %46 : vector<8x384xf32>
    %48 = vector.extract_strided_slice %47 {offsets = [0, 0], sizes = [8, 128], strides = [1, 1]} : vector<8x384xf32> to vector<8x128xf32>
    %49 = vector.extract_strided_slice %47 {offsets = [0, 128], sizes = [8, 128], strides = [1, 1]} : vector<8x384xf32> to vector<8x128xf32>
    %50 = vector.extract_strided_slice %47 {offsets = [0, 256], sizes = [8, 128], strides = [1, 1]} : vector<8x384xf32> to vector<8x128xf32>
    %51 = vector.extract_strided_slice %41 {offsets = [0, 384], sizes = [8, 128], strides = [1, 1]} : vector<8x512xf32> to vector<8x128xf32>
    %52 = math.tanh %51 : vector<8x128xf32>
    %53 = arith.mulf %49, %15 : vector<8x128xf32>
    %54 = arith.mulf %48, %52 : vector<8x128xf32>
    %55 = arith.addf %53, %54 : vector<8x128xf32>
    %56 = math.tanh %55 : vector<8x128xf32>
    %57 = arith.mulf %50, %56 : vector<8x128xf32>
    %c8 = arith.constant 8 : index
    %c0_20 = arith.constant 0 : index
    %58 = vector.load %arg12[%c8, %c0_20] : memref<80x512xf32, #tpu.memory_space<vmem>>, vector<8x512xf32>
    %59 = vector.extract_strided_slice %39 {offsets = [0, 0], sizes = [8, 512], strides = [1, 1]} : vector<8x1024xf32> to vector<8x512xf32>
    %60 = arith.addf %58, %59 : vector<8x512xf32>
    %61 = vector.extract_strided_slice %60 {offsets = [0, 0], sizes = [8, 384], strides = [1, 1]} : vector<8x512xf32> to vector<8x384xf32>
    %62 = arith.negf %61 : vector<8x384xf32>
    %63 = math.exp %62 : vector<8x384xf32>
    %cst_21 = arith.constant 1.000000e+00 : f32
    %64 = vector.broadcast %cst_21 : f32 to vector<8x384xf32>
    %65 = arith.addf %64, %63 : vector<8x384xf32>
    %66 = arith.divf %64, %65 : vector<8x384xf32>
    %67 = vector.extract_strided_slice %66 {offsets = [0, 0], sizes = [8, 128], strides = [1, 1]} : vector<8x384xf32> to vector<8x128xf32>
    %68 = vector.extract_strided_slice %66 {offsets = [0, 128], sizes = [8, 128], strides = [1, 1]} : vector<8x384xf32> to vector<8x128xf32>
    %69 = vector.extract_strided_slice %66 {offsets = [0, 256], sizes = [8, 128], strides = [1, 1]} : vector<8x384xf32> to vector<8x128xf32>
    %70 = vector.extract_strided_slice %60 {offsets = [0, 384], sizes = [8, 128], strides = [1, 1]} : vector<8x512xf32> to vector<8x128xf32>
    %71 = math.tanh %70 : vector<8x128xf32>
    %72 = arith.mulf %68, %31 : vector<8x128xf32>
    %73 = arith.mulf %67, %71 : vector<8x128xf32>
    %74 = arith.addf %72, %73 : vector<8x128xf32>
    %75 = math.tanh %74 : vector<8x128xf32>
    %76 = arith.mulf %69, %75 : vector<8x128xf32>
    %77 = tpu.concatenate %76, %57 in 1 : vector<8x128xf32>, vector<8x128xf32> -> vector<8x256xf32>
    %78 = arith.truncf %77 : vector<8x256xf32> to vector<8x256xbf16>
    %c0_22 = arith.constant 0 : index
    %c0_23 = arith.constant 0 : index
    %79 = vector.load %arg10[%c0_22, %c0_23] : memref<256x1024xbf16, #tpu.memory_space<vmem>>, vector<256x1024xbf16>
    %cst_24 = arith.constant dense<0.000000e+00> : vector<8x1024xf32>
    %80 = tpu.matmul %78, %79, %cst_24 {dimension_numbers = #tpu.dot_dimension_numbers<[1], [0], [0], [1], [0, 0, 1, 1], [], []>} : vector<8x256xbf16>, vector<256x1024xbf16>, vector<8x1024xf32> -> vector<8x1024xf32>
    %81 = vector.extract_strided_slice %80 {offsets = [0, 512], sizes = [8, 512], strides = [1, 1]} : vector<8x1024xf32> to vector<8x512xf32>
    %82 = arith.addf %81, %13 : vector<8x512xf32>
    %83 = vector.extract_strided_slice %82 {offsets = [0, 0], sizes = [8, 384], strides = [1, 1]} : vector<8x512xf32> to vector<8x384xf32>
    %84 = arith.negf %83 : vector<8x384xf32>
    %85 = math.exp %84 : vector<8x384xf32>
    %cst_25 = arith.constant 1.000000e+00 : f32
    %86 = vector.broadcast %cst_25 : f32 to vector<8x384xf32>
    %87 = arith.addf %86, %85 : vector<8x384xf32>
    %88 = arith.divf %86, %87 : vector<8x384xf32>
    %89 = vector.extract_strided_slice %88 {offsets = [0, 0], sizes = [8, 128], strides = [1, 1]} : vector<8x384xf32> to vector<8x128xf32>
    %90 = vector.extract_strided_slice %88 {offsets = [0, 128], sizes = [8, 128], strides = [1, 1]} : vector<8x384xf32> to vector<8x128xf32>
    %91 = vector.extract_strided_slice %88 {offsets = [0, 256], sizes = [8, 128], strides = [1, 1]} : vector<8x384xf32> to vector<8x128xf32>
    %92 = vector.extract_strided_slice %82 {offsets = [0, 384], sizes = [8, 128], strides = [1, 1]} : vector<8x512xf32> to vector<8x128xf32>
    %93 = math.tanh %92 : vector<8x128xf32>
    %94 = arith.mulf %90, %55 : vector<8x128xf32>
    %95 = arith.mulf %89, %93 : vector<8x128xf32>
    %96 = arith.addf %94, %95 : vector<8x128xf32>
    %97 = math.tanh %96 : vector<8x128xf32>
    %98 = arith.mulf %91, %97 : vector<8x128xf32>
    %c16 = arith.constant 16 : index
    %c0_26 = arith.constant 0 : index
    %99 = vector.load %arg12[%c16, %c0_26] : memref<80x512xf32, #tpu.memory_space<vmem>>, vector<8x512xf32>
    %100 = vector.extract_strided_slice %80 {offsets = [0, 0], sizes = [8, 512], strides = [1, 1]} : vector<8x1024xf32> to vector<8x512xf32>
    %101 = arith.addf %99, %100 : vector<8x512xf32>
    %102 = vector.extract_strided_slice %101 {offsets = [0, 0], sizes = [8, 384], strides = [1, 1]} : vector<8x512xf32> to vector<8x384xf32>
    %103 = arith.negf %102 : vector<8x384xf32>
    %104 = math.exp %103 : vector<8x384xf32>
    %cst_27 = arith.constant 1.000000e+00 : f32
    %105 = vector.broadcast %cst_27 : f32 to vector<8x384xf32>
    %106 = arith.addf %105, %104 : vector<8x384xf32>
    %107 = arith.divf %105, %106 : vector<8x384xf32>
    %108 = vector.extract_strided_slice %107 {offsets = [0, 0], sizes = [8, 128], strides = [1, 1]} : vector<8x384xf32> to vector<8x128xf32>
    %109 = vector.extract_strided_slice %107 {offsets = [0, 128], sizes = [8, 128], strides = [1, 1]} : vector<8x384xf32> to vector<8x128xf32>
    %110 = vector.extract_strided_slice %107 {offsets = [0, 256], sizes = [8, 128], strides = [1, 1]} : vector<8x384xf32> to vector<8x128xf32>
    %111 = vector.extract_strided_slice %101 {offsets = [0, 384], sizes = [8, 128], strides = [1, 1]} : vector<8x512xf32> to vector<8x128xf32>
    %112 = math.tanh %111 : vector<8x128xf32>
    %113 = arith.mulf %109, %74 : vector<8x128xf32>
    %114 = arith.mulf %108, %112 : vector<8x128xf32>
    %115 = arith.addf %113, %114 : vector<8x128xf32>
    %116 = math.tanh %115 : vector<8x128xf32>
    %117 = arith.mulf %110, %116 : vector<8x128xf32>
    %118 = tpu.concatenate %117, %98 in 1 : vector<8x128xf32>, vector<8x128xf32> -> vector<8x256xf32>
    %119 = arith.truncf %118 : vector<8x256xf32> to vector<8x256xbf16>
    %c0_28 = arith.constant 0 : index
    %c0_29 = arith.constant 0 : index
    %120 = vector.load %arg10[%c0_28, %c0_29] : memref<256x1024xbf16, #tpu.memory_space<vmem>>, vector<256x1024xbf16>
    %cst_30 = arith.constant dense<0.000000e+00> : vector<8x1024xf32>
    %121 = tpu.matmul %119, %120, %cst_30 {dimension_numbers = #tpu.dot_dimension_numbers<[1], [0], [0], [1], [0, 0, 1, 1], [], []>} : vector<8x256xbf16>, vector<256x1024xbf16>, vector<8x1024xf32> -> vector<8x1024xf32>
    %122 = vector.extract_strided_slice %121 {offsets = [0, 512], sizes = [8, 512], strides = [1, 1]} : vector<8x1024xf32> to vector<8x512xf32>
    %123 = arith.addf %122, %13 : vector<8x512xf32>
    %124 = vector.extract_strided_slice %123 {offsets = [0, 0], sizes = [8, 384], strides = [1, 1]} : vector<8x512xf32> to vector<8x384xf32>
    %125 = arith.negf %124 : vector<8x384xf32>
    %126 = math.exp %125 : vector<8x384xf32>
    %cst_31 = arith.constant 1.000000e+00 : f32
    %127 = vector.broadcast %cst_31 : f32 to vector<8x384xf32>
    %128 = arith.addf %127, %126 : vector<8x384xf32>
    %129 = arith.divf %127, %128 : vector<8x384xf32>
    %130 = vector.extract_strided_slice %129 {offsets = [0, 0], sizes = [8, 128], strides = [1, 1]} : vector<8x384xf32> to vector<8x128xf32>
    %131 = vector.extract_strided_slice %129 {offsets = [0, 128], sizes = [8, 128], strides = [1, 1]} : vector<8x384xf32> to vector<8x128xf32>
    %132 = vector.extract_strided_slice %129 {offsets = [0, 256], sizes = [8, 128], strides = [1, 1]} : vector<8x384xf32> to vector<8x128xf32>
    %133 = vector.extract_strided_slice %123 {offsets = [0, 384], sizes = [8, 128], strides = [1, 1]} : vector<8x512xf32> to vector<8x128xf32>
    %134 = math.tanh %133 : vector<8x128xf32>
    %135 = arith.mulf %131, %96 : vector<8x128xf32>
    %136 = arith.mulf %130, %134 : vector<8x128xf32>
    %137 = arith.addf %135, %136 : vector<8x128xf32>
    %138 = math.tanh %137 : vector<8x128xf32>
    %139 = arith.mulf %132, %138 : vector<8x128xf32>
    %c24 = arith.constant 24 : index
    %c0_32 = arith.constant 0 : index
    %140 = vector.load %arg12[%c24, %c0_32] : memref<80x512xf32, #tpu.memory_space<vmem>>, vector<8x512xf32>
    %141 = vector.extract_strided_slice %121 {offsets = [0, 0], sizes = [8, 512], strides = [1, 1]} : vector<8x1024xf32> to vector<8x512xf32>
    %142 = arith.addf %140, %141 : vector<8x512xf32>
    %143 = vector.extract_strided_slice %142 {offsets = [0, 0], sizes = [8, 384], strides = [1, 1]} : vector<8x512xf32> to vector<8x384xf32>
    %144 = arith.negf %143 : vector<8x384xf32>
    %145 = math.exp %144 : vector<8x384xf32>
    %cst_33 = arith.constant 1.000000e+00 : f32
    %146 = vector.broadcast %cst_33 : f32 to vector<8x384xf32>
    %147 = arith.addf %146, %145 : vector<8x384xf32>
    %148 = arith.divf %146, %147 : vector<8x384xf32>
    %149 = vector.extract_strided_slice %148 {offsets = [0, 0], sizes = [8, 128], strides = [1, 1]} : vector<8x384xf32> to vector<8x128xf32>
    %150 = vector.extract_strided_slice %148 {offsets = [0, 128], sizes = [8, 128], strides = [1, 1]} : vector<8x384xf32> to vector<8x128xf32>
    %151 = vector.extract_strided_slice %148 {offsets = [0, 256], sizes = [8, 128], strides = [1, 1]} : vector<8x384xf32> to vector<8x128xf32>
    %152 = vector.extract_strided_slice %142 {offsets = [0, 384], sizes = [8, 128], strides = [1, 1]} : vector<8x512xf32> to vector<8x128xf32>
    %153 = math.tanh %152 : vector<8x128xf32>
    %154 = arith.mulf %150, %115 : vector<8x128xf32>
    %155 = arith.mulf %149, %153 : vector<8x128xf32>
    %156 = arith.addf %154, %155 : vector<8x128xf32>
    %157 = math.tanh %156 : vector<8x128xf32>
    %158 = arith.mulf %151, %157 : vector<8x128xf32>
    %159 = tpu.concatenate %158, %139 in 1 : vector<8x128xf32>, vector<8x128xf32> -> vector<8x256xf32>
    %160 = arith.truncf %159 : vector<8x256xf32> to vector<8x256xbf16>
    %c0_34 = arith.constant 0 : index
    %c0_35 = arith.constant 0 : index
    %161 = vector.load %arg10[%c0_34, %c0_35] : memref<256x1024xbf16, #tpu.memory_space<vmem>>, vector<256x1024xbf16>
    %cst_36 = arith.constant dense<0.000000e+00> : vector<8x1024xf32>
    %162 = tpu.matmul %160, %161, %cst_36 {dimension_numbers = #tpu.dot_dimension_numbers<[1], [0], [0], [1], [0, 0, 1, 1], [], []>} : vector<8x256xbf16>, vector<256x1024xbf16>, vector<8x1024xf32> -> vector<8x1024xf32>
    %163 = vector.extract_strided_slice %162 {offsets = [0, 512], sizes = [8, 512], strides = [1, 1]} : vector<8x1024xf32> to vector<8x512xf32>
    %164 = arith.addf %163, %13 : vector<8x512xf32>
    %165 = vector.extract_strided_slice %164 {offsets = [0, 0], sizes = [8, 384], strides = [1, 1]} : vector<8x512xf32> to vector<8x384xf32>
    %166 = arith.negf %165 : vector<8x384xf32>
    %167 = math.exp %166 : vector<8x384xf32>
    %cst_37 = arith.constant 1.000000e+00 : f32
    %168 = vector.broadcast %cst_37 : f32 to vector<8x384xf32>
    %169 = arith.addf %168, %167 : vector<8x384xf32>
    %170 = arith.divf %168, %169 : vector<8x384xf32>
    %171 = vector.extract_strided_slice %170 {offsets = [0, 0], sizes = [8, 128], strides = [1, 1]} : vector<8x384xf32> to vector<8x128xf32>
    %172 = vector.extract_strided_slice %170 {offsets = [0, 128], sizes = [8, 128], strides = [1, 1]} : vector<8x384xf32> to vector<8x128xf32>
    %173 = vector.extract_strided_slice %170 {offsets = [0, 256], sizes = [8, 128], strides = [1, 1]} : vector<8x384xf32> to vector<8x128xf32>
    %174 = vector.extract_strided_slice %164 {offsets = [0, 384], sizes = [8, 128], strides = [1, 1]} : vector<8x512xf32> to vector<8x128xf32>
    %175 = math.tanh %174 : vector<8x128xf32>
    %176 = arith.mulf %172, %137 : vector<8x128xf32>
    %177 = arith.mulf %171, %175 : vector<8x128xf32>
    %178 = arith.addf %176, %177 : vector<8x128xf32>
    %179 = math.tanh %178 : vector<8x128xf32>
    %180 = arith.mulf %173, %179 : vector<8x128xf32>
    %c32 = arith.constant 32 : index
    %c0_38 = arith.constant 0 : index
    %181 = vector.load %arg12[%c32, %c0_38] : memref<80x512xf32, #tpu.memory_space<vmem>>, vector<8x512xf32>
    %182 = vector.extract_strided_slice %162 {offsets = [0, 0], sizes = [8, 512], strides = [1, 1]} : vector<8x1024xf32> to vector<8x512xf32>
    %183 = arith.addf %181, %182 : vector<8x512xf32>
    %184 = vector.extract_strided_slice %183 {offsets = [0, 0], sizes = [8, 384], strides = [1, 1]} : vector<8x512xf32> to vector<8x384xf32>
    %185 = arith.negf %184 : vector<8x384xf32>
    %186 = math.exp %185 : vector<8x384xf32>
    %cst_39 = arith.constant 1.000000e+00 : f32
    %187 = vector.broadcast %cst_39 : f32 to vector<8x384xf32>
    %188 = arith.addf %187, %186 : vector<8x384xf32>
    %189 = arith.divf %187, %188 : vector<8x384xf32>
    %190 = vector.extract_strided_slice %189 {offsets = [0, 0], sizes = [8, 128], strides = [1, 1]} : vector<8x384xf32> to vector<8x128xf32>
    %191 = vector.extract_strided_slice %189 {offsets = [0, 128], sizes = [8, 128], strides = [1, 1]} : vector<8x384xf32> to vector<8x128xf32>
    %192 = vector.extract_strided_slice %189 {offsets = [0, 256], sizes = [8, 128], strides = [1, 1]} : vector<8x384xf32> to vector<8x128xf32>
    %193 = vector.extract_strided_slice %183 {offsets = [0, 384], sizes = [8, 128], strides = [1, 1]} : vector<8x512xf32> to vector<8x128xf32>
    %194 = math.tanh %193 : vector<8x128xf32>
    %195 = arith.mulf %191, %156 : vector<8x128xf32>
    %196 = arith.mulf %190, %194 : vector<8x128xf32>
    %197 = arith.addf %195, %196 : vector<8x128xf32>
    %198 = math.tanh %197 : vector<8x128xf32>
    %199 = arith.mulf %192, %198 : vector<8x128xf32>
    %200 = tpu.concatenate %199, %180 in 1 : vector<8x128xf32>, vector<8x128xf32> -> vector<8x256xf32>
    %201 = arith.truncf %200 : vector<8x256xf32> to vector<8x256xbf16>
    %c0_40 = arith.constant 0 : index
    %c0_41 = arith.constant 0 : index
    %202 = vector.load %arg10[%c0_40, %c0_41] : memref<256x1024xbf16, #tpu.memory_space<vmem>>, vector<256x1024xbf16>
    %cst_42 = arith.constant dense<0.000000e+00> : vector<8x1024xf32>
    %203 = tpu.matmul %201, %202, %cst_42 {dimension_numbers = #tpu.dot_dimension_numbers<[1], [0], [0], [1], [0, 0, 1, 1], [], []>} : vector<8x256xbf16>, vector<256x1024xbf16>, vector<8x1024xf32> -> vector<8x1024xf32>
    %204 = vector.extract_strided_slice %203 {offsets = [0, 512], sizes = [8, 512], strides = [1, 1]} : vector<8x1024xf32> to vector<8x512xf32>
    %205 = arith.addf %204, %13 : vector<8x512xf32>
    %206 = vector.extract_strided_slice %205 {offsets = [0, 0], sizes = [8, 384], strides = [1, 1]} : vector<8x512xf32> to vector<8x384xf32>
    %207 = arith.negf %206 : vector<8x384xf32>
    %208 = math.exp %207 : vector<8x384xf32>
    %cst_43 = arith.constant 1.000000e+00 : f32
    %209 = vector.broadcast %cst_43 : f32 to vector<8x384xf32>
    %210 = arith.addf %209, %208 : vector<8x384xf32>
    %211 = arith.divf %209, %210 : vector<8x384xf32>
    %212 = vector.extract_strided_slice %211 {offsets = [0, 0], sizes = [8, 128], strides = [1, 1]} : vector<8x384xf32> to vector<8x128xf32>
    %213 = vector.extract_strided_slice %211 {offsets = [0, 128], sizes = [8, 128], strides = [1, 1]} : vector<8x384xf32> to vector<8x128xf32>
    %214 = vector.extract_strided_slice %211 {offsets = [0, 256], sizes = [8, 128], strides = [1, 1]} : vector<8x384xf32> to vector<8x128xf32>
    %215 = vector.extract_strided_slice %205 {offsets = [0, 384], sizes = [8, 128], strides = [1, 1]} : vector<8x512xf32> to vector<8x128xf32>
    %216 = math.tanh %215 : vector<8x128xf32>
    %217 = arith.mulf %213, %178 : vector<8x128xf32>
    %218 = arith.mulf %212, %216 : vector<8x128xf32>
    %219 = arith.addf %217, %218 : vector<8x128xf32>
    %220 = math.tanh %219 : vector<8x128xf32>
    %221 = arith.mulf %214, %220 : vector<8x128xf32>
    %c40 = arith.constant 40 : index
    %c0_44 = arith.constant 0 : index
    %222 = vector.load %arg12[%c40, %c0_44] : memref<80x512xf32, #tpu.memory_space<vmem>>, vector<8x512xf32>
    %223 = vector.extract_strided_slice %203 {offsets = [0, 0], sizes = [8, 512], strides = [1, 1]} : vector<8x1024xf32> to vector<8x512xf32>
    %224 = arith.addf %222, %223 : vector<8x512xf32>
    %225 = vector.extract_strided_slice %224 {offsets = [0, 0], sizes = [8, 384], strides = [1, 1]} : vector<8x512xf32> to vector<8x384xf32>
    %226 = arith.negf %225 : vector<8x384xf32>
    %227 = math.exp %226 : vector<8x384xf32>
    %cst_45 = arith.constant 1.000000e+00 : f32
    %228 = vector.broadcast %cst_45 : f32 to vector<8x384xf32>
    %229 = arith.addf %228, %227 : vector<8x384xf32>
    %230 = arith.divf %228, %229 : vector<8x384xf32>
    %231 = vector.extract_strided_slice %230 {offsets = [0, 0], sizes = [8, 128], strides = [1, 1]} : vector<8x384xf32> to vector<8x128xf32>
    %232 = vector.extract_strided_slice %230 {offsets = [0, 128], sizes = [8, 128], strides = [1, 1]} : vector<8x384xf32> to vector<8x128xf32>
    %233 = vector.extract_strided_slice %230 {offsets = [0, 256], sizes = [8, 128], strides = [1, 1]} : vector<8x384xf32> to vector<8x128xf32>
    %234 = vector.extract_strided_slice %224 {offsets = [0, 384], sizes = [8, 128], strides = [1, 1]} : vector<8x512xf32> to vector<8x128xf32>
    %235 = math.tanh %234 : vector<8x128xf32>
    %236 = arith.mulf %232, %197 : vector<8x128xf32>
    %237 = arith.mulf %231, %235 : vector<8x128xf32>
    %238 = arith.addf %236, %237 : vector<8x128xf32>
    %239 = math.tanh %238 : vector<8x128xf32>
    %240 = arith.mulf %233, %239 : vector<8x128xf32>
    %241 = tpu.concatenate %240, %221 in 1 : vector<8x128xf32>, vector<8x128xf32> -> vector<8x256xf32>
    %242 = arith.truncf %241 : vector<8x256xf32> to vector<8x256xbf16>
    %c0_46 = arith.constant 0 : index
    %c0_47 = arith.constant 0 : index
    %243 = vector.load %arg10[%c0_46, %c0_47] : memref<256x1024xbf16, #tpu.memory_space<vmem>>, vector<256x1024xbf16>
    %cst_48 = arith.constant dense<0.000000e+00> : vector<8x1024xf32>
    %244 = tpu.matmul %242, %243, %cst_48 {dimension_numbers = #tpu.dot_dimension_numbers<[1], [0], [0], [1], [0, 0, 1, 1], [], []>} : vector<8x256xbf16>, vector<256x1024xbf16>, vector<8x1024xf32> -> vector<8x1024xf32>
    %245 = vector.extract_strided_slice %244 {offsets = [0, 512], sizes = [8, 512], strides = [1, 1]} : vector<8x1024xf32> to vector<8x512xf32>
    %246 = arith.addf %245, %13 : vector<8x512xf32>
    %247 = vector.extract_strided_slice %246 {offsets = [0, 0], sizes = [8, 384], strides = [1, 1]} : vector<8x512xf32> to vector<8x384xf32>
    %248 = arith.negf %247 : vector<8x384xf32>
    %249 = math.exp %248 : vector<8x384xf32>
    %cst_49 = arith.constant 1.000000e+00 : f32
    %250 = vector.broadcast %cst_49 : f32 to vector<8x384xf32>
    %251 = arith.addf %250, %249 : vector<8x384xf32>
    %252 = arith.divf %250, %251 : vector<8x384xf32>
    %253 = vector.extract_strided_slice %252 {offsets = [0, 0], sizes = [8, 128], strides = [1, 1]} : vector<8x384xf32> to vector<8x128xf32>
    %254 = vector.extract_strided_slice %252 {offsets = [0, 128], sizes = [8, 128], strides = [1, 1]} : vector<8x384xf32> to vector<8x128xf32>
    %255 = vector.extract_strided_slice %252 {offsets = [0, 256], sizes = [8, 128], strides = [1, 1]} : vector<8x384xf32> to vector<8x128xf32>
    %256 = vector.extract_strided_slice %246 {offsets = [0, 384], sizes = [8, 128], strides = [1, 1]} : vector<8x512xf32> to vector<8x128xf32>
    %257 = math.tanh %256 : vector<8x128xf32>
    %258 = arith.mulf %254, %219 : vector<8x128xf32>
    %259 = arith.mulf %253, %257 : vector<8x128xf32>
    %260 = arith.addf %258, %259 : vector<8x128xf32>
    %261 = math.tanh %260 : vector<8x128xf32>
    %262 = arith.mulf %255, %261 : vector<8x128xf32>
    %c48 = arith.constant 48 : index
    %c0_50 = arith.constant 0 : index
    %263 = vector.load %arg12[%c48, %c0_50] : memref<80x512xf32, #tpu.memory_space<vmem>>, vector<8x512xf32>
    %264 = vector.extract_strided_slice %244 {offsets = [0, 0], sizes = [8, 512], strides = [1, 1]} : vector<8x1024xf32> to vector<8x512xf32>
    %265 = arith.addf %263, %264 : vector<8x512xf32>
    %266 = vector.extract_strided_slice %265 {offsets = [0, 0], sizes = [8, 384], strides = [1, 1]} : vector<8x512xf32> to vector<8x384xf32>
    %267 = arith.negf %266 : vector<8x384xf32>
    %268 = math.exp %267 : vector<8x384xf32>
    %cst_51 = arith.constant 1.000000e+00 : f32
    %269 = vector.broadcast %cst_51 : f32 to vector<8x384xf32>
    %270 = arith.addf %269, %268 : vector<8x384xf32>
    %271 = arith.divf %269, %270 : vector<8x384xf32>
    %272 = vector.extract_strided_slice %271 {offsets = [0, 0], sizes = [8, 128], strides = [1, 1]} : vector<8x384xf32> to vector<8x128xf32>
    %273 = vector.extract_strided_slice %271 {offsets = [0, 128], sizes = [8, 128], strides = [1, 1]} : vector<8x384xf32> to vector<8x128xf32>
    %274 = vector.extract_strided_slice %271 {offsets = [0, 256], sizes = [8, 128], strides = [1, 1]} : vector<8x384xf32> to vector<8x128xf32>
    %275 = vector.extract_strided_slice %265 {offsets = [0, 384], sizes = [8, 128], strides = [1, 1]} : vector<8x512xf32> to vector<8x128xf32>
    %276 = math.tanh %275 : vector<8x128xf32>
    %277 = arith.mulf %273, %238 : vector<8x128xf32>
    %278 = arith.mulf %272, %276 : vector<8x128xf32>
    %279 = arith.addf %277, %278 : vector<8x128xf32>
    %280 = math.tanh %279 : vector<8x128xf32>
    %281 = arith.mulf %274, %280 : vector<8x128xf32>
    %282 = tpu.concatenate %281, %262 in 1 : vector<8x128xf32>, vector<8x128xf32> -> vector<8x256xf32>
    %283 = arith.truncf %282 : vector<8x256xf32> to vector<8x256xbf16>
    %c0_52 = arith.constant 0 : index
    %c0_53 = arith.constant 0 : index
    %284 = vector.load %arg10[%c0_52, %c0_53] : memref<256x1024xbf16, #tpu.memory_space<vmem>>, vector<256x1024xbf16>
    %cst_54 = arith.constant dense<0.000000e+00> : vector<8x1024xf32>
    %285 = tpu.matmul %283, %284, %cst_54 {dimension_numbers = #tpu.dot_dimension_numbers<[1], [0], [0], [1], [0, 0, 1, 1], [], []>} : vector<8x256xbf16>, vector<256x1024xbf16>, vector<8x1024xf32> -> vector<8x1024xf32>
    %286 = vector.extract_strided_slice %285 {offsets = [0, 512], sizes = [8, 512], strides = [1, 1]} : vector<8x1024xf32> to vector<8x512xf32>
    %287 = arith.addf %286, %13 : vector<8x512xf32>
    %288 = vector.extract_strided_slice %287 {offsets = [0, 0], sizes = [8, 384], strides = [1, 1]} : vector<8x512xf32> to vector<8x384xf32>
    %289 = arith.negf %288 : vector<8x384xf32>
    %290 = math.exp %289 : vector<8x384xf32>
    %cst_55 = arith.constant 1.000000e+00 : f32
    %291 = vector.broadcast %cst_55 : f32 to vector<8x384xf32>
    %292 = arith.addf %291, %290 : vector<8x384xf32>
    %293 = arith.divf %291, %292 : vector<8x384xf32>
    %294 = vector.extract_strided_slice %293 {offsets = [0, 0], sizes = [8, 128], strides = [1, 1]} : vector<8x384xf32> to vector<8x128xf32>
    %295 = vector.extract_strided_slice %293 {offsets = [0, 128], sizes = [8, 128], strides = [1, 1]} : vector<8x384xf32> to vector<8x128xf32>
    %296 = vector.extract_strided_slice %293 {offsets = [0, 256], sizes = [8, 128], strides = [1, 1]} : vector<8x384xf32> to vector<8x128xf32>
    %297 = vector.extract_strided_slice %287 {offsets = [0, 384], sizes = [8, 128], strides = [1, 1]} : vector<8x512xf32> to vector<8x128xf32>
    %298 = math.tanh %297 : vector<8x128xf32>
    %299 = arith.mulf %295, %260 : vector<8x128xf32>
    %300 = arith.mulf %294, %298 : vector<8x128xf32>
    %301 = arith.addf %299, %300 : vector<8x128xf32>
    %302 = math.tanh %301 : vector<8x128xf32>
    %303 = arith.mulf %296, %302 : vector<8x128xf32>
    %c56 = arith.constant 56 : index
    %c0_56 = arith.constant 0 : index
    %304 = vector.load %arg12[%c56, %c0_56] : memref<80x512xf32, #tpu.memory_space<vmem>>, vector<8x512xf32>
    %305 = vector.extract_strided_slice %285 {offsets = [0, 0], sizes = [8, 512], strides = [1, 1]} : vector<8x1024xf32> to vector<8x512xf32>
    %306 = arith.addf %304, %305 : vector<8x512xf32>
    %307 = vector.extract_strided_slice %306 {offsets = [0, 0], sizes = [8, 384], strides = [1, 1]} : vector<8x512xf32> to vector<8x384xf32>
    %308 = arith.negf %307 : vector<8x384xf32>
    %309 = math.exp %308 : vector<8x384xf32>
    %cst_57 = arith.constant 1.000000e+00 : f32
    %310 = vector.broadcast %cst_57 : f32 to vector<8x384xf32>
    %311 = arith.addf %310, %309 : vector<8x384xf32>
    %312 = arith.divf %310, %311 : vector<8x384xf32>
    %313 = vector.extract_strided_slice %312 {offsets = [0, 0], sizes = [8, 128], strides = [1, 1]} : vector<8x384xf32> to vector<8x128xf32>
    %314 = vector.extract_strided_slice %312 {offsets = [0, 128], sizes = [8, 128], strides = [1, 1]} : vector<8x384xf32> to vector<8x128xf32>
    %315 = vector.extract_strided_slice %312 {offsets = [0, 256], sizes = [8, 128], strides = [1, 1]} : vector<8x384xf32> to vector<8x128xf32>
    %316 = vector.extract_strided_slice %306 {offsets = [0, 384], sizes = [8, 128], strides = [1, 1]} : vector<8x512xf32> to vector<8x128xf32>
    %317 = math.tanh %316 : vector<8x128xf32>
    %318 = arith.mulf %314, %279 : vector<8x128xf32>
    %319 = arith.mulf %313, %317 : vector<8x128xf32>
    %320 = arith.addf %318, %319 : vector<8x128xf32>
    %321 = math.tanh %320 : vector<8x128xf32>
    %322 = arith.mulf %315, %321 : vector<8x128xf32>
    %323 = tpu.concatenate %322, %303 in 1 : vector<8x128xf32>, vector<8x128xf32> -> vector<8x256xf32>
    %324 = arith.truncf %323 : vector<8x256xf32> to vector<8x256xbf16>
    %c0_58 = arith.constant 0 : index
    %c0_59 = arith.constant 0 : index
    %325 = vector.load %arg10[%c0_58, %c0_59] : memref<256x1024xbf16, #tpu.memory_space<vmem>>, vector<256x1024xbf16>
    %cst_60 = arith.constant dense<0.000000e+00> : vector<8x1024xf32>
    %326 = tpu.matmul %324, %325, %cst_60 {dimension_numbers = #tpu.dot_dimension_numbers<[1], [0], [0], [1], [0, 0, 1, 1], [], []>} : vector<8x256xbf16>, vector<256x1024xbf16>, vector<8x1024xf32> -> vector<8x1024xf32>
    %327 = vector.extract_strided_slice %326 {offsets = [0, 512], sizes = [8, 512], strides = [1, 1]} : vector<8x1024xf32> to vector<8x512xf32>
    %328 = arith.addf %327, %13 : vector<8x512xf32>
    %329 = vector.extract_strided_slice %328 {offsets = [0, 0], sizes = [8, 384], strides = [1, 1]} : vector<8x512xf32> to vector<8x384xf32>
    %330 = arith.negf %329 : vector<8x384xf32>
    %331 = math.exp %330 : vector<8x384xf32>
    %cst_61 = arith.constant 1.000000e+00 : f32
    %332 = vector.broadcast %cst_61 : f32 to vector<8x384xf32>
    %333 = arith.addf %332, %331 : vector<8x384xf32>
    %334 = arith.divf %332, %333 : vector<8x384xf32>
    %335 = vector.extract_strided_slice %334 {offsets = [0, 0], sizes = [8, 128], strides = [1, 1]} : vector<8x384xf32> to vector<8x128xf32>
    %336 = vector.extract_strided_slice %334 {offsets = [0, 128], sizes = [8, 128], strides = [1, 1]} : vector<8x384xf32> to vector<8x128xf32>
    %337 = vector.extract_strided_slice %334 {offsets = [0, 256], sizes = [8, 128], strides = [1, 1]} : vector<8x384xf32> to vector<8x128xf32>
    %338 = vector.extract_strided_slice %328 {offsets = [0, 384], sizes = [8, 128], strides = [1, 1]} : vector<8x512xf32> to vector<8x128xf32>
    %339 = math.tanh %338 : vector<8x128xf32>
    %340 = arith.mulf %336, %301 : vector<8x128xf32>
    %341 = arith.mulf %335, %339 : vector<8x128xf32>
    %342 = arith.addf %340, %341 : vector<8x128xf32>
    %343 = math.tanh %342 : vector<8x128xf32>
    %344 = arith.mulf %337, %343 : vector<8x128xf32>
    %c64 = arith.constant 64 : index
    %c0_62 = arith.constant 0 : index
    %345 = vector.load %arg12[%c64, %c0_62] : memref<80x512xf32, #tpu.memory_space<vmem>>, vector<8x512xf32>
    %346 = vector.extract_strided_slice %326 {offsets = [0, 0], sizes = [8, 512], strides = [1, 1]} : vector<8x1024xf32> to vector<8x512xf32>
    %347 = arith.addf %345, %346 : vector<8x512xf32>
    %348 = vector.extract_strided_slice %347 {offsets = [0, 0], sizes = [8, 384], strides = [1, 1]} : vector<8x512xf32> to vector<8x384xf32>
    %349 = arith.negf %348 : vector<8x384xf32>
    %350 = math.exp %349 : vector<8x384xf32>
    %cst_63 = arith.constant 1.000000e+00 : f32
    %351 = vector.broadcast %cst_63 : f32 to vector<8x384xf32>
    %352 = arith.addf %351, %350 : vector<8x384xf32>
    %353 = arith.divf %351, %352 : vector<8x384xf32>
    %354 = vector.extract_strided_slice %353 {offsets = [0, 0], sizes = [8, 128], strides = [1, 1]} : vector<8x384xf32> to vector<8x128xf32>
    %355 = vector.extract_strided_slice %353 {offsets = [0, 128], sizes = [8, 128], strides = [1, 1]} : vector<8x384xf32> to vector<8x128xf32>
    %356 = vector.extract_strided_slice %353 {offsets = [0, 256], sizes = [8, 128], strides = [1, 1]} : vector<8x384xf32> to vector<8x128xf32>
    %357 = vector.extract_strided_slice %347 {offsets = [0, 384], sizes = [8, 128], strides = [1, 1]} : vector<8x512xf32> to vector<8x128xf32>
    %358 = math.tanh %357 : vector<8x128xf32>
    %359 = arith.mulf %355, %320 : vector<8x128xf32>
    %360 = arith.mulf %354, %358 : vector<8x128xf32>
    %361 = arith.addf %359, %360 : vector<8x128xf32>
    %362 = math.tanh %361 : vector<8x128xf32>
    %363 = arith.mulf %356, %362 : vector<8x128xf32>
    %364 = tpu.concatenate %363, %344 in 1 : vector<8x128xf32>, vector<8x128xf32> -> vector<8x256xf32>
    %365 = arith.truncf %364 : vector<8x256xf32> to vector<8x256xbf16>
    %c0_64 = arith.constant 0 : index
    %c0_65 = arith.constant 0 : index
    %366 = vector.load %arg10[%c0_64, %c0_65] : memref<256x1024xbf16, #tpu.memory_space<vmem>>, vector<256x1024xbf16>
    %cst_66 = arith.constant dense<0.000000e+00> : vector<8x1024xf32>
    %367 = tpu.matmul %365, %366, %cst_66 {dimension_numbers = #tpu.dot_dimension_numbers<[1], [0], [0], [1], [0, 0, 1, 1], [], []>} : vector<8x256xbf16>, vector<256x1024xbf16>, vector<8x1024xf32> -> vector<8x1024xf32>
    %368 = vector.extract_strided_slice %367 {offsets = [0, 512], sizes = [8, 512], strides = [1, 1]} : vector<8x1024xf32> to vector<8x512xf32>
    %369 = arith.addf %368, %13 : vector<8x512xf32>
    %370 = vector.extract_strided_slice %369 {offsets = [0, 0], sizes = [8, 384], strides = [1, 1]} : vector<8x512xf32> to vector<8x384xf32>
    %371 = arith.negf %370 : vector<8x384xf32>
    %372 = math.exp %371 : vector<8x384xf32>
    %cst_67 = arith.constant 1.000000e+00 : f32
    %373 = vector.broadcast %cst_67 : f32 to vector<8x384xf32>
    %374 = arith.addf %373, %372 : vector<8x384xf32>
    %375 = arith.divf %373, %374 : vector<8x384xf32>
    %376 = vector.extract_strided_slice %375 {offsets = [0, 0], sizes = [8, 128], strides = [1, 1]} : vector<8x384xf32> to vector<8x128xf32>
    %377 = vector.extract_strided_slice %375 {offsets = [0, 128], sizes = [8, 128], strides = [1, 1]} : vector<8x384xf32> to vector<8x128xf32>
    %378 = vector.extract_strided_slice %375 {offsets = [0, 256], sizes = [8, 128], strides = [1, 1]} : vector<8x384xf32> to vector<8x128xf32>
    %379 = vector.extract_strided_slice %369 {offsets = [0, 384], sizes = [8, 128], strides = [1, 1]} : vector<8x512xf32> to vector<8x128xf32>
    %380 = math.tanh %379 : vector<8x128xf32>
    %381 = arith.mulf %377, %342 : vector<8x128xf32>
    %382 = arith.mulf %376, %380 : vector<8x128xf32>
    %383 = arith.addf %381, %382 : vector<8x128xf32>
    %384 = math.tanh %383 : vector<8x128xf32>
    %385 = arith.mulf %378, %384 : vector<8x128xf32>
    %c72 = arith.constant 72 : index
    %c0_68 = arith.constant 0 : index
    %386 = vector.load %arg12[%c72, %c0_68] : memref<80x512xf32, #tpu.memory_space<vmem>>, vector<8x512xf32>
    %387 = vector.extract_strided_slice %367 {offsets = [0, 0], sizes = [8, 512], strides = [1, 1]} : vector<8x1024xf32> to vector<8x512xf32>
    %388 = arith.addf %386, %387 : vector<8x512xf32>
    %389 = vector.extract_strided_slice %388 {offsets = [0, 0], sizes = [8, 384], strides = [1, 1]} : vector<8x512xf32> to vector<8x384xf32>
    %390 = arith.negf %389 : vector<8x384xf32>
    %391 = math.exp %390 : vector<8x384xf32>
    %cst_69 = arith.constant 1.000000e+00 : f32
    %392 = vector.broadcast %cst_69 : f32 to vector<8x384xf32>
    %393 = arith.addf %392, %391 : vector<8x384xf32>
    %394 = arith.divf %392, %393 : vector<8x384xf32>
    %395 = vector.extract_strided_slice %394 {offsets = [0, 0], sizes = [8, 128], strides = [1, 1]} : vector<8x384xf32> to vector<8x128xf32>
    %396 = vector.extract_strided_slice %394 {offsets = [0, 128], sizes = [8, 128], strides = [1, 1]} : vector<8x384xf32> to vector<8x128xf32>
    %397 = vector.extract_strided_slice %394 {offsets = [0, 256], sizes = [8, 128], strides = [1, 1]} : vector<8x384xf32> to vector<8x128xf32>
    %398 = vector.extract_strided_slice %388 {offsets = [0, 384], sizes = [8, 128], strides = [1, 1]} : vector<8x512xf32> to vector<8x128xf32>
    %399 = math.tanh %398 : vector<8x128xf32>
    %400 = arith.mulf %396, %361 : vector<8x128xf32>
    %401 = arith.mulf %395, %399 : vector<8x128xf32>
    %402 = arith.addf %400, %401 : vector<8x128xf32>
    %403 = math.tanh %402 : vector<8x128xf32>
    %404 = arith.mulf %397, %403 : vector<8x128xf32>
    %405 = tpu.concatenate %404, %385 in 1 : vector<8x128xf32>, vector<8x128xf32> -> vector<8x256xf32>
    %406 = arith.truncf %405 : vector<8x256xf32> to vector<8x256xbf16>
    %c0_70 = arith.constant 0 : index
    %c0_71 = arith.constant 0 : index
    %407 = vector.load %arg10[%c0_70, %c0_71] : memref<256x1024xbf16, #tpu.memory_space<vmem>>, vector<256x1024xbf16>
    %cst_72 = arith.constant dense<0.000000e+00> : vector<8x1024xf32>
    %408 = tpu.matmul %406, %407, %cst_72 {dimension_numbers = #tpu.dot_dimension_numbers<[1], [0], [0], [1], [0, 0, 1, 1], [], []>} : vector<8x256xbf16>, vector<256x1024xbf16>, vector<8x1024xf32> -> vector<8x1024xf32>
    %409 = vector.extract_strided_slice %408 {offsets = [0, 512], sizes = [8, 512], strides = [1, 1]} : vector<8x1024xf32> to vector<8x512xf32>
    %410 = arith.addf %409, %13 : vector<8x512xf32>
    %411 = vector.extract_strided_slice %410 {offsets = [0, 0], sizes = [8, 384], strides = [1, 1]} : vector<8x512xf32> to vector<8x384xf32>
    %412 = arith.negf %411 : vector<8x384xf32>
    %413 = math.exp %412 : vector<8x384xf32>
    %cst_73 = arith.constant 1.000000e+00 : f32
    %414 = vector.broadcast %cst_73 : f32 to vector<8x384xf32>
    %415 = arith.addf %414, %413 : vector<8x384xf32>
    %416 = arith.divf %414, %415 : vector<8x384xf32>
    %417 = vector.extract_strided_slice %416 {offsets = [0, 0], sizes = [8, 128], strides = [1, 1]} : vector<8x384xf32> to vector<8x128xf32>
    %418 = vector.extract_strided_slice %416 {offsets = [0, 128], sizes = [8, 128], strides = [1, 1]} : vector<8x384xf32> to vector<8x128xf32>
    %419 = vector.extract_strided_slice %416 {offsets = [0, 256], sizes = [8, 128], strides = [1, 1]} : vector<8x384xf32> to vector<8x128xf32>
    %420 = vector.extract_strided_slice %410 {offsets = [0, 384], sizes = [8, 128], strides = [1, 1]} : vector<8x512xf32> to vector<8x128xf32>
    %421 = math.tanh %420 : vector<8x128xf32>
    %422 = arith.mulf %418, %383 : vector<8x128xf32>
    %423 = arith.mulf %417, %421 : vector<8x128xf32>
    %424 = arith.addf %422, %423 : vector<8x128xf32>
    %425 = math.tanh %424 : vector<8x128xf32>
    %426 = arith.mulf %419, %425 : vector<8x128xf32>
    %c1_i32_74 = arith.constant 1 : i32
    %427 = tpu.memref_slice %arg13[%c1_i32_74] : memref<2x!tpu.dma_semaphore, #tpu.memory_space<semaphore_mem>> -> memref<1x!tpu.dma_semaphore, #tpu.memory_space<semaphore_mem>>
    %428 = tpu.memref_squeeze %427 : memref<1x!tpu.dma_semaphore, #tpu.memory_space<semaphore_mem>> -> memref<!tpu.dma_semaphore, #tpu.memory_space<semaphore_mem>>
    tpu.wait_dma2 semaphore(%428 : memref<!tpu.dma_semaphore, #tpu.memory_space<semaphore_mem>>) src(%arg5 : memref<128x128xbf16, #tpu.memory_space<any>>) dst(%arg11 : memref<128x128xbf16, #tpu.memory_space<vmem>>)
    %429 = arith.truncf %426 : vector<8x128xf32> to vector<8x128xbf16>
    %c0_75 = arith.constant 0 : index
    %c0_76 = arith.constant 0 : index
    %430 = vector.load %arg11[%c0_75, %c0_76] : memref<128x128xbf16, #tpu.memory_space<vmem>>, vector<128x128xbf16>
    %cst_77 = arith.constant dense<0.000000e+00> : vector<8x128xf32>
    %431 = tpu.matmul %429, %430, %cst_77 {dimension_numbers = #tpu.dot_dimension_numbers<[1], [0], [0], [1], [0, 0, 1, 1], [], []>} : vector<8x128xbf16>, vector<128x128xbf16>, vector<8x128xf32> -> vector<8x128xf32>
    %c0_78 = arith.constant 0 : index
    %c0_79 = arith.constant 0 : index
    %432 = vector.load %arg6[%c0_78, %c0_79] : memref<1x128xf32, #tpu.memory_space<vmem>>, vector<1x128xf32>
    %433 = vector.broadcast %432 : vector<1x128xf32> to vector<8x128xf32>
    %434 = arith.addf %431, %433 : vector<8x128xf32>
    %c0_80 = arith.constant 0 : index
    %c0_81 = arith.constant 0 : index
    %435 = vector.load %arg7[%c0_80, %c0_81] : memref<8x128xf32, #tpu.memory_space<vmem>>, vector<8x128xf32>
    tpu.vector_store %arg7[%c0_80, %c0_81], %434 {strides = array<i32>} : memref<8x128xf32, #tpu.memory_space<vmem>>, vector<8x128xf32>,
    %c0_82 = arith.constant 0 : index
    %c0_83 = arith.constant 0 : index
    %c0_84 = arith.constant 0 : index
    %436 = vector.load %arg8[%c0_82, %c0_83, %c0_84] : memref<2x8x128xf32, #tpu.memory_space<vmem>>, vector<1x8x128xf32>
    %437 = vector.shape_cast %436 : vector<1x8x128xf32> to vector<8x128xf32>
    %438 = vector.shape_cast %404 : vector<8x128xf32> to vector<1x8x128xf32>
    tpu.vector_store %arg8[%c0_82, %c0_83, %c0_84], %438 {strides = array<i32>} : memref<2x8x128xf32, #tpu.memory_space<vmem>>, vector<1x8x128xf32>,
    %c1 = arith.constant 1 : index
    %c0_85 = arith.constant 0 : index
    %c0_86 = arith.constant 0 : index
    %439 = vector.load %arg8[%c1, %c0_85, %c0_86] : memref<2x8x128xf32, #tpu.memory_space<vmem>>, vector<1x8x128xf32>
    %440 = vector.shape_cast %439 : vector<1x8x128xf32> to vector<8x128xf32>
    %441 = vector.shape_cast %426 : vector<8x128xf32> to vector<1x8x128xf32>
    tpu.vector_store %arg8[%c1, %c0_85, %c0_86], %441 {strides = array<i32>} : memref<2x8x128xf32, #tpu.memory_space<vmem>>, vector<1x8x128xf32>,
    %c0_87 = arith.constant 0 : index
    %c0_88 = arith.constant 0 : index
    %c0_89 = arith.constant 0 : index
    %442 = vector.load %arg9[%c0_87, %c0_88, %c0_89] : memref<2x8x128xf32, #tpu.memory_space<vmem>>, vector<1x8x128xf32>
    %443 = vector.shape_cast %442 : vector<1x8x128xf32> to vector<8x128xf32>
    %444 = vector.shape_cast %402 : vector<8x128xf32> to vector<1x8x128xf32>
    tpu.vector_store %arg9[%c0_87, %c0_88, %c0_89], %444 {strides = array<i32>} : memref<2x8x128xf32, #tpu.memory_space<vmem>>, vector<1x8x128xf32>,
    %c1_90 = arith.constant 1 : index
    %c0_91 = arith.constant 0 : index
    %c0_92 = arith.constant 0 : index
    %445 = vector.load %arg9[%c1_90, %c0_91, %c0_92] : memref<2x8x128xf32, #tpu.memory_space<vmem>>, vector<1x8x128xf32>
    %446 = vector.shape_cast %445 : vector<1x8x128xf32> to vector<8x128xf32>
    %447 = vector.shape_cast %424 : vector<8x128xf32> to vector<1x8x128xf32>
    tpu.vector_store %arg9[%c1_90, %c0_91, %c0_92], %447 {strides = array<i32>} : memref<2x8x128xf32, #tpu.memory_space<vmem>>, vector<1x8x128xf32>,
    return
  }
}

</mosaic_0001>

<llo_original>
// kernel: tpu_custom_call.1
$region0: #{tpu_custom_call.1}
  #allocation0 [shape = 'u32[]', space=smem, size = 0x4, offset = 0x4, fixed_abs, tag = 'smem constant byte address 0x4 - core index']
  #allocation1 [shape = 'u32[72,128]{1,0:T(1,128)}', space=vmem, size = 0x9000, scoped, tag = 'internal scratch']
  #allocation2 [shape = 'bf16[256,1024]{1,0:T(8,128)(2,1)}', space=vmem, size = 0x80000, scoped, tag = 'scratch operand']
  #allocation3 [shape = 'bf16[128,128]{1,0:T(8,128)(2,1)}', space=vmem, size = 0x8000, scoped, tag = 'scratch operand']
  #allocation4 [shape = 'f32[80,512]{1,0:T(8,128)}', space=vmem, size = 0x28000, scoped, tag = 'scratch operand']
  #allocation5 [shape = 's32[2]{0}', space=sflag, size = 0x8, scoped, tag = 'scratch operand']
  #allocation18 [shape = 's32[]', space=sflag, size = 0x4, offset = 0, fixed_abs, tag = 'sflag constant byte address 0x0 - dummy sync flag']
  #allocation19 [shape = 's32[]', space=sflag, size = 0x4, offset = 0, fixed_abs, tag = 'sflag constant byte address 0x0 - dummy sync flag']
  #allocation20 [shape = 'u32[]', space=smem, size = 0x4, offset = 0x44, fixed_abs, tag = 'smem constant byte address 0x44 - assertion arg 0']
  #allocation21 [shape = 'u32[]', space=smem, size = 0x4, offset = 0x48, fixed_abs, tag = 'smem constant byte address 0x48 - assertion arg 1']
  #allocation22 [shape = 's32[]', space=sflag, size = 0x4, offset = 0, fixed_abs, tag = 'sflag constant byte address 0x0 - dummy sync flag']
  #allocation23 [shape = 's32[]', space=sflag, size = 0x4, offset = 0, fixed_abs, tag = 'sflag constant byte address 0x0 - dummy sync flag']
  %s0 = inlined_call_operand.hbm [shape: bf16[80,512], index: 0, kind: input, shape index: {}]
  %s1 = inlined_call_operand.hbm [shape: bf16[512,512], index: 1, kind: input, shape index: {}]
  %s2 = inlined_call_operand.hbm [shape: f32[1,512], index: 2, kind: input, shape index: {}]
  %s3 = inlined_call_operand.hbm [shape: bf16[256,1024], index: 3, kind: input, shape index: {}]
  %s4 = inlined_call_operand.hbm [shape: f32[1,512], index: 4, kind: input, shape index: {}]
  %s5 = inlined_call_operand.hbm [shape: bf16[128,128], index: 5, kind: input, shape index: {}]
  %s6 = inlined_call_operand.vmem [shape: f32[1,128], index: 6, kind: input, shape index: {}]
  %s7 = inlined_call_operand.hbm [shape: f32[8,128], index: 7, kind: output, shape index: {0}]
  %s8 = inlined_call_operand.hbm [shape: f32[2,8,128], index: 8, kind: output, shape index: {1}]
  %s9 = inlined_call_operand.hbm [shape: f32[2,8,128], index: 9, kind: output, shape index: {2}]
  %10 = xla_tuple %s7, %s8, %s9
  %s11 = sld [smem:[#allocation0]]
  $region70: #{tpu_custom_call.1} parent=0
    _
  %s13 = ssub.s32 1, %s11
  %s14 = scalar_select 0, %s13, %s11
  $region1: #{tpu_custom_call.1} parent=0
    #allocation6 [shape = 'u8[81920]{0}', space=vmem, size = 0x14000, scoped, tag = 'input window, operand 0, single buffered']
    #allocation7 [shape = 's32[1]{0}', space=sflag, size = 0x4, scoped, tag = 'scoped memory for tpu_custom_call.1']
    #allocation8 [shape = 's32[1]{0}', space=sflag, size = 0x4, scoped, tag = 'scoped memory for tpu_custom_call.1']
    #allocation9 [shape = 'u8[524288]{0}', space=vmem, size = 0x80000, scoped, tag = 'input window, operand 1, single buffered']
    #allocation10 [shape = 's32[1]{0}', space=sflag, size = 0x4, scoped, tag = 'scoped memory for tpu_custom_call.1']
    #allocation11 [shape = 'u8[2048]{0}', space=vmem, size = 0x800, scoped, tag = 'input window, operand 2, single buffered']
    #allocation12 [shape = 'u8[2048]{0}', space=vmem, size = 0x800, scoped, tag = 'input window, operand 4, single buffered']
    #allocation13 [shape = 's32[1]{0}', space=sflag, size = 0x4, scoped, tag = 'scoped memory for tpu_custom_call.1']
    #allocation14 [shape = 'u8[4096]{0}', space=vmem, size = 0x1000, scoped, tag = 'output window, operand 0, single buffered']
    #allocation15 [shape = 'u8[8192]{0}', space=vmem, size = 0x2000, scoped, tag = 'output window, operand 1, single buffered']
    #allocation16 [shape = 's32[1]{0}', space=sflag, size = 0x4, scoped, tag = 'scoped memory for tpu_custom_call.1']
    #allocation17 [shape = 'u8[8192]{0}', space=vmem, size = 0x2000, scoped, tag = 'output window, operand 2, single buffered']
    %15 = vsyncpa [#allocation7], 0
    %16 = vsyncpa [#allocation10], 0
    %17 = vsyncpa [#allocation13], 0
    %18 = vsyncpa [#allocation8], 0
    %19 = vsyncpa [#allocation16], 0
    // Predicated region
    $region2: #{tpu_custom_call.1} parent=1 // pred_check
      _
    $region3: #{tpu_custom_call.1} parent=1 // pred_check_branch
      %21 = sbr.rel (0) target = $region5
    $region4: #{tpu_custom_call.1} parent=1 // pred_region
      %23 = vsyncadd [#allocation7], 0
      %s24 = sshll.u32 %s0, 4
      %s25 = int_to_ptr.hbm [resolvable:$true] %s24
      %s26 = sshll.u32 [#allocation6], 4
      %s27 = int_to_ptr.vmem [resolvable:$true] %s26
      %32 = dma.hbm_to_vmem [thread:$0]  %s25, 2560, %s27, [#allocation7], 256, 256, 16
    $region5: #{tpu_custom_call.1} parent=1 // pred_fallthru
      _
    // Predicated region
    $region6: #{tpu_custom_call.1} parent=1 // pred_check
      _
    $region7: #{tpu_custom_call.1} parent=1 // pred_check_branch
      %34 = sbr.rel (0) target = $region9
    $region8: #{tpu_custom_call.1} parent=1 // pred_region
      %36 = vsyncadd [#allocation10], 0
      %s37 = sshll.u32 %s1, 4
      %s38 = int_to_ptr.hbm [resolvable:$true] %s37
      %s39 = sshll.u32 [#allocation9], 4
      %s40 = int_to_ptr.vmem [resolvable:$true] %s39
      %45 = dma.hbm_to_vmem [thread:$0]  %s38, 16384, %s40, [#allocation10], 256, 256, 16
    $region9: #{tpu_custom_call.1} parent=1 // pred_fallthru
      _
    // Predicated region
    $region10: #{tpu_custom_call.1} parent=1 // pred_check
      _
    $region11: #{tpu_custom_call.1} parent=1 // pred_check_branch
      %47 = sbr.rel (0) target = $region13
    $region12: #{tpu_custom_call.1} parent=1 // pred_region
      %49 = vsyncadd [#allocation10], 0
      %s51 = sshll.u32 %s2, 4
      %s52 = int_to_ptr.hbm [resolvable:$true] %s51
      %s53 = sshll.u32 [#allocation11], 4
      %s54 = int_to_ptr.vmem [resolvable:$true] %s53
      %56 = dma.hbm_to_vmem [thread:$0]  %s52, 64, %s54, [#allocation10]
    $region13: #{tpu_custom_call.1} parent=1 // pred_fallthru
      _
    // Predicated region
    $region14: #{tpu_custom_call.1} parent=1 // pred_check
      _
    $region15: #{tpu_custom_call.1} parent=1 // pred_check_branch
      %58 = sbr.rel (0) target = $region17
    $region16: #{tpu_custom_call.1} parent=1 // pred_region
      %60 = vsyncadd [#allocation13], 0
      %s62 = sshll.u32 %s4, 4
      %s63 = int_to_ptr.hbm [resolvable:$true] %s62
      %s64 = sshll.u32 [#allocation12], 4
      %s65 = int_to_ptr.vmem [resolvable:$true] %s64
      %67 = dma.hbm_to_vmem [thread:$0]  %s63, 64, %s65, [#allocation13]
    $region17: #{tpu_custom_call.1} parent=1 // pred_fallthru
      _
    // Predicated region
    $region18: #{tpu_custom_call.1} parent=1 // pred_check
      _
    $region19: #{tpu_custom_call.1} parent=1 // pred_check_branch
      %69 = sbr.rel (0) target = $region21
    $region20: #{tpu_custom_call.1} parent=1 // pred_region
      _
    $region21: #{tpu_custom_call.1} parent=1 // pred_fallthru
      _
    // Predicated region
    $region22: #{tpu_custom_call.1} parent=1 // pred_check
      _
    $region23: #{tpu_custom_call.1} parent=1 // pred_check_branch
      %71 = sbr.rel (0) target = $region25
    $region24: #{tpu_custom_call.1} parent=1 // pred_region
      %73 = dma.done [#allocation7], 2560
    $region25: #{tpu_custom_call.1} parent=1 // pred_fallthru
      _
    // Predicated region
    $region26: #{tpu_custom_call.1} parent=1 // pred_check
      _
    $region27: #{tpu_custom_call.1} parent=1 // pred_check_branch
      %75 = sbr.rel (0) target = $region29
    $region28: #{tpu_custom_call.1} parent=1 // pred_region
      %77 = dma.done [#allocation10], 16384
    $region29: #{tpu_custom_call.1} parent=1 // pred_fallthru
      _
    // Predicated region
    $region30: #{tpu_custom_call.1} parent=1 // pred_check
      _
    $region31: #{tpu_custom_call.1} parent=1 // pred_check_branch
      %79 = sbr.rel (0) target = $region33
    $region32: #{tpu_custom_call.1} parent=1 // pred_region
      %81 = dma.done [#allocation10], 64
    $region33: #{tpu_custom_call.1} parent=1 // pred_fallthru
      _
    // Predicated region
    $region34: #{tpu_custom_call.1} parent=1 // pred_check
      _
    $region35: #{tpu_custom_call.1} parent=1 // pred_check_branch
      %83 = sbr.rel (0) target = $region37
    $region36: #{tpu_custom_call.1} parent=1 // pred_region
      %85 = dma.done [#allocation13], 64
    $region37: #{tpu_custom_call.1} parent=1 // pred_fallthru
      _
    // Predicated region
    $region38: #{tpu_custom_call.1} parent=1 // pred_check
      _
    $region39: #{tpu_custom_call.1} parent=1 // pred_check_branch
      %87 = sbr.rel target = $region41
    $region40: #{tpu_custom_call.1} parent=1 // pred_region
      %88 = sst [smem:[#allocation20]] [#allocation19]
      %89 = sst [smem:[#allocation21]] [#allocation18]
    $region41: #{tpu_custom_call.1} parent=1 // pred_fallthru
      _
    %91 = shalt.err (0)
    %s93 = sshll.u32 %s3, 4
    %s94 = int_to_ptr.hbm [resolvable:$true] %s93
    %s95 = sshll.u32 [#allocation2], 4
    %s96 = int_to_ptr.vmem [resolvable:$true] %s95
    %98 = dma.hbm_to_vmem [thread:$0]  %s94, 16384, %s96, [#allocation5]
    %s99 = scalar_lea.sflag [#allocation5], 1
    // Predicated region
    $region42: #{tpu_custom_call.1} parent=1 // pred_check
      _
    $region43: #{tpu_custom_call.1} parent=1 // pred_check_branch
      %101 = sbr.rel target = $region45
    $region44: #{tpu_custom_call.1} parent=1 // pred_region
      %102 = sst [smem:[#allocation20]] [#allocation23]
      %103 = sst [smem:[#allocation21]] [#allocation22]
    $region45: #{tpu_custom_call.1} parent=1 // pred_fallthru
      _
    %105 = shalt.err (0)
    %s107 = sshll.u32 %s5, 4
    %s108 = int_to_ptr.hbm [resolvable:$true] %s107
    %s109 = sshll.u32 [#allocation3], 4
    %s110 = int_to_ptr.vmem [resolvable:$true] %s109
    %112 = dma.hbm_to_vmem [thread:$0]  %s108, 1024, %s110, %s99
    %v113 = vld [vmem:[#allocation6] sm:$0xff]
    %v114 = vld [vmem:[#allocation6 + $0x8] sm:$0xff]
    %v115 = vld [vmem:[#allocation6 + $0x10] sm:$0xff]
    %v116 = vld [vmem:[#allocation6 + $0x18] sm:$0xff]
    %v117 = vld [vmem:[#allocation6 + $0x20] sm:$0xff]
    %v118 = vld [vmem:[#allocation6 + $0x28] sm:$0xff]
    %v119 = vld [vmem:[#allocation6 + $0x30] sm:$0xff]
    %v120 = vld [vmem:[#allocation6 + $0x38] sm:$0xff]
    %v121 = vld [vmem:[#allocation6 + $0x40] sm:$0xff]
    %v122 = vld [vmem:[#allocation6 + $0x48] sm:$0xff]
    %v123 = vld [vmem:[#allocation6 + $0x50] sm:$0xff]
    %v124 = vld [vmem:[#allocation6 + $0x58] sm:$0xff]
    %v125 = vld [vmem:[#allocation6 + $0x60] sm:$0xff]
    %v126 = vld [vmem:[#allocation6 + $0x68] sm:$0xff]
    %v127 = vld [vmem:[#allocation6 + $0x70] sm:$0xff]
    %v128 = vld [vmem:[#allocation6 + $0x78] sm:$0xff]
    %v129 = vld [vmem:[#allocation6 + $0x80] sm:$0xff]
    %v130 = vld [vmem:[#allocation6 + $0x88] sm:$0xff]
    %v131 = vld [vmem:[#allocation6 + $0x90] sm:$0xff]
    %v132 = vld [vmem:[#allocation6 + $0x98] sm:$0xff]
    %v133 = vld [vmem:[#allocation9] sm:$0xff]
    %v134 = vld [vmem:[#allocation9 + $0x8] sm:$0xff]
    %v135 = vld [vmem:[#allocation9 + $0x10] sm:$0xff]
    %v136 = vld [vmem:[#allocation9 + $0x18] sm:$0xff]
    %v137 = vld [vmem:[#allocation9 + $0x20] sm:$0xff]
    %v138 = vld [vmem:[#allocation9 + $0x28] sm:$0xff]
    %v139 = vld [vmem:[#allocation9 + $0x30] sm:$0xff]
    %v140 = vld [vmem:[#allocation9 + $0x38] sm:$0xff]
    %v141 = vld [vmem:[#allocation9 + $0x40] sm:$0xff]
    %v142 = vld [vmem:[#allocation9 + $0x48] sm:$0xff]
    %v143 = vld [vmem:[#allocation9 + $0x50] sm:$0xff]
    %v144 = vld [vmem:[#allocation9 + $0x58] sm:$0xff]
    %v145 = vld [vmem:[#allocation9 + $0x60] sm:$0xff]
    %v146 = vld [vmem:[#allocation9 + $0x68] sm:$0xff]
    %v147 = vld [vmem:[#allocation9 + $0x70] sm:$0xff]
    %v148 = vld [vmem:[#allocation9 + $0x78] sm:$0xff]
    %v149 = vld [vmem:[#allocation9 + $0x80] sm:$0xff]
    %v150 = vld [vmem:[#allocation9 + $0x88] sm:$0xff]
    %v151 = vld [vmem:[#allocation9 + $0x90] sm:$0xff]
    %v152 = vld [vmem:[#allocation9 + $0x98] sm:$0xff]
    %v153 = vld [vmem:[#allocation9 + $0xa0] sm:$0xff]
    %v154 = vld [vmem:[#allocation9 + $0xa8] sm:$0xff]
    %v155 = vld [vmem:[#allocation9 + $0xb0] sm:$0xff]
    %v156 = vld [vmem:[#allocation9 + $0xb8] sm:$0xff]
    %v157 = vld [vmem:[#allocation9 + $0xc0] sm:$0xff]
    %v158 = vld [vmem:[#allocation9 + $0xc8] sm:$0xff]
    %v159 = vld [vmem:[#allocation9 + $0xd0] sm:$0xff]
    %v160 = vld [vmem:[#allocation9 + $0xd8] sm:$0xff]
    %v161 = vld [vmem:[#allocation9 + $0xe0] sm:$0xff]
    %v162 = vld [vmem:[#allocation9 + $0xe8] sm:$0xff]
    %v163 = vld [vmem:[#allocation9 + $0xf0] sm:$0xff]
    %v164 = vld [vmem:[#allocation9 + $0xf8] sm:$0xff]
    %v165 = vld [vmem:[#allocation9 + $0x100] sm:$0xff]
    %v166 = vld [vmem:[#allocation9 + $0x108] sm:$0xff]
    %v167 = vld [vmem:[#allocation9 + $0x110] sm:$0xff]
    %v168 = vld [vmem:[#allocation9 + $0x118] sm:$0xff]
    %v169 = vld [vmem:[#allocation9 + $0x120] sm:$0xff]
    %v170 = vld [vmem:[#allocation9 + $0x128] sm:$0xff]
    %v171 = vld [vmem:[#allocation9 + $0x130] sm:$0xff]
    %v172 = vld [vmem:[#allocation9 + $0x138] sm:$0xff]
    %v173 = vld [vmem:[#allocation9 + $0x140] sm:$0xff]
    %v174 = vld [vmem:[#allocation9 + $0x148] sm:$0xff]
    %v175 = vld [vmem:[#allocation9 + $0x150] sm:$0xff]
    %v176 = vld [vmem:[#allocation9 + $0x158] sm:$0xff]
    %v177 = vld [vmem:[#allocation9 + $0x160] sm:$0xff]
    %v178 = vld [vmem:[#allocation9 + $0x168] sm:$0xff]
    %v179 = vld [vmem:[#allocation9 + $0x170] sm:$0xff]
    %v180 = vld [vmem:[#allocation9 + $0x178] sm:$0xff]
    %v181 = vld [vmem:[#allocation9 + $0x180] sm:$0xff]
    %v182 = vld [vmem:[#allocation9 + $0x188] sm:$0xff]
    %v183 = vld [vmem:[#allocation9 + $0x190] sm:$0xff]
    %v184 = vld [vmem:[#allocation9 + $0x198] sm:$0xff]
    %v185 = vld [vmem:[#allocation9 + $0x1a0] sm:$0xff]
    %v186 = vld [vmem:[#allocation9 + $0x1a8] sm:$0xff]
    %v187 = vld [vmem:[#allocation9 + $0x1b0] sm:$0xff]
    %v188 = vld [vmem:[#allocation9 + $0x1b8] sm:$0xff]
    %v189 = vld [vmem:[#allocation9 + $0x1c0] sm:$0xff]
    %v190 = vld [vmem:[#allocation9 + $0x1c8] sm:$0xff]
    %v191 = vld [vmem:[#allocation9 + $0x1d0] sm:$0xff]
    %v192 = vld [vmem:[#allocation9 + $0x1d8] sm:$0xff]
    %v193 = vld [vmem:[#allocation9 + $0x1e0] sm:$0xff]
    %v194 = vld [vmem:[#allocation9 + $0x1e8] sm:$0xff]
    %v195 = vld [vmem:[#allocation9 + $0x1f0] sm:$0xff]
    %v196 = vld [vmem:[#allocation9 + $0x1f8] sm:$0xff]
    %v197 = vld [vmem:[#allocation9 + $0x200] sm:$0xff]
    %v198 = vld [vmem:[#allocation9 + $0x208] sm:$0xff]
    %v199 = vld [vmem:[#allocation9 + $0x210] sm:$0xff]
    %v200 = vld [vmem:[#allocation9 + $0x218] sm:$0xff]
    %v201 = vld [vmem:[#allocation9 + $0x220] sm:$0xff]
    %v202 = vld [vmem:[#allocation9 + $0x228] sm:$0xff]
    %v203 = vld [vmem:[#allocation9 + $0x230] sm:$0xff]
    %v204 = vld [vmem:[#allocation9 + $0x238] sm:$0xff]
    %v205 = vld [vmem:[#allocation9 + $0x240] sm:$0xff]
    %v206 = vld [vmem:[#allocation9 + $0x248] sm:$0xff]
    %v207 = vld [vmem:[#allocation9 + $0x250] sm:$0xff]
    %v208 = vld [vmem:[#allocation9 + $0x258] sm:$0xff]
    %v209 = vld [vmem:[#allocation9 + $0x260] sm:$0xff]
    %v210 = vld [vmem:[#allocation9 + $0x268] sm:$0xff]
    %v211 = vld [vmem:[#allocation9 + $0x270] sm:$0xff]
    %v212 = vld [vmem:[#allocation9 + $0x278] sm:$0xff]
    %v213 = vld [vmem:[#allocation9 + $0x280] sm:$0xff]
    %v214 = vld [vmem:[#allocation9 + $0x288] sm:$0xff]
    %v215 = vld [vmem:[#allocation9 + $0x290] sm:$0xff]
    %v216 = vld [vmem:[#allocation9 + $0x298] sm:$0xff]
    %v217 = vld [vmem:[#allocation9 + $0x2a0] sm:$0xff]
    %v218 = vld [vmem:[#allocation9 + $0x2a8] sm:$0xff]
    %v219 = vld [vmem:[#allocation9 + $0x2b0] sm:$0xff]
    %v220 = vld [vmem:[#allocation9 + $0x2b8] sm:$0xff]
    %v221 = vld [vmem:[#allocation9 + $0x2c0] sm:$0xff]
    %v222 = vld [vmem:[#allocation9 + $0x2c8] sm:$0xff]
    %v223 = vld [vmem:[#allocation9 + $0x2d0] sm:$0xff]
    %v224 = vld [vmem:[#allocation9 + $0x2d8] sm:$0xff]
    %v225 = vld [vmem:[#allocation9 + $0x2e0] sm:$0xff]
    %v226 = vld [vmem:[#allocation9 + $0x2e8] sm:$0xff]
    %v227 = vld [vmem:[#allocation9 + $0x2f0] sm:$0xff]
    %v228 = vld [vmem:[#allocation9 + $0x2f8] sm:$0xff]
    %v229 = vld [vmem:[#allocation9 + $0x300] sm:$0xff]
    %v230 = vld [vmem:[#allocation9 + $0x308] sm:$0xff]
    %v231 = vld [vmem:[#allocation9 + $0x310] sm:$0xff]
    %v232 = vld [vmem:[#allocation9 + $0x318] sm:$0xff]
    %v233 = vld [vmem:[#allocation9 + $0x320] sm:$0xff]
    %v234 = vld [vmem:[#allocation9 + $0x328] sm:$0xff]
    %v235 = vld [vmem:[#allocation9 + $0x330] sm:$0xff]
    %v236 = vld [vmem:[#allocation9 + $0x338] sm:$0xff]
    %v237 = vld [vmem:[#allocation9 + $0x340] sm:$0xff]
    %v238 = vld [vmem:[#allocation9 + $0x348] sm:$0xff]
    %v239 = vld [vmem:[#allocation9 + $0x350] sm:$0xff]
    %v240 = vld [vmem:[#allocation9 + $0x358] sm:$0xff]
    %v241 = vld [vmem:[#allocation9 + $0x360] sm:$0xff]
    %v242 = vld [vmem:[#allocation9 + $0x368] sm:$0xff]
    %v243 = vld [vmem:[#allocation9 + $0x370] sm:$0xff]
    %v244 = vld [vmem:[#allocation9 + $0x378] sm:$0xff]
    %v245 = vld [vmem:[#allocation9 + $0x380] sm:$0xff]
    %v246 = vld [vmem:[#allocation9 + $0x388] sm:$0xff]
    %v247 = vld [vmem:[#allocation9 + $0x390] sm:$0xff]
    %v248 = vld [vmem:[#allocation9 + $0x398] sm:$0xff]
    %v249 = vld [vmem:[#allocation9 + $0x3a0] sm:$0xff]
    %v250 = vld [vmem:[#allocation9 + $0x3a8] sm:$0xff]
    %v251 = vld [vmem:[#allocation9 + $0x3b0] sm:$0xff]
    %v252 = vld [vmem:[#allocation9 + $0x3b8] sm:$0xff]
    %v253 = vld [vmem:[#allocation9 + $0x3c0] sm:$0xff]
    %v254 = vld [vmem:[#allocation9 + $0x3c8] sm:$0xff]
    %v255 = vld [vmem:[#allocation9 + $0x3d0] sm:$0xff]
    %v256 = vld [vmem:[#allocation9 + $0x3d8] sm:$0xff]
    %v257 = vld [vmem:[#allocation9 + $0x3e0] sm:$0xff]
    %v258 = vld [vmem:[#allocation9 + $0x3e8] sm:$0xff]
    %v259 = vld [vmem:[#allocation9 + $0x3f0] sm:$0xff]
    %v260 = vld [vmem:[#allocation9 + $0x3f8] sm:$0xff]
    %v261 = vld [vmem:[#allocation11] sm:$0xf]
    %v263 = vperm.slane %v261, 0
    %v264 = vperm.slane %v261, 1
    %v265 = vperm.slane %v261, 2
    %v266 = vperm.slane %v261, 3
    %v291 = vunpack.c.l.b16 %v113
    %v292 = vunpack.c.h.b16 %v113
    %v293 = vunpack.c.l.b16 %v114
    %v294 = vunpack.c.h.b16 %v114
    %v295 = vunpack.c.l.b16 %v115
    %v296 = vunpack.c.h.b16 %v115
    %v297 = vunpack.c.l.b16 %v116
    %v298 = vunpack.c.h.b16 %v116
    %v299 = vunpack.c.l.b16 %v117
    %v300 = vunpack.c.h.b16 %v117
    %v301 = vunpack.c.l.b16 %v118
    %v302 = vunpack.c.h.b16 %v118
    %v303 = vunpack.c.l.b16 %v119
    %v304 = vunpack.c.h.b16 %v119
    %v305 = vunpack.c.l.b16 %v120
    %v306 = vunpack.c.h.b16 %v120
    %v307 = vunpack.c.l.b16 %v121
    %v308 = vunpack.c.h.b16 %v121
    %v309 = vunpack.c.l.b16 %v122
    %v310 = vunpack.c.h.b16 %v122
    %v311 = vunpack.c.l.b16 %v123
    %v312 = vunpack.c.h.b16 %v123
    %v313 = vunpack.c.l.b16 %v124
    %v314 = vunpack.c.h.b16 %v124
    %v315 = vunpack.c.l.b16 %v125
    %v316 = vunpack.c.h.b16 %v125
    %v317 = vunpack.c.l.b16 %v126
    %v318 = vunpack.c.h.b16 %v126
    %v319 = vunpack.c.l.b16 %v127
    %v320 = vunpack.c.h.b16 %v127
    %v321 = vunpack.c.l.b16 %v128
    %v322 = vunpack.c.h.b16 %v128
    %v323 = vunpack.c.l.b16 %v129
    %v324 = vunpack.c.h.b16 %v129
    %v325 = vunpack.c.l.b16 %v130
    %v326 = vunpack.c.h.b16 %v130
    %v327 = vunpack.c.l.b16 %v131
    %v328 = vunpack.c.h.b16 %v131
    %v329 = vunpack.c.l.b16 %v132
    %v330 = vunpack.c.h.b16 %v132
    %v331 = vpack.c.b16 %v295, %v291
    %v332 = vpack.c.b16 %v296, %v292
    %v333 = vpack.c.b16 %v297, %v293
    %v334 = vpack.c.b16 %v298, %v294
    %v335 = vpack.c.b16 %v303, %v299
    %v336 = vpack.c.b16 %v304, %v300
    %v337 = vpack.c.b16 %v305, %v301
    %v338 = vpack.c.b16 %v306, %v302
    %v339 = vpack.c.b16 %v311, %v307
    %v340 = vpack.c.b16 %v312, %v308
    %v341 = vpack.c.b16 %v313, %v309
    %v342 = vpack.c.b16 %v314, %v310
    %v343 = vpack.c.b16 %v319, %v315
    %v344 = vpack.c.b16 %v320, %v316
    %v345 = vpack.c.b16 %v321, %v317
    %v346 = vpack.c.b16 %v322, %v318
    %v347 = vpack.c.b16 %v327, %v323
    %v348 = vpack.c.b16 %v328, %v324
    %v349 = vpack.c.b16 %v329, %v325
    %v350 = vpack.c.b16 %v330, %v326
    %v499 = vunpack.c.l.b16 %v133
    %v500 = vunpack.c.h.b16 %v133
    %v501 = vunpack.c.l.b16 %v134
    %v502 = vunpack.c.h.b16 %v134
    %v503 = vunpack.c.l.b16 %v135
    %v504 = vunpack.c.h.b16 %v135
    %v505 = vunpack.c.l.b16 %v136
    %v506 = vunpack.c.h.b16 %v136
    %v507 = vunpack.c.l.b16 %v137
    %v508 = vunpack.c.h.b16 %v137
    %v509 = vunpack.c.l.b16 %v138
    %v510 = vunpack.c.h.b16 %v138
    %v511 = vunpack.c.l.b16 %v139
    %v512 = vunpack.c.h.b16 %v139
    %v513 = vunpack.c.l.b16 %v140
    %v514 = vunpack.c.h.b16 %v140
    %v515 = vunpack.c.l.b16 %v141
    %v516 = vunpack.c.h.b16 %v141
    %v517 = vunpack.c.l.b16 %v142
    %v518 = vunpack.c.h.b16 %v142
    %v519 = vunpack.c.l.b16 %v143
    %v520 = vunpack.c.h.b16 %v143
    %v521 = vunpack.c.l.b16 %v144
    %v522 = vunpack.c.h.b16 %v144
    %v523 = vunpack.c.l.b16 %v145
    %v524 = vunpack.c.h.b16 %v145
    %v525 = vunpack.c.l.b16 %v146
    %v526 = vunpack.c.h.b16 %v146
    %v527 = vunpack.c.l.b16 %v147
    %v528 = vunpack.c.h.b16 %v147
    %v529 = vunpack.c.l.b16 %v148
    %v530 = vunpack.c.h.b16 %v148
    %v531 = vunpack.c.l.b16 %v149
    %v532 = vunpack.c.h.b16 %v149
    %v533 = vunpack.c.l.b16 %v150
    %v534 = vunpack.c.h.b16 %v150
    %v535 = vunpack.c.l.b16 %v151
    %v536 = vunpack.c.h.b16 %v151
    %v537 = vunpack.c.l.b16 %v152
    %v538 = vunpack.c.h.b16 %v152
    %v539 = vunpack.c.l.b16 %v153
    %v540 = vunpack.c.h.b16 %v153
    %v541 = vunpack.c.l.b16 %v154
    %v542 = vunpack.c.h.b16 %v154
    %v543 = vunpack.c.l.b16 %v155
    %v544 = vunpack.c.h.b16 %v155
    %v545 = vunpack.c.l.b16 %v156
    %v546 = vunpack.c.h.b16 %v156
    %v547 = vunpack.c.l.b16 %v157
    %v548 = vunpack.c.h.b16 %v157
    %v549 = vunpack.c.l.b16 %v158
    %v550 = vunpack.c.h.b16 %v158
    %v551 = vunpack.c.l.b16 %v159
    %v552 = vunpack.c.h.b16 %v159
    %v553 = vunpack.c.l.b16 %v160
    %v554 = vunpack.c.h.b16 %v160
    %v555 = vunpack.c.l.b16 %v161
    %v556 = vunpack.c.h.b16 %v161
    %v557 = vunpack.c.l.b16 %v162
    %v558 = vunpack.c.h.b16 %v162
    %v559 = vunpack.c.l.b16 %v163
    %v560 = vunpack.c.h.b16 %v163
    %v561 = vunpack.c.l.b16 %v164
    %v562 = vunpack.c.h.b16 %v164
    %v563 = vunpack.c.l.b16 %v165
    %v564 = vunpack.c.h.b16 %v165
    %v565 = vunpack.c.l.b16 %v166
    %v566 = vunpack.c.h.b16 %v166
    %v567 = vunpack.c.l.b16 %v167
    %v568 = vunpack.c.h.b16 %v167
    %v569 = vunpack.c.l.b16 %v168
    %v570 = vunpack.c.h.b16 %v168
    %v571 = vunpack.c.l.b16 %v169
    %v572 = vunpack.c.h.b16 %v169
    %v573 = vunpack.c.l.b16 %v170
    %v574 = vunpack.c.h.b16 %v170
    %v575 = vunpack.c.l.b16 %v171
    %v576 = vunpack.c.h.b16 %v171
    %v577 = vunpack.c.l.b16 %v172
    %v578 = vunpack.c.h.b16 %v172
    %v579 = vunpack.c.l.b16 %v173
    %v580 = vunpack.c.h.b16 %v173
    %v581 = vunpack.c.l.b16 %v174
    %v582 = vunpack.c.h.b16 %v174
    %v583 = vunpack.c.l.b16 %v175
    %v584 = vunpack.c.h.b16 %v175
    %v585 = vunpack.c.l.b16 %v176
    %v586 = vunpack.c.h.b16 %v176
    %v587 = vunpack.c.l.b16 %v177
    %v588 = vunpack.c.h.b16 %v177
    %v589 = vunpack.c.l.b16 %v178
    %v590 = vunpack.c.h.b16 %v178
    %v591 = vunpack.c.l.b16 %v179
    %v592 = vunpack.c.h.b16 %v179
    %v593 = vunpack.c.l.b16 %v180
    %v594 = vunpack.c.h.b16 %v180
    %v595 = vunpack.c.l.b16 %v181
    %v596 = vunpack.c.h.b16 %v181
    %v597 = vunpack.c.l.b16 %v182
    %v598 = vunpack.c.h.b16 %v182
    %v599 = vunpack.c.l.b16 %v183
    %v600 = vunpack.c.h.b16 %v183
    %v601 = vunpack.c.l.b16 %v184
    %v602 = vunpack.c.h.b16 %v184
    %v603 = vunpack.c.l.b16 %v185
    %v604 = vunpack.c.h.b16 %v185
    %v605 = vunpack.c.l.b16 %v186
    %v606 = vunpack.c.h.b16 %v186
    %v607 = vunpack.c.l.b16 %v187
    %v608 = vunpack.c.h.b16 %v187
    %v609 = vunpack.c.l.b16 %v188
    %v610 = vunpack.c.h.b16 %v188
    %v611 = vunpack.c.l.b16 %v189
    %v612 = vunpack.c.h.b16 %v189
    %v613 = vunpack.c.l.b16 %v190
    %v614 = vunpack.c.h.b16 %v190
    %v615 = vunpack.c.l.b16 %v191
    %v616 = vunpack.c.h.b16 %v191
    %v617 = vunpack.c.l.b16 %v192
    %v618 = vunpack.c.h.b16 %v192
    %v619 = vunpack.c.l.b16 %v193
    %v620 = vunpack.c.h.b16 %v193
    %v621 = vunpack.c.l.b16 %v194
    %v622 = vunpack.c.h.b16 %v194
    %v623 = vunpack.c.l.b16 %v195
    %v624 = vunpack.c.h.b16 %v195
    %v625 = vunpack.c.l.b16 %v196
    %v626 = vunpack.c.h.b16 %v196
    %v627 = vunpack.c.l.b16 %v197
    %v628 = vunpack.c.h.b16 %v197
    %v629 = vunpack.c.l.b16 %v198
    %v630 = vunpack.c.h.b16 %v198
    %v631 = vunpack.c.l.b16 %v199
    %v632 = vunpack.c.h.b16 %v199
    %v633 = vunpack.c.l.b16 %v200
    %v634 = vunpack.c.h.b16 %v200
    %v635 = vunpack.c.l.b16 %v201
    %v636 = vunpack.c.h.b16 %v201
    %v637 = vunpack.c.l.b16 %v202
    %v638 = vunpack.c.h.b16 %v202
    %v639 = vunpack.c.l.b16 %v203
    %v640 = vunpack.c.h.b16 %v203
    %v641 = vunpack.c.l.b16 %v204
    %v642 = vunpack.c.h.b16 %v204
    %v643 = vunpack.c.l.b16 %v205
    %v644 = vunpack.c.h.b16 %v205
    %v645 = vunpack.c.l.b16 %v206
    %v646 = vunpack.c.h.b16 %v206
    %v647 = vunpack.c.l.b16 %v207
    %v648 = vunpack.c.h.b16 %v207
    %v649 = vunpack.c.l.b16 %v208
    %v650 = vunpack.c.h.b16 %v208
    %v651 = vunpack.c.l.b16 %v209
    %v652 = vunpack.c.h.b16 %v209
    %v653 = vunpack.c.l.b16 %v210
    %v654 = vunpack.c.h.b16 %v210
    %v655 = vunpack.c.l.b16 %v211
    %v656 = vunpack.c.h.b16 %v211
    %v657 = vunpack.c.l.b16 %v212
    %v658 = vunpack.c.h.b16 %v212
    %v659 = vunpack.c.l.b16 %v213
    %v660 = vunpack.c.h.b16 %v213
    %v661 = vunpack.c.l.b16 %v214
    %v662 = vunpack.c.h.b16 %v214
    %v663 = vunpack.c.l.b16 %v215
    %v664 = vunpack.c.h.b16 %v215
    %v665 = vunpack.c.l.b16 %v216
    %v666 = vunpack.c.h.b16 %v216
    %v667 = vunpack.c.l.b16 %v217
    %v668 = vunpack.c.h.b16 %v217
    %v669 = vunpack.c.l.b16 %v218
    %v670 = vunpack.c.h.b16 %v218
    %v671 = vunpack.c.l.b16 %v219
    %v672 = vunpack.c.h.b16 %v219
    %v673 = vunpack.c.l.b16 %v220
    %v674 = vunpack.c.h.b16 %v220
    %v675 = vunpack.c.l.b16 %v221
    %v676 = vunpack.c.h.b16 %v221
    %v677 = vunpack.c.l.b16 %v222
    %v678 = vunpack.c.h.b16 %v222
    %v679 = vunpack.c.l.b16 %v223
    %v680 = vunpack.c.h.b16 %v223
    %v681 = vunpack.c.l.b16 %v224
    %v682 = vunpack.c.h.b16 %v224
    %v683 = vunpack.c.l.b16 %v225
    %v684 = vunpack.c.h.b16 %v225
    %v685 = vunpack.c.l.b16 %v226
    %v686 = vunpack.c.h.b16 %v226
    %v687 = vunpack.c.l.b16 %v227
    %v688 = vunpack.c.h.b16 %v227
    %v689 = vunpack.c.l.b16 %v228
    %v690 = vunpack.c.h.b16 %v228
    %v691 = vunpack.c.l.b16 %v229
    %v692 = vunpack.c.h.b16 %v229
    %v693 = vunpack.c.l.b16 %v230
    %v694 = vunpack.c.h.b16 %v230
    %v695 = vunpack.c.l.b16 %v231
    %v696 = vunpack.c.h.b16 %v231
    %v697 = vunpack.c.l.b16 %v232
    %v698 = vunpack.c.h.b16 %v232
    %v699 = vunpack.c.l.b16 %v233
    %v700 = vunpack.c.h.b16 %v233
    %v701 = vunpack.c.l.b16 %v234
    %v702 = vunpack.c.h.b16 %v234
    %v703 = vunpack.c.l.b16 %v235
    %v704 = vunpack.c.h.b16 %v235
    %v705 = vunpack.c.l.b16 %v236
    %v706 = vunpack.c.h.b16 %v236
    %v707 = vunpack.c.l.b16 %v237
    %v708 = vunpack.c.h.b16 %v237
    %v709 = vunpack.c.l.b16 %v238
    %v710 = vunpack.c.h.b16 %v238
    %v711 = vunpack.c.l.b16 %v239
    %v712 = vunpack.c.h.b16 %v239
    %v713 = vunpack.c.l.b16 %v240
    %v714 = vunpack.c.h.b16 %v240
    %v715 = vunpack.c.l.b16 %v241
    %v716 = vunpack.c.h.b16 %v241
    %v717 = vunpack.c.l.b16 %v242
    %v718 = vunpack.c.h.b16 %v242
    %v719 = vunpack.c.l.b16 %v243
    %v720 = vunpack.c.h.b16 %v243
    %v721 = vunpack.c.l.b16 %v244
    %v722 = vunpack.c.h.b16 %v244
    %v723 = vunpack.c.l.b16 %v245
    %v724 = vunpack.c.h.b16 %v245
    %v725 = vunpack.c.l.b16 %v246
    %v726 = vunpack.c.h.b16 %v246
    %v727 = vunpack.c.l.b16 %v247
    %v728 = vunpack.c.h.b16 %v247
    %v729 = vunpack.c.l.b16 %v248
    %v730 = vunpack.c.h.b16 %v248
    %v731 = vunpack.c.l.b16 %v249
    %v732 = vunpack.c.h.b16 %v249
    %v733 = vunpack.c.l.b16 %v250
    %v734 = vunpack.c.h.b16 %v250
    %v735 = vunpack.c.l.b16 %v251
    %v736 = vunpack.c.h.b16 %v251
    %v737 = vunpack.c.l.b16 %v252
    %v738 = vunpack.c.h.b16 %v252
    %v739 = vunpack.c.l.b16 %v253
    %v740 = vunpack.c.h.b16 %v253
    %v741 = vunpack.c.l.b16 %v254
    %v742 = vunpack.c.h.b16 %v254
    %v743 = vunpack.c.l.b16 %v255
    %v744 = vunpack.c.h.b16 %v255
    %v745 = vunpack.c.l.b16 %v256
    %v746 = vunpack.c.h.b16 %v256
    %v747 = vunpack.c.l.b16 %v257
    %v748 = vunpack.c.h.b16 %v257
    %v749 = vunpack.c.l.b16 %v258
    %v750 = vunpack.c.h.b16 %v258
    %v751 = vunpack.c.l.b16 %v259
    %v752 = vunpack.c.h.b16 %v259
    %v753 = vunpack.c.l.b16 %v260
    %v754 = vunpack.c.h.b16 %v260
    %v755 = vpack.c.b16 %v503, %v499
    %v756 = vpack.c.b16 %v504, %v500
    %v757 = vpack.c.b16 %v505, %v501
    %v758 = vpack.c.b16 %v506, %v502
    %v759 = vpack.c.b16 %v511, %v507
    %v760 = vpack.c.b16 %v512, %v508
    %v761 = vpack.c.b16 %v513, %v509
    %v762 = vpack.c.b16 %v514, %v510
    %v763 = vpack.c.b16 %v519, %v515
    %v764 = vpack.c.b16 %v520, %v516
    %v765 = vpack.c.b16 %v521, %v517
    %v766 = vpack.c.b16 %v522, %v518
    %v767 = vpack.c.b16 %v527, %v523
    %v768 = vpack.c.b16 %v528, %v524
    %v769 = vpack.c.b16 %v529, %v525
    %v770 = vpack.c.b16 %v530, %v526
    %v771 = vpack.c.b16 %v535, %v531
    %v772 = vpack.c.b16 %v536, %v532
    %v773 = vpack.c.b16 %v537, %v533
    %v774 = vpack.c.b16 %v538, %v534
    %v775 = vpack.c.b16 %v543, %v539
    %v776 = vpack.c.b16 %v544, %v540
    %v777 = vpack.c.b16 %v545, %v541
    %v778 = vpack.c.b16 %v546, %v542
    %v779 = vpack.c.b16 %v551, %v547
    %v780 = vpack.c.b16 %v552, %v548
    %v781 = vpack.c.b16 %v553, %v549
    %v782 = vpack.c.b16 %v554, %v550
    %v783 = vpack.c.b16 %v559, %v555
    %v784 = vpack.c.b16 %v560, %v556
    %v785 = vpack.c.b16 %v561, %v557
    %v786 = vpack.c.b16 %v562, %v558
    %v787 = vpack.c.b16 %v567, %v563
    %v788 = vpack.c.b16 %v568, %v564
    %v789 = vpack.c.b16 %v569, %v565
    %v790 = vpack.c.b16 %v570, %v566
    %v791 = vpack.c.b16 %v575, %v571
    %v792 = vpack.c.b16 %v576, %v572
    %v793 = vpack.c.b16 %v577, %v573
    %v794 = vpack.c.b16 %v578, %v574
    %v795 = vpack.c.b16 %v583, %v579
    %v796 = vpack.c.b16 %v584, %v580
    %v797 = vpack.c.b16 %v585, %v581
    %v798 = vpack.c.b16 %v586, %v582
    %v799 = vpack.c.b16 %v591, %v587
    %v800 = vpack.c.b16 %v592, %v588
    %v801 = vpack.c.b16 %v593, %v589
    %v802 = vpack.c.b16 %v594, %v590
    %v803 = vpack.c.b16 %v599, %v595
    %v804 = vpack.c.b16 %v600, %v596
    %v805 = vpack.c.b16 %v601, %v597
    %v806 = vpack.c.b16 %v602, %v598
    %v807 = vpack.c.b16 %v607, %v603
    %v808 = vpack.c.b16 %v608, %v604
    %v809 = vpack.c.b16 %v609, %v605
    %v810 = vpack.c.b16 %v610, %v606
    %v811 = vpack.c.b16 %v615, %v611
    %v812 = vpack.c.b16 %v616, %v612
    %v813 = vpack.c.b16 %v617, %v613
    %v814 = vpack.c.b16 %v618, %v614
    %v815 = vpack.c.b16 %v623, %v619
    %v816 = vpack.c.b16 %v624, %v620
    %v817 = vpack.c.b16 %v625, %v621
    %v818 = vpack.c.b16 %v626, %v622
    %v819 = vpack.c.b16 %v631, %v627
    %v820 = vpack.c.b16 %v632, %v628
    %v821 = vpack.c.b16 %v633, %v629
    %v822 = vpack.c.b16 %v634, %v630
    %v823 = vpack.c.b16 %v639, %v635
    %v824 = vpack.c.b16 %v640, %v636
    %v825 = vpack.c.b16 %v641, %v637
    %v826 = vpack.c.b16 %v642, %v638
    %v827 = vpack.c.b16 %v647, %v643
    %v828 = vpack.c.b16 %v648, %v644
    %v829 = vpack.c.b16 %v649, %v645
    %v830 = vpack.c.b16 %v650, %v646
    %v831 = vpack.c.b16 %v655, %v651
    %v832 = vpack.c.b16 %v656, %v652
    %v833 = vpack.c.b16 %v657, %v653
    %v834 = vpack.c.b16 %v658, %v654
    %v835 = vpack.c.b16 %v663, %v659
    %v836 = vpack.c.b16 %v664, %v660
    %v837 = vpack.c.b16 %v665, %v661
    %v838 = vpack.c.b16 %v666, %v662
    %v839 = vpack.c.b16 %v671, %v667
    %v840 = vpack.c.b16 %v672, %v668
    %v841 = vpack.c.b16 %v673, %v669
    %v842 = vpack.c.b16 %v674, %v670
    %v843 = vpack.c.b16 %v679, %v675
    %v844 = vpack.c.b16 %v680, %v676
    %v845 = vpack.c.b16 %v681, %v677
    %v846 = vpack.c.b16 %v682, %v678
    %v847 = vpack.c.b16 %v687, %v683
    %v848 = vpack.c.b16 %v688, %v684
    %v849 = vpack.c.b16 %v689, %v685
    %v850 = vpack.c.b16 %v690, %v686
    %v851 = vpack.c.b16 %v695, %v691
    %v852 = vpack.c.b16 %v696, %v692
    %v853 = vpack.c.b16 %v697, %v693
    %v854 = vpack.c.b16 %v698, %v694
    %v855 = vpack.c.b16 %v703, %v699
    %v856 = vpack.c.b16 %v704, %v700
    %v857 = vpack.c.b16 %v705, %v701
    %v858 = vpack.c.b16 %v706, %v702
    %v859 = vpack.c.b16 %v711, %v707
    %v860 = vpack.c.b16 %v712, %v708
    %v861 = vpack.c.b16 %v713, %v709
    %v862 = vpack.c.b16 %v714, %v710
    %v863 = vpack.c.b16 %v719, %v715
    %v864 = vpack.c.b16 %v720, %v716
    %v865 = vpack.c.b16 %v721, %v717
    %v866 = vpack.c.b16 %v722, %v718
    %v867 = vpack.c.b16 %v727, %v723
    %v868 = vpack.c.b16 %v728, %v724
    %v869 = vpack.c.b16 %v729, %v725
    %v870 = vpack.c.b16 %v730, %v726
    %v871 = vpack.c.b16 %v735, %v731
    %v872 = vpack.c.b16 %v736, %v732
    %v873 = vpack.c.b16 %v737, %v733
    %v874 = vpack.c.b16 %v738, %v734
    %v875 = vpack.c.b16 %v743, %v739
    %v876 = vpack.c.b16 %v744, %v740
    %v877 = vpack.c.b16 %v745, %v741
    %v878 = vpack.c.b16 %v746, %v742
    %v879 = vpack.c.b16 %v751, %v747
    %v880 = vpack.c.b16 %v752, %v748
    %v881 = vpack.c.b16 %v753, %v749
    %v882 = vpack.c.b16 %v754, %v750
    %1011 = vmatpush.bf16.msra.mxu0 %v783
    %1012 = vmatpush.bf16.msra.mxu0 %v779
    %1013 = vmatpush.bf16.msra.mxu0 %v775
    %1014 = vmatpush.bf16.msra.mxu0 %v771
    %1015 = vmatpush.bf16.msra.mxu0 %v767
    %1016 = vmatpush.bf16.msra.mxu0 %v763
    %1017 = vmatpush.bf16.msra.mxu0 %v759
    %1018 = vmatpush.bf16.msra.mxu0 %v755
    %1019 = vmatmul.bf16.gmra.mxu0 %v331
    %v1020 = vpop.f32.mrf.mxu0
    %v1021 = vadd.f32 %v263, %v1020
    %v1022 = vpop.f32.mrf.mxu0
    %v1023 = vadd.f32 %v263, %v1022
    %1024 = vmatmul.bf16.gmra.mxu0 %v335
    %v1025 = vpop.f32.mrf.mxu0
    %v1026 = vadd.f32 %v263, %v1025
    %v1027 = vpop.f32.mrf.mxu0
    %v1028 = vadd.f32 %v263, %v1027
    %1029 = vmatmul.bf16.gmra.mxu0 %v339
    %v1030 = vpop.f32.mrf.mxu0
    %v1031 = vadd.f32 %v263, %v1030
    %v1032 = vpop.f32.mrf.mxu0
    %v1033 = vadd.f32 %v263, %v1032
    %1034 = vmatmul.bf16.gmra.mxu0 %v343
    %v1035 = vpop.f32.mrf.mxu0
    %v1036 = vadd.f32 %v263, %v1035
    %v1037 = vpop.f32.mrf.mxu0
    %v1038 = vadd.f32 %v263, %v1037
    %1039 = vmatmul.bf16.gmra.mxu0 %v347
    %v1040 = vpop.f32.mrf.mxu0
    %v1041 = vadd.f32 %v263, %v1040
    %v1042 = vpop.f32.mrf.mxu0
    %v1043 = vadd.f32 %v263, %v1042
    %1044 = vdwg.mxu0
    %1045 = vmatpush.bf16.msra.mxu0 %v815
    %1046 = vmatpush.bf16.msra.mxu0 %v811
    %1047 = vmatpush.bf16.msra.mxu0 %v807
    %1048 = vmatpush.bf16.msra.mxu0 %v803
    %1049 = vmatpush.bf16.msra.mxu0 %v799
    %1050 = vmatpush.bf16.msra.mxu0 %v795
    %1051 = vmatpush.bf16.msra.mxu0 %v791
    %1052 = vmatpush.bf16.msra.mxu0 %v787
    %1053 = vmatmul.bf16.gmra.mxu0 %v332
    %v1054 = vpop.f32.mrf.mxu0
    %v1055 = vadd.f32 %v1021, %v1054
    %v1056 = vpop.f32.mrf.mxu0
    %v1057 = vadd.f32 %v1023, %v1056
    %1058 = vmatmul.bf16.gmra.mxu0 %v336
    %v1059 = vpop.f32.mrf.mxu0
    %v1060 = vadd.f32 %v1026, %v1059
    %v1061 = vpop.f32.mrf.mxu0
    %v1062 = vadd.f32 %v1028, %v1061
    %1063 = vmatmul.bf16.gmra.mxu0 %v340
    %v1064 = vpop.f32.mrf.mxu0
    %v1065 = vadd.f32 %v1031, %v1064
    %v1066 = vpop.f32.mrf.mxu0
    %v1067 = vadd.f32 %v1033, %v1066
    %1068 = vmatmul.bf16.gmra.mxu0 %v344
    %v1069 = vpop.f32.mrf.mxu0
    %v1070 = vadd.f32 %v1036, %v1069
    %v1071 = vpop.f32.mrf.mxu0
    %v1072 = vadd.f32 %v1038, %v1071
    %1073 = vmatmul.bf16.gmra.mxu0 %v348
    %v1074 = vpop.f32.mrf.mxu0
    %v1075 = vadd.f32 %v1041, %v1074
    %v1076 = vpop.f32.mrf.mxu0
    %v1077 = vadd.f32 %v1043, %v1076
    %1078 = vdwg.mxu0
    %1079 = vmatpush.bf16.msra.mxu0 %v847
    %1080 = vmatpush.bf16.msra.mxu0 %v843
    %1081 = vmatpush.bf16.msra.mxu0 %v839
    %1082 = vmatpush.bf16.msra.mxu0 %v835
    %1083 = vmatpush.bf16.msra.mxu0 %v831
    %1084 = vmatpush.bf16.msra.mxu0 %v827
    %1085 = vmatpush.bf16.msra.mxu0 %v823
    %1086 = vmatpush.bf16.msra.mxu0 %v819
    %1087 = vmatmul.bf16.gmra.mxu0 %v333
    %v1088 = vpop.f32.mrf.mxu0
    %v1089 = vadd.f32 %v1055, %v1088
    %v1090 = vpop.f32.mrf.mxu0
    %v1091 = vadd.f32 %v1057, %v1090
    %1092 = vmatmul.bf16.gmra.mxu0 %v337
    %v1093 = vpop.f32.mrf.mxu0
    %v1094 = vadd.f32 %v1060, %v1093
    %v1095 = vpop.f32.mrf.mxu0
    %v1096 = vadd.f32 %v1062, %v1095
    %1097 = vmatmul.bf16.gmra.mxu0 %v341
    %v1098 = vpop.f32.mrf.mxu0
    %v1099 = vadd.f32 %v1065, %v1098
    %v1100 = vpop.f32.mrf.mxu0
    %v1101 = vadd.f32 %v1067, %v1100
    %1102 = vmatmul.bf16.gmra.mxu0 %v345
    %v1103 = vpop.f32.mrf.mxu0
    %v1104 = vadd.f32 %v1070, %v1103
    %v1105 = vpop.f32.mrf.mxu0
    %v1106 = vadd.f32 %v1072, %v1105
    %1107 = vmatmul.bf16.gmra.mxu0 %v349
    %v1108 = vpop.f32.mrf.mxu0
    %v1109 = vadd.f32 %v1075, %v1108
    %v1110 = vpop.f32.mrf.mxu0
    %v1111 = vadd.f32 %v1077, %v1110
    %1112 = vdwg.mxu0
    %1113 = vmatpush.bf16.msra.mxu0 %v879
    %1114 = vmatpush.bf16.msra.mxu0 %v875
    %1115 = vmatpush.bf16.msra.mxu0 %v871
    %1116 = vmatpush.bf16.msra.mxu0 %v867
    %1117 = vmatpush.bf16.msra.mxu0 %v863
    %1118 = vmatpush.bf16.msra.mxu0 %v859
    %1119 = vmatpush.bf16.msra.mxu0 %v855
    %1120 = vmatpush.bf16.msra.mxu0 %v851
    %1121 = vmatmul.bf16.gmra.mxu0 %v334
    %v1122 = vpop.f32.mrf.mxu0
    %v1123 = vadd.f32 %v1089, %v1122
    %v1124 = vpop.f32.mrf.mxu0
    %v1125 = vadd.f32 %v1091, %v1124
    %1126 = vmatmul.bf16.gmra.mxu0 %v338
    %v1127 = vpop.f32.mrf.mxu0
    %v1128 = vadd.f32 %v1094, %v1127
    %v1129 = vpop.f32.mrf.mxu0
    %v1130 = vadd.f32 %v1096, %v1129
    %1131 = vmatmul.bf16.gmra.mxu0 %v342
    %v1132 = vpop.f32.mrf.mxu0
    %v1133 = vadd.f32 %v1099, %v1132
    %v1134 = vpop.f32.mrf.mxu0
    %v1135 = vadd.f32 %v1101, %v1134
    %1136 = vmatmul.bf16.gmra.mxu0 %v346
    %v1137 = vpop.f32.mrf.mxu0
    %v1138 = vadd.f32 %v1104, %v1137
    %v1139 = vpop.f32.mrf.mxu0
    %v1140 = vadd.f32 %v1106, %v1139
    %1141 = vmatmul.bf16.gmra.mxu0 %v350
    %v1142 = vpop.f32.mrf.mxu0
    %v1143 = vadd.f32 %v1109, %v1142
    %v1144 = vpop.f32.mrf.mxu0
    %v1145 = vadd.f32 %v1111, %v1144
    %1146 = vdwg.mxu0
    %1147 = vmatpush.bf16.msra.mxu0 %v784
    %1148 = vmatpush.bf16.msra.mxu0 %v780
    %1149 = vmatpush.bf16.msra.mxu0 %v776
    %1150 = vmatpush.bf16.msra.mxu0 %v772
    %1151 = vmatpush.bf16.msra.mxu0 %v768
    %1152 = vmatpush.bf16.msra.mxu0 %v764
    %1153 = vmatpush.bf16.msra.mxu0 %v760
    %1154 = vmatpush.bf16.msra.mxu0 %v756
    %1155 = vmatmul.bf16.gmra.mxu0 %v331
    %v1156 = vpop.f32.mrf.mxu0
    %v1157 = vadd.f32 %v264, %v1156
    %v1158 = vpop.f32.mrf.mxu0
    %v1159 = vadd.f32 %v264, %v1158
    %1160 = vmatmul.bf16.gmra.mxu0 %v335
    %v1161 = vpop.f32.mrf.mxu0
    %v1162 = vadd.f32 %v264, %v1161
    %v1163 = vpop.f32.mrf.mxu0
    %v1164 = vadd.f32 %v264, %v1163
    %1165 = vmatmul.bf16.gmra.mxu0 %v339
    %v1166 = vpop.f32.mrf.mxu0
    %v1167 = vadd.f32 %v264, %v1166
    %v1168 = vpop.f32.mrf.mxu0
    %v1169 = vadd.f32 %v264, %v1168
    %1170 = vmatmul.bf16.gmra.mxu0 %v343
    %v1171 = vpop.f32.mrf.mxu0
    %v1172 = vadd.f32 %v264, %v1171
    %v1173 = vpop.f32.mrf.mxu0
    %v1174 = vadd.f32 %v264, %v1173
    %1175 = vmatmul.bf16.gmra.mxu0 %v347
    %v1176 = vpop.f32.mrf.mxu0
    %v1177 = vadd.f32 %v264, %v1176
    %v1178 = vpop.f32.mrf.mxu0
    %v1179 = vadd.f32 %v264, %v1178
    %1180 = vdwg.mxu0
    %1181 = vmatpush.bf16.msra.mxu0 %v816
    %1182 = vmatpush.bf16.msra.mxu0 %v812
    %1183 = vmatpush.bf16.msra.mxu0 %v808
    %1184 = vmatpush.bf16.msra.mxu0 %v804
    %1185 = vmatpush.bf16.msra.mxu0 %v800
    %1186 = vmatpush.bf16.msra.mxu0 %v796
    %1187 = vmatpush.bf16.msra.mxu0 %v792
    %1188 = vmatpush.bf16.msra.mxu0 %v788
    %1189 = vmatmul.bf16.gmra.mxu0 %v332
    %v1190 = vpop.f32.mrf.mxu0
    %v1191 = vadd.f32 %v1157, %v1190
    %v1192 = vpop.f32.mrf.mxu0
    %v1193 = vadd.f32 %v1159, %v1192
    %1194 = vmatmul.bf16.gmra.mxu0 %v336
    %v1195 = vpop.f32.mrf.mxu0
    %v1196 = vadd.f32 %v1162, %v1195
    %v1197 = vpop.f32.mrf.mxu0
    %v1198 = vadd.f32 %v1164, %v1197
    %1199 = vmatmul.bf16.gmra.mxu0 %v340
    %v1200 = vpop.f32.mrf.mxu0
    %v1201 = vadd.f32 %v1167, %v1200
    %v1202 = vpop.f32.mrf.mxu0
    %v1203 = vadd.f32 %v1169, %v1202
    %1204 = vmatmul.bf16.gmra.mxu0 %v344
    %v1205 = vpop.f32.mrf.mxu0
    %v1206 = vadd.f32 %v1172, %v1205
    %v1207 = vpop.f32.mrf.mxu0
    %v1208 = vadd.f32 %v1174, %v1207
    %1209 = vmatmul.bf16.gmra.mxu0 %v348
    %v1210 = vpop.f32.mrf.mxu0
    %v1211 = vadd.f32 %v1177, %v1210
    %v1212 = vpop.f32.mrf.mxu0
    %v1213 = vadd.f32 %v1179, %v1212
    %1214 = vdwg.mxu0
    %1215 = vmatpush.bf16.msra.mxu0 %v848
    %1216 = vmatpush.bf16.msra.mxu0 %v844
    %1217 = vmatpush.bf16.msra.mxu0 %v840
    %1218 = vmatpush.bf16.msra.mxu0 %v836
    %1219 = vmatpush.bf16.msra.mxu0 %v832
    %1220 = vmatpush.bf16.msra.mxu0 %v828
    %1221 = vmatpush.bf16.msra.mxu0 %v824
    %1222 = vmatpush.bf16.msra.mxu0 %v820
    %1223 = vmatmul.bf16.gmra.mxu0 %v333
    %v1224 = vpop.f32.mrf.mxu0
    %v1225 = vadd.f32 %v1191, %v1224
    %v1226 = vpop.f32.mrf.mxu0
    %v1227 = vadd.f32 %v1193, %v1226
    %1228 = vmatmul.bf16.gmra.mxu0 %v337
    %v1229 = vpop.f32.mrf.mxu0
    %v1230 = vadd.f32 %v1196, %v1229
    %v1231 = vpop.f32.mrf.mxu0
    %v1232 = vadd.f32 %v1198, %v1231
    %1233 = vmatmul.bf16.gmra.mxu0 %v341
    %v1234 = vpop.f32.mrf.mxu0
    %v1235 = vadd.f32 %v1201, %v1234
    %v1236 = vpop.f32.mrf.mxu0
    %v1237 = vadd.f32 %v1203, %v1236
    %1238 = vmatmul.bf16.gmra.mxu0 %v345
    %v1239 = vpop.f32.mrf.mxu0
    %v1240 = vadd.f32 %v1206, %v1239
    %v1241 = vpop.f32.mrf.mxu0
    %v1242 = vadd.f32 %v1208, %v1241
    %1243 = vmatmul.bf16.gmra.mxu0 %v349
    %v1244 = vpop.f32.mrf.mxu0
    %v1245 = vadd.f32 %v1211, %v1244
    %v1246 = vpop.f32.mrf.mxu0
    %v1247 = vadd.f32 %v1213, %v1246
    %1248 = vdwg.mxu0
    %1249 = vmatpush.bf16.msra.mxu0 %v880
    %1250 = vmatpush.bf16.msra.mxu0 %v876
    %1251 = vmatpush.bf16.msra.mxu0 %v872
    %1252 = vmatpush.bf16.msra.mxu0 %v868
    %1253 = vmatpush.bf16.msra.mxu0 %v864
    %1254 = vmatpush.bf16.msra.mxu0 %v860
    %1255 = vmatpush.bf16.msra.mxu0 %v856
    %1256 = vmatpush.bf16.msra.mxu0 %v852
    %1257 = vmatmul.bf16.gmra.mxu0 %v334
    %v1258 = vpop.f32.mrf.mxu0
    %v1259 = vadd.f32 %v1225, %v1258
    %v1260 = vpop.f32.mrf.mxu0
    %v1261 = vadd.f32 %v1227, %v1260
    %1262 = vmatmul.bf16.gmra.mxu0 %v338
    %v1263 = vpop.f32.mrf.mxu0
    %v1264 = vadd.f32 %v1230, %v1263
    %v1265 = vpop.f32.mrf.mxu0
    %v1266 = vadd.f32 %v1232, %v1265
    %1267 = vmatmul.bf16.gmra.mxu0 %v342
    %v1268 = vpop.f32.mrf.mxu0
    %v1269 = vadd.f32 %v1235, %v1268
    %v1270 = vpop.f32.mrf.mxu0
    %v1271 = vadd.f32 %v1237, %v1270
    %1272 = vmatmul.bf16.gmra.mxu0 %v346
    %v1273 = vpop.f32.mrf.mxu0
    %v1274 = vadd.f32 %v1240, %v1273
    %v1275 = vpop.f32.mrf.mxu0
    %v1276 = vadd.f32 %v1242, %v1275
    %1277 = vmatmul.bf16.gmra.mxu0 %v350
    %v1278 = vpop.f32.mrf.mxu0
    %v1279 = vadd.f32 %v1245, %v1278
    %v1280 = vpop.f32.mrf.mxu0
    %v1281 = vadd.f32 %v1247, %v1280
    %1282 = vdwg.mxu0
    %1283 = vmatpush.bf16.msra.mxu0 %v785
    %1284 = vmatpush.bf16.msra.mxu0 %v781
    %1285 = vmatpush.bf16.msra.mxu0 %v777
    %1286 = vmatpush.bf16.msra.mxu0 %v773
    %1287 = vmatpush.bf16.msra.mxu0 %v769
    %1288 = vmatpush.bf16.msra.mxu0 %v765
    %1289 = vmatpush.bf16.msra.mxu0 %v761
    %1290 = vmatpush.bf16.msra.mxu0 %v757
    %1291 = vmatmul.bf16.gmra.mxu0 %v331
    %v1292 = vpop.f32.mrf.mxu0
    %v1293 = vadd.f32 %v265, %v1292
    %v1294 = vpop.f32.mrf.mxu0
    %v1295 = vadd.f32 %v265, %v1294
    %1296 = vmatmul.bf16.gmra.mxu0 %v335
    %v1297 = vpop.f32.mrf.mxu0
    %v1298 = vadd.f32 %v265, %v1297
    %v1299 = vpop.f32.mrf.mxu0
    %v1300 = vadd.f32 %v265, %v1299
    %1301 = vmatmul.bf16.gmra.mxu0 %v339
    %v1302 = vpop.f32.mrf.mxu0
    %v1303 = vadd.f32 %v265, %v1302
    %v1304 = vpop.f32.mrf.mxu0
    %v1305 = vadd.f32 %v265, %v1304
    %1306 = vmatmul.bf16.gmra.mxu0 %v343
    %v1307 = vpop.f32.mrf.mxu0
    %v1308 = vadd.f32 %v265, %v1307
    %v1309 = vpop.f32.mrf.mxu0
    %v1310 = vadd.f32 %v265, %v1309
    %1311 = vmatmul.bf16.gmra.mxu0 %v347
    %v1312 = vpop.f32.mrf.mxu0
    %v1313 = vadd.f32 %v265, %v1312
    %v1314 = vpop.f32.mrf.mxu0
    %v1315 = vadd.f32 %v265, %v1314
    %1316 = vdwg.mxu0
    %1317 = vmatpush.bf16.msra.mxu0 %v817
    %1318 = vmatpush.bf16.msra.mxu0 %v813
    %1319 = vmatpush.bf16.msra.mxu0 %v809
    %1320 = vmatpush.bf16.msra.mxu0 %v805
    %1321 = vmatpush.bf16.msra.mxu0 %v801
    %1322 = vmatpush.bf16.msra.mxu0 %v797
    %1323 = vmatpush.bf16.msra.mxu0 %v793
    %1324 = vmatpush.bf16.msra.mxu0 %v789
    %1325 = vmatmul.bf16.gmra.mxu0 %v332
    %v1326 = vpop.f32.mrf.mxu0
    %v1327 = vadd.f32 %v1293, %v1326
    %v1328 = vpop.f32.mrf.mxu0
    %v1329 = vadd.f32 %v1295, %v1328
    %1330 = vmatmul.bf16.gmra.mxu0 %v336
    %v1331 = vpop.f32.mrf.mxu0
    %v1332 = vadd.f32 %v1298, %v1331
    %v1333 = vpop.f32.mrf.mxu0
    %v1334 = vadd.f32 %v1300, %v1333
    %1335 = vmatmul.bf16.gmra.mxu0 %v340
    %v1336 = vpop.f32.mrf.mxu0
    %v1337 = vadd.f32 %v1303, %v1336
    %v1338 = vpop.f32.mrf.mxu0
    %v1339 = vadd.f32 %v1305, %v1338
    %1340 = vmatmul.bf16.gmra.mxu0 %v344
    %v1341 = vpop.f32.mrf.mxu0
    %v1342 = vadd.f32 %v1308, %v1341
    %v1343 = vpop.f32.mrf.mxu0
    %v1344 = vadd.f32 %v1310, %v1343
    %1345 = vmatmul.bf16.gmra.mxu0 %v348
    %v1346 = vpop.f32.mrf.mxu0
    %v1347 = vadd.f32 %v1313, %v1346
    %v1348 = vpop.f32.mrf.mxu0
    %v1349 = vadd.f32 %v1315, %v1348
    %1350 = vdwg.mxu0
    %1351 = vmatpush.bf16.msra.mxu0 %v849
    %1352 = vmatpush.bf16.msra.mxu0 %v845
    %1353 = vmatpush.bf16.msra.mxu0 %v841
    %1354 = vmatpush.bf16.msra.mxu0 %v837
    %1355 = vmatpush.bf16.msra.mxu0 %v833
    %1356 = vmatpush.bf16.msra.mxu0 %v829
    %1357 = vmatpush.bf16.msra.mxu0 %v825
    %1358 = vmatpush.bf16.msra.mxu0 %v821
    %1359 = vmatmul.bf16.gmra.mxu0 %v333
    %v1360 = vpop.f32.mrf.mxu0
    %v1361 = vadd.f32 %v1327, %v1360
    %v1362 = vpop.f32.mrf.mxu0
    %v1363 = vadd.f32 %v1329, %v1362
    %1364 = vmatmul.bf16.gmra.mxu0 %v337
    %v1365 = vpop.f32.mrf.mxu0
    %v1366 = vadd.f32 %v1332, %v1365
    %v1367 = vpop.f32.mrf.mxu0
    %v1368 = vadd.f32 %v1334, %v1367
    %1369 = vmatmul.bf16.gmra.mxu0 %v341
    %v1370 = vpop.f32.mrf.mxu0
    %v1371 = vadd.f32 %v1337, %v1370
    %v1372 = vpop.f32.mrf.mxu0
    %v1373 = vadd.f32 %v1339, %v1372
    %1374 = vmatmul.bf16.gmra.mxu0 %v345
    %v1375 = vpop.f32.mrf.mxu0
    %v1376 = vadd.f32 %v1342, %v1375
    %v1377 = vpop.f32.mrf.mxu0
    %v1378 = vadd.f32 %v1344, %v1377
    %1379 = vmatmul.bf16.gmra.mxu0 %v349
    %v1380 = vpop.f32.mrf.mxu0
    %v1381 = vadd.f32 %v1347, %v1380
    %v1382 = vpop.f32.mrf.mxu0
    %v1383 = vadd.f32 %v1349, %v1382
    %1384 = vdwg.mxu0
    %1385 = vmatpush.bf16.msra.mxu0 %v881
    %1386 = vmatpush.bf16.msra.mxu0 %v877
    %1387 = vmatpush.bf16.msra.mxu0 %v873
    %1388 = vmatpush.bf16.msra.mxu0 %v869
    %1389 = vmatpush.bf16.msra.mxu0 %v865
    %1390 = vmatpush.bf16.msra.mxu0 %v861
    %1391 = vmatpush.bf16.msra.mxu0 %v857
    %1392 = vmatpush.bf16.msra.mxu0 %v853
    %1393 = vmatmul.bf16.gmra.mxu0 %v334
    %v1394 = vpop.f32.mrf.mxu0
    %v1395 = vadd.f32 %v1361, %v1394
    %v1396 = vpop.f32.mrf.mxu0
    %v1397 = vadd.f32 %v1363, %v1396
    %1398 = vmatmul.bf16.gmra.mxu0 %v338
    %v1399 = vpop.f32.mrf.mxu0
    %v1400 = vadd.f32 %v1366, %v1399
    %v1401 = vpop.f32.mrf.mxu0
    %v1402 = vadd.f32 %v1368, %v1401
    %1403 = vmatmul.bf16.gmra.mxu0 %v342
    %v1404 = vpop.f32.mrf.mxu0
    %v1405 = vadd.f32 %v1371, %v1404
    %v1406 = vpop.f32.mrf.mxu0
    %v1407 = vadd.f32 %v1373, %v1406
    %1408 = vmatmul.bf16.gmra.mxu0 %v346
    %v1409 = vpop.f32.mrf.mxu0
    %v1410 = vadd.f32 %v1376, %v1409
    %v1411 = vpop.f32.mrf.mxu0
    %v1412 = vadd.f32 %v1378, %v1411
    %1413 = vmatmul.bf16.gmra.mxu0 %v350
    %v1414 = vpop.f32.mrf.mxu0
    %v1415 = vadd.f32 %v1381, %v1414
    %v1416 = vpop.f32.mrf.mxu0
    %v1417 = vadd.f32 %v1383, %v1416
    %1418 = vdwg.mxu0
    %1419 = vmatpush.bf16.msra.mxu0 %v786
    %1420 = vmatpush.bf16.msra.mxu0 %v782
    %1421 = vmatpush.bf16.msra.mxu0 %v778
    %1422 = vmatpush.bf16.msra.mxu0 %v774
    %1423 = vmatpush.bf16.msra.mxu0 %v770
    %1424 = vmatpush.bf16.msra.mxu0 %v766
    %1425 = vmatpush.bf16.msra.mxu0 %v762
    %1426 = vmatpush.bf16.msra.mxu0 %v758
    %1427 = vmatmul.bf16.gmra.mxu0 %v331
    %v1428 = vpop.f32.mrf.mxu0
    %v1429 = vadd.f32 %v266, %v1428
    %v1430 = vpop.f32.mrf.mxu0
    %v1431 = vadd.f32 %v266, %v1430
    %1432 = vmatmul.bf16.gmra.mxu0 %v335
    %v1433 = vpop.f32.mrf.mxu0
    %v1434 = vadd.f32 %v266, %v1433
    %v1435 = vpop.f32.mrf.mxu0
    %v1436 = vadd.f32 %v266, %v1435
    %1437 = vmatmul.bf16.gmra.mxu0 %v339
    %v1438 = vpop.f32.mrf.mxu0
    %v1439 = vadd.f32 %v266, %v1438
    %v1440 = vpop.f32.mrf.mxu0
    %v1441 = vadd.f32 %v266, %v1440
    %1442 = vmatmul.bf16.gmra.mxu0 %v343
    %v1443 = vpop.f32.mrf.mxu0
    %v1444 = vadd.f32 %v266, %v1443
    %v1445 = vpop.f32.mrf.mxu0
    %v1446 = vadd.f32 %v266, %v1445
    %1447 = vmatmul.bf16.gmra.mxu0 %v347
    %v1448 = vpop.f32.mrf.mxu0
    %v1449 = vadd.f32 %v266, %v1448
    %v1450 = vpop.f32.mrf.mxu0
    %v1451 = vadd.f32 %v266, %v1450
    %1452 = vdwg.mxu0
    %1453 = vmatpush.bf16.msra.mxu0 %v818
    %1454 = vmatpush.bf16.msra.mxu0 %v814
    %1455 = vmatpush.bf16.msra.mxu0 %v810
    %1456 = vmatpush.bf16.msra.mxu0 %v806
    %1457 = vmatpush.bf16.msra.mxu0 %v802
    %1458 = vmatpush.bf16.msra.mxu0 %v798
    %1459 = vmatpush.bf16.msra.mxu0 %v794
    %1460 = vmatpush.bf16.msra.mxu0 %v790
    %1461 = vmatmul.bf16.gmra.mxu0 %v332
    %v1462 = vpop.f32.mrf.mxu0
    %v1463 = vadd.f32 %v1429, %v1462
    %v1464 = vpop.f32.mrf.mxu0
    %v1465 = vadd.f32 %v1431, %v1464
    %1466 = vmatmul.bf16.gmra.mxu0 %v336
    %v1467 = vpop.f32.mrf.mxu0
    %v1468 = vadd.f32 %v1434, %v1467
    %v1469 = vpop.f32.mrf.mxu0
    %v1470 = vadd.f32 %v1436, %v1469
    %1471 = vmatmul.bf16.gmra.mxu0 %v340
    %v1472 = vpop.f32.mrf.mxu0
    %v1473 = vadd.f32 %v1439, %v1472
    %v1474 = vpop.f32.mrf.mxu0
    %v1475 = vadd.f32 %v1441, %v1474
    %1476 = vmatmul.bf16.gmra.mxu0 %v344
    %v1477 = vpop.f32.mrf.mxu0
    %v1478 = vadd.f32 %v1444, %v1477
    %v1479 = vpop.f32.mrf.mxu0
    %v1480 = vadd.f32 %v1446, %v1479
    %1481 = vmatmul.bf16.gmra.mxu0 %v348
    %v1482 = vpop.f32.mrf.mxu0
    %v1483 = vadd.f32 %v1449, %v1482
    %v1484 = vpop.f32.mrf.mxu0
    %v1485 = vadd.f32 %v1451, %v1484
    %1486 = vdwg.mxu0
    %1487 = vmatpush.bf16.msra.mxu0 %v850
    %1488 = vmatpush.bf16.msra.mxu0 %v846
    %1489 = vmatpush.bf16.msra.mxu0 %v842
    %1490 = vmatpush.bf16.msra.mxu0 %v838
    %1491 = vmatpush.bf16.msra.mxu0 %v834
    %1492 = vmatpush.bf16.msra.mxu0 %v830
    %1493 = vmatpush.bf16.msra.mxu0 %v826
    %1494 = vmatpush.bf16.msra.mxu0 %v822
    %1495 = vmatmul.bf16.gmra.mxu0 %v333
    %v1496 = vpop.f32.mrf.mxu0
    %v1497 = vadd.f32 %v1463, %v1496
    %v1498 = vpop.f32.mrf.mxu0
    %v1499 = vadd.f32 %v1465, %v1498
    %1500 = vmatmul.bf16.gmra.mxu0 %v337
    %v1501 = vpop.f32.mrf.mxu0
    %v1502 = vadd.f32 %v1468, %v1501
    %v1503 = vpop.f32.mrf.mxu0
    %v1504 = vadd.f32 %v1470, %v1503
    %1505 = vmatmul.bf16.gmra.mxu0 %v341
    %v1506 = vpop.f32.mrf.mxu0
    %v1507 = vadd.f32 %v1473, %v1506
    %v1508 = vpop.f32.mrf.mxu0
    %v1509 = vadd.f32 %v1475, %v1508
    %1510 = vmatmul.bf16.gmra.mxu0 %v345
    %v1511 = vpop.f32.mrf.mxu0
    %v1512 = vadd.f32 %v1478, %v1511
    %v1513 = vpop.f32.mrf.mxu0
    %v1514 = vadd.f32 %v1480, %v1513
    %1515 = vmatmul.bf16.gmra.mxu0 %v349
    %v1516 = vpop.f32.mrf.mxu0
    %v1517 = vadd.f32 %v1483, %v1516
    %v1518 = vpop.f32.mrf.mxu0
    %v1519 = vadd.f32 %v1485, %v1518
    %1520 = vdwg.mxu0
    %1521 = vmatpush.bf16.msra.mxu0 %v882
    %1522 = vmatpush.bf16.msra.mxu0 %v878
    %1523 = vmatpush.bf16.msra.mxu0 %v874
    %1524 = vmatpush.bf16.msra.mxu0 %v870
    %1525 = vmatpush.bf16.msra.mxu0 %v866
    %1526 = vmatpush.bf16.msra.mxu0 %v862
    %1527 = vmatpush.bf16.msra.mxu0 %v858
    %1528 = vmatpush.bf16.msra.mxu0 %v854
    %1529 = vmatmul.bf16.gmra.mxu0 %v334
    %v1530 = vpop.f32.mrf.mxu0
    %v1531 = vadd.f32 %v1497, %v1530
    %v1532 = vpop.f32.mrf.mxu0
    %v1533 = vadd.f32 %v1499, %v1532
    %1534 = vmatmul.bf16.gmra.mxu0 %v338
    %v1535 = vpop.f32.mrf.mxu0
    %v1536 = vadd.f32 %v1502, %v1535
    %v1537 = vpop.f32.mrf.mxu0
    %v1538 = vadd.f32 %v1504, %v1537
    %1539 = vmatmul.bf16.gmra.mxu0 %v342
    %v1540 = vpop.f32.mrf.mxu0
    %v1541 = vadd.f32 %v1507, %v1540
    %v1542 = vpop.f32.mrf.mxu0
    %v1543 = vadd.f32 %v1509, %v1542
    %1544 = vmatmul.bf16.gmra.mxu0 %v346
    %v1545 = vpop.f32.mrf.mxu0
    %v1546 = vadd.f32 %v1512, %v1545
    %v1547 = vpop.f32.mrf.mxu0
    %v1548 = vadd.f32 %v1514, %v1547
    %1549 = vmatmul.bf16.gmra.mxu0 %v350
    %v1550 = vpop.f32.mrf.mxu0
    %v1551 = vadd.f32 %v1517, %v1550
    %v1552 = vpop.f32.mrf.mxu0
    %v1553 = vadd.f32 %v1519, %v1552
    %1554 = vdwg.mxu0
    %1555 = vst [vmem:[#allocation4] sm:$0xff] %v1123
    %1556 = vst [vmem:[#allocation4 + $0x8] sm:$0xff] %v1259
    %1557 = vst [vmem:[#allocation4 + $0x10] sm:$0xff] %v1395
    %1558 = vst [vmem:[#allocation4 + $0x18] sm:$0xff] %v1531
    %1559 = vst [vmem:[#allocation4 + $0x20] sm:$0xff] %v1125
    %1560 = vst [vmem:[#allocation4 + $0x28] sm:$0xff] %v1261
    %1561 = vst [vmem:[#allocation4 + $0x30] sm:$0xff] %v1397
    %1562 = vst [vmem:[#allocation4 + $0x38] sm:$0xff] %v1533
    %1563 = vst [vmem:[#allocation4 + $0x40] sm:$0xff] %v1128
    %1564 = vst [vmem:[#allocation4 + $0x48] sm:$0xff] %v1264
    %1565 = vst [vmem:[#allocation4 + $0x50] sm:$0xff] %v1400
    %1566 = vst [vmem:[#allocation4 + $0x58] sm:$0xff] %v1536
    %1567 = vst [vmem:[#allocation4 + $0x60] sm:$0xff] %v1130
    %1568 = vst [vmem:[#allocation4 + $0x68] sm:$0xff] %v1266
    %1569 = vst [vmem:[#allocation4 + $0x70] sm:$0xff] %v1402
    %1570 = vst [vmem:[#allocation4 + $0x78] sm:$0xff] %v1538
    %1571 = vst [vmem:[#allocation4 + $0x80] sm:$0xff] %v1133
    %1572 = vst [vmem:[#allocation4 + $0x88] sm:$0xff] %v1269
    %1573 = vst [vmem:[#allocation4 + $0x90] sm:$0xff] %v1405
    %1574 = vst [vmem:[#allocation4 + $0x98] sm:$0xff] %v1541
    %1575 = vst [vmem:[#allocation4 + $0xa0] sm:$0xff] %v1135
    %1576 = vst [vmem:[#allocation4 + $0xa8] sm:$0xff] %v1271
    %1577 = vst [vmem:[#allocation4 + $0xb0] sm:$0xff] %v1407
    %1578 = vst [vmem:[#allocation4 + $0xb8] sm:$0xff] %v1543
    %1579 = vst [vmem:[#allocation4 + $0xc0] sm:$0xff] %v1138
    %1580 = vst [vmem:[#allocation4 + $0xc8] sm:$0xff] %v1274
    %1581 = vst [vmem:[#allocation4 + $0xd0] sm:$0xff] %v1410
    %1582 = vst [vmem:[#allocation4 + $0xd8] sm:$0xff] %v1546
    %1583 = vst [vmem:[#allocation4 + $0xe0] sm:$0xff] %v1140
    %1584 = vst [vmem:[#allocation4 + $0xe8] sm:$0xff] %v1276
    %1585 = vst [vmem:[#allocation4 + $0xf0] sm:$0xff] %v1412
    %1586 = vst [vmem:[#allocation4 + $0xf8] sm:$0xff] %v1548
    %1587 = vst [vmem:[#allocation4 + $0x100] sm:$0xff] %v1143
    %1588 = vst [vmem:[#allocation4 + $0x108] sm:$0xff] %v1279
    %1589 = vst [vmem:[#allocation4 + $0x110] sm:$0xff] %v1415
    %1590 = vst [vmem:[#allocation4 + $0x118] sm:$0xff] %v1551
    %1591 = vst [vmem:[#allocation4 + $0x120] sm:$0xff] %v1145
    %1592 = vst [vmem:[#allocation4 + $0x128] sm:$0xff] %v1281
    %1593 = vst [vmem:[#allocation4 + $0x130] sm:$0xff] %v1417
    %1594 = vst [vmem:[#allocation4 + $0x138] sm:$0xff] %v1553
    %v1595 = vld [vmem:[#allocation12] sm:$0xf]
    %v1597 = vperm.slane %v1595, 0
    %v1598 = vperm.slane %v1595, 1
    %v1599 = vperm.slane %v1595, 2
    %v1600 = vperm.slane %v1595, 3
    %v1605 = vld [vmem:[#allocation4] sm:$0xff]
    %v1606 = vld [vmem:[#allocation4 + $0x8] sm:$0xff]
    %v1607 = vld [vmem:[#allocation4 + $0x10] sm:$0xff]
    %v1608 = vld [vmem:[#allocation4 + $0x18] sm:$0xff]
    %v1609 = vxor.u32 %v1605, 2147483648
    %v1610 = vxor.u32 %v1606, 2147483648
    %v1611 = vxor.u32 %v1607, 2147483648
    %v1612 = vmul.f32 %v1609, 1.442695
    %v1613 = vpow.pop %v1612
    %v1614 = vmul.f32 %v1610, 1.442695
    %v1615 = vpow.pop %v1614
    %v1616 = vmul.f32 %v1611, 1.442695
    %v1617 = vpow.pop %v1616
    %v1618 = vadd.f32 %v1613, 1.0
    %v1619 = vadd.f32 %v1615, 1.0
    %v1620 = vadd.f32 %v1617, 1.0
    %v1621 = vrcp.pop %v1618
    %v1622 = vmul.f32 %v1618, %v1621
    %v1623 = vsub.f32 1.0, %v1622
    %v1624 = vmul.f32 %v1621, %v1623
    %v1625 = vadd.f32 %v1621, %v1624
    %vm1626 = vweird.f32 %v1618
    %vm1627 = vweird.f32 %v1621
    %vm1628 = vmor %vm1626, %vm1627
    %v1629 = vsel %vm1628, %v1621, %v1625
    %v1630 = vand.u32 2147483647, %v1618
    %vm1631 = vcmp.eq.f32.partialorder %v1630, 8.507059e+37
    %v1632 = vand.u32 %v1618, 2147483648
    %v1633 = vor.u32 1.1754944e-38, %v1632
    %v1634 = vsel %vm1631, %v1633, %v1629
    %v1635 = vmul.f32 1.0, %v1634
    %v1636 = vrcp.pop %v1619
    %v1637 = vmul.f32 %v1619, %v1636
    %v1638 = vsub.f32 1.0, %v1637
    %v1639 = vmul.f32 %v1636, %v1638
    %v1640 = vadd.f32 %v1636, %v1639
    %vm1641 = vweird.f32 %v1619
    %vm1642 = vweird.f32 %v1636
    %vm1643 = vmor %vm1641, %vm1642
    %v1644 = vsel %vm1643, %v1636, %v1640
    %v1645 = vand.u32 2147483647, %v1619
    %vm1646 = vcmp.eq.f32.partialorder %v1645, 8.507059e+37
    %v1647 = vand.u32 %v1619, 2147483648
    %v1648 = vor.u32 1.1754944e-38, %v1647
    %v1649 = vsel %vm1646, %v1648, %v1644
    %v1650 = vmul.f32 1.0, %v1649
    %v1651 = vrcp.pop %v1620
    %v1652 = vmul.f32 %v1620, %v1651
    %v1653 = vsub.f32 1.0, %v1652
    %v1654 = vmul.f32 %v1651, %v1653
    %v1655 = vadd.f32 %v1651, %v1654
    %vm1656 = vweird.f32 %v1620
    %vm1657 = vweird.f32 %v1651
    %vm1658 = vmor %vm1656, %vm1657
    %v1659 = vsel %vm1658, %v1651, %v1655
    %v1660 = vand.u32 2147483647, %v1620
    %vm1661 = vcmp.eq.f32.partialorder %v1660, 8.507059e+37
    %v1662 = vand.u32 %v1620, 2147483648
    %v1663 = vor.u32 1.1754944e-38, %v1662
    %v1664 = vsel %vm1661, %v1663, %v1659
    %v1665 = vmul.f32 1.0, %v1664
    %v1666 = vtanh.pop %v1608
    %v1667 = vmul.f32 %v1650, 0.0
    %v1668 = vmul.f32 %v1635, %v1666
    %v1669 = vadd.f32 %v1667, %v1668
    %v1670 = vtanh.pop %v1669
    %v1671 = vmul.f32 %v1665, %v1670
    %s1672 = smul.u32 4, 32
    %s1673 = smul.u32 %s1672, 8
    %s1674 = sshll.u32 %s1673, 4
    %1675 = dma.done [#allocation5], %s1674
    %v1676 = vpack.c.bf16 %v1671, %v1671
    %v1677 = vpack.c.bf16 0.0, 0.0
    %v1678 = vld [vmem:[#allocation2] sm:$0xff]
    %v1679 = vld [vmem:[#allocation2 + $0x8] sm:$0xff]
    %v1680 = vld [vmem:[#allocation2 + $0x10] sm:$0xff]
    %v1681 = vld [vmem:[#allocation2 + $0x18] sm:$0xff]
    %v1682 = vld [vmem:[#allocation2 + $0x20] sm:$0xff]
    %v1683 = vld [vmem:[#allocation2 + $0x28] sm:$0xff]
    %v1684 = vld [vmem:[#allocation2 + $0x30] sm:$0xff]
    %v1685 = vld [vmem:[#allocation2 + $0x38] sm:$0xff]
    %v1686 = vld [vmem:[#allocation2 + $0x40] sm:$0xff]
    %v1687 = vld [vmem:[#allocation2 + $0x48] sm:$0xff]
    %v1688 = vld [vmem:[#allocation2 + $0x50] sm:$0xff]
    %v1689 = vld [vmem:[#allocation2 + $0x58] sm:$0xff]
    %v1690 = vld [vmem:[#allocation2 + $0x60] sm:$0xff]
    %v1691 = vld [vmem:[#allocation2 + $0x68] sm:$0xff]
    %v1692 = vld [vmem:[#allocation2 + $0x70] sm:$0xff]
    %v1693 = vld [vmem:[#allocation2 + $0x78] sm:$0xff]
    %v1694 = vld [vmem:[#allocation2 + $0x80] sm:$0xff]
    %v1695 = vld [vmem:[#allocation2 + $0x88] sm:$0xff]
    %v1696 = vld [vmem:[#allocation2 + $0x90] sm:$0xff]
    %v1697 = vld [vmem:[#allocation2 + $0x98] sm:$0xff]
    %v1698 = vld [vmem:[#allocation2 + $0xa0] sm:$0xff]
    %v1699 = vld [vmem:[#allocation2 + $0xa8] sm:$0xff]
    %v1700 = vld [vmem:[#allocation2 + $0xb0] sm:$0xff]
    %v1701 = vld [vmem:[#allocation2 + $0xb8] sm:$0xff]
    %v1702 = vld [vmem:[#allocation2 + $0xc0] sm:$0xff]
    %v1703 = vld [vmem:[#allocation2 + $0xc8] sm:$0xff]
    %v1704 = vld [vmem:[#allocation2 + $0xd0] sm:$0xff]
    %v1705 = vld [vmem:[#allocation2 + $0xd8] sm:$0xff]
    %v1706 = vld [vmem:[#allocation2 + $0xe0] sm:$0xff]
    %v1707 = vld [vmem:[#allocation2 + $0xe8] sm:$0xff]
    %v1708 = vld [vmem:[#allocation2 + $0xf0] sm:$0xff]
    %v1709 = vld [vmem:[#allocation2 + $0xf8] sm:$0xff]
    %v1710 = vld [vmem:[#allocation2 + $0x100] sm:$0xff]
    %v1711 = vld [vmem:[#allocation2 + $0x108] sm:$0xff]
    %v1712 = vld [vmem:[#allocation2 + $0x110] sm:$0xff]
    %v1713 = vld [vmem:[#allocation2 + $0x118] sm:$0xff]
    %v1714 = vld [vmem:[#allocation2 + $0x120] sm:$0xff]
    %v1715 = vld [vmem:[#allocation2 + $0x128] sm:$0xff]
    %v1716 = vld [vmem:[#allocation2 + $0x130] sm:$0xff]
    %v1717 = vld [vmem:[#allocation2 + $0x138] sm:$0xff]
    %v1718 = vld [vmem:[#allocation2 + $0x140] sm:$0xff]
    %v1719 = vld [vmem:[#allocation2 + $0x148] sm:$0xff]
    %v1720 = vld [vmem:[#allocation2 + $0x150] sm:$0xff]
    %v1721 = vld [vmem:[#allocation2 + $0x158] sm:$0xff]
    %v1722 = vld [vmem:[#allocation2 + $0x160] sm:$0xff]
    %v1723 = vld [vmem:[#allocation2 + $0x168] sm:$0xff]
    %v1724 = vld [vmem:[#allocation2 + $0x170] sm:$0xff]
    %v1725 = vld [vmem:[#allocation2 + $0x178] sm:$0xff]
    %v1726 = vld [vmem:[#allocation2 + $0x180] sm:$0xff]
    %v1727 = vld [vmem:[#allocation2 + $0x188] sm:$0xff]
    %v1728 = vld [vmem:[#allocation2 + $0x190] sm:$0xff]
    %v1729 = vld [vmem:[#allocation2 + $0x198] sm:$0xff]
    %v1730 = vld [vmem:[#allocation2 + $0x1a0] sm:$0xff]
    %v1731 = vld [vmem:[#allocation2 + $0x1a8] sm:$0xff]
    %v1732 = vld [vmem:[#allocation2 + $0x1b0] sm:$0xff]
    %v1733 = vld [vmem:[#allocation2 + $0x1b8] sm:$0xff]
    %v1734 = vld [vmem:[#allocation2 + $0x1c0] sm:$0xff]
    %v1735 = vld [vmem:[#allocation2 + $0x1c8] sm:$0xff]
    %v1736 = vld [vmem:[#allocation2 + $0x1d0] sm:$0xff]
    %v1737 = vld [vmem:[#allocation2 + $0x1d8] sm:$0xff]
    %v1738 = vld [vmem:[#allocation2 + $0x1e0] sm:$0xff]
    %v1739 = vld [vmem:[#allocation2 + $0x1e8] sm:$0xff]
    %v1740 = vld [vmem:[#allocation2 + $0x1f0] sm:$0xff]
    %v1741 = vld [vmem:[#allocation2 + $0x1f8] sm:$0xff]
    %v1742 = vld [vmem:[#allocation2 + $0x200] sm:$0xff]
    %v1743 = vld [vmem:[#allocation2 + $0x208] sm:$0xff]
    %v1744 = vld [vmem:[#allocation2 + $0x210] sm:$0xff]
    %v1745 = vld [vmem:[#allocation2 + $0x218] sm:$0xff]
    %v1746 = vld [vmem:[#allocation2 + $0x220] sm:$0xff]
    %v1747 = vld [vmem:[#allocation2 + $0x228] sm:$0xff]
    %v1748 = vld [vmem:[#allocation2 + $0x230] sm:$0xff]
    %v1749 = vld [vmem:[#allocation2 + $0x238] sm:$0xff]
    %v1750 = vld [vmem:[#allocation2 + $0x240] sm:$0xff]
    %v1751 = vld [vmem:[#allocation2 + $0x248] sm:$0xff]
    %v1752 = vld [vmem:[#allocation2 + $0x250] sm:$0xff]
    %v1753 = vld [vmem:[#allocation2 + $0x258] sm:$0xff]
    %v1754 = vld [vmem:[#allocation2 + $0x260] sm:$0xff]
    %v1755 = vld [vmem:[#allocation2 + $0x268] sm:$0xff]
    %v1756 = vld [vmem:[#allocation2 + $0x270] sm:$0xff]
    %v1757 = vld [vmem:[#allocation2 + $0x278] sm:$0xff]
    %v1758 = vld [vmem:[#allocation2 + $0x280] sm:$0xff]
    %v1759 = vld [vmem:[#allocation2 + $0x288] sm:$0xff]
    %v1760 = vld [vmem:[#allocation2 + $0x290] sm:$0xff]
    %v1761 = vld [vmem:[#allocation2 + $0x298] sm:$0xff]
    %v1762 = vld [vmem:[#allocation2 + $0x2a0] sm:$0xff]
    %v1763 = vld [vmem:[#allocation2 + $0x2a8] sm:$0xff]
    %v1764 = vld [vmem:[#allocation2 + $0x2b0] sm:$0xff]
    %v1765 = vld [vmem:[#allocation2 + $0x2b8] sm:$0xff]
    %v1766 = vld [vmem:[#allocation2 + $0x2c0] sm:$0xff]
    %v1767 = vld [vmem:[#allocation2 + $0x2c8] sm:$0xff]
    %v1768 = vld [vmem:[#allocation2 + $0x2d0] sm:$0xff]
    %v1769 = vld [vmem:[#allocation2 + $0x2d8] sm:$0xff]
    %v1770 = vld [vmem:[#allocation2 + $0x2e0] sm:$0xff]
    %v1771 = vld [vmem:[#allocation2 + $0x2e8] sm:$0xff]
    %v1772 = vld [vmem:[#allocation2 + $0x2f0] sm:$0xff]
    %v1773 = vld [vmem:[#allocation2 + $0x2f8] sm:$0xff]
    %v1774 = vld [vmem:[#allocation2 + $0x300] sm:$0xff]
    %v1775 = vld [vmem:[#allocation2 + $0x308] sm:$0xff]
    %v1776 = vld [vmem:[#allocation2 + $0x310] sm:$0xff]
    %v1777 = vld [vmem:[#allocation2 + $0x318] sm:$0xff]
    %v1778 = vld [vmem:[#allocation2 + $0x320] sm:$0xff]
    %v1779 = vld [vmem:[#allocation2 + $0x328] sm:$0xff]
    %v1780 = vld [vmem:[#allocation2 + $0x330] sm:$0xff]
    %v1781 = vld [vmem:[#allocation2 + $0x338] sm:$0xff]
    %v1782 = vld [vmem:[#allocation2 + $0x340] sm:$0xff]
    %v1783 = vld [vmem:[#allocation2 + $0x348] sm:$0xff]
    %v1784 = vld [vmem:[#allocation2 + $0x350] sm:$0xff]
    %v1785 = vld [vmem:[#allocation2 + $0x358] sm:$0xff]
    %v1786 = vld [vmem:[#allocation2 + $0x360] sm:$0xff]
    %v1787 = vld [vmem:[#allocation2 + $0x368] sm:$0xff]
    %v1788 = vld [vmem:[#allocation2 + $0x370] sm:$0xff]
    %v1789 = vld [vmem:[#allocation2 + $0x378] sm:$0xff]
    %v1790 = vld [vmem:[#allocation2 + $0x380] sm:$0xff]
    %v1791 = vld [vmem:[#allocation2 + $0x388] sm:$0xff]
    %v1792 = vld [vmem:[#allocation2 + $0x390] sm:$0xff]
    %v1793 = vld [vmem:[#allocation2 + $0x398] sm:$0xff]
    %v1794 = vld [vmem:[#allocation2 + $0x3a0] sm:$0xff]
    %v1795 = vld [vmem:[#allocation2 + $0x3a8] sm:$0xff]
    %v1796 = vld [vmem:[#allocation2 + $0x3b0] sm:$0xff]
    %v1797 = vld [vmem:[#allocation2 + $0x3b8] sm:$0xff]
    %v1798 = vld [vmem:[#allocation2 + $0x3c0] sm:$0xff]
    %v1799 = vld [vmem:[#allocation2 + $0x3c8] sm:$0xff]
    %v1800 = vld [vmem:[#allocation2 + $0x3d0] sm:$0xff]
    %v1801 = vld [vmem:[#allocation2 + $0x3d8] sm:$0xff]
    %v1802 = vld [vmem:[#allocation2 + $0x3e0] sm:$0xff]
    %v1803 = vld [vmem:[#allocation2 + $0x3e8] sm:$0xff]
    %v1804 = vld [vmem:[#allocation2 + $0x3f0] sm:$0xff]
    %v1805 = vld [vmem:[#allocation2 + $0x3f8] sm:$0xff]
    %v1934 = vunpack.c.l.b16 %v1678
    %v1935 = vunpack.c.h.b16 %v1678
    %v1936 = vunpack.c.l.b16 %v1679
    %v1937 = vunpack.c.h.b16 %v1679
    %v1938 = vunpack.c.l.b16 %v1680
    %v1939 = vunpack.c.h.b16 %v1680
    %v1940 = vunpack.c.l.b16 %v1681
    %v1941 = vunpack.c.h.b16 %v1681
    %v1942 = vunpack.c.l.b16 %v1682
    %v1943 = vunpack.c.h.b16 %v1682
    %v1944 = vunpack.c.l.b16 %v1683
    %v1945 = vunpack.c.h.b16 %v1683
    %v1946 = vunpack.c.l.b16 %v1684
    %v1947 = vunpack.c.h.b16 %v1684
    %v1948 = vunpack.c.l.b16 %v1685
    %v1949 = vunpack.c.h.b16 %v1685
    %v1950 = vunpack.c.l.b16 %v1686
    %v1951 = vunpack.c.h.b16 %v1686
    %v1952 = vunpack.c.l.b16 %v1687
    %v1953 = vunpack.c.h.b16 %v1687
    %v1954 = vunpack.c.l.b16 %v1688
    %v1955 = vunpack.c.h.b16 %v1688
    %v1956 = vunpack.c.l.b16 %v1689
    %v1957 = vunpack.c.h.b16 %v1689
    %v1958 = vunpack.c.l.b16 %v1690
    %v1959 = vunpack.c.h.b16 %v1690
    %v1960 = vunpack.c.l.b16 %v1691
    %v1961 = vunpack.c.h.b16 %v1691
    %v1962 = vunpack.c.l.b16 %v1692
    %v1963 = vunpack.c.h.b16 %v1692
    %v1964 = vunpack.c.l.b16 %v1693
    %v1965 = vunpack.c.h.b16 %v1693
    %v1966 = vunpack.c.l.b16 %v1694
    %v1967 = vunpack.c.h.b16 %v1694
    %v1968 = vunpack.c.l.b16 %v1695
    %v1969 = vunpack.c.h.b16 %v1695
    %v1970 = vunpack.c.l.b16 %v1696
    %v1971 = vunpack.c.h.b16 %v1696
    %v1972 = vunpack.c.l.b16 %v1697
    %v1973 = vunpack.c.h.b16 %v1697
    %v1974 = vunpack.c.l.b16 %v1698
    %v1975 = vunpack.c.h.b16 %v1698
    %v1976 = vunpack.c.l.b16 %v1699
    %v1977 = vunpack.c.h.b16 %v1699
    %v1978 = vunpack.c.l.b16 %v1700
    %v1979 = vunpack.c.h.b16 %v1700
    %v1980 = vunpack.c.l.b16 %v1701
    %v1981 = vunpack.c.h.b16 %v1701
    %v1982 = vunpack.c.l.b16 %v1702
    %v1983 = vunpack.c.h.b16 %v1702
    %v1984 = vunpack.c.l.b16 %v1703
    %v1985 = vunpack.c.h.b16 %v1703
    %v1986 = vunpack.c.l.b16 %v1704
    %v1987 = vunpack.c.h.b16 %v1704
    %v1988 = vunpack.c.l.b16 %v1705
    %v1989 = vunpack.c.h.b16 %v1705
    %v1990 = vunpack.c.l.b16 %v1706
    %v1991 = vunpack.c.h.b16 %v1706
    %v1992 = vunpack.c.l.b16 %v1707
    %v1993 = vunpack.c.h.b16 %v1707
    %v1994 = vunpack.c.l.b16 %v1708
    %v1995 = vunpack.c.h.b16 %v1708
    %v1996 = vunpack.c.l.b16 %v1709
    %v1997 = vunpack.c.h.b16 %v1709
    %v1998 = vunpack.c.l.b16 %v1710
    %v1999 = vunpack.c.h.b16 %v1710
    %v2000 = vunpack.c.l.b16 %v1711
    %v2001 = vunpack.c.h.b16 %v1711
    %v2002 = vunpack.c.l.b16 %v1712
    %v2003 = vunpack.c.h.b16 %v1712
    %v2004 = vunpack.c.l.b16 %v1713
    %v2005 = vunpack.c.h.b16 %v1713
    %v2006 = vunpack.c.l.b16 %v1714
    %v2007 = vunpack.c.h.b16 %v1714
    %v2008 = vunpack.c.l.b16 %v1715
    %v2009 = vunpack.c.h.b16 %v1715
    %v2010 = vunpack.c.l.b16 %v1716
    %v2011 = vunpack.c.h.b16 %v1716
    %v2012 = vunpack.c.l.b16 %v1717
    %v2013 = vunpack.c.h.b16 %v1717
    %v2014 = vunpack.c.l.b16 %v1718
    %v2015 = vunpack.c.h.b16 %v1718
    %v2016 = vunpack.c.l.b16 %v1719
    %v2017 = vunpack.c.h.b16 %v1719
    %v2018 = vunpack.c.l.b16 %v1720
    %v2019 = vunpack.c.h.b16 %v1720
    %v2020 = vunpack.c.l.b16 %v1721
    %v2021 = vunpack.c.h.b16 %v1721
    %v2022 = vunpack.c.l.b16 %v1722
    %v2023 = vunpack.c.h.b16 %v1722
    %v2024 = vunpack.c.l.b16 %v1723
    %v2025 = vunpack.c.h.b16 %v1723
    %v2026 = vunpack.c.l.b16 %v1724
    %v2027 = vunpack.c.h.b16 %v1724
    %v2028 = vunpack.c.l.b16 %v1725
    %v2029 = vunpack.c.h.b16 %v1725
    %v2030 = vunpack.c.l.b16 %v1726
    %v2031 = vunpack.c.h.b16 %v1726
    %v2032 = vunpack.c.l.b16 %v1727
    %v2033 = vunpack.c.h.b16 %v1727
    %v2034 = vunpack.c.l.b16 %v1728
    %v2035 = vunpack.c.h.b16 %v1728
    %v2036 = vunpack.c.l.b16 %v1729
    %v2037 = vunpack.c.h.b16 %v1729
    %v2038 = vunpack.c.l.b16 %v1730
    %v2039 = vunpack.c.h.b16 %v1730
    %v2040 = vunpack.c.l.b16 %v1731
    %v2041 = vunpack.c.h.b16 %v1731
    %v2042 = vunpack.c.l.b16 %v1732
    %v2043 = vunpack.c.h.b16 %v1732
    %v2044 = vunpack.c.l.b16 %v1733
    %v2045 = vunpack.c.h.b16 %v1733
    %v2046 = vunpack.c.l.b16 %v1734
    %v2047 = vunpack.c.h.b16 %v1734
    %v2048 = vunpack.c.l.b16 %v1735
    %v2049 = vunpack.c.h.b16 %v1735
    %v2050 = vunpack.c.l.b16 %v1736
    %v2051 = vunpack.c.h.b16 %v1736
    %v2052 = vunpack.c.l.b16 %v1737
    %v2053 = vunpack.c.h.b16 %v1737
    %v2054 = vunpack.c.l.b16 %v1738
    %v2055 = vunpack.c.h.b16 %v1738
    %v2056 = vunpack.c.l.b16 %v1739
    %v2057 = vunpack.c.h.b16 %v1739
    %v2058 = vunpack.c.l.b16 %v1740
    %v2059 = vunpack.c.h.b16 %v1740
    %v2060 = vunpack.c.l.b16 %v1741
    %v2061 = vunpack.c.h.b16 %v1741
    %v2062 = vunpack.c.l.b16 %v1742
    %v2063 = vunpack.c.h.b16 %v1742
    %v2064 = vunpack.c.l.b16 %v1743
    %v2065 = vunpack.c.h.b16 %v1743
    %v2066 = vunpack.c.l.b16 %v1744
    %v2067 = vunpack.c.h.b16 %v1744
    %v2068 = vunpack.c.l.b16 %v1745
    %v2069 = vunpack.c.h.b16 %v1745
    %v2070 = vunpack.c.l.b16 %v1746
    %v2071 = vunpack.c.h.b16 %v1746
    %v2072 = vunpack.c.l.b16 %v1747
    %v2073 = vunpack.c.h.b16 %v1747
    %v2074 = vunpack.c.l.b16 %v1748
    %v2075 = vunpack.c.h.b16 %v1748
    %v2076 = vunpack.c.l.b16 %v1749
    %v2077 = vunpack.c.h.b16 %v1749
    %v2078 = vunpack.c.l.b16 %v1750
    %v2079 = vunpack.c.h.b16 %v1750
    %v2080 = vunpack.c.l.b16 %v1751
    %v2081 = vunpack.c.h.b16 %v1751
    %v2082 = vunpack.c.l.b16 %v1752
    %v2083 = vunpack.c.h.b16 %v1752
    %v2084 = vunpack.c.l.b16 %v1753
    %v2085 = vunpack.c.h.b16 %v1753
    %v2086 = vunpack.c.l.b16 %v1754
    %v2087 = vunpack.c.h.b16 %v1754
    %v2088 = vunpack.c.l.b16 %v1755
    %v2089 = vunpack.c.h.b16 %v1755
    %v2090 = vunpack.c.l.b16 %v1756
    %v2091 = vunpack.c.h.b16 %v1756
    %v2092 = vunpack.c.l.b16 %v1757
    %v2093 = vunpack.c.h.b16 %v1757
    %v2094 = vunpack.c.l.b16 %v1758
    %v2095 = vunpack.c.h.b16 %v1758
    %v2096 = vunpack.c.l.b16 %v1759
    %v2097 = vunpack.c.h.b16 %v1759
    %v2098 = vunpack.c.l.b16 %v1760
    %v2099 = vunpack.c.h.b16 %v1760
    %v2100 = vunpack.c.l.b16 %v1761
    %v2101 = vunpack.c.h.b16 %v1761
    %v2102 = vunpack.c.l.b16 %v1762
    %v2103 = vunpack.c.h.b16 %v1762
    %v2104 = vunpack.c.l.b16 %v1763
    %v2105 = vunpack.c.h.b16 %v1763
    %v2106 = vunpack.c.l.b16 %v1764
    %v2107 = vunpack.c.h.b16 %v1764
    %v2108 = vunpack.c.l.b16 %v1765
    %v2109 = vunpack.c.h.b16 %v1765
    %v2110 = vunpack.c.l.b16 %v1766
    %v2111 = vunpack.c.h.b16 %v1766
    %v2112 = vunpack.c.l.b16 %v1767
    %v2113 = vunpack.c.h.b16 %v1767
    %v2114 = vunpack.c.l.b16 %v1768
    %v2115 = vunpack.c.h.b16 %v1768
    %v2116 = vunpack.c.l.b16 %v1769
    %v2117 = vunpack.c.h.b16 %v1769
    %v2118 = vunpack.c.l.b16 %v1770
    %v2119 = vunpack.c.h.b16 %v1770
    %v2120 = vunpack.c.l.b16 %v1771
    %v2121 = vunpack.c.h.b16 %v1771
    %v2122 = vunpack.c.l.b16 %v1772
    %v2123 = vunpack.c.h.b16 %v1772
    %v2124 = vunpack.c.l.b16 %v1773
    %v2125 = vunpack.c.h.b16 %v1773
    %v2126 = vunpack.c.l.b16 %v1774
    %v2127 = vunpack.c.h.b16 %v1774
    %v2128 = vunpack.c.l.b16 %v1775
    %v2129 = vunpack.c.h.b16 %v1775
    %v2130 = vunpack.c.l.b16 %v1776
    %v2131 = vunpack.c.h.b16 %v1776
    %v2132 = vunpack.c.l.b16 %v1777
    %v2133 = vunpack.c.h.b16 %v1777
    %v2134 = vunpack.c.l.b16 %v1778
    %v2135 = vunpack.c.h.b16 %v1778
    %v2136 = vunpack.c.l.b16 %v1779
    %v2137 = vunpack.c.h.b16 %v1779
    %v2138 = vunpack.c.l.b16 %v1780
    %v2139 = vunpack.c.h.b16 %v1780
    %v2140 = vunpack.c.l.b16 %v1781
    %v2141 = vunpack.c.h.b16 %v1781
    %v2142 = vunpack.c.l.b16 %v1782
    %v2143 = vunpack.c.h.b16 %v1782
    %v2144 = vunpack.c.l.b16 %v1783
    %v2145 = vunpack.c.h.b16 %v1783
    %v2146 = vunpack.c.l.b16 %v1784
    %v2147 = vunpack.c.h.b16 %v1784
    %v2148 = vunpack.c.l.b16 %v1785
    %v2149 = vunpack.c.h.b16 %v1785
    %v2150 = vunpack.c.l.b16 %v1786
    %v2151 = vunpack.c.h.b16 %v1786
    %v2152 = vunpack.c.l.b16 %v1787
    %v2153 = vunpack.c.h.b16 %v1787
    %v2154 = vunpack.c.l.b16 %v1788
    %v2155 = vunpack.c.h.b16 %v1788
    %v2156 = vunpack.c.l.b16 %v1789
    %v2157 = vunpack.c.h.b16 %v1789
    %v2158 = vunpack.c.l.b16 %v1790
    %v2159 = vunpack.c.h.b16 %v1790
    %v2160 = vunpack.c.l.b16 %v1791
    %v2161 = vunpack.c.h.b16 %v1791
    %v2162 = vunpack.c.l.b16 %v1792
    %v2163 = vunpack.c.h.b16 %v1792
    %v2164 = vunpack.c.l.b16 %v1793
    %v2165 = vunpack.c.h.b16 %v1793
    %v2166 = vunpack.c.l.b16 %v1794
    %v2167 = vunpack.c.h.b16 %v1794
    %v2168 = vunpack.c.l.b16 %v1795
    %v2169 = vunpack.c.h.b16 %v1795
    %v2170 = vunpack.c.l.b16 %v1796
    %v2171 = vunpack.c.h.b16 %v1796
    %v2172 = vunpack.c.l.b16 %v1797
    %v2173 = vunpack.c.h.b16 %v1797
    %v2174 = vunpack.c.l.b16 %v1798
    %v2175 = vunpack.c.h.b16 %v1798
    %v2176 = vunpack.c.l.b16 %v1799
    %v2177 = vunpack.c.h.b16 %v1799
    %v2178 = vunpack.c.l.b16 %v1800
    %v2179 = vunpack.c.h.b16 %v1800
    %v2180 = vunpack.c.l.b16 %v1801
    %v2181 = vunpack.c.h.b16 %v1801
    %v2182 = vunpack.c.l.b16 %v1802
    %v2183 = vunpack.c.h.b16 %v1802
    %v2184 = vunpack.c.l.b16 %v1803
    %v2185 = vunpack.c.h.b16 %v1803
    %v2186 = vunpack.c.l.b16 %v1804
    %v2187 = vunpack.c.h.b16 %v1804
    %v2188 = vunpack.c.l.b16 %v1805
    %v2189 = vunpack.c.h.b16 %v1805
    %v2190 = vpack.c.b16 %v1942, %v1934
    %v2191 = vpack.c.b16 %v1943, %v1935
    %v2192 = vpack.c.b16 %v1944, %v1936
    %v2193 = vpack.c.b16 %v1945, %v1937
    %v2194 = vpack.c.b16 %v1946, %v1938
    %v2195 = vpack.c.b16 %v1947, %v1939
    %v2196 = vpack.c.b16 %v1948, %v1940
    %v2197 = vpack.c.b16 %v1949, %v1941
    %v2198 = vpack.c.b16 %v1958, %v1950
    %v2199 = vpack.c.b16 %v1959, %v1951
    %v2200 = vpack.c.b16 %v1960, %v1952
    %v2201 = vpack.c.b16 %v1961, %v1953
    %v2202 = vpack.c.b16 %v1962, %v1954
    %v2203 = vpack.c.b16 %v1963, %v1955
    %v2204 = vpack.c.b16 %v1964, %v1956
    %v2205 = vpack.c.b16 %v1965, %v1957
    %v2206 = vpack.c.b16 %v1974, %v1966
    %v2207 = vpack.c.b16 %v1975, %v1967
    %v2208 = vpack.c.b16 %v1976, %v1968
    %v2209 = vpack.c.b16 %v1977, %v1969
    %v2210 = vpack.c.b16 %v1978, %v1970
    %v2211 = vpack.c.b16 %v1979, %v1971
    %v2212 = vpack.c.b16 %v1980, %v1972
    %v2213 = vpack.c.b16 %v1981, %v1973
    %v2214 = vpack.c.b16 %v1990, %v1982
    %v2215 = vpack.c.b16 %v1991, %v1983
    %v2216 = vpack.c.b16 %v1992, %v1984
    %v2217 = vpack.c.b16 %v1993, %v1985
    %v2218 = vpack.c.b16 %v1994, %v1986
    %v2219 = vpack.c.b16 %v1995, %v1987
    %v2220 = vpack.c.b16 %v1996, %v1988
    %v2221 = vpack.c.b16 %v1997, %v1989
    %v2222 = vpack.c.b16 %v2006, %v1998
    %v2223 = vpack.c.b16 %v2007, %v1999
    %v2224 = vpack.c.b16 %v2008, %v2000
    %v2225 = vpack.c.b16 %v2009, %v2001
    %v2226 = vpack.c.b16 %v2010, %v2002
    %v2227 = vpack.c.b16 %v2011, %v2003
    %v2228 = vpack.c.b16 %v2012, %v2004
    %v2229 = vpack.c.b16 %v2013, %v2005
    %v2230 = vpack.c.b16 %v2022, %v2014
    %v2231 = vpack.c.b16 %v2023, %v2015
    %v2232 = vpack.c.b16 %v2024, %v2016
    %v2233 = vpack.c.b16 %v2025, %v2017
    %v2234 = vpack.c.b16 %v2026, %v2018
    %v2235 = vpack.c.b16 %v2027, %v2019
    %v2236 = vpack.c.b16 %v2028, %v2020
    %v2237 = vpack.c.b16 %v2029, %v2021
    %v2238 = vpack.c.b16 %v2038, %v2030
    %v2239 = vpack.c.b16 %v2039, %v2031
    %v2240 = vpack.c.b16 %v2040, %v2032
    %v2241 = vpack.c.b16 %v2041, %v2033
    %v2242 = vpack.c.b16 %v2042, %v2034
    %v2243 = vpack.c.b16 %v2043, %v2035
    %v2244 = vpack.c.b16 %v2044, %v2036
    %v2245 = vpack.c.b16 %v2045, %v2037
    %v2246 = vpack.c.b16 %v2054, %v2046
    %v2247 = vpack.c.b16 %v2055, %v2047
    %v2248 = vpack.c.b16 %v2056, %v2048
    %v2249 = vpack.c.b16 %v2057, %v2049
    %v2250 = vpack.c.b16 %v2058, %v2050
    %v2251 = vpack.c.b16 %v2059, %v2051
    %v2252 = vpack.c.b16 %v2060, %v2052
    %v2253 = vpack.c.b16 %v2061, %v2053
    %v2254 = vpack.c.b16 %v2070, %v2062
    %v2255 = vpack.c.b16 %v2071, %v2063
    %v2256 = vpack.c.b16 %v2072, %v2064
    %v2257 = vpack.c.b16 %v2073, %v2065
    %v2258 = vpack.c.b16 %v2074, %v2066
    %v2259 = vpack.c.b16 %v2075, %v2067
    %v2260 = vpack.c.b16 %v2076, %v2068
    %v2261 = vpack.c.b16 %v2077, %v2069
    %v2262 = vpack.c.b16 %v2086, %v2078
    %v2263 = vpack.c.b16 %v2087, %v2079
    %v2264 = vpack.c.b16 %v2088, %v2080
    %v2265 = vpack.c.b16 %v2089, %v2081
    %v2266 = vpack.c.b16 %v2090, %v2082
    %v2267 = vpack.c.b16 %v2091, %v2083
    %v2268 = vpack.c.b16 %v2092, %v2084
    %v2269 = vpack.c.b16 %v2093, %v2085
    %v2270 = vpack.c.b16 %v2102, %v2094
    %v2271 = vpack.c.b16 %v2103, %v2095
    %v2272 = vpack.c.b16 %v2104, %v2096
    %v2273 = vpack.c.b16 %v2105, %v2097
    %v2274 = vpack.c.b16 %v2106, %v2098
    %v2275 = vpack.c.b16 %v2107, %v2099
    %v2276 = vpack.c.b16 %v2108, %v2100
    %v2277 = vpack.c.b16 %v2109, %v2101
    %v2278 = vpack.c.b16 %v2118, %v2110
    %v2279 = vpack.c.b16 %v2119, %v2111
    %v2280 = vpack.c.b16 %v2120, %v2112
    %v2281 = vpack.c.b16 %v2121, %v2113
    %v2282 = vpack.c.b16 %v2122, %v2114
    %v2283 = vpack.c.b16 %v2123, %v2115
    %v2284 = vpack.c.b16 %v2124, %v2116
    %v2285 = vpack.c.b16 %v2125, %v2117
    %v2286 = vpack.c.b16 %v2134, %v2126
    %v2287 = vpack.c.b16 %v2135, %v2127
    %v2288 = vpack.c.b16 %v2136, %v2128
    %v2289 = vpack.c.b16 %v2137, %v2129
    %v2290 = vpack.c.b16 %v2138, %v2130
    %v2291 = vpack.c.b16 %v2139, %v2131
    %v2292 = vpack.c.b16 %v2140, %v2132
    %v2293 = vpack.c.b16 %v2141, %v2133
    %v2294 = vpack.c.b16 %v2150, %v2142
    %v2295 = vpack.c.b16 %v2151, %v2143
    %v2296 = vpack.c.b16 %v2152, %v2144
    %v2297 = vpack.c.b16 %v2153, %v2145
    %v2298 = vpack.c.b16 %v2154, %v2146
    %v2299 = vpack.c.b16 %v2155, %v2147
    %v2300 = vpack.c.b16 %v2156, %v2148
    %v2301 = vpack.c.b16 %v2157, %v2149
    %v2302 = vpack.c.b16 %v2166, %v2158
    %v2303 = vpack.c.b16 %v2167, %v2159
    %v2304 = vpack.c.b16 %v2168, %v2160
    %v2305 = vpack.c.b16 %v2169, %v2161
    %v2306 = vpack.c.b16 %v2170, %v2162
    %v2307 = vpack.c.b16 %v2171, %v2163
    %v2308 = vpack.c.b16 %v2172, %v2164
    %v2309 = vpack.c.b16 %v2173, %v2165
    %v2310 = vpack.c.b16 %v2182, %v2174
    %v2311 = vpack.c.b16 %v2183, %v2175
    %v2312 = vpack.c.b16 %v2184, %v2176
    %v2313 = vpack.c.b16 %v2185, %v2177
    %v2314 = vpack.c.b16 %v2186, %v2178
    %v2315 = vpack.c.b16 %v2187, %v2179
    %v2316 = vpack.c.b16 %v2188, %v2180
    %v2317 = vpack.c.b16 %v2189, %v2181
    %2446 = vmatpush.bf16.msra.mxu0 %v2246
    %2447 = vmatpush.bf16.msra.mxu0 %v2238
    %2448 = vmatpush.bf16.msra.mxu0 %v2230
    %2449 = vmatpush.bf16.msra.mxu0 %v2222
    %2450 = vmatpush.bf16.msra.mxu0 %v2214
    %2451 = vmatpush.bf16.msra.mxu0 %v2206
    %2452 = vmatpush.bf16.msra.mxu0 %v2198
    %2453 = vmatpush.bf16.msra.mxu0 %v2190
    %2454 = vmatmul.bf16.gmra.mxu0 %v1676
    %v2455 = vpop.f32.mrf.mxu0
    %v2456 = vadd.f32 0.0, %v2455
    %v2457 = vpop.f32.mrf.mxu0
    %2458 = vdwg.mxu0
    %2459 = vmatpush.bf16.msra.mxu0 %v2310
    %2460 = vmatpush.bf16.msra.mxu0 %v2302
    %2461 = vmatpush.bf16.msra.mxu0 %v2294
    %2462 = vmatpush.bf16.msra.mxu0 %v2286
    %2463 = vmatpush.bf16.msra.mxu0 %v2278
    %2464 = vmatpush.bf16.msra.mxu0 %v2270
    %2465 = vmatpush.bf16.msra.mxu0 %v2262
    %2466 = vmatpush.bf16.msra.mxu0 %v2254
    %2467 = vmatmul.bf16.gmra.mxu0 %v1677
    %v2468 = vpop.f32.mrf.mxu0
    %v2469 = vadd.f32 %v2456, %v2468
    %v2470 = vpop.f32.mrf.mxu0
    %2471 = vdwg.mxu0
    %2472 = vmatpush.bf16.msra.mxu0 %v2247
    %2473 = vmatpush.bf16.msra.mxu0 %v2239
    %2474 = vmatpush.bf16.msra.mxu0 %v2231
    %2475 = vmatpush.bf16.msra.mxu0 %v2223
    %2476 = vmatpush.bf16.msra.mxu0 %v2215
    %2477 = vmatpush.bf16.msra.mxu0 %v2207
    %2478 = vmatpush.bf16.msra.mxu0 %v2199
    %2479 = vmatpush.bf16.msra.mxu0 %v2191
    %2480 = vmatmul.bf16.gmra.mxu0 %v1676
    %v2481 = vpop.f32.mrf.mxu0
    %v2482 = vadd.f32 0.0, %v2481
    %v2483 = vpop.f32.mrf.mxu0
    %2484 = vdwg.mxu0
    %2485 = vmatpush.bf16.msra.mxu0 %v2311
    %2486 = vmatpush.bf16.msra.mxu0 %v2303
    %2487 = vmatpush.bf16.msra.mxu0 %v2295
    %2488 = vmatpush.bf16.msra.mxu0 %v2287
    %2489 = vmatpush.bf16.msra.mxu0 %v2279
    %2490 = vmatpush.bf16.msra.mxu0 %v2271
    %2491 = vmatpush.bf16.msra.mxu0 %v2263
    %2492 = vmatpush.bf16.msra.mxu0 %v2255
    %2493 = vmatmul.bf16.gmra.mxu0 %v1677
    %v2494 = vpop.f32.mrf.mxu0
    %v2495 = vadd.f32 %v2482, %v2494
    %v2496 = vpop.f32.mrf.mxu0
    %2497 = vdwg.mxu0
    %2498 = vmatpush.bf16.msra.mxu0 %v2248
    %2499 = vmatpush.bf16.msra.mxu0 %v2240
    %2500 = vmatpush.bf16.msra.mxu0 %v2232
    %2501 = vmatpush.bf16.msra.mxu0 %v2224
    %2502 = vmatpush.bf16.msra.mxu0 %v2216
    %2503 = vmatpush.bf16.msra.mxu0 %v2208
    %2504 = vmatpush.bf16.msra.mxu0 %v2200
    %2505 = vmatpush.bf16.msra.mxu0 %v2192
    %2506 = vmatmul.bf16.gmra.mxu0 %v1676
    %v2507 = vpop.f32.mrf.mxu0
    %v2508 = vadd.f32 0.0, %v2507
    %v2509 = vpop.f32.mrf.mxu0
    %2510 = vdwg.mxu0
    %2511 = vmatpush.bf16.msra.mxu0 %v2312
    %2512 = vmatpush.bf16.msra.mxu0 %v2304
    %2513 = vmatpush.bf16.msra.mxu0 %v2296
    %2514 = vmatpush.bf16.msra.mxu0 %v2288
    %2515 = vmatpush.bf16.msra.mxu0 %v2280
    %2516 = vmatpush.bf16.msra.mxu0 %v2272
    %2517 = vmatpush.bf16.msra.mxu0 %v2264
    %2518 = vmatpush.bf16.msra.mxu0 %v2256
    %2519 = vmatmul.bf16.gmra.mxu0 %v1677
    %v2520 = vpop.f32.mrf.mxu0
    %v2521 = vadd.f32 %v2508, %v2520
    %v2522 = vpop.f32.mrf.mxu0
    %2523 = vdwg.mxu0
    %2524 = vmatpush.bf16.msra.mxu0 %v2249
    %2525 = vmatpush.bf16.msra.mxu0 %v2241
    %2526 = vmatpush.bf16.msra.mxu0 %v2233
    %2527 = vmatpush.bf16.msra.mxu0 %v2225
    %2528 = vmatpush.bf16.msra.mxu0 %v2217
    %2529 = vmatpush.bf16.msra.mxu0 %v2209
    %2530 = vmatpush.bf16.msra.mxu0 %v2201
    %2531 = vmatpush.bf16.msra.mxu0 %v2193
    %2532 = vmatmul.bf16.gmra.mxu0 %v1676
    %v2533 = vpop.f32.mrf.mxu0
    %v2534 = vadd.f32 0.0, %v2533
    %v2535 = vpop.f32.mrf.mxu0
    %2536 = vdwg.mxu0
    %2537 = vmatpush.bf16.msra.mxu0 %v2313
    %2538 = vmatpush.bf16.msra.mxu0 %v2305
    %2539 = vmatpush.bf16.msra.mxu0 %v2297
    %2540 = vmatpush.bf16.msra.mxu0 %v2289
    %2541 = vmatpush.bf16.msra.mxu0 %v2281
    %2542 = vmatpush.bf16.msra.mxu0 %v2273
    %2543 = vmatpush.bf16.msra.mxu0 %v2265
    %2544 = vmatpush.bf16.msra.mxu0 %v2257
    %2545 = vmatmul.bf16.gmra.mxu0 %v1677
    %v2546 = vpop.f32.mrf.mxu0
    %v2547 = vadd.f32 %v2534, %v2546
    %v2548 = vpop.f32.mrf.mxu0
    %2549 = vdwg.mxu0
    %2550 = vmatpush.bf16.msra.mxu0 %v2250
    %2551 = vmatpush.bf16.msra.mxu0 %v2242
    %2552 = vmatpush.bf16.msra.mxu0 %v2234
    %2553 = vmatpush.bf16.msra.mxu0 %v2226
    %2554 = vmatpush.bf16.msra.mxu0 %v2218
    %2555 = vmatpush.bf16.msra.mxu0 %v2210
    %2556 = vmatpush.bf16.msra.mxu0 %v2202
    %2557 = vmatpush.bf16.msra.mxu0 %v2194
    %2558 = vmatmul.bf16.gmra.mxu0 %v1676
    %v2559 = vpop.f32.mrf.mxu0
    %v2560 = vadd.f32 0.0, %v2559
    %v2561 = vpop.f32.mrf.mxu0
    %2562 = vdwg.mxu0
    %2563 = vmatpush.bf16.msra.mxu0 %v2314
    %2564 = vmatpush.bf16.msra.mxu0 %v2306
    %2565 = vmatpush.bf16.msra.mxu0 %v2298
    %2566 = vmatpush.bf16.msra.mxu0 %v2290
    %2567 = vmatpush.bf16.msra.mxu0 %v2282
    %2568 = vmatpush.bf16.msra.mxu0 %v2274
    %2569 = vmatpush.bf16.msra.mxu0 %v2266
    %2570 = vmatpush.bf16.msra.mxu0 %v2258
    %2571 = vmatmul.bf16.gmra.mxu0 %v1677
    %v2572 = vpop.f32.mrf.mxu0
    %v2573 = vadd.f32 %v2560, %v2572
    %v2574 = vpop.f32.mrf.mxu0
    %2575 = vdwg.mxu0
    %2576 = vmatpush.bf16.msra.mxu0 %v2251
    %2577 = vmatpush.bf16.msra.mxu0 %v2243
    %2578 = vmatpush.bf16.msra.mxu0 %v2235
    %2579 = vmatpush.bf16.msra.mxu0 %v2227
    %2580 = vmatpush.bf16.msra.mxu0 %v2219
    %2581 = vmatpush.bf16.msra.mxu0 %v2211
    %2582 = vmatpush.bf16.msra.mxu0 %v2203
    %2583 = vmatpush.bf16.msra.mxu0 %v2195
    %2584 = vmatmul.bf16.gmra.mxu0 %v1676
    %v2585 = vpop.f32.mrf.mxu0
    %v2586 = vadd.f32 0.0, %v2585
    %v2587 = vpop.f32.mrf.mxu0
    %2588 = vdwg.mxu0
    %2589 = vmatpush.bf16.msra.mxu0 %v2315
    %2590 = vmatpush.bf16.msra.mxu0 %v2307
    %2591 = vmatpush.bf16.msra.mxu0 %v2299
    %2592 = vmatpush.bf16.msra.mxu0 %v2291
    %2593 = vmatpush.bf16.msra.mxu0 %v2283
    %2594 = vmatpush.bf16.msra.mxu0 %v2275
    %2595 = vmatpush.bf16.msra.mxu0 %v2267
    %2596 = vmatpush.bf16.msra.mxu0 %v2259
    %2597 = vmatmul.bf16.gmra.mxu0 %v1677
    %v2598 = vpop.f32.mrf.mxu0
    %v2599 = vadd.f32 %v2586, %v2598
    %v2600 = vpop.f32.mrf.mxu0
    %2601 = vdwg.mxu0
    %2602 = vmatpush.bf16.msra.mxu0 %v2252
    %2603 = vmatpush.bf16.msra.mxu0 %v2244
    %2604 = vmatpush.bf16.msra.mxu0 %v2236
    %2605 = vmatpush.bf16.msra.mxu0 %v2228
    %2606 = vmatpush.bf16.msra.mxu0 %v2220
    %2607 = vmatpush.bf16.msra.mxu0 %v2212
    %2608 = vmatpush.bf16.msra.mxu0 %v2204
    %2609 = vmatpush.bf16.msra.mxu0 %v2196
    %2610 = vmatmul.bf16.gmra.mxu0 %v1676
    %v2611 = vpop.f32.mrf.mxu0
    %v2612 = vadd.f32 0.0, %v2611
    %v2613 = vpop.f32.mrf.mxu0
    %2614 = vdwg.mxu0
    %2615 = vmatpush.bf16.msra.mxu0 %v2316
    %2616 = vmatpush.bf16.msra.mxu0 %v2308
    %2617 = vmatpush.bf16.msra.mxu0 %v2300
    %2618 = vmatpush.bf16.msra.mxu0 %v2292
    %2619 = vmatpush.bf16.msra.mxu0 %v2284
    %2620 = vmatpush.bf16.msra.mxu0 %v2276
    %2621 = vmatpush.bf16.msra.mxu0 %v2268
    %2622 = vmatpush.bf16.msra.mxu0 %v2260
    %2623 = vmatmul.bf16.gmra.mxu0 %v1677
    %v2624 = vpop.f32.mrf.mxu0
    %v2625 = vadd.f32 %v2612, %v2624
    %v2626 = vpop.f32.mrf.mxu0
    %2627 = vdwg.mxu0
    %2628 = vmatpush.bf16.msra.mxu0 %v2253
    %2629 = vmatpush.bf16.msra.mxu0 %v2245
    %2630 = vmatpush.bf16.msra.mxu0 %v2237
    %2631 = vmatpush.bf16.msra.mxu0 %v2229
    %2632 = vmatpush.bf16.msra.mxu0 %v2221
    %2633 = vmatpush.bf16.msra.mxu0 %v2213
    %2634 = vmatpush.bf16.msra.mxu0 %v2205
    %2635 = vmatpush.bf16.msra.mxu0 %v2197
    %2636 = vmatmul.bf16.gmra.mxu0 %v1676
    %v2637 = vpop.f32.mrf.mxu0
    %v2638 = vadd.f32 0.0, %v2637
    %v2639 = vpop.f32.mrf.mxu0
    %2640 = vdwg.mxu0
    %2641 = vmatpush.bf16.msra.mxu0 %v2317
    %2642 = vmatpush.bf16.msra.mxu0 %v2309
    %2643 = vmatpush.bf16.msra.mxu0 %v2301
    %2644 = vmatpush.bf16.msra.mxu0 %v2293
    %2645 = vmatpush.bf16.msra.mxu0 %v2285
    %2646 = vmatpush.bf16.msra.mxu0 %v2277
    %2647 = vmatpush.bf16.msra.mxu0 %v2269
    %2648 = vmatpush.bf16.msra.mxu0 %v2261
    %2649 = vmatmul.bf16.gmra.mxu0 %v1677
    %v2650 = vpop.f32.mrf.mxu0
    %v2651 = vadd.f32 %v2638, %v2650
    %v2652 = vpop.f32.mrf.mxu0
    %2653 = vdwg.mxu0
    %v2654 = vadd.f32 %v2573, %v1597
    %v2655 = vadd.f32 %v2599, %v1598
    %v2656 = vadd.f32 %v2625, %v1599
    %v2657 = vadd.f32 %v2651, %v1600
    %v2658 = vxor.u32 %v2654, 2147483648
    %v2659 = vxor.u32 %v2655, 2147483648
    %v2660 = vxor.u32 %v2656, 2147483648
    %v2661 = vmul.f32 %v2658, 1.442695
    %v2662 = vpow.pop %v2661
    %v2663 = vmul.f32 %v2659, 1.442695
    %v2664 = vpow.pop %v2663
    %v2665 = vmul.f32 %v2660, 1.442695
    %v2666 = vpow.pop %v2665
    %v2667 = vadd.f32 %v2662, 1.0
    %v2668 = vadd.f32 %v2664, 1.0
    %v2669 = vadd.f32 %v2666, 1.0
    %v2670 = vrcp.pop %v2667
    %v2671 = vmul.f32 %v2667, %v2670
    %v2672 = vsub.f32 1.0, %v2671
    %v2673 = vmul.f32 %v2670, %v2672
    %v2674 = vadd.f32 %v2670, %v2673
    %vm2675 = vweird.f32 %v2667
    %vm2676 = vweird.f32 %v2670
    %vm2677 = vmor %vm2675, %vm2676
    %v2678 = vsel %vm2677, %v2670, %v2674
    %v2679 = vand.u32 2147483647, %v2667
    %vm2680 = vcmp.eq.f32.partialorder %v2679, 8.507059e+37
    %v2681 = vand.u32 %v2667, 2147483648
    %v2682 = vor.u32 1.1754944e-38, %v2681
    %v2683 = vsel %vm2680, %v2682, %v2678
    %v2684 = vmul.f32 1.0, %v2683
    %v2685 = vrcp.pop %v2668
    %v2686 = vmul.f32 %v2668, %v2685
    %v2687 = vsub.f32 1.0, %v2686
    %v2688 = vmul.f32 %v2685, %v2687
    %v2689 = vadd.f32 %v2685, %v2688
    %vm2690 = vweird.f32 %v2668
    %vm2691 = vweird.f32 %v2685
    %vm2692 = vmor %vm2690, %vm2691
    %v2693 = vsel %vm2692, %v2685, %v2689
    %v2694 = vand.u32 2147483647, %v2668
    %vm2695 = vcmp.eq.f32.partialorder %v2694, 8.507059e+37
    %v2696 = vand.u32 %v2668, 2147483648
    %v2697 = vor.u32 1.1754944e-38, %v2696
    %v2698 = vsel %vm2695, %v2697, %v2693
    %v2699 = vmul.f32 1.0, %v2698
    %v2700 = vrcp.pop %v2669
    %v2701 = vmul.f32 %v2669, %v2700
    %v2702 = vsub.f32 1.0, %v2701
    %v2703 = vmul.f32 %v2700, %v2702
    %v2704 = vadd.f32 %v2700, %v2703
    %vm2705 = vweird.f32 %v2669
    %vm2706 = vweird.f32 %v2700
    %vm2707 = vmor %vm2705, %vm2706
    %v2708 = vsel %vm2707, %v2700, %v2704
    %v2709 = vand.u32 2147483647, %v2669
    %vm2710 = vcmp.eq.f32.partialorder %v2709, 8.507059e+37
    %v2711 = vand.u32 %v2669, 2147483648
    %v2712 = vor.u32 1.1754944e-38, %v2711
    %v2713 = vsel %vm2710, %v2712, %v2708
    %v2714 = vmul.f32 1.0, %v2713
    %v2715 = vtanh.pop %v2657
    %v2716 = vmul.f32 %v2699, 0.0
    %v2717 = vmul.f32 %v2684, %v2715
    %v2718 = vadd.f32 %v2716, %v2717
    %v2719 = vtanh.pop %v2718
    %v2720 = vmul.f32 %v2714, %v2719
    %v2721 = vld [vmem:[#allocation4 + $0x20] sm:$0xff]
    %v2722 = vld [vmem:[#allocation4 + $0x28] sm:$0xff]
    %v2723 = vld [vmem:[#allocation4 + $0x30] sm:$0xff]
    %v2724 = vld [vmem:[#allocation4 + $0x38] sm:$0xff]
    %v2725 = vadd.f32 %v2721, %v2469
    %v2726 = vadd.f32 %v2722, %v2495
    %v2727 = vadd.f32 %v2723, %v2521
    %v2728 = vadd.f32 %v2724, %v2547
    %v2729 = vxor.u32 %v2725, 2147483648
    %v2730 = vxor.u32 %v2726, 2147483648
    %v2731 = vxor.u32 %v2727, 2147483648
    %v2732 = vmul.f32 %v2729, 1.442695
    %v2733 = vpow.pop %v2732
    %v2734 = vmul.f32 %v2730, 1.442695
    %v2735 = vpow.pop %v2734
    %v2736 = vmul.f32 %v2731, 1.442695
    %v2737 = vpow.pop %v2736
    %v2738 = vadd.f32 %v2733, 1.0
    %v2739 = vadd.f32 %v2735, 1.0
    %v2740 = vadd.f32 %v2737, 1.0
    %v2741 = vrcp.pop %v2738
    %v2742 = vmul.f32 %v2738, %v2741
    %v2743 = vsub.f32 1.0, %v2742
    %v2744 = vmul.f32 %v2741, %v2743
    %v2745 = vadd.f32 %v2741, %v2744
    %vm2746 = vweird.f32 %v2738
    %vm2747 = vweird.f32 %v2741
    %vm2748 = vmor %vm2746, %vm2747
    %v2749 = vsel %vm2748, %v2741, %v2745
    %v2750 = vand.u32 2147483647, %v2738
    %vm2751 = vcmp.eq.f32.partialorder %v2750, 8.507059e+37
    %v2752 = vand.u32 %v2738, 2147483648
    %v2753 = vor.u32 1.1754944e-38, %v2752
    %v2754 = vsel %vm2751, %v2753, %v2749
    %v2755 = vmul.f32 1.0, %v2754
    %v2756 = vrcp.pop %v2739
    %v2757 = vmul.f32 %v2739, %v2756
    %v2758 = vsub.f32 1.0, %v2757
    %v2759 = vmul.f32 %v2756, %v2758
    %v2760 = vadd.f32 %v2756, %v2759
    %vm2761 = vweird.f32 %v2739
    %vm2762 = vweird.f32 %v2756
    %vm2763 = vmor %vm2761, %vm2762
    %v2764 = vsel %vm2763, %v2756, %v2760
    %v2765 = vand.u32 2147483647, %v2739
    %vm2766 = vcmp.eq.f32.partialorder %v2765, 8.507059e+37
    %v2767 = vand.u32 %v2739, 2147483648
    %v2768 = vor.u32 1.1754944e-38, %v2767
    %v2769 = vsel %vm2766, %v2768, %v2764
    %v2770 = vmul.f32 1.0, %v2769
    %v2771 = vrcp.pop %v2740
    %v2772 = vmul.f32 %v2740, %v2771
    %v2773 = vsub.f32 1.0, %v2772
    %v2774 = vmul.f32 %v2771, %v2773
    %v2775 = vadd.f32 %v2771, %v2774
    %vm2776 = vweird.f32 %v2740
    %vm2777 = vweird.f32 %v2771
    %vm2778 = vmor %vm2776, %vm2777
    %v2779 = vsel %vm2778, %v2771, %v2775
    %v2780 = vand.u32 2147483647, %v2740
    %vm2781 = vcmp.eq.f32.partialorder %v2780, 8.507059e+37
    %v2782 = vand.u32 %v2740, 2147483648
    %v2783 = vor.u32 1.1754944e-38, %v2782
    %v2784 = vsel %vm2781, %v2783, %v2779
    %v2785 = vmul.f32 1.0, %v2784
    %v2786 = vtanh.pop %v2728
    %v2787 = vmul.f32 %v2770, %v1669
    %v2788 = vmul.f32 %v2755, %v2786
    %v2789 = vadd.f32 %v2787, %v2788
    %v2790 = vtanh.pop %v2789
    %v2791 = vmul.f32 %v2785, %v2790
    %v2792 = vpack.c.bf16 %v2791, %v2791
    %v2793 = vpack.c.bf16 %v2720, %v2720
    %2794 = vmatpush.bf16.msra.mxu0 %v2246
    %2795 = vmatpush.bf16.msra.mxu0 %v2238
    %2796 = vmatpush.bf16.msra.mxu0 %v2230
    %2797 = vmatpush.bf16.msra.mxu0 %v2222
    %2798 = vmatpush.bf16.msra.mxu0 %v2214
    %2799 = vmatpush.bf16.msra.mxu0 %v2206
    %2800 = vmatpush.bf16.msra.mxu0 %v2198
    %2801 = vmatpush.bf16.msra.mxu0 %v2190
    %2802 = vmatmul.bf16.gmra.mxu0 %v2792
    %v2803 = vpop.f32.mrf.mxu0
    %v2804 = vadd.f32 0.0, %v2803
    %v2805 = vpop.f32.mrf.mxu0
    %2806 = vdwg.mxu0
    %2807 = vmatpush.bf16.msra.mxu0 %v2310
    %2808 = vmatpush.bf16.msra.mxu0 %v2302
    %2809 = vmatpush.bf16.msra.mxu0 %v2294
    %2810 = vmatpush.bf16.msra.mxu0 %v2286
    %2811 = vmatpush.bf16.msra.mxu0 %v2278
    %2812 = vmatpush.bf16.msra.mxu0 %v2270
    %2813 = vmatpush.bf16.msra.mxu0 %v2262
    %2814 = vmatpush.bf16.msra.mxu0 %v2254
    %2815 = vmatmul.bf16.gmra.mxu0 %v2793
    %v2816 = vpop.f32.mrf.mxu0
    %v2817 = vadd.f32 %v2804, %v2816
    %v2818 = vpop.f32.mrf.mxu0
    %2819 = vdwg.mxu0
    %2820 = vmatpush.bf16.msra.mxu0 %v2247
    %2821 = vmatpush.bf16.msra.mxu0 %v2239
    %2822 = vmatpush.bf16.msra.mxu0 %v2231
    %2823 = vmatpush.bf16.msra.mxu0 %v2223
    %2824 = vmatpush.bf16.msra.mxu0 %v2215
    %2825 = vmatpush.bf16.msra.mxu0 %v2207
    %2826 = vmatpush.bf16.msra.mxu0 %v2199
    %2827 = vmatpush.bf16.msra.mxu0 %v2191
    %2828 = vmatmul.bf16.gmra.mxu0 %v2792
    %v2829 = vpop.f32.mrf.mxu0
    %v2830 = vadd.f32 0.0, %v2829
    %v2831 = vpop.f32.mrf.mxu0
    %2832 = vdwg.mxu0
    %2833 = vmatpush.bf16.msra.mxu0 %v2311
    %2834 = vmatpush.bf16.msra.mxu0 %v2303
    %2835 = vmatpush.bf16.msra.mxu0 %v2295
    %2836 = vmatpush.bf16.msra.mxu0 %v2287
    %2837 = vmatpush.bf16.msra.mxu0 %v2279
    %2838 = vmatpush.bf16.msra.mxu0 %v2271
    %2839 = vmatpush.bf16.msra.mxu0 %v2263
    %2840 = vmatpush.bf16.msra.mxu0 %v2255
    %2841 = vmatmul.bf16.gmra.mxu0 %v2793
    %v2842 = vpop.f32.mrf.mxu0
    %v2843 = vadd.f32 %v2830, %v2842
    %v2844 = vpop.f32.mrf.mxu0
    %2845 = vdwg.mxu0
    %2846 = vmatpush.bf16.msra.mxu0 %v2248
    %2847 = vmatpush.bf16.msra.mxu0 %v2240
    %2848 = vmatpush.bf16.msra.mxu0 %v2232
    %2849 = vmatpush.bf16.msra.mxu0 %v2224
    %2850 = vmatpush.bf16.msra.mxu0 %v2216
    %2851 = vmatpush.bf16.msra.mxu0 %v2208
    %2852 = vmatpush.bf16.msra.mxu0 %v2200
    %2853 = vmatpush.bf16.msra.mxu0 %v2192
    %2854 = vmatmul.bf16.gmra.mxu0 %v2792
    %v2855 = vpop.f32.mrf.mxu0
    %v2856 = vadd.f32 0.0, %v2855
    %v2857 = vpop.f32.mrf.mxu0
    %2858 = vdwg.mxu0
    %2859 = vmatpush.bf16.msra.mxu0 %v2312
    %2860 = vmatpush.bf16.msra.mxu0 %v2304
    %2861 = vmatpush.bf16.msra.mxu0 %v2296
    %2862 = vmatpush.bf16.msra.mxu0 %v2288
    %2863 = vmatpush.bf16.msra.mxu0 %v2280
    %2864 = vmatpush.bf16.msra.mxu0 %v2272
    %2865 = vmatpush.bf16.msra.mxu0 %v2264
    %2866 = vmatpush.bf16.msra.mxu0 %v2256
    %2867 = vmatmul.bf16.gmra.mxu0 %v2793
    %v2868 = vpop.f32.mrf.mxu0
    %v2869 = vadd.f32 %v2856, %v2868
    %v2870 = vpop.f32.mrf.mxu0
    %2871 = vdwg.mxu0
    %2872 = vmatpush.bf16.msra.mxu0 %v2249
    %2873 = vmatpush.bf16.msra.mxu0 %v2241
    %2874 = vmatpush.bf16.msra.mxu0 %v2233
    %2875 = vmatpush.bf16.msra.mxu0 %v2225
    %2876 = vmatpush.bf16.msra.mxu0 %v2217
    %2877 = vmatpush.bf16.msra.mxu0 %v2209
    %2878 = vmatpush.bf16.msra.mxu0 %v2201
    %2879 = vmatpush.bf16.msra.mxu0 %v2193
    %2880 = vmatmul.bf16.gmra.mxu0 %v2792
    %v2881 = vpop.f32.mrf.mxu0
    %v2882 = vadd.f32 0.0, %v2881
    %v2883 = vpop.f32.mrf.mxu0
    %2884 = vdwg.mxu0
    %2885 = vmatpush.bf16.msra.mxu0 %v2313
    %2886 = vmatpush.bf16.msra.mxu0 %v2305
    %2887 = vmatpush.bf16.msra.mxu0 %v2297
    %2888 = vmatpush.bf16.msra.mxu0 %v2289
    %2889 = vmatpush.bf16.msra.mxu0 %v2281
    %2890 = vmatpush.bf16.msra.mxu0 %v2273
    %2891 = vmatpush.bf16.msra.mxu0 %v2265
    %2892 = vmatpush.bf16.msra.mxu0 %v2257
    %2893 = vmatmul.bf16.gmra.mxu0 %v2793
    %v2894 = vpop.f32.mrf.mxu0
    %v2895 = vadd.f32 %v2882, %v2894
    %v2896 = vpop.f32.mrf.mxu0
    %2897 = vdwg.mxu0
    %2898 = vmatpush.bf16.msra.mxu0 %v2250
    %2899 = vmatpush.bf16.msra.mxu0 %v2242
    %2900 = vmatpush.bf16.msra.mxu0 %v2234
    %2901 = vmatpush.bf16.msra.mxu0 %v2226
    %2902 = vmatpush.bf16.msra.mxu0 %v2218
    %2903 = vmatpush.bf16.msra.mxu0 %v2210
    %2904 = vmatpush.bf16.msra.mxu0 %v2202
    %2905 = vmatpush.bf16.msra.mxu0 %v2194
    %2906 = vmatmul.bf16.gmra.mxu0 %v2792
    %v2907 = vpop.f32.mrf.mxu0
    %v2908 = vadd.f32 0.0, %v2907
    %v2909 = vpop.f32.mrf.mxu0
    %2910 = vdwg.mxu0
    %2911 = vmatpush.bf16.msra.mxu0 %v2314
    %2912 = vmatpush.bf16.msra.mxu0 %v2306
    %2913 = vmatpush.bf16.msra.mxu0 %v2298
    %2914 = vmatpush.bf16.msra.mxu0 %v2290
    %2915 = vmatpush.bf16.msra.mxu0 %v2282
    %2916 = vmatpush.bf16.msra.mxu0 %v2274
    %2917 = vmatpush.bf16.msra.mxu0 %v2266
    %2918 = vmatpush.bf16.msra.mxu0 %v2258
    %2919 = vmatmul.bf16.gmra.mxu0 %v2793
    %v2920 = vpop.f32.mrf.mxu0
    %v2921 = vadd.f32 %v2908, %v2920
    %v2922 = vpop.f32.mrf.mxu0
    %2923 = vdwg.mxu0
    %2924 = vmatpush.bf16.msra.mxu0 %v2251
    %2925 = vmatpush.bf16.msra.mxu0 %v2243
    %2926 = vmatpush.bf16.msra.mxu0 %v2235
    %2927 = vmatpush.bf16.msra.mxu0 %v2227
    %2928 = vmatpush.bf16.msra.mxu0 %v2219
    %2929 = vmatpush.bf16.msra.mxu0 %v2211
    %2930 = vmatpush.bf16.msra.mxu0 %v2203
    %2931 = vmatpush.bf16.msra.mxu0 %v2195
    %2932 = vmatmul.bf16.gmra.mxu0 %v2792
    %v2933 = vpop.f32.mrf.mxu0
    %v2934 = vadd.f32 0.0, %v2933
    %v2935 = vpop.f32.mrf.mxu0
    %2936 = vdwg.mxu0
    %2937 = vmatpush.bf16.msra.mxu0 %v2315
    %2938 = vmatpush.bf16.msra.mxu0 %v2307
    %2939 = vmatpush.bf16.msra.mxu0 %v2299
    %2940 = vmatpush.bf16.msra.mxu0 %v2291
    %2941 = vmatpush.bf16.msra.mxu0 %v2283
    %2942 = vmatpush.bf16.msra.mxu0 %v2275
    %2943 = vmatpush.bf16.msra.mxu0 %v2267
    %2944 = vmatpush.bf16.msra.mxu0 %v2259
    %2945 = vmatmul.bf16.gmra.mxu0 %v2793
    %v2946 = vpop.f32.mrf.mxu0
    %v2947 = vadd.f32 %v2934, %v2946
    %v2948 = vpop.f32.mrf.mxu0
    %2949 = vdwg.mxu0
    %2950 = vmatpush.bf16.msra.mxu0 %v2252
    %2951 = vmatpush.bf16.msra.mxu0 %v2244
    %2952 = vmatpush.bf16.msra.mxu0 %v2236
    %2953 = vmatpush.bf16.msra.mxu0 %v2228
    %2954 = vmatpush.bf16.msra.mxu0 %v2220
    %2955 = vmatpush.bf16.msra.mxu0 %v2212
    %2956 = vmatpush.bf16.msra.mxu0 %v2204
    %2957 = vmatpush.bf16.msra.mxu0 %v2196
    %2958 = vmatmul.bf16.gmra.mxu0 %v2792
    %v2959 = vpop.f32.mrf.mxu0
    %v2960 = vadd.f32 0.0, %v2959
    %v2961 = vpop.f32.mrf.mxu0
    %2962 = vdwg.mxu0
    %2963 = vmatpush.bf16.msra.mxu0 %v2316
    %2964 = vmatpush.bf16.msra.mxu0 %v2308
    %2965 = vmatpush.bf16.msra.mxu0 %v2300
    %2966 = vmatpush.bf16.msra.mxu0 %v2292
    %2967 = vmatpush.bf16.msra.mxu0 %v2284
    %2968 = vmatpush.bf16.msra.mxu0 %v2276
    %2969 = vmatpush.bf16.msra.mxu0 %v2268
    %2970 = vmatpush.bf16.msra.mxu0 %v2260
    %2971 = vmatmul.bf16.gmra.mxu0 %v2793
    %v2972 = vpop.f32.mrf.mxu0
    %v2973 = vadd.f32 %v2960, %v2972
    %v2974 = vpop.f32.mrf.mxu0
    %2975 = vdwg.mxu0
    %2976 = vmatpush.bf16.msra.mxu0 %v2253
    %2977 = vmatpush.bf16.msra.mxu0 %v2245
    %2978 = vmatpush.bf16.msra.mxu0 %v2237
    %2979 = vmatpush.bf16.msra.mxu0 %v2229
    %2980 = vmatpush.bf16.msra.mxu0 %v2221
    %2981 = vmatpush.bf16.msra.mxu0 %v2213
    %2982 = vmatpush.bf16.msra.mxu0 %v2205
    %2983 = vmatpush.bf16.msra.mxu0 %v2197
    %2984 = vmatmul.bf16.gmra.mxu0 %v2792
    %v2985 = vpop.f32.mrf.mxu0
    %v2986 = vadd.f32 0.0, %v2985
    %v2987 = vpop.f32.mrf.mxu0
    %2988 = vdwg.mxu0
    %2989 = vmatpush.bf16.msra.mxu0 %v2317
    %2990 = vmatpush.bf16.msra.mxu0 %v2309
    %2991 = vmatpush.bf16.msra.mxu0 %v2301
    %2992 = vmatpush.bf16.msra.mxu0 %v2293
    %2993 = vmatpush.bf16.msra.mxu0 %v2285
    %2994 = vmatpush.bf16.msra.mxu0 %v2277
    %2995 = vmatpush.bf16.msra.mxu0 %v2269
    %2996 = vmatpush.bf16.msra.mxu0 %v2261
    %2997 = vmatmul.bf16.gmra.mxu0 %v2793
    %v2998 = vpop.f32.mrf.mxu0
    %v2999 = vadd.f32 %v2986, %v2998
    %v3000 = vpop.f32.mrf.mxu0
    %3001 = vdwg.mxu0
    %v3002 = vadd.f32 %v2921, %v1597
    %v3003 = vadd.f32 %v2947, %v1598
    %v3004 = vadd.f32 %v2973, %v1599
    %v3005 = vadd.f32 %v2999, %v1600
    %v3006 = vxor.u32 %v3002, 2147483648
    %v3007 = vxor.u32 %v3003, 2147483648
    %v3008 = vxor.u32 %v3004, 2147483648
    %v3009 = vmul.f32 %v3006, 1.442695
    %v3010 = vpow.pop %v3009
    %v3011 = vmul.f32 %v3007, 1.442695
    %v3012 = vpow.pop %v3011
    %v3013 = vmul.f32 %v3008, 1.442695
    %v3014 = vpow.pop %v3013
    %v3015 = vadd.f32 %v3010, 1.0
    %v3016 = vadd.f32 %v3012, 1.0
    %v3017 = vadd.f32 %v3014, 1.0
    %v3018 = vrcp.pop %v3015
    %v3019 = vmul.f32 %v3015, %v3018
    %v3020 = vsub.f32 1.0, %v3019
    %v3021 = vmul.f32 %v3018, %v3020
    %v3022 = vadd.f32 %v3018, %v3021
    %vm3023 = vweird.f32 %v3015
    %vm3024 = vweird.f32 %v3018
    %vm3025 = vmor %vm3023, %vm3024
    %v3026 = vsel %vm3025, %v3018, %v3022
    %v3027 = vand.u32 2147483647, %v3015
    %vm3028 = vcmp.eq.f32.partialorder %v3027, 8.507059e+37
    %v3029 = vand.u32 %v3015, 2147483648
    %v3030 = vor.u32 1.1754944e-38, %v3029
    %v3031 = vsel %vm3028, %v3030, %v3026
    %v3032 = vmul.f32 1.0, %v3031
    %v3033 = vrcp.pop %v3016
    %v3034 = vmul.f32 %v3016, %v3033
    %v3035 = vsub.f32 1.0, %v3034
    %v3036 = vmul.f32 %v3033, %v3035
    %v3037 = vadd.f32 %v3033, %v3036
    %vm3038 = vweird.f32 %v3016
    %vm3039 = vweird.f32 %v3033
    %vm3040 = vmor %vm3038, %vm3039
    %v3041 = vsel %vm3040, %v3033, %v3037
    %v3042 = vand.u32 2147483647, %v3016
    %vm3043 = vcmp.eq.f32.partialorder %v3042, 8.507059e+37
    %v3044 = vand.u32 %v3016, 2147483648
    %v3045 = vor.u32 1.1754944e-38, %v3044
    %v3046 = vsel %vm3043, %v3045, %v3041
    %v3047 = vmul.f32 1.0, %v3046
    %v3048 = vrcp.pop %v3017
    %v3049 = vmul.f32 %v3017, %v3048
    %v3050 = vsub.f32 1.0, %v3049
    %v3051 = vmul.f32 %v3048, %v3050
    %v3052 = vadd.f32 %v3048, %v3051
    %vm3053 = vweird.f32 %v3017
    %vm3054 = vweird.f32 %v3048
    %vm3055 = vmor %vm3053, %vm3054
    %v3056 = vsel %vm3055, %v3048, %v3052
    %v3057 = vand.u32 2147483647, %v3017
    %vm3058 = vcmp.eq.f32.partialorder %v3057, 8.507059e+37
    %v3059 = vand.u32 %v3017, 2147483648
    %v3060 = vor.u32 1.1754944e-38, %v3059
    %v3061 = vsel %vm3058, %v3060, %v3056
    %v3062 = vmul.f32 1.0, %v3061
    %v3063 = vtanh.pop %v3005
    %v3064 = vmul.f32 %v3047, %v2718
    %v3065 = vmul.f32 %v3032, %v3063
    %v3066 = vadd.f32 %v3064, %v3065
    %v3067 = vtanh.pop %v3066
    %v3068 = vmul.f32 %v3062, %v3067
    %v3069 = vld [vmem:[#allocation4 + $0x40] sm:$0xff]
    %v3070 = vld [vmem:[#allocation4 + $0x48] sm:$0xff]
    %v3071 = vld [vmem:[#allocation4 + $0x50] sm:$0xff]
    %v3072 = vld [vmem:[#allocation4 + $0x58] sm:$0xff]
    %v3073 = vadd.f32 %v3069, %v2817
    %v3074 = vadd.f32 %v3070, %v2843
    %v3075 = vadd.f32 %v3071, %v2869
    %v3076 = vadd.f32 %v3072, %v2895
    %v3077 = vxor.u32 %v3073, 2147483648
    %v3078 = vxor.u32 %v3074, 2147483648
    %v3079 = vxor.u32 %v3075, 2147483648
    %v3080 = vmul.f32 %v3077, 1.442695
    %v3081 = vpow.pop %v3080
    %v3082 = vmul.f32 %v3078, 1.442695
    %v3083 = vpow.pop %v3082
    %v3084 = vmul.f32 %v3079, 1.442695
    %v3085 = vpow.pop %v3084
    %v3086 = vadd.f32 %v3081, 1.0
    %v3087 = vadd.f32 %v3083, 1.0
    %v3088 = vadd.f32 %v3085, 1.0
    %v3089 = vrcp.pop %v3086
    %v3090 = vmul.f32 %v3086, %v3089
    %v3091 = vsub.f32 1.0, %v3090
    %v3092 = vmul.f32 %v3089, %v3091
    %v3093 = vadd.f32 %v3089, %v3092
    %vm3094 = vweird.f32 %v3086
    %vm3095 = vweird.f32 %v3089
    %vm3096 = vmor %vm3094, %vm3095
    %v3097 = vsel %vm3096, %v3089, %v3093
    %v3098 = vand.u32 2147483647, %v3086
    %vm3099 = vcmp.eq.f32.partialorder %v3098, 8.507059e+37
    %v3100 = vand.u32 %v3086, 2147483648
    %v3101 = vor.u32 1.1754944e-38, %v3100
    %v3102 = vsel %vm3099, %v3101, %v3097
    %v3103 = vmul.f32 1.0, %v3102
    %v3104 = vrcp.pop %v3087
    %v3105 = vmul.f32 %v3087, %v3104
    %v3106 = vsub.f32 1.0, %v3105
    %v3107 = vmul.f32 %v3104, %v3106
    %v3108 = vadd.f32 %v3104, %v3107
    %vm3109 = vweird.f32 %v3087
    %vm3110 = vweird.f32 %v3104
    %vm3111 = vmor %vm3109, %vm3110
    %v3112 = vsel %vm3111, %v3104, %v3108
    %v3113 = vand.u32 2147483647, %v3087
    %vm3114 = vcmp.eq.f32.partialorder %v3113, 8.507059e+37
    %v3115 = vand.u32 %v3087, 2147483648
    %v3116 = vor.u32 1.1754944e-38, %v3115
    %v3117 = vsel %vm3114, %v3116, %v3112
    %v3118 = vmul.f32 1.0, %v3117
    %v3119 = vrcp.pop %v3088
    %v3120 = vmul.f32 %v3088, %v3119
    %v3121 = vsub.f32 1.0, %v3120
    %v3122 = vmul.f32 %v3119, %v3121
    %v3123 = vadd.f32 %v3119, %v3122
    %vm3124 = vweird.f32 %v3088
    %vm3125 = vweird.f32 %v3119
    %vm3126 = vmor %vm3124, %vm3125
    %v3127 = vsel %vm3126, %v3119, %v3123
    %v3128 = vand.u32 2147483647, %v3088
    %vm3129 = vcmp.eq.f32.partialorder %v3128, 8.507059e+37
    %v3130 = vand.u32 %v3088, 2147483648
    %v3131 = vor.u32 1.1754944e-38, %v3130
    %v3132 = vsel %vm3129, %v3131, %v3127
    %v3133 = vmul.f32 1.0, %v3132
    %v3134 = vtanh.pop %v3076
    %v3135 = vmul.f32 %v3118, %v2789
    %v3136 = vmul.f32 %v3103, %v3134
    %v3137 = vadd.f32 %v3135, %v3136
    %v3138 = vtanh.pop %v3137
    %v3139 = vmul.f32 %v3133, %v3138
    %v3140 = vpack.c.bf16 %v3139, %v3139
    %v3141 = vpack.c.bf16 %v3068, %v3068
    %3142 = vmatpush.bf16.msra.mxu0 %v2246
    %3143 = vmatpush.bf16.msra.mxu0 %v2238
    %3144 = vmatpush.bf16.msra.mxu0 %v2230
    %3145 = vmatpush.bf16.msra.mxu0 %v2222
    %3146 = vmatpush.bf16.msra.mxu0 %v2214
    %3147 = vmatpush.bf16.msra.mxu0 %v2206
    %3148 = vmatpush.bf16.msra.mxu0 %v2198
    %3149 = vmatpush.bf16.msra.mxu0 %v2190
    %3150 = vmatmul.bf16.gmra.mxu0 %v3140
    %v3151 = vpop.f32.mrf.mxu0
    %v3152 = vadd.f32 0.0, %v3151
    %v3153 = vpop.f32.mrf.mxu0
    %3154 = vdwg.mxu0
    %3155 = vmatpush.bf16.msra.mxu0 %v2310
    %3156 = vmatpush.bf16.msra.mxu0 %v2302
    %3157 = vmatpush.bf16.msra.mxu0 %v2294
    %3158 = vmatpush.bf16.msra.mxu0 %v2286
    %3159 = vmatpush.bf16.msra.mxu0 %v2278
    %3160 = vmatpush.bf16.msra.mxu0 %v2270
    %3161 = vmatpush.bf16.msra.mxu0 %v2262
    %3162 = vmatpush.bf16.msra.mxu0 %v2254
    %3163 = vmatmul.bf16.gmra.mxu0 %v3141
    %v3164 = vpop.f32.mrf.mxu0
    %v3165 = vadd.f32 %v3152, %v3164
    %v3166 = vpop.f32.mrf.mxu0
    %3167 = vdwg.mxu0
    %3168 = vmatpush.bf16.msra.mxu0 %v2247
    %3169 = vmatpush.bf16.msra.mxu0 %v2239
    %3170 = vmatpush.bf16.msra.mxu0 %v2231
    %3171 = vmatpush.bf16.msra.mxu0 %v2223
    %3172 = vmatpush.bf16.msra.mxu0 %v2215
    %3173 = vmatpush.bf16.msra.mxu0 %v2207
    %3174 = vmatpush.bf16.msra.mxu0 %v2199
    %3175 = vmatpush.bf16.msra.mxu0 %v2191
    %3176 = vmatmul.bf16.gmra.mxu0 %v3140
    %v3177 = vpop.f32.mrf.mxu0
    %v3178 = vadd.f32 0.0, %v3177
    %v3179 = vpop.f32.mrf.mxu0
    %3180 = vdwg.mxu0
    %3181 = vmatpush.bf16.msra.mxu0 %v2311
    %3182 = vmatpush.bf16.msra.mxu0 %v2303
    %3183 = vmatpush.bf16.msra.mxu0 %v2295
    %3184 = vmatpush.bf16.msra.mxu0 %v2287
    %3185 = vmatpush.bf16.msra.mxu0 %v2279
    %3186 = vmatpush.bf16.msra.mxu0 %v2271
    %3187 = vmatpush.bf16.msra.mxu0 %v2263
    %3188 = vmatpush.bf16.msra.mxu0 %v2255
    %3189 = vmatmul.bf16.gmra.mxu0 %v3141
    %v3190 = vpop.f32.mrf.mxu0
    %v3191 = vadd.f32 %v3178, %v3190
    %v3192 = vpop.f32.mrf.mxu0
    %3193 = vdwg.mxu0
    %3194 = vmatpush.bf16.msra.mxu0 %v2248
    %3195 = vmatpush.bf16.msra.mxu0 %v2240
    %3196 = vmatpush.bf16.msra.mxu0 %v2232
    %3197 = vmatpush.bf16.msra.mxu0 %v2224
    %3198 = vmatpush.bf16.msra.mxu0 %v2216
    %3199 = vmatpush.bf16.msra.mxu0 %v2208
    %3200 = vmatpush.bf16.msra.mxu0 %v2200
    %3201 = vmatpush.bf16.msra.mxu0 %v2192
    %3202 = vmatmul.bf16.gmra.mxu0 %v3140
    %v3203 = vpop.f32.mrf.mxu0
    %v3204 = vadd.f32 0.0, %v3203
    %v3205 = vpop.f32.mrf.mxu0
    %3206 = vdwg.mxu0
    %3207 = vmatpush.bf16.msra.mxu0 %v2312
    %3208 = vmatpush.bf16.msra.mxu0 %v2304
    %3209 = vmatpush.bf16.msra.mxu0 %v2296
    %3210 = vmatpush.bf16.msra.mxu0 %v2288
    %3211 = vmatpush.bf16.msra.mxu0 %v2280
    %3212 = vmatpush.bf16.msra.mxu0 %v2272
    %3213 = vmatpush.bf16.msra.mxu0 %v2264
    %3214 = vmatpush.bf16.msra.mxu0 %v2256
    %3215 = vmatmul.bf16.gmra.mxu0 %v3141
    %v3216 = vpop.f32.mrf.mxu0
    %v3217 = vadd.f32 %v3204, %v3216
    %v3218 = vpop.f32.mrf.mxu0
    %3219 = vdwg.mxu0
    %3220 = vmatpush.bf16.msra.mxu0 %v2249
    %3221 = vmatpush.bf16.msra.mxu0 %v2241
    %3222 = vmatpush.bf16.msra.mxu0 %v2233
    %3223 = vmatpush.bf16.msra.mxu0 %v2225
    %3224 = vmatpush.bf16.msra.mxu0 %v2217
    %3225 = vmatpush.bf16.msra.mxu0 %v2209
    %3226 = vmatpush.bf16.msra.mxu0 %v2201
    %3227 = vmatpush.bf16.msra.mxu0 %v2193
    %3228 = vmatmul.bf16.gmra.mxu0 %v3140
    %v3229 = vpop.f32.mrf.mxu0
    %v3230 = vadd.f32 0.0, %v3229
    %v3231 = vpop.f32.mrf.mxu0
    %3232 = vdwg.mxu0
    %3233 = vmatpush.bf16.msra.mxu0 %v2313
    %3234 = vmatpush.bf16.msra.mxu0 %v2305
    %3235 = vmatpush.bf16.msra.mxu0 %v2297
    %3236 = vmatpush.bf16.msra.mxu0 %v2289
    %3237 = vmatpush.bf16.msra.mxu0 %v2281
    %3238 = vmatpush.bf16.msra.mxu0 %v2273
    %3239 = vmatpush.bf16.msra.mxu0 %v2265
    %3240 = vmatpush.bf16.msra.mxu0 %v2257
    %3241 = vmatmul.bf16.gmra.mxu0 %v3141
    %v3242 = vpop.f32.mrf.mxu0
    %v3243 = vadd.f32 %v3230, %v3242
    %v3244 = vpop.f32.mrf.mxu0
    %3245 = vdwg.mxu0
    %3246 = vmatpush.bf16.msra.mxu0 %v2250
    %3247 = vmatpush.bf16.msra.mxu0 %v2242
    %3248 = vmatpush.bf16.msra.mxu0 %v2234
    %3249 = vmatpush.bf16.msra.mxu0 %v2226
    %3250 = vmatpush.bf16.msra.mxu0 %v2218
    %3251 = vmatpush.bf16.msra.mxu0 %v2210
    %3252 = vmatpush.bf16.msra.mxu0 %v2202
    %3253 = vmatpush.bf16.msra.mxu0 %v2194
    %3254 = vmatmul.bf16.gmra.mxu0 %v3140
    %v3255 = vpop.f32.mrf.mxu0
    %v3256 = vadd.f32 0.0, %v3255
    %v3257 = vpop.f32.mrf.mxu0
    %3258 = vdwg.mxu0
    %3259 = vmatpush.bf16.msra.mxu0 %v2314
    %3260 = vmatpush.bf16.msra.mxu0 %v2306
    %3261 = vmatpush.bf16.msra.mxu0 %v2298
    %3262 = vmatpush.bf16.msra.mxu0 %v2290
    %3263 = vmatpush.bf16.msra.mxu0 %v2282
    %3264 = vmatpush.bf16.msra.mxu0 %v2274
    %3265 = vmatpush.bf16.msra.mxu0 %v2266
    %3266 = vmatpush.bf16.msra.mxu0 %v2258
    %3267 = vmatmul.bf16.gmra.mxu0 %v3141
    %v3268 = vpop.f32.mrf.mxu0
    %v3269 = vadd.f32 %v3256, %v3268
    %v3270 = vpop.f32.mrf.mxu0
    %3271 = vdwg.mxu0
    %3272 = vmatpush.bf16.msra.mxu0 %v2251
    %3273 = vmatpush.bf16.msra.mxu0 %v2243
    %3274 = vmatpush.bf16.msra.mxu0 %v2235
    %3275 = vmatpush.bf16.msra.mxu0 %v2227
    %3276 = vmatpush.bf16.msra.mxu0 %v2219
    %3277 = vmatpush.bf16.msra.mxu0 %v2211
    %3278 = vmatpush.bf16.msra.mxu0 %v2203
    %3279 = vmatpush.bf16.msra.mxu0 %v2195
    %3280 = vmatmul.bf16.gmra.mxu0 %v3140
    %v3281 = vpop.f32.mrf.mxu0
    %v3282 = vadd.f32 0.0, %v3281
    %v3283 = vpop.f32.mrf.mxu0
    %3284 = vdwg.mxu0
    %3285 = vmatpush.bf16.msra.mxu0 %v2315
    %3286 = vmatpush.bf16.msra.mxu0 %v2307
    %3287 = vmatpush.bf16.msra.mxu0 %v2299
    %3288 = vmatpush.bf16.msra.mxu0 %v2291
    %3289 = vmatpush.bf16.msra.mxu0 %v2283
    %3290 = vmatpush.bf16.msra.mxu0 %v2275
    %3291 = vmatpush.bf16.msra.mxu0 %v2267
    %3292 = vmatpush.bf16.msra.mxu0 %v2259
    %3293 = vmatmul.bf16.gmra.mxu0 %v3141
    %v3294 = vpop.f32.mrf.mxu0
    %v3295 = vadd.f32 %v3282, %v3294
    %v3296 = vpop.f32.mrf.mxu0
    %3297 = vdwg.mxu0
    %3298 = vmatpush.bf16.msra.mxu0 %v2252
    %3299 = vmatpush.bf16.msra.mxu0 %v2244
    %3300 = vmatpush.bf16.msra.mxu0 %v2236
    %3301 = vmatpush.bf16.msra.mxu0 %v2228
    %3302 = vmatpush.bf16.msra.mxu0 %v2220
    %3303 = vmatpush.bf16.msra.mxu0 %v2212
    %3304 = vmatpush.bf16.msra.mxu0 %v2204
    %3305 = vmatpush.bf16.msra.mxu0 %v2196
    %3306 = vmatmul.bf16.gmra.mxu0 %v3140
    %v3307 = vpop.f32.mrf.mxu0
    %v3308 = vadd.f32 0.0, %v3307
    %v3309 = vpop.f32.mrf.mxu0
    %3310 = vdwg.mxu0
    %3311 = vmatpush.bf16.msra.mxu0 %v2316
    %3312 = vmatpush.bf16.msra.mxu0 %v2308
    %3313 = vmatpush.bf16.msra.mxu0 %v2300
    %3314 = vmatpush.bf16.msra.mxu0 %v2292
    %3315 = vmatpush.bf16.msra.mxu0 %v2284
    %3316 = vmatpush.bf16.msra.mxu0 %v2276
    %3317 = vmatpush.bf16.msra.mxu0 %v2268
    %3318 = vmatpush.bf16.msra.mxu0 %v2260
    %3319 = vmatmul.bf16.gmra.mxu0 %v3141
    %v3320 = vpop.f32.mrf.mxu0
    %v3321 = vadd.f32 %v3308, %v3320
    %v3322 = vpop.f32.mrf.mxu0
    %3323 = vdwg.mxu0
    %3324 = vmatpush.bf16.msra.mxu0 %v2253
    %3325 = vmatpush.bf16.msra.mxu0 %v2245
    %3326 = vmatpush.bf16.msra.mxu0 %v2237
    %3327 = vmatpush.bf16.msra.mxu0 %v2229
    %3328 = vmatpush.bf16.msra.mxu0 %v2221
    %3329 = vmatpush.bf16.msra.mxu0 %v2213
    %3330 = vmatpush.bf16.msra.mxu0 %v2205
    %3331 = vmatpush.bf16.msra.mxu0 %v2197
    %3332 = vmatmul.bf16.gmra.mxu0 %v3140
    %v3333 = vpop.f32.mrf.mxu0
    %v3334 = vadd.f32 0.0, %v3333
    %v3335 = vpop.f32.mrf.mxu0
    %3336 = vdwg.mxu0
    %3337 = vmatpush.bf16.msra.mxu0 %v2317
    %3338 = vmatpush.bf16.msra.mxu0 %v2309
    %3339 = vmatpush.bf16.msra.mxu0 %v2301
    %3340 = vmatpush.bf16.msra.mxu0 %v2293
    %3341 = vmatpush.bf16.msra.mxu0 %v2285
    %3342 = vmatpush.bf16.msra.mxu0 %v2277
    %3343 = vmatpush.bf16.msra.mxu0 %v2269
    %3344 = vmatpush.bf16.msra.mxu0 %v2261
    %3345 = vmatmul.bf16.gmra.mxu0 %v3141
    %v3346 = vpop.f32.mrf.mxu0
    %v3347 = vadd.f32 %v3334, %v3346
    %v3348 = vpop.f32.mrf.mxu0
    %3349 = vdwg.mxu0
    %v3350 = vadd.f32 %v3269, %v1597
    %v3351 = vadd.f32 %v3295, %v1598
    %v3352 = vadd.f32 %v3321, %v1599
    %v3353 = vadd.f32 %v3347, %v1600
    %v3354 = vxor.u32 %v3350, 2147483648
    %v3355 = vxor.u32 %v3351, 2147483648
    %v3356 = vxor.u32 %v3352, 2147483648
    %v3357 = vmul.f32 %v3354, 1.442695
    %v3358 = vpow.pop %v3357
    %v3359 = vmul.f32 %v3355, 1.442695
    %v3360 = vpow.pop %v3359
    %v3361 = vmul.f32 %v3356, 1.442695
    %v3362 = vpow.pop %v3361
    %v3363 = vadd.f32 %v3358, 1.0
    %v3364 = vadd.f32 %v3360, 1.0
    %v3365 = vadd.f32 %v3362, 1.0
    %v3366 = vrcp.pop %v3363
    %v3367 = vmul.f32 %v3363, %v3366
    %v3368 = vsub.f32 1.0, %v3367
    %v3369 = vmul.f32 %v3366, %v3368
    %v3370 = vadd.f32 %v3366, %v3369
    %vm3371 = vweird.f32 %v3363
    %vm3372 = vweird.f32 %v3366
    %vm3373 = vmor %vm3371, %vm3372
    %v3374 = vsel %vm3373, %v3366, %v3370
    %v3375 = vand.u32 2147483647, %v3363
    %vm3376 = vcmp.eq.f32.partialorder %v3375, 8.507059e+37
    %v3377 = vand.u32 %v3363, 2147483648
    %v3378 = vor.u32 1.1754944e-38, %v3377
    %v3379 = vsel %vm3376, %v3378, %v3374
    %v3380 = vmul.f32 1.0, %v3379
    %v3381 = vrcp.pop %v3364
    %v3382 = vmul.f32 %v3364, %v3381
    %v3383 = vsub.f32 1.0, %v3382
    %v3384 = vmul.f32 %v3381, %v3383
    %v3385 = vadd.f32 %v3381, %v3384
    %vm3386 = vweird.f32 %v3364
    %vm3387 = vweird.f32 %v3381
    %vm3388 = vmor %vm3386, %vm3387
    %v3389 = vsel %vm3388, %v3381, %v3385
    %v3390 = vand.u32 2147483647, %v3364
    %vm3391 = vcmp.eq.f32.partialorder %v3390, 8.507059e+37
    %v3392 = vand.u32 %v3364, 2147483648
    %v3393 = vor.u32 1.1754944e-38, %v3392
    %v3394 = vsel %vm3391, %v3393, %v3389
    %v3395 = vmul.f32 1.0, %v3394
    %v3396 = vrcp.pop %v3365
    %v3397 = vmul.f32 %v3365, %v3396
    %v3398 = vsub.f32 1.0, %v3397
    %v3399 = vmul.f32 %v3396, %v3398
    %v3400 = vadd.f32 %v3396, %v3399
    %vm3401 = vweird.f32 %v3365
    %vm3402 = vweird.f32 %v3396
    %vm3403 = vmor %vm3401, %vm3402
    %v3404 = vsel %vm3403, %v3396, %v3400
    %v3405 = vand.u32 2147483647, %v3365
    %vm3406 = vcmp.eq.f32.partialorder %v3405, 8.507059e+37
    %v3407 = vand.u32 %v3365, 2147483648
    %v3408 = vor.u32 1.1754944e-38, %v3407
    %v3409 = vsel %vm3406, %v3408, %v3404
    %v3410 = vmul.f32 1.0, %v3409
    %v3411 = vtanh.pop %v3353
    %v3412 = vmul.f32 %v3395, %v3066
    %v3413 = vmul.f32 %v3380, %v3411
    %v3414 = vadd.f32 %v3412, %v3413
    %v3415 = vtanh.pop %v3414
    %v3416 = vmul.f32 %v3410, %v3415
    %v3417 = vld [vmem:[#allocation4 + $0x60] sm:$0xff]
    %v3418 = vld [vmem:[#allocation4 + $0x68] sm:$0xff]
    %v3419 = vld [vmem:[#allocation4 + $0x70] sm:$0xff]
    %v3420 = vld [vmem:[#allocation4 + $0x78] sm:$0xff]
    %v3421 = vadd.f32 %v3417, %v3165
    %v3422 = vadd.f32 %v3418, %v3191
    %v3423 = vadd.f32 %v3419, %v3217
    %v3424 = vadd.f32 %v3420, %v3243
    %v3425 = vxor.u32 %v3421, 2147483648
    %v3426 = vxor.u32 %v3422, 2147483648
    %v3427 = vxor.u32 %v3423, 2147483648
    %v3428 = vmul.f32 %v3425, 1.442695
    %v3429 = vpow.pop %v3428
    %v3430 = vmul.f32 %v3426, 1.442695
    %v3431 = vpow.pop %v3430
    %v3432 = vmul.f32 %v3427, 1.442695
    %v3433 = vpow.pop %v3432
    %v3434 = vadd.f32 %v3429, 1.0
    %v3435 = vadd.f32 %v3431, 1.0
    %v3436 = vadd.f32 %v3433, 1.0
    %v3437 = vrcp.pop %v3434
    %v3438 = vmul.f32 %v3434, %v3437
    %v3439 = vsub.f32 1.0, %v3438
    %v3440 = vmul.f32 %v3437, %v3439
    %v3441 = vadd.f32 %v3437, %v3440
    %vm3442 = vweird.f32 %v3434
    %vm3443 = vweird.f32 %v3437
    %vm3444 = vmor %vm3442, %vm3443
    %v3445 = vsel %vm3444, %v3437, %v3441
    %v3446 = vand.u32 2147483647, %v3434
    %vm3447 = vcmp.eq.f32.partialorder %v3446, 8.507059e+37
    %v3448 = vand.u32 %v3434, 2147483648
    %v3449 = vor.u32 1.1754944e-38, %v3448
    %v3450 = vsel %vm3447, %v3449, %v3445
    %v3451 = vmul.f32 1.0, %v3450
    %v3452 = vrcp.pop %v3435
    %v3453 = vmul.f32 %v3435, %v3452
    %v3454 = vsub.f32 1.0, %v3453
    %v3455 = vmul.f32 %v3452, %v3454
    %v3456 = vadd.f32 %v3452, %v3455
    %vm3457 = vweird.f32 %v3435
    %vm3458 = vweird.f32 %v3452
    %vm3459 = vmor %vm3457, %vm3458
    %v3460 = vsel %vm3459, %v3452, %v3456
    %v3461 = vand.u32 2147483647, %v3435
    %vm3462 = vcmp.eq.f32.partialorder %v3461, 8.507059e+37
    %v3463 = vand.u32 %v3435, 2147483648
    %v3464 = vor.u32 1.1754944e-38, %v3463
    %v3465 = vsel %vm3462, %v3464, %v3460
    %v3466 = vmul.f32 1.0, %v3465
    %v3467 = vrcp.pop %v3436
    %v3468 = vmul.f32 %v3436, %v3467
    %v3469 = vsub.f32 1.0, %v3468
    %v3470 = vmul.f32 %v3467, %v3469
    %v3471 = vadd.f32 %v3467, %v3470
    %vm3472 = vweird.f32 %v3436
    %vm3473 = vweird.f32 %v3467
    %vm3474 = vmor %vm3472, %vm3473
    %v3475 = vsel %vm3474, %v3467, %v3471
    %v3476 = vand.u32 2147483647, %v3436
    %vm3477 = vcmp.eq.f32.partialorder %v3476, 8.507059e+37
    %v3478 = vand.u32 %v3436, 2147483648
    %v3479 = vor.u32 1.1754944e-38, %v3478
    %v3480 = vsel %vm3477, %v3479, %v3475
    %v3481 = vmul.f32 1.0, %v3480
    %v3482 = vtanh.pop %v3424
    %v3483 = vmul.f32 %v3466, %v3137
    %v3484 = vmul.f32 %v3451, %v3482
    %v3485 = vadd.f32 %v3483, %v3484
    %v3486 = vtanh.pop %v3485
    %v3487 = vmul.f32 %v3481, %v3486
    %v3488 = vpack.c.bf16 %v3487, %v3487
    %v3489 = vpack.c.bf16 %v3416, %v3416
    %3490 = vmatpush.bf16.msra.mxu0 %v2246
    %3491 = vmatpush.bf16.msra.mxu0 %v2238
    %3492 = vmatpush.bf16.msra.mxu0 %v2230
    %3493 = vmatpush.bf16.msra.mxu0 %v2222
    %3494 = vmatpush.bf16.msra.mxu0 %v2214
    %3495 = vmatpush.bf16.msra.mxu0 %v2206
    %3496 = vmatpush.bf16.msra.mxu0 %v2198
    %3497 = vmatpush.bf16.msra.mxu0 %v2190
    %3498 = vmatmul.bf16.gmra.mxu0 %v3488
    %v3499 = vpop.f32.mrf.mxu0
    %v3500 = vadd.f32 0.0, %v3499
    %v3501 = vpop.f32.mrf.mxu0
    %3502 = vdwg.mxu0
    %3503 = vmatpush.bf16.msra.mxu0 %v2310
    %3504 = vmatpush.bf16.msra.mxu0 %v2302
    %3505 = vmatpush.bf16.msra.mxu0 %v2294
    %3506 = vmatpush.bf16.msra.mxu0 %v2286
    %3507 = vmatpush.bf16.msra.mxu0 %v2278
    %3508 = vmatpush.bf16.msra.mxu0 %v2270
    %3509 = vmatpush.bf16.msra.mxu0 %v2262
    %3510 = vmatpush.bf16.msra.mxu0 %v2254
    %3511 = vmatmul.bf16.gmra.mxu0 %v3489
    %v3512 = vpop.f32.mrf.mxu0
    %v3513 = vadd.f32 %v3500, %v3512
    %v3514 = vpop.f32.mrf.mxu0
    %3515 = vdwg.mxu0
    %3516 = vmatpush.bf16.msra.mxu0 %v2247
    %3517 = vmatpush.bf16.msra.mxu0 %v2239
    %3518 = vmatpush.bf16.msra.mxu0 %v2231
    %3519 = vmatpush.bf16.msra.mxu0 %v2223
    %3520 = vmatpush.bf16.msra.mxu0 %v2215
    %3521 = vmatpush.bf16.msra.mxu0 %v2207
    %3522 = vmatpush.bf16.msra.mxu0 %v2199
    %3523 = vmatpush.bf16.msra.mxu0 %v2191
    %3524 = vmatmul.bf16.gmra.mxu0 %v3488
    %v3525 = vpop.f32.mrf.mxu0
    %v3526 = vadd.f32 0.0, %v3525
    %v3527 = vpop.f32.mrf.mxu0
    %3528 = vdwg.mxu0
    %3529 = vmatpush.bf16.msra.mxu0 %v2311
    %3530 = vmatpush.bf16.msra.mxu0 %v2303
    %3531 = vmatpush.bf16.msra.mxu0 %v2295
    %3532 = vmatpush.bf16.msra.mxu0 %v2287
    %3533 = vmatpush.bf16.msra.mxu0 %v2279
    %3534 = vmatpush.bf16.msra.mxu0 %v2271
    %3535 = vmatpush.bf16.msra.mxu0 %v2263
    %3536 = vmatpush.bf16.msra.mxu0 %v2255
    %3537 = vmatmul.bf16.gmra.mxu0 %v3489
    %v3538 = vpop.f32.mrf.mxu0
    %v3539 = vadd.f32 %v3526, %v3538
    %v3540 = vpop.f32.mrf.mxu0
    %3541 = vdwg.mxu0
    %3542 = vmatpush.bf16.msra.mxu0 %v2248
    %3543 = vmatpush.bf16.msra.mxu0 %v2240
    %3544 = vmatpush.bf16.msra.mxu0 %v2232
    %3545 = vmatpush.bf16.msra.mxu0 %v2224
    %3546 = vmatpush.bf16.msra.mxu0 %v2216
    %3547 = vmatpush.bf16.msra.mxu0 %v2208
    %3548 = vmatpush.bf16.msra.mxu0 %v2200
    %3549 = vmatpush.bf16.msra.mxu0 %v2192
    %3550 = vmatmul.bf16.gmra.mxu0 %v3488
    %v3551 = vpop.f32.mrf.mxu0
    %v3552 = vadd.f32 0.0, %v3551
    %v3553 = vpop.f32.mrf.mxu0
    %3554 = vdwg.mxu0
    %3555 = vmatpush.bf16.msra.mxu0 %v2312
    %3556 = vmatpush.bf16.msra.mxu0 %v2304
    %3557 = vmatpush.bf16.msra.mxu0 %v2296
    %3558 = vmatpush.bf16.msra.mxu0 %v2288
    %3559 = vmatpush.bf16.msra.mxu0 %v2280
    %3560 = vmatpush.bf16.msra.mxu0 %v2272
    %3561 = vmatpush.bf16.msra.mxu0 %v2264
    %3562 = vmatpush.bf16.msra.mxu0 %v2256
    %3563 = vmatmul.bf16.gmra.mxu0 %v3489
    %v3564 = vpop.f32.mrf.mxu0
    %v3565 = vadd.f32 %v3552, %v3564
    %v3566 = vpop.f32.mrf.mxu0
    %3567 = vdwg.mxu0
    %3568 = vmatpush.bf16.msra.mxu0 %v2249
    %3569 = vmatpush.bf16.msra.mxu0 %v2241
    %3570 = vmatpush.bf16.msra.mxu0 %v2233
    %3571 = vmatpush.bf16.msra.mxu0 %v2225
    %3572 = vmatpush.bf16.msra.mxu0 %v2217
    %3573 = vmatpush.bf16.msra.mxu0 %v2209
    %3574 = vmatpush.bf16.msra.mxu0 %v2201
    %3575 = vmatpush.bf16.msra.mxu0 %v2193
    %3576 = vmatmul.bf16.gmra.mxu0 %v3488
    %v3577 = vpop.f32.mrf.mxu0
    %v3578 = vadd.f32 0.0, %v3577
    %v3579 = vpop.f32.mrf.mxu0
    %3580 = vdwg.mxu0
    %3581 = vmatpush.bf16.msra.mxu0 %v2313
    %3582 = vmatpush.bf16.msra.mxu0 %v2305
    %3583 = vmatpush.bf16.msra.mxu0 %v2297
    %3584 = vmatpush.bf16.msra.mxu0 %v2289
    %3585 = vmatpush.bf16.msra.mxu0 %v2281
    %3586 = vmatpush.bf16.msra.mxu0 %v2273
    %3587 = vmatpush.bf16.msra.mxu0 %v2265
    %3588 = vmatpush.bf16.msra.mxu0 %v2257
    %3589 = vmatmul.bf16.gmra.mxu0 %v3489
    %v3590 = vpop.f32.mrf.mxu0
    %v3591 = vadd.f32 %v3578, %v3590
    %v3592 = vpop.f32.mrf.mxu0
    %3593 = vdwg.mxu0
    %3594 = vmatpush.bf16.msra.mxu0 %v2250
    %3595 = vmatpush.bf16.msra.mxu0 %v2242
    %3596 = vmatpush.bf16.msra.mxu0 %v2234
    %3597 = vmatpush.bf16.msra.mxu0 %v2226
    %3598 = vmatpush.bf16.msra.mxu0 %v2218
    %3599 = vmatpush.bf16.msra.mxu0 %v2210
    %3600 = vmatpush.bf16.msra.mxu0 %v2202
    %3601 = vmatpush.bf16.msra.mxu0 %v2194
    %3602 = vmatmul.bf16.gmra.mxu0 %v3488
    %v3603 = vpop.f32.mrf.mxu0
    %v3604 = vadd.f32 0.0, %v3603
    %v3605 = vpop.f32.mrf.mxu0
    %3606 = vdwg.mxu0
    %3607 = vmatpush.bf16.msra.mxu0 %v2314
    %3608 = vmatpush.bf16.msra.mxu0 %v2306
    %3609 = vmatpush.bf16.msra.mxu0 %v2298
    %3610 = vmatpush.bf16.msra.mxu0 %v2290
    %3611 = vmatpush.bf16.msra.mxu0 %v2282
    %3612 = vmatpush.bf16.msra.mxu0 %v2274
    %3613 = vmatpush.bf16.msra.mxu0 %v2266
    %3614 = vmatpush.bf16.msra.mxu0 %v2258
    %3615 = vmatmul.bf16.gmra.mxu0 %v3489
    %v3616 = vpop.f32.mrf.mxu0
    %v3617 = vadd.f32 %v3604, %v3616
    %v3618 = vpop.f32.mrf.mxu0
    %3619 = vdwg.mxu0
    %3620 = vmatpush.bf16.msra.mxu0 %v2251
    %3621 = vmatpush.bf16.msra.mxu0 %v2243
    %3622 = vmatpush.bf16.msra.mxu0 %v2235
    %3623 = vmatpush.bf16.msra.mxu0 %v2227
    %3624 = vmatpush.bf16.msra.mxu0 %v2219
    %3625 = vmatpush.bf16.msra.mxu0 %v2211
    %3626 = vmatpush.bf16.msra.mxu0 %v2203
    %3627 = vmatpush.bf16.msra.mxu0 %v2195
    %3628 = vmatmul.bf16.gmra.mxu0 %v3488
    %v3629 = vpop.f32.mrf.mxu0
    %v3630 = vadd.f32 0.0, %v3629
    %v3631 = vpop.f32.mrf.mxu0
    %3632 = vdwg.mxu0
    %3633 = vmatpush.bf16.msra.mxu0 %v2315
    %3634 = vmatpush.bf16.msra.mxu0 %v2307
    %3635 = vmatpush.bf16.msra.mxu0 %v2299
    %3636 = vmatpush.bf16.msra.mxu0 %v2291
    %3637 = vmatpush.bf16.msra.mxu0 %v2283
    %3638 = vmatpush.bf16.msra.mxu0 %v2275
    %3639 = vmatpush.bf16.msra.mxu0 %v2267
    %3640 = vmatpush.bf16.msra.mxu0 %v2259
    %3641 = vmatmul.bf16.gmra.mxu0 %v3489
    %v3642 = vpop.f32.mrf.mxu0
    %v3643 = vadd.f32 %v3630, %v3642
    %v3644 = vpop.f32.mrf.mxu0
    %3645 = vdwg.mxu0
    %3646 = vmatpush.bf16.msra.mxu0 %v2252
    %3647 = vmatpush.bf16.msra.mxu0 %v2244
    %3648 = vmatpush.bf16.msra.mxu0 %v2236
    %3649 = vmatpush.bf16.msra.mxu0 %v2228
    %3650 = vmatpush.bf16.msra.mxu0 %v2220
    %3651 = vmatpush.bf16.msra.mxu0 %v2212
    %3652 = vmatpush.bf16.msra.mxu0 %v2204
    %3653 = vmatpush.bf16.msra.mxu0 %v2196
    %3654 = vmatmul.bf16.gmra.mxu0 %v3488
    %v3655 = vpop.f32.mrf.mxu0
    %v3656 = vadd.f32 0.0, %v3655
    %v3657 = vpop.f32.mrf.mxu0
    %3658 = vdwg.mxu0
    %3659 = vmatpush.bf16.msra.mxu0 %v2316
    %3660 = vmatpush.bf16.msra.mxu0 %v2308
    %3661 = vmatpush.bf16.msra.mxu0 %v2300
    %3662 = vmatpush.bf16.msra.mxu0 %v2292
    %3663 = vmatpush.bf16.msra.mxu0 %v2284
    %3664 = vmatpush.bf16.msra.mxu0 %v2276
    %3665 = vmatpush.bf16.msra.mxu0 %v2268
    %3666 = vmatpush.bf16.msra.mxu0 %v2260
    %3667 = vmatmul.bf16.gmra.mxu0 %v3489
    %v3668 = vpop.f32.mrf.mxu0
    %v3669 = vadd.f32 %v3656, %v3668
    %v3670 = vpop.f32.mrf.mxu0
    %3671 = vdwg.mxu0
    %3672 = vmatpush.bf16.msra.mxu0 %v2253
    %3673 = vmatpush.bf16.msra.mxu0 %v2245
    %3674 = vmatpush.bf16.msra.mxu0 %v2237
    %3675 = vmatpush.bf16.msra.mxu0 %v2229
    %3676 = vmatpush.bf16.msra.mxu0 %v2221
    %3677 = vmatpush.bf16.msra.mxu0 %v2213
    %3678 = vmatpush.bf16.msra.mxu0 %v2205
    %3679 = vmatpush.bf16.msra.mxu0 %v2197
    %3680 = vmatmul.bf16.gmra.mxu0 %v3488
    %v3681 = vpop.f32.mrf.mxu0
    %v3682 = vadd.f32 0.0, %v3681
    %v3683 = vpop.f32.mrf.mxu0
    %3684 = vdwg.mxu0
    %3685 = vmatpush.bf16.msra.mxu0 %v2317
    %3686 = vmatpush.bf16.msra.mxu0 %v2309
    %3687 = vmatpush.bf16.msra.mxu0 %v2301
    %3688 = vmatpush.bf16.msra.mxu0 %v2293
    %3689 = vmatpush.bf16.msra.mxu0 %v2285
    %3690 = vmatpush.bf16.msra.mxu0 %v2277
    %3691 = vmatpush.bf16.msra.mxu0 %v2269
    %3692 = vmatpush.bf16.msra.mxu0 %v2261
    %3693 = vmatmul.bf16.gmra.mxu0 %v3489
    %v3694 = vpop.f32.mrf.mxu0
    %v3695 = vadd.f32 %v3682, %v3694
    %v3696 = vpop.f32.mrf.mxu0
    %3697 = vdwg.mxu0
    %v3698 = vadd.f32 %v3617, %v1597
    %v3699 = vadd.f32 %v3643, %v1598
    %v3700 = vadd.f32 %v3669, %v1599
    %v3701 = vadd.f32 %v3695, %v1600
    %v3702 = vxor.u32 %v3698, 2147483648
    %v3703 = vxor.u32 %v3699, 2147483648
    %v3704 = vxor.u32 %v3700, 2147483648
    %v3705 = vmul.f32 %v3702, 1.442695
    %v3706 = vpow.pop %v3705
    %v3707 = vmul.f32 %v3703, 1.442695
    %v3708 = vpow.pop %v3707
    %v3709 = vmul.f32 %v3704, 1.442695
    %v3710 = vpow.pop %v3709
    %v3711 = vadd.f32 %v3706, 1.0
    %v3712 = vadd.f32 %v3708, 1.0
    %v3713 = vadd.f32 %v3710, 1.0
    %v3714 = vrcp.pop %v3711
    %v3715 = vmul.f32 %v3711, %v3714
    %v3716 = vsub.f32 1.0, %v3715
    %v3717 = vmul.f32 %v3714, %v3716
    %v3718 = vadd.f32 %v3714, %v3717
    %vm3719 = vweird.f32 %v3711
    %vm3720 = vweird.f32 %v3714
    %vm3721 = vmor %vm3719, %vm3720
    %v3722 = vsel %vm3721, %v3714, %v3718
    %v3723 = vand.u32 2147483647, %v3711
    %vm3724 = vcmp.eq.f32.partialorder %v3723, 8.507059e+37
    %v3725 = vand.u32 %v3711, 2147483648
    %v3726 = vor.u32 1.1754944e-38, %v3725
    %v3727 = vsel %vm3724, %v3726, %v3722
    %v3728 = vmul.f32 1.0, %v3727
    %v3729 = vrcp.pop %v3712
    %v3730 = vmul.f32 %v3712, %v3729
    %v3731 = vsub.f32 1.0, %v3730
    %v3732 = vmul.f32 %v3729, %v3731
    %v3733 = vadd.f32 %v3729, %v3732
    %vm3734 = vweird.f32 %v3712
    %vm3735 = vweird.f32 %v3729
    %vm3736 = vmor %vm3734, %vm3735
    %v3737 = vsel %vm3736, %v3729, %v3733
    %v3738 = vand.u32 2147483647, %v3712
    %vm3739 = vcmp.eq.f32.partialorder %v3738, 8.507059e+37
    %v3740 = vand.u32 %v3712, 2147483648
    %v3741 = vor.u32 1.1754944e-38, %v3740
    %v3742 = vsel %vm3739, %v3741, %v3737
    %v3743 = vmul.f32 1.0, %v3742
    %v3744 = vrcp.pop %v3713
    %v3745 = vmul.f32 %v3713, %v3744
    %v3746 = vsub.f32 1.0, %v3745
    %v3747 = vmul.f32 %v3744, %v3746
    %v3748 = vadd.f32 %v3744, %v3747
    %vm3749 = vweird.f32 %v3713
    %vm3750 = vweird.f32 %v3744
    %vm3751 = vmor %vm3749, %vm3750
    %v3752 = vsel %vm3751, %v3744, %v3748
    %v3753 = vand.u32 2147483647, %v3713
    %vm3754 = vcmp.eq.f32.partialorder %v3753, 8.507059e+37
    %v3755 = vand.u32 %v3713, 2147483648
    %v3756 = vor.u32 1.1754944e-38, %v3755
    %v3757 = vsel %vm3754, %v3756, %v3752
    %v3758 = vmul.f32 1.0, %v3757
    %v3759 = vtanh.pop %v3701
    %v3760 = vmul.f32 %v3743, %v3414
    %v3761 = vmul.f32 %v3728, %v3759
    %v3762 = vadd.f32 %v3760, %v3761
    %v3763 = vtanh.pop %v3762
    %v3764 = vmul.f32 %v3758, %v3763
    %v3765 = vld [vmem:[#allocation4 + $0x80] sm:$0xff]
    %v3766 = vld [vmem:[#allocation4 + $0x88] sm:$0xff]
    %v3767 = vld [vmem:[#allocation4 + $0x90] sm:$0xff]
    %v3768 = vld [vmem:[#allocation4 + $0x98] sm:$0xff]
    %v3769 = vadd.f32 %v3765, %v3513
    %v3770 = vadd.f32 %v3766, %v3539
    %v3771 = vadd.f32 %v3767, %v3565
    %v3772 = vadd.f32 %v3768, %v3591
    %v3773 = vxor.u32 %v3769, 2147483648
    %v3774 = vxor.u32 %v3770, 2147483648
    %v3775 = vxor.u32 %v3771, 2147483648
    %v3776 = vmul.f32 %v3773, 1.442695
    %v3777 = vpow.pop %v3776
    %v3778 = vmul.f32 %v3774, 1.442695
    %v3779 = vpow.pop %v3778
    %v3780 = vmul.f32 %v3775, 1.442695
    %v3781 = vpow.pop %v3780
    %v3782 = vadd.f32 %v3777, 1.0
    %v3783 = vadd.f32 %v3779, 1.0
    %v3784 = vadd.f32 %v3781, 1.0
    %v3785 = vrcp.pop %v3782
    %v3786 = vmul.f32 %v3782, %v3785
    %v3787 = vsub.f32 1.0, %v3786
    %v3788 = vmul.f32 %v3785, %v3787
    %v3789 = vadd.f32 %v3785, %v3788
    %vm3790 = vweird.f32 %v3782
    %vm3791 = vweird.f32 %v3785
    %vm3792 = vmor %vm3790, %vm3791
    %v3793 = vsel %vm3792, %v3785, %v3789
    %v3794 = vand.u32 2147483647, %v3782
    %vm3795 = vcmp.eq.f32.partialorder %v3794, 8.507059e+37
    %v3796 = vand.u32 %v3782, 2147483648
    %v3797 = vor.u32 1.1754944e-38, %v3796
    %v3798 = vsel %vm3795, %v3797, %v3793
    %v3799 = vmul.f32 1.0, %v3798
    %v3800 = vrcp.pop %v3783
    %v3801 = vmul.f32 %v3783, %v3800
    %v3802 = vsub.f32 1.0, %v3801
    %v3803 = vmul.f32 %v3800, %v3802
    %v3804 = vadd.f32 %v3800, %v3803
    %vm3805 = vweird.f32 %v3783
    %vm3806 = vweird.f32 %v3800
    %vm3807 = vmor %vm3805, %vm3806
    %v3808 = vsel %vm3807, %v3800, %v3804
    %v3809 = vand.u32 2147483647, %v3783
    %vm3810 = vcmp.eq.f32.partialorder %v3809, 8.507059e+37
    %v3811 = vand.u32 %v3783, 2147483648
    %v3812 = vor.u32 1.1754944e-38, %v3811
    %v3813 = vsel %vm3810, %v3812, %v3808
    %v3814 = vmul.f32 1.0, %v3813
    %v3815 = vrcp.pop %v3784
    %v3816 = vmul.f32 %v3784, %v3815
    %v3817 = vsub.f32 1.0, %v3816
    %v3818 = vmul.f32 %v3815, %v3817
    %v3819 = vadd.f32 %v3815, %v3818
    %vm3820 = vweird.f32 %v3784
    %vm3821 = vweird.f32 %v3815
    %vm3822 = vmor %vm3820, %vm3821
    %v3823 = vsel %vm3822, %v3815, %v3819
    %v3824 = vand.u32 2147483647, %v3784
    %vm3825 = vcmp.eq.f32.partialorder %v3824, 8.507059e+37
    %v3826 = vand.u32 %v3784, 2147483648
    %v3827 = vor.u32 1.1754944e-38, %v3826
    %v3828 = vsel %vm3825, %v3827, %v3823
    %v3829 = vmul.f32 1.0, %v3828
    %v3830 = vtanh.pop %v3772
    %v3831 = vmul.f32 %v3814, %v3485
    %v3832 = vmul.f32 %v3799, %v3830
    %v3833 = vadd.f32 %v3831, %v3832
    %v3834 = vtanh.pop %v3833
    %v3835 = vmul.f32 %v3829, %v3834
    %v3836 = vpack.c.bf16 %v3835, %v3835
    %v3837 = vpack.c.bf16 %v3764, %v3764
    %3838 = vmatpush.bf16.msra.mxu0 %v2246
    %3839 = vmatpush.bf16.msra.mxu0 %v2238
    %3840 = vmatpush.bf16.msra.mxu0 %v2230
    %3841 = vmatpush.bf16.msra.mxu0 %v2222
    %3842 = vmatpush.bf16.msra.mxu0 %v2214
    %3843 = vmatpush.bf16.msra.mxu0 %v2206
    %3844 = vmatpush.bf16.msra.mxu0 %v2198
    %3845 = vmatpush.bf16.msra.mxu0 %v2190
    %3846 = vmatmul.bf16.gmra.mxu0 %v3836
    %v3847 = vpop.f32.mrf.mxu0
    %v3848 = vadd.f32 0.0, %v3847
    %v3849 = vpop.f32.mrf.mxu0
    %3850 = vdwg.mxu0
    %3851 = vmatpush.bf16.msra.mxu0 %v2310
    %3852 = vmatpush.bf16.msra.mxu0 %v2302
    %3853 = vmatpush.bf16.msra.mxu0 %v2294
    %3854 = vmatpush.bf16.msra.mxu0 %v2286
    %3855 = vmatpush.bf16.msra.mxu0 %v2278
    %3856 = vmatpush.bf16.msra.mxu0 %v2270
    %3857 = vmatpush.bf16.msra.mxu0 %v2262
    %3858 = vmatpush.bf16.msra.mxu0 %v2254
    %3859 = vmatmul.bf16.gmra.mxu0 %v3837
    %v3860 = vpop.f32.mrf.mxu0
    %v3861 = vadd.f32 %v3848, %v3860
    %v3862 = vpop.f32.mrf.mxu0
    %3863 = vdwg.mxu0
    %3864 = vmatpush.bf16.msra.mxu0 %v2247
    %3865 = vmatpush.bf16.msra.mxu0 %v2239
    %3866 = vmatpush.bf16.msra.mxu0 %v2231
    %3867 = vmatpush.bf16.msra.mxu0 %v2223
    %3868 = vmatpush.bf16.msra.mxu0 %v2215
    %3869 = vmatpush.bf16.msra.mxu0 %v2207
    %3870 = vmatpush.bf16.msra.mxu0 %v2199
    %3871 = vmatpush.bf16.msra.mxu0 %v2191
    %3872 = vmatmul.bf16.gmra.mxu0 %v3836
    %v3873 = vpop.f32.mrf.mxu0
    %v3874 = vadd.f32 0.0, %v3873
    %v3875 = vpop.f32.mrf.mxu0
    %3876 = vdwg.mxu0
    %3877 = vmatpush.bf16.msra.mxu0 %v2311
    %3878 = vmatpush.bf16.msra.mxu0 %v2303
    %3879 = vmatpush.bf16.msra.mxu0 %v2295
    %3880 = vmatpush.bf16.msra.mxu0 %v2287
    %3881 = vmatpush.bf16.msra.mxu0 %v2279
    %3882 = vmatpush.bf16.msra.mxu0 %v2271
    %3883 = vmatpush.bf16.msra.mxu0 %v2263
    %3884 = vmatpush.bf16.msra.mxu0 %v2255
    %3885 = vmatmul.bf16.gmra.mxu0 %v3837
    %v3886 = vpop.f32.mrf.mxu0
    %v3887 = vadd.f32 %v3874, %v3886
    %v3888 = vpop.f32.mrf.mxu0
    %3889 = vdwg.mxu0
    %3890 = vmatpush.bf16.msra.mxu0 %v2248
    %3891 = vmatpush.bf16.msra.mxu0 %v2240
    %3892 = vmatpush.bf16.msra.mxu0 %v2232
    %3893 = vmatpush.bf16.msra.mxu0 %v2224
    %3894 = vmatpush.bf16.msra.mxu0 %v2216
    %3895 = vmatpush.bf16.msra.mxu0 %v2208
    %3896 = vmatpush.bf16.msra.mxu0 %v2200
    %3897 = vmatpush.bf16.msra.mxu0 %v2192
    %3898 = vmatmul.bf16.gmra.mxu0 %v3836
    %v3899 = vpop.f32.mrf.mxu0
    %v3900 = vadd.f32 0.0, %v3899
    %v3901 = vpop.f32.mrf.mxu0
    %3902 = vdwg.mxu0
    %3903 = vmatpush.bf16.msra.mxu0 %v2312
    %3904 = vmatpush.bf16.msra.mxu0 %v2304
    %3905 = vmatpush.bf16.msra.mxu0 %v2296
    %3906 = vmatpush.bf16.msra.mxu0 %v2288
    %3907 = vmatpush.bf16.msra.mxu0 %v2280
    %3908 = vmatpush.bf16.msra.mxu0 %v2272
    %3909 = vmatpush.bf16.msra.mxu0 %v2264
    %3910 = vmatpush.bf16.msra.mxu0 %v2256
    %3911 = vmatmul.bf16.gmra.mxu0 %v3837
    %v3912 = vpop.f32.mrf.mxu0
    %v3913 = vadd.f32 %v3900, %v3912
    %v3914 = vpop.f32.mrf.mxu0
    %3915 = vdwg.mxu0
    %3916 = vmatpush.bf16.msra.mxu0 %v2249
    %3917 = vmatpush.bf16.msra.mxu0 %v2241
    %3918 = vmatpush.bf16.msra.mxu0 %v2233
    %3919 = vmatpush.bf16.msra.mxu0 %v2225
    %3920 = vmatpush.bf16.msra.mxu0 %v2217
    %3921 = vmatpush.bf16.msra.mxu0 %v2209
    %3922 = vmatpush.bf16.msra.mxu0 %v2201
    %3923 = vmatpush.bf16.msra.mxu0 %v2193
    %3924 = vmatmul.bf16.gmra.mxu0 %v3836
    %v3925 = vpop.f32.mrf.mxu0
    %v3926 = vadd.f32 0.0, %v3925
    %v3927 = vpop.f32.mrf.mxu0
    %3928 = vdwg.mxu0
    %3929 = vmatpush.bf16.msra.mxu0 %v2313
    %3930 = vmatpush.bf16.msra.mxu0 %v2305
    %3931 = vmatpush.bf16.msra.mxu0 %v2297
    %3932 = vmatpush.bf16.msra.mxu0 %v2289
    %3933 = vmatpush.bf16.msra.mxu0 %v2281
    %3934 = vmatpush.bf16.msra.mxu0 %v2273
    %3935 = vmatpush.bf16.msra.mxu0 %v2265
    %3936 = vmatpush.bf16.msra.mxu0 %v2257
    %3937 = vmatmul.bf16.gmra.mxu0 %v3837
    %v3938 = vpop.f32.mrf.mxu0
    %v3939 = vadd.f32 %v3926, %v3938
    %v3940 = vpop.f32.mrf.mxu0
    %3941 = vdwg.mxu0
    %3942 = vmatpush.bf16.msra.mxu0 %v2250
    %3943 = vmatpush.bf16.msra.mxu0 %v2242
    %3944 = vmatpush.bf16.msra.mxu0 %v2234
    %3945 = vmatpush.bf16.msra.mxu0 %v2226
    %3946 = vmatpush.bf16.msra.mxu0 %v2218
    %3947 = vmatpush.bf16.msra.mxu0 %v2210
    %3948 = vmatpush.bf16.msra.mxu0 %v2202
    %3949 = vmatpush.bf16.msra.mxu0 %v2194
    %3950 = vmatmul.bf16.gmra.mxu0 %v3836
    %v3951 = vpop.f32.mrf.mxu0
    %v3952 = vadd.f32 0.0, %v3951
    %v3953 = vpop.f32.mrf.mxu0
    %3954 = vdwg.mxu0
    %3955 = vmatpush.bf16.msra.mxu0 %v2314
    %3956 = vmatpush.bf16.msra.mxu0 %v2306
    %3957 = vmatpush.bf16.msra.mxu0 %v2298
    %3958 = vmatpush.bf16.msra.mxu0 %v2290
    %3959 = vmatpush.bf16.msra.mxu0 %v2282
    %3960 = vmatpush.bf16.msra.mxu0 %v2274
    %3961 = vmatpush.bf16.msra.mxu0 %v2266
    %3962 = vmatpush.bf16.msra.mxu0 %v2258
    %3963 = vmatmul.bf16.gmra.mxu0 %v3837
    %v3964 = vpop.f32.mrf.mxu0
    %v3965 = vadd.f32 %v3952, %v3964
    %v3966 = vpop.f32.mrf.mxu0
    %3967 = vdwg.mxu0
    %3968 = vmatpush.bf16.msra.mxu0 %v2251
    %3969 = vmatpush.bf16.msra.mxu0 %v2243
    %3970 = vmatpush.bf16.msra.mxu0 %v2235
    %3971 = vmatpush.bf16.msra.mxu0 %v2227
    %3972 = vmatpush.bf16.msra.mxu0 %v2219
    %3973 = vmatpush.bf16.msra.mxu0 %v2211
    %3974 = vmatpush.bf16.msra.mxu0 %v2203
    %3975 = vmatpush.bf16.msra.mxu0 %v2195
    %3976 = vmatmul.bf16.gmra.mxu0 %v3836
    %v3977 = vpop.f32.mrf.mxu0
    %v3978 = vadd.f32 0.0, %v3977
    %v3979 = vpop.f32.mrf.mxu0
    %3980 = vdwg.mxu0
    %3981 = vmatpush.bf16.msra.mxu0 %v2315
    %3982 = vmatpush.bf16.msra.mxu0 %v2307
    %3983 = vmatpush.bf16.msra.mxu0 %v2299
    %3984 = vmatpush.bf16.msra.mxu0 %v2291
    %3985 = vmatpush.bf16.msra.mxu0 %v2283
    %3986 = vmatpush.bf16.msra.mxu0 %v2275
    %3987 = vmatpush.bf16.msra.mxu0 %v2267
    %3988 = vmatpush.bf16.msra.mxu0 %v2259
    %3989 = vmatmul.bf16.gmra.mxu0 %v3837
    %v3990 = vpop.f32.mrf.mxu0
    %v3991 = vadd.f32 %v3978, %v3990
    %v3992 = vpop.f32.mrf.mxu0
    %3993 = vdwg.mxu0
    %3994 = vmatpush.bf16.msra.mxu0 %v2252
    %3995 = vmatpush.bf16.msra.mxu0 %v2244
    %3996 = vmatpush.bf16.msra.mxu0 %v2236
    %3997 = vmatpush.bf16.msra.mxu0 %v2228
    %3998 = vmatpush.bf16.msra.mxu0 %v2220
    %3999 = vmatpush.bf16.msra.mxu0 %v2212
    %4000 = vmatpush.bf16.msra.mxu0 %v2204
    %4001 = vmatpush.bf16.msra.mxu0 %v2196
    %4002 = vmatmul.bf16.gmra.mxu0 %v3836
    %v4003 = vpop.f32.mrf.mxu0
    %v4004 = vadd.f32 0.0, %v4003
    %v4005 = vpop.f32.mrf.mxu0
    %4006 = vdwg.mxu0
    %4007 = vmatpush.bf16.msra.mxu0 %v2316
    %4008 = vmatpush.bf16.msra.mxu0 %v2308
    %4009 = vmatpush.bf16.msra.mxu0 %v2300
    %4010 = vmatpush.bf16.msra.mxu0 %v2292
    %4011 = vmatpush.bf16.msra.mxu0 %v2284
    %4012 = vmatpush.bf16.msra.mxu0 %v2276
    %4013 = vmatpush.bf16.msra.mxu0 %v2268
    %4014 = vmatpush.bf16.msra.mxu0 %v2260
    %4015 = vmatmul.bf16.gmra.mxu0 %v3837
    %v4016 = vpop.f32.mrf.mxu0
    %v4017 = vadd.f32 %v4004, %v4016
    %v4018 = vpop.f32.mrf.mxu0
    %4019 = vdwg.mxu0
    %4020 = vmatpush.bf16.msra.mxu0 %v2253
    %4021 = vmatpush.bf16.msra.mxu0 %v2245
    %4022 = vmatpush.bf16.msra.mxu0 %v2237
    %4023 = vmatpush.bf16.msra.mxu0 %v2229
    %4024 = vmatpush.bf16.msra.mxu0 %v2221
    %4025 = vmatpush.bf16.msra.mxu0 %v2213
    %4026 = vmatpush.bf16.msra.mxu0 %v2205
    %4027 = vmatpush.bf16.msra.mxu0 %v2197
    %4028 = vmatmul.bf16.gmra.mxu0 %v3836
    %v4029 = vpop.f32.mrf.mxu0
    %v4030 = vadd.f32 0.0, %v4029
    %v4031 = vpop.f32.mrf.mxu0
    %4032 = vdwg.mxu0
    %4033 = vmatpush.bf16.msra.mxu0 %v2317
    %4034 = vmatpush.bf16.msra.mxu0 %v2309
    %4035 = vmatpush.bf16.msra.mxu0 %v2301
    %4036 = vmatpush.bf16.msra.mxu0 %v2293
    %4037 = vmatpush.bf16.msra.mxu0 %v2285
    %4038 = vmatpush.bf16.msra.mxu0 %v2277
    %4039 = vmatpush.bf16.msra.mxu0 %v2269
    %4040 = vmatpush.bf16.msra.mxu0 %v2261
    %4041 = vmatmul.bf16.gmra.mxu0 %v3837
    %v4042 = vpop.f32.mrf.mxu0
    %v4043 = vadd.f32 %v4030, %v4042
    %v4044 = vpop.f32.mrf.mxu0
    %4045 = vdwg.mxu0
    %v4046 = vadd.f32 %v3965, %v1597
    %v4047 = vadd.f32 %v3991, %v1598
    %v4048 = vadd.f32 %v4017, %v1599
    %v4049 = vadd.f32 %v4043, %v1600
    %v4050 = vxor.u32 %v4046, 2147483648
    %v4051 = vxor.u32 %v4047, 2147483648
    %v4052 = vxor.u32 %v4048, 2147483648
    %v4053 = vmul.f32 %v4050, 1.442695
    %v4054 = vpow.pop %v4053
    %v4055 = vmul.f32 %v4051, 1.442695
    %v4056 = vpow.pop %v4055
    %v4057 = vmul.f32 %v4052, 1.442695
    %v4058 = vpow.pop %v4057
    %v4059 = vadd.f32 %v4054, 1.0
    %v4060 = vadd.f32 %v4056, 1.0
    %v4061 = vadd.f32 %v4058, 1.0
    %v4062 = vrcp.pop %v4059
    %v4063 = vmul.f32 %v4059, %v4062
    %v4064 = vsub.f32 1.0, %v4063
    %v4065 = vmul.f32 %v4062, %v4064
    %v4066 = vadd.f32 %v4062, %v4065
    %vm4067 = vweird.f32 %v4059
    %vm4068 = vweird.f32 %v4062
    %vm4069 = vmor %vm4067, %vm4068
    %v4070 = vsel %vm4069, %v4062, %v4066
    %v4071 = vand.u32 2147483647, %v4059
    %vm4072 = vcmp.eq.f32.partialorder %v4071, 8.507059e+37
    %v4073 = vand.u32 %v4059, 2147483648
    %v4074 = vor.u32 1.1754944e-38, %v4073
    %v4075 = vsel %vm4072, %v4074, %v4070
    %v4076 = vmul.f32 1.0, %v4075
    %v4077 = vrcp.pop %v4060
    %v4078 = vmul.f32 %v4060, %v4077
    %v4079 = vsub.f32 1.0, %v4078
    %v4080 = vmul.f32 %v4077, %v4079
    %v4081 = vadd.f32 %v4077, %v4080
    %vm4082 = vweird.f32 %v4060
    %vm4083 = vweird.f32 %v4077
    %vm4084 = vmor %vm4082, %vm4083
    %v4085 = vsel %vm4084, %v4077, %v4081
    %v4086 = vand.u32 2147483647, %v4060
    %vm4087 = vcmp.eq.f32.partialorder %v4086, 8.507059e+37
    %v4088 = vand.u32 %v4060, 2147483648
    %v4089 = vor.u32 1.1754944e-38, %v4088
    %v4090 = vsel %vm4087, %v4089, %v4085
    %v4091 = vmul.f32 1.0, %v4090
    %v4092 = vrcp.pop %v4061
    %v4093 = vmul.f32 %v4061, %v4092
    %v4094 = vsub.f32 1.0, %v4093
    %v4095 = vmul.f32 %v4092, %v4094
    %v4096 = vadd.f32 %v4092, %v4095
    %vm4097 = vweird.f32 %v4061
    %vm4098 = vweird.f32 %v4092
    %vm4099 = vmor %vm4097, %vm4098
    %v4100 = vsel %vm4099, %v4092, %v4096
    %v4101 = vand.u32 2147483647, %v4061
    %vm4102 = vcmp.eq.f32.partialorder %v4101, 8.507059e+37
    %v4103 = vand.u32 %v4061, 2147483648
    %v4104 = vor.u32 1.1754944e-38, %v4103
    %v4105 = vsel %vm4102, %v4104, %v4100
    %v4106 = vmul.f32 1.0, %v4105
    %v4107 = vtanh.pop %v4049
    %v4108 = vmul.f32 %v4091, %v3762
    %v4109 = vmul.f32 %v4076, %v4107
    %v4110 = vadd.f32 %v4108, %v4109
    %v4111 = vtanh.pop %v4110
    %v4112 = vmul.f32 %v4106, %v4111
    %v4113 = vld [vmem:[#allocation4 + $0xa0] sm:$0xff]
    %v4114 = vld [vmem:[#allocation4 + $0xa8] sm:$0xff]
    %v4115 = vld [vmem:[#allocation4 + $0xb0] sm:$0xff]
    %v4116 = vld [vmem:[#allocation4 + $0xb8] sm:$0xff]
    %v4117 = vadd.f32 %v4113, %v3861
    %v4118 = vadd.f32 %v4114, %v3887
    %v4119 = vadd.f32 %v4115, %v3913
    %v4120 = vadd.f32 %v4116, %v3939
    %v4121 = vxor.u32 %v4117, 2147483648
    %v4122 = vxor.u32 %v4118, 2147483648
    %v4123 = vxor.u32 %v4119, 2147483648
    %v4124 = vmul.f32 %v4121, 1.442695
    %v4125 = vpow.pop %v4124
    %v4126 = vmul.f32 %v4122, 1.442695
    %v4127 = vpow.pop %v4126
    %v4128 = vmul.f32 %v4123, 1.442695
    %v4129 = vpow.pop %v4128
    %v4130 = vadd.f32 %v4125, 1.0
    %v4131 = vadd.f32 %v4127, 1.0
    %v4132 = vadd.f32 %v4129, 1.0
    %v4133 = vrcp.pop %v4130
    %v4134 = vmul.f32 %v4130, %v4133
    %v4135 = vsub.f32 1.0, %v4134
    %v4136 = vmul.f32 %v4133, %v4135
    %v4137 = vadd.f32 %v4133, %v4136
    %vm4138 = vweird.f32 %v4130
    %vm4139 = vweird.f32 %v4133
    %vm4140 = vmor %vm4138, %vm4139
    %v4141 = vsel %vm4140, %v4133, %v4137
    %v4142 = vand.u32 2147483647, %v4130
    %vm4143 = vcmp.eq.f32.partialorder %v4142, 8.507059e+37
    %v4144 = vand.u32 %v4130, 2147483648
    %v4145 = vor.u32 1.1754944e-38, %v4144
    %v4146 = vsel %vm4143, %v4145, %v4141
    %v4147 = vmul.f32 1.0, %v4146
    %v4148 = vrcp.pop %v4131
    %v4149 = vmul.f32 %v4131, %v4148
    %v4150 = vsub.f32 1.0, %v4149
    %v4151 = vmul.f32 %v4148, %v4150
    %v4152 = vadd.f32 %v4148, %v4151
    %vm4153 = vweird.f32 %v4131
    %vm4154 = vweird.f32 %v4148
    %vm4155 = vmor %vm4153, %vm4154
    %v4156 = vsel %vm4155, %v4148, %v4152
    %v4157 = vand.u32 2147483647, %v4131
    %vm4158 = vcmp.eq.f32.partialorder %v4157, 8.507059e+37
    %v4159 = vand.u32 %v4131, 2147483648
    %v4160 = vor.u32 1.1754944e-38, %v4159
    %v4161 = vsel %vm4158, %v4160, %v4156
    %v4162 = vmul.f32 1.0, %v4161
    %v4163 = vrcp.pop %v4132
    %v4164 = vmul.f32 %v4132, %v4163
    %v4165 = vsub.f32 1.0, %v4164
    %v4166 = vmul.f32 %v4163, %v4165
    %v4167 = vadd.f32 %v4163, %v4166
    %vm4168 = vweird.f32 %v4132
    %vm4169 = vweird.f32 %v4163
    %vm4170 = vmor %vm4168, %vm4169
    %v4171 = vsel %vm4170, %v4163, %v4167
    %v4172 = vand.u32 2147483647, %v4132
    %vm4173 = vcmp.eq.f32.partialorder %v4172, 8.507059e+37
    %v4174 = vand.u32 %v4132, 2147483648
    %v4175 = vor.u32 1.1754944e-38, %v4174
    %v4176 = vsel %vm4173, %v4175, %v4171
    %v4177 = vmul.f32 1.0, %v4176
    %v4178 = vtanh.pop %v4120
    %v4179 = vmul.f32 %v4162, %v3833
    %v4180 = vmul.f32 %v4147, %v4178
    %v4181 = vadd.f32 %v4179, %v4180
    %v4182 = vtanh.pop %v4181
    %v4183 = vmul.f32 %v4177, %v4182
    %v4184 = vpack.c.bf16 %v4183, %v4183
    %v4185 = vpack.c.bf16 %v4112, %v4112
    %4186 = vmatpush.bf16.msra.mxu0 %v2246
    %4187 = vmatpush.bf16.msra.mxu0 %v2238
    %4188 = vmatpush.bf16.msra.mxu0 %v2230
    %4189 = vmatpush.bf16.msra.mxu0 %v2222
    %4190 = vmatpush.bf16.msra.mxu0 %v2214
    %4191 = vmatpush.bf16.msra.mxu0 %v2206
    %4192 = vmatpush.bf16.msra.mxu0 %v2198
    %4193 = vmatpush.bf16.msra.mxu0 %v2190
    %4194 = vmatmul.bf16.gmra.mxu0 %v4184
    %v4195 = vpop.f32.mrf.mxu0
    %v4196 = vadd.f32 0.0, %v4195
    %v4197 = vpop.f32.mrf.mxu0
    %4198 = vdwg.mxu0
    %4199 = vmatpush.bf16.msra.mxu0 %v2310
    %4200 = vmatpush.bf16.msra.mxu0 %v2302
    %4201 = vmatpush.bf16.msra.mxu0 %v2294
    %4202 = vmatpush.bf16.msra.mxu0 %v2286
    %4203 = vmatpush.bf16.msra.mxu0 %v2278
    %4204 = vmatpush.bf16.msra.mxu0 %v2270
    %4205 = vmatpush.bf16.msra.mxu0 %v2262
    %4206 = vmatpush.bf16.msra.mxu0 %v2254
    %4207 = vmatmul.bf16.gmra.mxu0 %v4185
    %v4208 = vpop.f32.mrf.mxu0
    %v4209 = vadd.f32 %v4196, %v4208
    %v4210 = vpop.f32.mrf.mxu0
    %4211 = vdwg.mxu0
    %4212 = vmatpush.bf16.msra.mxu0 %v2247
    %4213 = vmatpush.bf16.msra.mxu0 %v2239
    %4214 = vmatpush.bf16.msra.mxu0 %v2231
    %4215 = vmatpush.bf16.msra.mxu0 %v2223
    %4216 = vmatpush.bf16.msra.mxu0 %v2215
    %4217 = vmatpush.bf16.msra.mxu0 %v2207
    %4218 = vmatpush.bf16.msra.mxu0 %v2199
    %4219 = vmatpush.bf16.msra.mxu0 %v2191
    %4220 = vmatmul.bf16.gmra.mxu0 %v4184
    %v4221 = vpop.f32.mrf.mxu0
    %v4222 = vadd.f32 0.0, %v4221
    %v4223 = vpop.f32.mrf.mxu0
    %4224 = vdwg.mxu0
    %4225 = vmatpush.bf16.msra.mxu0 %v2311
    %4226 = vmatpush.bf16.msra.mxu0 %v2303
    %4227 = vmatpush.bf16.msra.mxu0 %v2295
    %4228 = vmatpush.bf16.msra.mxu0 %v2287
    %4229 = vmatpush.bf16.msra.mxu0 %v2279
    %4230 = vmatpush.bf16.msra.mxu0 %v2271
    %4231 = vmatpush.bf16.msra.mxu0 %v2263
    %4232 = vmatpush.bf16.msra.mxu0 %v2255
    %4233 = vmatmul.bf16.gmra.mxu0 %v4185
    %v4234 = vpop.f32.mrf.mxu0
    %v4235 = vadd.f32 %v4222, %v4234
    %v4236 = vpop.f32.mrf.mxu0
    %4237 = vdwg.mxu0
    %4238 = vmatpush.bf16.msra.mxu0 %v2248
    %4239 = vmatpush.bf16.msra.mxu0 %v2240
    %4240 = vmatpush.bf16.msra.mxu0 %v2232
    %4241 = vmatpush.bf16.msra.mxu0 %v2224
    %4242 = vmatpush.bf16.msra.mxu0 %v2216
    %4243 = vmatpush.bf16.msra.mxu0 %v2208
    %4244 = vmatpush.bf16.msra.mxu0 %v2200
    %4245 = vmatpush.bf16.msra.mxu0 %v2192
    %4246 = vmatmul.bf16.gmra.mxu0 %v4184
    %v4247 = vpop.f32.mrf.mxu0
    %v4248 = vadd.f32 0.0, %v4247
    %v4249 = vpop.f32.mrf.mxu0
    %4250 = vdwg.mxu0
    %4251 = vmatpush.bf16.msra.mxu0 %v2312
    %4252 = vmatpush.bf16.msra.mxu0 %v2304
    %4253 = vmatpush.bf16.msra.mxu0 %v2296
    %4254 = vmatpush.bf16.msra.mxu0 %v2288
    %4255 = vmatpush.bf16.msra.mxu0 %v2280
    %4256 = vmatpush.bf16.msra.mxu0 %v2272
    %4257 = vmatpush.bf16.msra.mxu0 %v2264
    %4258 = vmatpush.bf16.msra.mxu0 %v2256
    %4259 = vmatmul.bf16.gmra.mxu0 %v4185
    %v4260 = vpop.f32.mrf.mxu0
    %v4261 = vadd.f32 %v4248, %v4260
    %v4262 = vpop.f32.mrf.mxu0
    %4263 = vdwg.mxu0
    %4264 = vmatpush.bf16.msra.mxu0 %v2249
    %4265 = vmatpush.bf16.msra.mxu0 %v2241
    %4266 = vmatpush.bf16.msra.mxu0 %v2233
    %4267 = vmatpush.bf16.msra.mxu0 %v2225
    %4268 = vmatpush.bf16.msra.mxu0 %v2217
    %4269 = vmatpush.bf16.msra.mxu0 %v2209
    %4270 = vmatpush.bf16.msra.mxu0 %v2201
    %4271 = vmatpush.bf16.msra.mxu0 %v2193
    %4272 = vmatmul.bf16.gmra.mxu0 %v4184
    %v4273 = vpop.f32.mrf.mxu0
    %v4274 = vadd.f32 0.0, %v4273
    %v4275 = vpop.f32.mrf.mxu0
    %4276 = vdwg.mxu0
    %4277 = vmatpush.bf16.msra.mxu0 %v2313
    %4278 = vmatpush.bf16.msra.mxu0 %v2305
    %4279 = vmatpush.bf16.msra.mxu0 %v2297
    %4280 = vmatpush.bf16.msra.mxu0 %v2289
    %4281 = vmatpush.bf16.msra.mxu0 %v2281
    %4282 = vmatpush.bf16.msra.mxu0 %v2273
    %4283 = vmatpush.bf16.msra.mxu0 %v2265
    %4284 = vmatpush.bf16.msra.mxu0 %v2257
    %4285 = vmatmul.bf16.gmra.mxu0 %v4185
    %v4286 = vpop.f32.mrf.mxu0
    %v4287 = vadd.f32 %v4274, %v4286
    %v4288 = vpop.f32.mrf.mxu0
    %4289 = vdwg.mxu0
    %4290 = vmatpush.bf16.msra.mxu0 %v2250
    %4291 = vmatpush.bf16.msra.mxu0 %v2242
    %4292 = vmatpush.bf16.msra.mxu0 %v2234
    %4293 = vmatpush.bf16.msra.mxu0 %v2226
    %4294 = vmatpush.bf16.msra.mxu0 %v2218
    %4295 = vmatpush.bf16.msra.mxu0 %v2210
    %4296 = vmatpush.bf16.msra.mxu0 %v2202
    %4297 = vmatpush.bf16.msra.mxu0 %v2194
    %4298 = vmatmul.bf16.gmra.mxu0 %v4184
    %v4299 = vpop.f32.mrf.mxu0
    %v4300 = vadd.f32 0.0, %v4299
    %v4301 = vpop.f32.mrf.mxu0
    %4302 = vdwg.mxu0
    %4303 = vmatpush.bf16.msra.mxu0 %v2314
    %4304 = vmatpush.bf16.msra.mxu0 %v2306
    %4305 = vmatpush.bf16.msra.mxu0 %v2298
    %4306 = vmatpush.bf16.msra.mxu0 %v2290
    %4307 = vmatpush.bf16.msra.mxu0 %v2282
    %4308 = vmatpush.bf16.msra.mxu0 %v2274
    %4309 = vmatpush.bf16.msra.mxu0 %v2266
    %4310 = vmatpush.bf16.msra.mxu0 %v2258
    %4311 = vmatmul.bf16.gmra.mxu0 %v4185
    %v4312 = vpop.f32.mrf.mxu0
    %v4313 = vadd.f32 %v4300, %v4312
    %v4314 = vpop.f32.mrf.mxu0
    %4315 = vdwg.mxu0
    %4316 = vmatpush.bf16.msra.mxu0 %v2251
    %4317 = vmatpush.bf16.msra.mxu0 %v2243
    %4318 = vmatpush.bf16.msra.mxu0 %v2235
    %4319 = vmatpush.bf16.msra.mxu0 %v2227
    %4320 = vmatpush.bf16.msra.mxu0 %v2219
    %4321 = vmatpush.bf16.msra.mxu0 %v2211
    %4322 = vmatpush.bf16.msra.mxu0 %v2203
    %4323 = vmatpush.bf16.msra.mxu0 %v2195
    %4324 = vmatmul.bf16.gmra.mxu0 %v4184
    %v4325 = vpop.f32.mrf.mxu0
    %v4326 = vadd.f32 0.0, %v4325
    %v4327 = vpop.f32.mrf.mxu0
    %4328 = vdwg.mxu0
    %4329 = vmatpush.bf16.msra.mxu0 %v2315
    %4330 = vmatpush.bf16.msra.mxu0 %v2307
    %4331 = vmatpush.bf16.msra.mxu0 %v2299
    %4332 = vmatpush.bf16.msra.mxu0 %v2291
    %4333 = vmatpush.bf16.msra.mxu0 %v2283
    %4334 = vmatpush.bf16.msra.mxu0 %v2275
    %4335 = vmatpush.bf16.msra.mxu0 %v2267
    %4336 = vmatpush.bf16.msra.mxu0 %v2259
    %4337 = vmatmul.bf16.gmra.mxu0 %v4185
    %v4338 = vpop.f32.mrf.mxu0
    %v4339 = vadd.f32 %v4326, %v4338
    %v4340 = vpop.f32.mrf.mxu0
    %4341 = vdwg.mxu0
    %4342 = vmatpush.bf16.msra.mxu0 %v2252
    %4343 = vmatpush.bf16.msra.mxu0 %v2244
    %4344 = vmatpush.bf16.msra.mxu0 %v2236
    %4345 = vmatpush.bf16.msra.mxu0 %v2228
    %4346 = vmatpush.bf16.msra.mxu0 %v2220
    %4347 = vmatpush.bf16.msra.mxu0 %v2212
    %4348 = vmatpush.bf16.msra.mxu0 %v2204
    %4349 = vmatpush.bf16.msra.mxu0 %v2196
    %4350 = vmatmul.bf16.gmra.mxu0 %v4184
    %v4351 = vpop.f32.mrf.mxu0
    %v4352 = vadd.f32 0.0, %v4351
    %v4353 = vpop.f32.mrf.mxu0
    %4354 = vdwg.mxu0
    %4355 = vmatpush.bf16.msra.mxu0 %v2316
    %4356 = vmatpush.bf16.msra.mxu0 %v2308
    %4357 = vmatpush.bf16.msra.mxu0 %v2300
    %4358 = vmatpush.bf16.msra.mxu0 %v2292
    %4359 = vmatpush.bf16.msra.mxu0 %v2284
    %4360 = vmatpush.bf16.msra.mxu0 %v2276
    %4361 = vmatpush.bf16.msra.mxu0 %v2268
    %4362 = vmatpush.bf16.msra.mxu0 %v2260
    %4363 = vmatmul.bf16.gmra.mxu0 %v4185
    %v4364 = vpop.f32.mrf.mxu0
    %v4365 = vadd.f32 %v4352, %v4364
    %v4366 = vpop.f32.mrf.mxu0
    %4367 = vdwg.mxu0
    %4368 = vmatpush.bf16.msra.mxu0 %v2253
    %4369 = vmatpush.bf16.msra.mxu0 %v2245
    %4370 = vmatpush.bf16.msra.mxu0 %v2237
    %4371 = vmatpush.bf16.msra.mxu0 %v2229
    %4372 = vmatpush.bf16.msra.mxu0 %v2221
    %4373 = vmatpush.bf16.msra.mxu0 %v2213
    %4374 = vmatpush.bf16.msra.mxu0 %v2205
    %4375 = vmatpush.bf16.msra.mxu0 %v2197
    %4376 = vmatmul.bf16.gmra.mxu0 %v4184
    %v4377 = vpop.f32.mrf.mxu0
    %v4378 = vadd.f32 0.0, %v4377
    %v4379 = vpop.f32.mrf.mxu0
    %4380 = vdwg.mxu0
    %4381 = vmatpush.bf16.msra.mxu0 %v2317
    %4382 = vmatpush.bf16.msra.mxu0 %v2309
    %4383 = vmatpush.bf16.msra.mxu0 %v2301
    %4384 = vmatpush.bf16.msra.mxu0 %v2293
    %4385 = vmatpush.bf16.msra.mxu0 %v2285
    %4386 = vmatpush.bf16.msra.mxu0 %v2277
    %4387 = vmatpush.bf16.msra.mxu0 %v2269
    %4388 = vmatpush.bf16.msra.mxu0 %v2261
    %4389 = vmatmul.bf16.gmra.mxu0 %v4185
    %v4390 = vpop.f32.mrf.mxu0
    %v4391 = vadd.f32 %v4378, %v4390
    %v4392 = vpop.f32.mrf.mxu0
    %4393 = vdwg.mxu0
    %v4394 = vadd.f32 %v4313, %v1597
    %v4395 = vadd.f32 %v4339, %v1598
    %v4396 = vadd.f32 %v4365, %v1599
    %v4397 = vadd.f32 %v4391, %v1600
    %v4398 = vxor.u32 %v4394, 2147483648
    %v4399 = vxor.u32 %v4395, 2147483648
    %v4400 = vxor.u32 %v4396, 2147483648
    %v4401 = vmul.f32 %v4398, 1.442695
    %v4402 = vpow.pop %v4401
    %v4403 = vmul.f32 %v4399, 1.442695
    %v4404 = vpow.pop %v4403
    %v4405 = vmul.f32 %v4400, 1.442695
    %v4406 = vpow.pop %v4405
    %v4407 = vadd.f32 %v4402, 1.0
    %v4408 = vadd.f32 %v4404, 1.0
    %v4409 = vadd.f32 %v4406, 1.0
    %v4410 = vrcp.pop %v4407
    %v4411 = vmul.f32 %v4407, %v4410
    %v4412 = vsub.f32 1.0, %v4411
    %v4413 = vmul.f32 %v4410, %v4412
    %v4414 = vadd.f32 %v4410, %v4413
    %vm4415 = vweird.f32 %v4407
    %vm4416 = vweird.f32 %v4410
    %vm4417 = vmor %vm4415, %vm4416
    %v4418 = vsel %vm4417, %v4410, %v4414
    %v4419 = vand.u32 2147483647, %v4407
    %vm4420 = vcmp.eq.f32.partialorder %v4419, 8.507059e+37
    %v4421 = vand.u32 %v4407, 2147483648
    %v4422 = vor.u32 1.1754944e-38, %v4421
    %v4423 = vsel %vm4420, %v4422, %v4418
    %v4424 = vmul.f32 1.0, %v4423
    %v4425 = vrcp.pop %v4408
    %v4426 = vmul.f32 %v4408, %v4425
    %v4427 = vsub.f32 1.0, %v4426
    %v4428 = vmul.f32 %v4425, %v4427
    %v4429 = vadd.f32 %v4425, %v4428
    %vm4430 = vweird.f32 %v4408
    %vm4431 = vweird.f32 %v4425
    %vm4432 = vmor %vm4430, %vm4431
    %v4433 = vsel %vm4432, %v4425, %v4429
    %v4434 = vand.u32 2147483647, %v4408
    %vm4435 = vcmp.eq.f32.partialorder %v4434, 8.507059e+37
    %v4436 = vand.u32 %v4408, 2147483648
    %v4437 = vor.u32 1.1754944e-38, %v4436
    %v4438 = vsel %vm4435, %v4437, %v4433
    %v4439 = vmul.f32 1.0, %v4438
    %v4440 = vrcp.pop %v4409
    %v4441 = vmul.f32 %v4409, %v4440
    %v4442 = vsub.f32 1.0, %v4441
    %v4443 = vmul.f32 %v4440, %v4442
    %v4444 = vadd.f32 %v4440, %v4443
    %vm4445 = vweird.f32 %v4409
    %vm4446 = vweird.f32 %v4440
    %vm4447 = vmor %vm4445, %vm4446
    %v4448 = vsel %vm4447, %v4440, %v4444
    %v4449 = vand.u32 2147483647, %v4409
    %vm4450 = vcmp.eq.f32.partialorder %v4449, 8.507059e+37
    %v4451 = vand.u32 %v4409, 2147483648
    %v4452 = vor.u32 1.1754944e-38, %v4451
    %v4453 = vsel %vm4450, %v4452, %v4448
    %v4454 = vmul.f32 1.0, %v4453
    %v4455 = vtanh.pop %v4397
    %v4456 = vmul.f32 %v4439, %v4110
    %v4457 = vmul.f32 %v4424, %v4455
    %v4458 = vadd.f32 %v4456, %v4457
    %v4459 = vtanh.pop %v4458
    %v4460 = vmul.f32 %v4454, %v4459
    %v4461 = vld [vmem:[#allocation4 + $0xc0] sm:$0xff]
    %v4462 = vld [vmem:[#allocation4 + $0xc8] sm:$0xff]
    %v4463 = vld [vmem:[#allocation4 + $0xd0] sm:$0xff]
    %v4464 = vld [vmem:[#allocation4 + $0xd8] sm:$0xff]
    %v4465 = vadd.f32 %v4461, %v4209
    %v4466 = vadd.f32 %v4462, %v4235
    %v4467 = vadd.f32 %v4463, %v4261
    %v4468 = vadd.f32 %v4464, %v4287
    %v4469 = vxor.u32 %v4465, 2147483648
    %v4470 = vxor.u32 %v4466, 2147483648
    %v4471 = vxor.u32 %v4467, 2147483648
    %v4472 = vmul.f32 %v4469, 1.442695
    %v4473 = vpow.pop %v4472
    %v4474 = vmul.f32 %v4470, 1.442695
    %v4475 = vpow.pop %v4474
    %v4476 = vmul.f32 %v4471, 1.442695
    %v4477 = vpow.pop %v4476
    %v4478 = vadd.f32 %v4473, 1.0
    %v4479 = vadd.f32 %v4475, 1.0
    %v4480 = vadd.f32 %v4477, 1.0
    %v4481 = vrcp.pop %v4478
    %v4482 = vmul.f32 %v4478, %v4481
    %v4483 = vsub.f32 1.0, %v4482
    %v4484 = vmul.f32 %v4481, %v4483
    %v4485 = vadd.f32 %v4481, %v4484
    %vm4486 = vweird.f32 %v4478
    %vm4487 = vweird.f32 %v4481
    %vm4488 = vmor %vm4486, %vm4487
    %v4489 = vsel %vm4488, %v4481, %v4485
    %v4490 = vand.u32 2147483647, %v4478
    %vm4491 = vcmp.eq.f32.partialorder %v4490, 8.507059e+37
    %v4492 = vand.u32 %v4478, 2147483648
    %v4493 = vor.u32 1.1754944e-38, %v4492
    %v4494 = vsel %vm4491, %v4493, %v4489
    %v4495 = vmul.f32 1.0, %v4494
    %v4496 = vrcp.pop %v4479
    %v4497 = vmul.f32 %v4479, %v4496
    %v4498 = vsub.f32 1.0, %v4497
    %v4499 = vmul.f32 %v4496, %v4498
    %v4500 = vadd.f32 %v4496, %v4499
    %vm4501 = vweird.f32 %v4479
    %vm4502 = vweird.f32 %v4496
    %vm4503 = vmor %vm4501, %vm4502
    %v4504 = vsel %vm4503, %v4496, %v4500
    %v4505 = vand.u32 2147483647, %v4479
    %vm4506 = vcmp.eq.f32.partialorder %v4505, 8.507059e+37
    %v4507 = vand.u32 %v4479, 2147483648
    %v4508 = vor.u32 1.1754944e-38, %v4507
    %v4509 = vsel %vm4506, %v4508, %v4504
    %v4510 = vmul.f32 1.0, %v4509
    %v4511 = vrcp.pop %v4480
    %v4512 = vmul.f32 %v4480, %v4511
    %v4513 = vsub.f32 1.0, %v4512
    %v4514 = vmul.f32 %v4511, %v4513
    %v4515 = vadd.f32 %v4511, %v4514
    %vm4516 = vweird.f32 %v4480
    %vm4517 = vweird.f32 %v4511
    %vm4518 = vmor %vm4516, %vm4517
    %v4519 = vsel %vm4518, %v4511, %v4515
    %v4520 = vand.u32 2147483647, %v4480
    %vm4521 = vcmp.eq.f32.partialorder %v4520, 8.507059e+37
    %v4522 = vand.u32 %v4480, 2147483648
    %v4523 = vor.u32 1.1754944e-38, %v4522
    %v4524 = vsel %vm4521, %v4523, %v4519
    %v4525 = vmul.f32 1.0, %v4524
    %v4526 = vtanh.pop %v4468
    %v4527 = vmul.f32 %v4510, %v4181
    %v4528 = vmul.f32 %v4495, %v4526
    %v4529 = vadd.f32 %v4527, %v4528
    %v4530 = vtanh.pop %v4529
    %v4531 = vmul.f32 %v4525, %v4530
    %v4532 = vpack.c.bf16 %v4531, %v4531
    %v4533 = vpack.c.bf16 %v4460, %v4460
    %4534 = vmatpush.bf16.msra.mxu0 %v2246
    %4535 = vmatpush.bf16.msra.mxu0 %v2238
    %4536 = vmatpush.bf16.msra.mxu0 %v2230
    %4537 = vmatpush.bf16.msra.mxu0 %v2222
    %4538 = vmatpush.bf16.msra.mxu0 %v2214
    %4539 = vmatpush.bf16.msra.mxu0 %v2206
    %4540 = vmatpush.bf16.msra.mxu0 %v2198
    %4541 = vmatpush.bf16.msra.mxu0 %v2190
    %4542 = vmatmul.bf16.gmra.mxu0 %v4532
    %v4543 = vpop.f32.mrf.mxu0
    %v4544 = vadd.f32 0.0, %v4543
    %v4545 = vpop.f32.mrf.mxu0
    %4546 = vdwg.mxu0
    %4547 = vmatpush.bf16.msra.mxu0 %v2310
    %4548 = vmatpush.bf16.msra.mxu0 %v2302
    %4549 = vmatpush.bf16.msra.mxu0 %v2294
    %4550 = vmatpush.bf16.msra.mxu0 %v2286
    %4551 = vmatpush.bf16.msra.mxu0 %v2278
    %4552 = vmatpush.bf16.msra.mxu0 %v2270
    %4553 = vmatpush.bf16.msra.mxu0 %v2262
    %4554 = vmatpush.bf16.msra.mxu0 %v2254
    %4555 = vmatmul.bf16.gmra.mxu0 %v4533
    %v4556 = vpop.f32.mrf.mxu0
    %v4557 = vadd.f32 %v4544, %v4556
    %v4558 = vpop.f32.mrf.mxu0
    %4559 = vdwg.mxu0
    %4560 = vmatpush.bf16.msra.mxu0 %v2247
    %4561 = vmatpush.bf16.msra.mxu0 %v2239
    %4562 = vmatpush.bf16.msra.mxu0 %v2231
    %4563 = vmatpush.bf16.msra.mxu0 %v2223
    %4564 = vmatpush.bf16.msra.mxu0 %v2215
    %4565 = vmatpush.bf16.msra.mxu0 %v2207
    %4566 = vmatpush.bf16.msra.mxu0 %v2199
    %4567 = vmatpush.bf16.msra.mxu0 %v2191
    %4568 = vmatmul.bf16.gmra.mxu0 %v4532
    %v4569 = vpop.f32.mrf.mxu0
    %v4570 = vadd.f32 0.0, %v4569
    %v4571 = vpop.f32.mrf.mxu0
    %4572 = vdwg.mxu0
    %4573 = vmatpush.bf16.msra.mxu0 %v2311
    %4574 = vmatpush.bf16.msra.mxu0 %v2303
    %4575 = vmatpush.bf16.msra.mxu0 %v2295
    %4576 = vmatpush.bf16.msra.mxu0 %v2287
    %4577 = vmatpush.bf16.msra.mxu0 %v2279
    %4578 = vmatpush.bf16.msra.mxu0 %v2271
    %4579 = vmatpush.bf16.msra.mxu0 %v2263
    %4580 = vmatpush.bf16.msra.mxu0 %v2255
    %4581 = vmatmul.bf16.gmra.mxu0 %v4533
    %v4582 = vpop.f32.mrf.mxu0
    %v4583 = vadd.f32 %v4570, %v4582
    %v4584 = vpop.f32.mrf.mxu0
    %4585 = vdwg.mxu0
    %4586 = vmatpush.bf16.msra.mxu0 %v2248
    %4587 = vmatpush.bf16.msra.mxu0 %v2240
    %4588 = vmatpush.bf16.msra.mxu0 %v2232
    %4589 = vmatpush.bf16.msra.mxu0 %v2224
    %4590 = vmatpush.bf16.msra.mxu0 %v2216
    %4591 = vmatpush.bf16.msra.mxu0 %v2208
    %4592 = vmatpush.bf16.msra.mxu0 %v2200
    %4593 = vmatpush.bf16.msra.mxu0 %v2192
    %4594 = vmatmul.bf16.gmra.mxu0 %v4532
    %v4595 = vpop.f32.mrf.mxu0
    %v4596 = vadd.f32 0.0, %v4595
    %v4597 = vpop.f32.mrf.mxu0
    %4598 = vdwg.mxu0
    %4599 = vmatpush.bf16.msra.mxu0 %v2312
    %4600 = vmatpush.bf16.msra.mxu0 %v2304
    %4601 = vmatpush.bf16.msra.mxu0 %v2296
    %4602 = vmatpush.bf16.msra.mxu0 %v2288
    %4603 = vmatpush.bf16.msra.mxu0 %v2280
    %4604 = vmatpush.bf16.msra.mxu0 %v2272
    %4605 = vmatpush.bf16.msra.mxu0 %v2264
    %4606 = vmatpush.bf16.msra.mxu0 %v2256
    %4607 = vmatmul.bf16.gmra.mxu0 %v4533
    %v4608 = vpop.f32.mrf.mxu0
    %v4609 = vadd.f32 %v4596, %v4608
    %v4610 = vpop.f32.mrf.mxu0
    %4611 = vdwg.mxu0
    %4612 = vmatpush.bf16.msra.mxu0 %v2249
    %4613 = vmatpush.bf16.msra.mxu0 %v2241
    %4614 = vmatpush.bf16.msra.mxu0 %v2233
    %4615 = vmatpush.bf16.msra.mxu0 %v2225
    %4616 = vmatpush.bf16.msra.mxu0 %v2217
    %4617 = vmatpush.bf16.msra.mxu0 %v2209
    %4618 = vmatpush.bf16.msra.mxu0 %v2201
    %4619 = vmatpush.bf16.msra.mxu0 %v2193
    %4620 = vmatmul.bf16.gmra.mxu0 %v4532
    %v4621 = vpop.f32.mrf.mxu0
    %v4622 = vadd.f32 0.0, %v4621
    %v4623 = vpop.f32.mrf.mxu0
    %4624 = vdwg.mxu0
    %4625 = vmatpush.bf16.msra.mxu0 %v2313
    %4626 = vmatpush.bf16.msra.mxu0 %v2305
    %4627 = vmatpush.bf16.msra.mxu0 %v2297
    %4628 = vmatpush.bf16.msra.mxu0 %v2289
    %4629 = vmatpush.bf16.msra.mxu0 %v2281
    %4630 = vmatpush.bf16.msra.mxu0 %v2273
    %4631 = vmatpush.bf16.msra.mxu0 %v2265
    %4632 = vmatpush.bf16.msra.mxu0 %v2257
    %4633 = vmatmul.bf16.gmra.mxu0 %v4533
    %v4634 = vpop.f32.mrf.mxu0
    %v4635 = vadd.f32 %v4622, %v4634
    %v4636 = vpop.f32.mrf.mxu0
    %4637 = vdwg.mxu0
    %4638 = vmatpush.bf16.msra.mxu0 %v2250
    %4639 = vmatpush.bf16.msra.mxu0 %v2242
    %4640 = vmatpush.bf16.msra.mxu0 %v2234
    %4641 = vmatpush.bf16.msra.mxu0 %v2226
    %4642 = vmatpush.bf16.msra.mxu0 %v2218
    %4643 = vmatpush.bf16.msra.mxu0 %v2210
    %4644 = vmatpush.bf16.msra.mxu0 %v2202
    %4645 = vmatpush.bf16.msra.mxu0 %v2194
    %4646 = vmatmul.bf16.gmra.mxu0 %v4532
    %v4647 = vpop.f32.mrf.mxu0
    %v4648 = vadd.f32 0.0, %v4647
    %v4649 = vpop.f32.mrf.mxu0
    %4650 = vdwg.mxu0
    %4651 = vmatpush.bf16.msra.mxu0 %v2314
    %4652 = vmatpush.bf16.msra.mxu0 %v2306
    %4653 = vmatpush.bf16.msra.mxu0 %v2298
    %4654 = vmatpush.bf16.msra.mxu0 %v2290
    %4655 = vmatpush.bf16.msra.mxu0 %v2282
    %4656 = vmatpush.bf16.msra.mxu0 %v2274
    %4657 = vmatpush.bf16.msra.mxu0 %v2266
    %4658 = vmatpush.bf16.msra.mxu0 %v2258
    %4659 = vmatmul.bf16.gmra.mxu0 %v4533
    %v4660 = vpop.f32.mrf.mxu0
    %v4661 = vadd.f32 %v4648, %v4660
    %v4662 = vpop.f32.mrf.mxu0
    %4663 = vdwg.mxu0
    %4664 = vmatpush.bf16.msra.mxu0 %v2251
    %4665 = vmatpush.bf16.msra.mxu0 %v2243
    %4666 = vmatpush.bf16.msra.mxu0 %v2235
    %4667 = vmatpush.bf16.msra.mxu0 %v2227
    %4668 = vmatpush.bf16.msra.mxu0 %v2219
    %4669 = vmatpush.bf16.msra.mxu0 %v2211
    %4670 = vmatpush.bf16.msra.mxu0 %v2203
    %4671 = vmatpush.bf16.msra.mxu0 %v2195
    %4672 = vmatmul.bf16.gmra.mxu0 %v4532
    %v4673 = vpop.f32.mrf.mxu0
    %v4674 = vadd.f32 0.0, %v4673
    %v4675 = vpop.f32.mrf.mxu0
    %4676 = vdwg.mxu0
    %4677 = vmatpush.bf16.msra.mxu0 %v2315
    %4678 = vmatpush.bf16.msra.mxu0 %v2307
    %4679 = vmatpush.bf16.msra.mxu0 %v2299
    %4680 = vmatpush.bf16.msra.mxu0 %v2291
    %4681 = vmatpush.bf16.msra.mxu0 %v2283
    %4682 = vmatpush.bf16.msra.mxu0 %v2275
    %4683 = vmatpush.bf16.msra.mxu0 %v2267
    %4684 = vmatpush.bf16.msra.mxu0 %v2259
    %4685 = vmatmul.bf16.gmra.mxu0 %v4533
    %v4686 = vpop.f32.mrf.mxu0
    %v4687 = vadd.f32 %v4674, %v4686
    %v4688 = vpop.f32.mrf.mxu0
    %4689 = vdwg.mxu0
    %4690 = vmatpush.bf16.msra.mxu0 %v2252
    %4691 = vmatpush.bf16.msra.mxu0 %v2244
    %4692 = vmatpush.bf16.msra.mxu0 %v2236
    %4693 = vmatpush.bf16.msra.mxu0 %v2228
    %4694 = vmatpush.bf16.msra.mxu0 %v2220
    %4695 = vmatpush.bf16.msra.mxu0 %v2212
    %4696 = vmatpush.bf16.msra.mxu0 %v2204
    %4697 = vmatpush.bf16.msra.mxu0 %v2196
    %4698 = vmatmul.bf16.gmra.mxu0 %v4532
    %v4699 = vpop.f32.mrf.mxu0
    %v4700 = vadd.f32 0.0, %v4699
    %v4701 = vpop.f32.mrf.mxu0
    %4702 = vdwg.mxu0
    %4703 = vmatpush.bf16.msra.mxu0 %v2316
    %4704 = vmatpush.bf16.msra.mxu0 %v2308
    %4705 = vmatpush.bf16.msra.mxu0 %v2300
    %4706 = vmatpush.bf16.msra.mxu0 %v2292
    %4707 = vmatpush.bf16.msra.mxu0 %v2284
    %4708 = vmatpush.bf16.msra.mxu0 %v2276
    %4709 = vmatpush.bf16.msra.mxu0 %v2268
    %4710 = vmatpush.bf16.msra.mxu0 %v2260
    %4711 = vmatmul.bf16.gmra.mxu0 %v4533
    %v4712 = vpop.f32.mrf.mxu0
    %v4713 = vadd.f32 %v4700, %v4712
    %v4714 = vpop.f32.mrf.mxu0
    %4715 = vdwg.mxu0
    %4716 = vmatpush.bf16.msra.mxu0 %v2253
    %4717 = vmatpush.bf16.msra.mxu0 %v2245
    %4718 = vmatpush.bf16.msra.mxu0 %v2237
    %4719 = vmatpush.bf16.msra.mxu0 %v2229
    %4720 = vmatpush.bf16.msra.mxu0 %v2221
    %4721 = vmatpush.bf16.msra.mxu0 %v2213
    %4722 = vmatpush.bf16.msra.mxu0 %v2205
    %4723 = vmatpush.bf16.msra.mxu0 %v2197
    %4724 = vmatmul.bf16.gmra.mxu0 %v4532
    %v4725 = vpop.f32.mrf.mxu0
    %v4726 = vadd.f32 0.0, %v4725
    %v4727 = vpop.f32.mrf.mxu0
    %4728 = vdwg.mxu0
    %4729 = vmatpush.bf16.msra.mxu0 %v2317
    %4730 = vmatpush.bf16.msra.mxu0 %v2309
    %4731 = vmatpush.bf16.msra.mxu0 %v2301
    %4732 = vmatpush.bf16.msra.mxu0 %v2293
    %4733 = vmatpush.bf16.msra.mxu0 %v2285
    %4734 = vmatpush.bf16.msra.mxu0 %v2277
    %4735 = vmatpush.bf16.msra.mxu0 %v2269
    %4736 = vmatpush.bf16.msra.mxu0 %v2261
    %4737 = vmatmul.bf16.gmra.mxu0 %v4533
    %v4738 = vpop.f32.mrf.mxu0
    %v4739 = vadd.f32 %v4726, %v4738
    %v4740 = vpop.f32.mrf.mxu0
    %4741 = vdwg.mxu0
    %v4742 = vadd.f32 %v4661, %v1597
    %v4743 = vadd.f32 %v4687, %v1598
    %v4744 = vadd.f32 %v4713, %v1599
    %v4745 = vadd.f32 %v4739, %v1600
    %v4746 = vxor.u32 %v4742, 2147483648
    %v4747 = vxor.u32 %v4743, 2147483648
    %v4748 = vxor.u32 %v4744, 2147483648
    %v4749 = vmul.f32 %v4746, 1.442695
    %v4750 = vpow.pop %v4749
    %v4751 = vmul.f32 %v4747, 1.442695
    %v4752 = vpow.pop %v4751
    %v4753 = vmul.f32 %v4748, 1.442695
    %v4754 = vpow.pop %v4753
    %v4755 = vadd.f32 %v4750, 1.0
    %v4756 = vadd.f32 %v4752, 1.0
    %v4757 = vadd.f32 %v4754, 1.0
    %v4758 = vrcp.pop %v4755
    %v4759 = vmul.f32 %v4755, %v4758
    %v4760 = vsub.f32 1.0, %v4759
    %v4761 = vmul.f32 %v4758, %v4760
    %v4762 = vadd.f32 %v4758, %v4761
    %vm4763 = vweird.f32 %v4755
    %vm4764 = vweird.f32 %v4758
    %vm4765 = vmor %vm4763, %vm4764
    %v4766 = vsel %vm4765, %v4758, %v4762
    %v4767 = vand.u32 2147483647, %v4755
    %vm4768 = vcmp.eq.f32.partialorder %v4767, 8.507059e+37
    %v4769 = vand.u32 %v4755, 2147483648
    %v4770 = vor.u32 1.1754944e-38, %v4769
    %v4771 = vsel %vm4768, %v4770, %v4766
    %v4772 = vmul.f32 1.0, %v4771
    %v4773 = vrcp.pop %v4756
    %v4774 = vmul.f32 %v4756, %v4773
    %v4775 = vsub.f32 1.0, %v4774
    %v4776 = vmul.f32 %v4773, %v4775
    %v4777 = vadd.f32 %v4773, %v4776
    %vm4778 = vweird.f32 %v4756
    %vm4779 = vweird.f32 %v4773
    %vm4780 = vmor %vm4778, %vm4779
    %v4781 = vsel %vm4780, %v4773, %v4777
    %v4782 = vand.u32 2147483647, %v4756
    %vm4783 = vcmp.eq.f32.partialorder %v4782, 8.507059e+37
    %v4784 = vand.u32 %v4756, 2147483648
    %v4785 = vor.u32 1.1754944e-38, %v4784
    %v4786 = vsel %vm4783, %v4785, %v4781
    %v4787 = vmul.f32 1.0, %v4786
    %v4788 = vrcp.pop %v4757
    %v4789 = vmul.f32 %v4757, %v4788
    %v4790 = vsub.f32 1.0, %v4789
    %v4791 = vmul.f32 %v4788, %v4790
    %v4792 = vadd.f32 %v4788, %v4791
    %vm4793 = vweird.f32 %v4757
    %vm4794 = vweird.f32 %v4788
    %vm4795 = vmor %vm4793, %vm4794
    %v4796 = vsel %vm4795, %v4788, %v4792
    %v4797 = vand.u32 2147483647, %v4757
    %vm4798 = vcmp.eq.f32.partialorder %v4797, 8.507059e+37
    %v4799 = vand.u32 %v4757, 2147483648
    %v4800 = vor.u32 1.1754944e-38, %v4799
    %v4801 = vsel %vm4798, %v4800, %v4796
    %v4802 = vmul.f32 1.0, %v4801
    %v4803 = vtanh.pop %v4745
    %v4804 = vmul.f32 %v4787, %v4458
    %v4805 = vmul.f32 %v4772, %v4803
    %v4806 = vadd.f32 %v4804, %v4805
    %v4807 = vtanh.pop %v4806
    %v4808 = vmul.f32 %v4802, %v4807
    %v4809 = vld [vmem:[#allocation4 + $0xe0] sm:$0xff]
    %v4810 = vld [vmem:[#allocation4 + $0xe8] sm:$0xff]
    %v4811 = vld [vmem:[#allocation4 + $0xf0] sm:$0xff]
    %v4812 = vld [vmem:[#allocation4 + $0xf8] sm:$0xff]
    %v4813 = vadd.f32 %v4809, %v4557
    %v4814 = vadd.f32 %v4810, %v4583
    %v4815 = vadd.f32 %v4811, %v4609
    %v4816 = vadd.f32 %v4812, %v4635
    %v4817 = vxor.u32 %v4813, 2147483648
    %v4818 = vxor.u32 %v4814, 2147483648
    %v4819 = vxor.u32 %v4815, 2147483648
    %v4820 = vmul.f32 %v4817, 1.442695
    %v4821 = vpow.pop %v4820
    %v4822 = vmul.f32 %v4818, 1.442695
    %v4823 = vpow.pop %v4822
    %v4824 = vmul.f32 %v4819, 1.442695
    %v4825 = vpow.pop %v4824
    %v4826 = vadd.f32 %v4821, 1.0
    %v4827 = vadd.f32 %v4823, 1.0
    %v4828 = vadd.f32 %v4825, 1.0
    %v4829 = vrcp.pop %v4826
    %v4830 = vmul.f32 %v4826, %v4829
    %v4831 = vsub.f32 1.0, %v4830
    %v4832 = vmul.f32 %v4829, %v4831
    %v4833 = vadd.f32 %v4829, %v4832
    %vm4834 = vweird.f32 %v4826
    %vm4835 = vweird.f32 %v4829
    %vm4836 = vmor %vm4834, %vm4835
    %v4837 = vsel %vm4836, %v4829, %v4833
    %v4838 = vand.u32 2147483647, %v4826
    %vm4839 = vcmp.eq.f32.partialorder %v4838, 8.507059e+37
    %v4840 = vand.u32 %v4826, 2147483648
    %v4841 = vor.u32 1.1754944e-38, %v4840
    %v4842 = vsel %vm4839, %v4841, %v4837
    %v4843 = vmul.f32 1.0, %v4842
    %v4844 = vrcp.pop %v4827
    %v4845 = vmul.f32 %v4827, %v4844
    %v4846 = vsub.f32 1.0, %v4845
    %v4847 = vmul.f32 %v4844, %v4846
    %v4848 = vadd.f32 %v4844, %v4847
    %vm4849 = vweird.f32 %v4827
    %vm4850 = vweird.f32 %v4844
    %vm4851 = vmor %vm4849, %vm4850
    %v4852 = vsel %vm4851, %v4844, %v4848
    %v4853 = vand.u32 2147483647, %v4827
    %vm4854 = vcmp.eq.f32.partialorder %v4853, 8.507059e+37
    %v4855 = vand.u32 %v4827, 2147483648
    %v4856 = vor.u32 1.1754944e-38, %v4855
    %v4857 = vsel %vm4854, %v4856, %v4852
    %v4858 = vmul.f32 1.0, %v4857
    %v4859 = vrcp.pop %v4828
    %v4860 = vmul.f32 %v4828, %v4859
    %v4861 = vsub.f32 1.0, %v4860
    %v4862 = vmul.f32 %v4859, %v4861
    %v4863 = vadd.f32 %v4859, %v4862
    %vm4864 = vweird.f32 %v4828
    %vm4865 = vweird.f32 %v4859
    %vm4866 = vmor %vm4864, %vm4865
    %v4867 = vsel %vm4866, %v4859, %v4863
    %v4868 = vand.u32 2147483647, %v4828
    %vm4869 = vcmp.eq.f32.partialorder %v4868, 8.507059e+37
    %v4870 = vand.u32 %v4828, 2147483648
    %v4871 = vor.u32 1.1754944e-38, %v4870
    %v4872 = vsel %vm4869, %v4871, %v4867
    %v4873 = vmul.f32 1.0, %v4872
    %v4874 = vtanh.pop %v4816
    %v4875 = vmul.f32 %v4858, %v4529
    %v4876 = vmul.f32 %v4843, %v4874
    %v4877 = vadd.f32 %v4875, %v4876
    %v4878 = vtanh.pop %v4877
    %v4879 = vmul.f32 %v4873, %v4878
    %v4880 = vpack.c.bf16 %v4879, %v4879
    %v4881 = vpack.c.bf16 %v4808, %v4808
    %4882 = vmatpush.bf16.msra.mxu0 %v2246
    %4883 = vmatpush.bf16.msra.mxu0 %v2238
    %4884 = vmatpush.bf16.msra.mxu0 %v2230
    %4885 = vmatpush.bf16.msra.mxu0 %v2222
    %4886 = vmatpush.bf16.msra.mxu0 %v2214
    %4887 = vmatpush.bf16.msra.mxu0 %v2206
    %4888 = vmatpush.bf16.msra.mxu0 %v2198
    %4889 = vmatpush.bf16.msra.mxu0 %v2190
    %4890 = vmatmul.bf16.gmra.mxu0 %v4880
    %v4891 = vpop.f32.mrf.mxu0
    %v4892 = vadd.f32 0.0, %v4891
    %v4893 = vpop.f32.mrf.mxu0
    %4894 = vdwg.mxu0
    %4895 = vmatpush.bf16.msra.mxu0 %v2310
    %4896 = vmatpush.bf16.msra.mxu0 %v2302
    %4897 = vmatpush.bf16.msra.mxu0 %v2294
    %4898 = vmatpush.bf16.msra.mxu0 %v2286
    %4899 = vmatpush.bf16.msra.mxu0 %v2278
    %4900 = vmatpush.bf16.msra.mxu0 %v2270
    %4901 = vmatpush.bf16.msra.mxu0 %v2262
    %4902 = vmatpush.bf16.msra.mxu0 %v2254
    %4903 = vmatmul.bf16.gmra.mxu0 %v4881
    %v4904 = vpop.f32.mrf.mxu0
    %v4905 = vadd.f32 %v4892, %v4904
    %v4906 = vpop.f32.mrf.mxu0
    %4907 = vdwg.mxu0
    %4908 = vmatpush.bf16.msra.mxu0 %v2247
    %4909 = vmatpush.bf16.msra.mxu0 %v2239
    %4910 = vmatpush.bf16.msra.mxu0 %v2231
    %4911 = vmatpush.bf16.msra.mxu0 %v2223
    %4912 = vmatpush.bf16.msra.mxu0 %v2215
    %4913 = vmatpush.bf16.msra.mxu0 %v2207
    %4914 = vmatpush.bf16.msra.mxu0 %v2199
    %4915 = vmatpush.bf16.msra.mxu0 %v2191
    %4916 = vmatmul.bf16.gmra.mxu0 %v4880
    %v4917 = vpop.f32.mrf.mxu0
    %v4918 = vadd.f32 0.0, %v4917
    %v4919 = vpop.f32.mrf.mxu0
    %4920 = vdwg.mxu0
    %4921 = vmatpush.bf16.msra.mxu0 %v2311
    %4922 = vmatpush.bf16.msra.mxu0 %v2303
    %4923 = vmatpush.bf16.msra.mxu0 %v2295
    %4924 = vmatpush.bf16.msra.mxu0 %v2287
    %4925 = vmatpush.bf16.msra.mxu0 %v2279
    %4926 = vmatpush.bf16.msra.mxu0 %v2271
    %4927 = vmatpush.bf16.msra.mxu0 %v2263
    %4928 = vmatpush.bf16.msra.mxu0 %v2255
    %4929 = vmatmul.bf16.gmra.mxu0 %v4881
    %v4930 = vpop.f32.mrf.mxu0
    %v4931 = vadd.f32 %v4918, %v4930
    %v4932 = vpop.f32.mrf.mxu0
    %4933 = vdwg.mxu0
    %4934 = vmatpush.bf16.msra.mxu0 %v2248
    %4935 = vmatpush.bf16.msra.mxu0 %v2240
    %4936 = vmatpush.bf16.msra.mxu0 %v2232
    %4937 = vmatpush.bf16.msra.mxu0 %v2224
    %4938 = vmatpush.bf16.msra.mxu0 %v2216
    %4939 = vmatpush.bf16.msra.mxu0 %v2208
    %4940 = vmatpush.bf16.msra.mxu0 %v2200
    %4941 = vmatpush.bf16.msra.mxu0 %v2192
    %4942 = vmatmul.bf16.gmra.mxu0 %v4880
    %v4943 = vpop.f32.mrf.mxu0
    %v4944 = vadd.f32 0.0, %v4943
    %v4945 = vpop.f32.mrf.mxu0
    %4946 = vdwg.mxu0
    %4947 = vmatpush.bf16.msra.mxu0 %v2312
    %4948 = vmatpush.bf16.msra.mxu0 %v2304
    %4949 = vmatpush.bf16.msra.mxu0 %v2296
    %4950 = vmatpush.bf16.msra.mxu0 %v2288
    %4951 = vmatpush.bf16.msra.mxu0 %v2280
    %4952 = vmatpush.bf16.msra.mxu0 %v2272
    %4953 = vmatpush.bf16.msra.mxu0 %v2264
    %4954 = vmatpush.bf16.msra.mxu0 %v2256
    %4955 = vmatmul.bf16.gmra.mxu0 %v4881
    %v4956 = vpop.f32.mrf.mxu0
    %v4957 = vadd.f32 %v4944, %v4956
    %v4958 = vpop.f32.mrf.mxu0
    %4959 = vdwg.mxu0
    %4960 = vmatpush.bf16.msra.mxu0 %v2249
    %4961 = vmatpush.bf16.msra.mxu0 %v2241
    %4962 = vmatpush.bf16.msra.mxu0 %v2233
    %4963 = vmatpush.bf16.msra.mxu0 %v2225
    %4964 = vmatpush.bf16.msra.mxu0 %v2217
    %4965 = vmatpush.bf16.msra.mxu0 %v2209
    %4966 = vmatpush.bf16.msra.mxu0 %v2201
    %4967 = vmatpush.bf16.msra.mxu0 %v2193
    %4968 = vmatmul.bf16.gmra.mxu0 %v4880
    %v4969 = vpop.f32.mrf.mxu0
    %v4970 = vadd.f32 0.0, %v4969
    %v4971 = vpop.f32.mrf.mxu0
    %4972 = vdwg.mxu0
    %4973 = vmatpush.bf16.msra.mxu0 %v2313
    %4974 = vmatpush.bf16.msra.mxu0 %v2305
    %4975 = vmatpush.bf16.msra.mxu0 %v2297
    %4976 = vmatpush.bf16.msra.mxu0 %v2289
    %4977 = vmatpush.bf16.msra.mxu0 %v2281
    %4978 = vmatpush.bf16.msra.mxu0 %v2273
    %4979 = vmatpush.bf16.msra.mxu0 %v2265
    %4980 = vmatpush.bf16.msra.mxu0 %v2257
    %4981 = vmatmul.bf16.gmra.mxu0 %v4881
    %v4982 = vpop.f32.mrf.mxu0
    %v4983 = vadd.f32 %v4970, %v4982
    %v4984 = vpop.f32.mrf.mxu0
    %4985 = vdwg.mxu0
    %4986 = vmatpush.bf16.msra.mxu0 %v2250
    %4987 = vmatpush.bf16.msra.mxu0 %v2242
    %4988 = vmatpush.bf16.msra.mxu0 %v2234
    %4989 = vmatpush.bf16.msra.mxu0 %v2226
    %4990 = vmatpush.bf16.msra.mxu0 %v2218
    %4991 = vmatpush.bf16.msra.mxu0 %v2210
    %4992 = vmatpush.bf16.msra.mxu0 %v2202
    %4993 = vmatpush.bf16.msra.mxu0 %v2194
    %4994 = vmatmul.bf16.gmra.mxu0 %v4880
    %v4995 = vpop.f32.mrf.mxu0
    %v4996 = vadd.f32 0.0, %v4995
    %v4997 = vpop.f32.mrf.mxu0
    %4998 = vdwg.mxu0
    %4999 = vmatpush.bf16.msra.mxu0 %v2314
    %5000 = vmatpush.bf16.msra.mxu0 %v2306
    %5001 = vmatpush.bf16.msra.mxu0 %v2298
    %5002 = vmatpush.bf16.msra.mxu0 %v2290
    %5003 = vmatpush.bf16.msra.mxu0 %v2282
    %5004 = vmatpush.bf16.msra.mxu0 %v2274
    %5005 = vmatpush.bf16.msra.mxu0 %v2266
    %5006 = vmatpush.bf16.msra.mxu0 %v2258
    %5007 = vmatmul.bf16.gmra.mxu0 %v4881
    %v5008 = vpop.f32.mrf.mxu0
    %v5009 = vadd.f32 %v4996, %v5008
    %v5010 = vpop.f32.mrf.mxu0
    %5011 = vdwg.mxu0
    %5012 = vmatpush.bf16.msra.mxu0 %v2251
    %5013 = vmatpush.bf16.msra.mxu0 %v2243
    %5014 = vmatpush.bf16.msra.mxu0 %v2235
    %5015 = vmatpush.bf16.msra.mxu0 %v2227
    %5016 = vmatpush.bf16.msra.mxu0 %v2219
    %5017 = vmatpush.bf16.msra.mxu0 %v2211
    %5018 = vmatpush.bf16.msra.mxu0 %v2203
    %5019 = vmatpush.bf16.msra.mxu0 %v2195
    %5020 = vmatmul.bf16.gmra.mxu0 %v4880
    %v5021 = vpop.f32.mrf.mxu0
    %v5022 = vadd.f32 0.0, %v5021
    %v5023 = vpop.f32.mrf.mxu0
    %5024 = vdwg.mxu0
    %5025 = vmatpush.bf16.msra.mxu0 %v2315
    %5026 = vmatpush.bf16.msra.mxu0 %v2307
    %5027 = vmatpush.bf16.msra.mxu0 %v2299
    %5028 = vmatpush.bf16.msra.mxu0 %v2291
    %5029 = vmatpush.bf16.msra.mxu0 %v2283
    %5030 = vmatpush.bf16.msra.mxu0 %v2275
    %5031 = vmatpush.bf16.msra.mxu0 %v2267
    %5032 = vmatpush.bf16.msra.mxu0 %v2259
    %5033 = vmatmul.bf16.gmra.mxu0 %v4881
    %v5034 = vpop.f32.mrf.mxu0
    %v5035 = vadd.f32 %v5022, %v5034
    %v5036 = vpop.f32.mrf.mxu0
    %5037 = vdwg.mxu0
    %5038 = vmatpush.bf16.msra.mxu0 %v2252
    %5039 = vmatpush.bf16.msra.mxu0 %v2244
    %5040 = vmatpush.bf16.msra.mxu0 %v2236
    %5041 = vmatpush.bf16.msra.mxu0 %v2228
    %5042 = vmatpush.bf16.msra.mxu0 %v2220
    %5043 = vmatpush.bf16.msra.mxu0 %v2212
    %5044 = vmatpush.bf16.msra.mxu0 %v2204
    %5045 = vmatpush.bf16.msra.mxu0 %v2196
    %5046 = vmatmul.bf16.gmra.mxu0 %v4880
    %v5047 = vpop.f32.mrf.mxu0
    %v5048 = vadd.f32 0.0, %v5047
    %v5049 = vpop.f32.mrf.mxu0
    %5050 = vdwg.mxu0
    %5051 = vmatpush.bf16.msra.mxu0 %v2316
    %5052 = vmatpush.bf16.msra.mxu0 %v2308
    %5053 = vmatpush.bf16.msra.mxu0 %v2300
    %5054 = vmatpush.bf16.msra.mxu0 %v2292
    %5055 = vmatpush.bf16.msra.mxu0 %v2284
    %5056 = vmatpush.bf16.msra.mxu0 %v2276
    %5057 = vmatpush.bf16.msra.mxu0 %v2268
    %5058 = vmatpush.bf16.msra.mxu0 %v2260
    %5059 = vmatmul.bf16.gmra.mxu0 %v4881
    %v5060 = vpop.f32.mrf.mxu0
    %v5061 = vadd.f32 %v5048, %v5060
    %v5062 = vpop.f32.mrf.mxu0
    %5063 = vdwg.mxu0
    %5064 = vmatpush.bf16.msra.mxu0 %v2253
    %5065 = vmatpush.bf16.msra.mxu0 %v2245
    %5066 = vmatpush.bf16.msra.mxu0 %v2237
    %5067 = vmatpush.bf16.msra.mxu0 %v2229
    %5068 = vmatpush.bf16.msra.mxu0 %v2221
    %5069 = vmatpush.bf16.msra.mxu0 %v2213
    %5070 = vmatpush.bf16.msra.mxu0 %v2205
    %5071 = vmatpush.bf16.msra.mxu0 %v2197
    %5072 = vmatmul.bf16.gmra.mxu0 %v4880
    %v5073 = vpop.f32.mrf.mxu0
    %v5074 = vadd.f32 0.0, %v5073
    %v5075 = vpop.f32.mrf.mxu0
    %5076 = vdwg.mxu0
    %5077 = vmatpush.bf16.msra.mxu0 %v2317
    %5078 = vmatpush.bf16.msra.mxu0 %v2309
    %5079 = vmatpush.bf16.msra.mxu0 %v2301
    %5080 = vmatpush.bf16.msra.mxu0 %v2293
    %5081 = vmatpush.bf16.msra.mxu0 %v2285
    %5082 = vmatpush.bf16.msra.mxu0 %v2277
    %5083 = vmatpush.bf16.msra.mxu0 %v2269
    %5084 = vmatpush.bf16.msra.mxu0 %v2261
    %5085 = vmatmul.bf16.gmra.mxu0 %v4881
    %v5086 = vpop.f32.mrf.mxu0
    %v5087 = vadd.f32 %v5074, %v5086
    %v5088 = vpop.f32.mrf.mxu0
    %5089 = vdwg.mxu0
    %v5090 = vadd.f32 %v5009, %v1597
    %v5091 = vadd.f32 %v5035, %v1598
    %v5092 = vadd.f32 %v5061, %v1599
    %v5093 = vadd.f32 %v5087, %v1600
    %v5094 = vxor.u32 %v5090, 2147483648
    %v5095 = vxor.u32 %v5091, 2147483648
    %v5096 = vxor.u32 %v5092, 2147483648
    %v5097 = vmul.f32 %v5094, 1.442695
    %v5098 = vpow.pop %v5097
    %v5099 = vmul.f32 %v5095, 1.442695
    %v5100 = vpow.pop %v5099
    %v5101 = vmul.f32 %v5096, 1.442695
    %v5102 = vpow.pop %v5101
    %v5103 = vadd.f32 %v5098, 1.0
    %v5104 = vadd.f32 %v5100, 1.0
    %v5105 = vadd.f32 %v5102, 1.0
    %v5106 = vrcp.pop %v5103
    %v5107 = vmul.f32 %v5103, %v5106
    %v5108 = vsub.f32 1.0, %v5107
    %v5109 = vmul.f32 %v5106, %v5108
    %v5110 = vadd.f32 %v5106, %v5109
    %vm5111 = vweird.f32 %v5103
    %vm5112 = vweird.f32 %v5106
    %vm5113 = vmor %vm5111, %vm5112
    %v5114 = vsel %vm5113, %v5106, %v5110
    %v5115 = vand.u32 2147483647, %v5103
    %vm5116 = vcmp.eq.f32.partialorder %v5115, 8.507059e+37
    %v5117 = vand.u32 %v5103, 2147483648
    %v5118 = vor.u32 1.1754944e-38, %v5117
    %v5119 = vsel %vm5116, %v5118, %v5114
    %v5120 = vmul.f32 1.0, %v5119
    %v5121 = vrcp.pop %v5104
    %v5122 = vmul.f32 %v5104, %v5121
    %v5123 = vsub.f32 1.0, %v5122
    %v5124 = vmul.f32 %v5121, %v5123
    %v5125 = vadd.f32 %v5121, %v5124
    %vm5126 = vweird.f32 %v5104
    %vm5127 = vweird.f32 %v5121
    %vm5128 = vmor %vm5126, %vm5127
    %v5129 = vsel %vm5128, %v5121, %v5125
    %v5130 = vand.u32 2147483647, %v5104
    %vm5131 = vcmp.eq.f32.partialorder %v5130, 8.507059e+37
    %v5132 = vand.u32 %v5104, 2147483648
    %v5133 = vor.u32 1.1754944e-38, %v5132
    %v5134 = vsel %vm5131, %v5133, %v5129
    %v5135 = vmul.f32 1.0, %v5134
    %v5136 = vrcp.pop %v5105
    %v5137 = vmul.f32 %v5105, %v5136
    %v5138 = vsub.f32 1.0, %v5137
    %v5139 = vmul.f32 %v5136, %v5138
    %v5140 = vadd.f32 %v5136, %v5139
    %vm5141 = vweird.f32 %v5105
    %vm5142 = vweird.f32 %v5136
    %vm5143 = vmor %vm5141, %vm5142
    %v5144 = vsel %vm5143, %v5136, %v5140
    %v5145 = vand.u32 2147483647, %v5105
    %vm5146 = vcmp.eq.f32.partialorder %v5145, 8.507059e+37
    %v5147 = vand.u32 %v5105, 2147483648
    %v5148 = vor.u32 1.1754944e-38, %v5147
    %v5149 = vsel %vm5146, %v5148, %v5144
    %v5150 = vmul.f32 1.0, %v5149
    %v5151 = vtanh.pop %v5093
    %v5152 = vmul.f32 %v5135, %v4806
    %v5153 = vmul.f32 %v5120, %v5151
    %v5154 = vadd.f32 %v5152, %v5153
    %v5155 = vtanh.pop %v5154
    %v5156 = vmul.f32 %v5150, %v5155
    %v5157 = vld [vmem:[#allocation4 + $0x100] sm:$0xff]
    %v5158 = vld [vmem:[#allocation4 + $0x108] sm:$0xff]
    %v5159 = vld [vmem:[#allocation4 + $0x110] sm:$0xff]
    %v5160 = vld [vmem:[#allocation4 + $0x118] sm:$0xff]
    %v5161 = vadd.f32 %v5157, %v4905
    %v5162 = vadd.f32 %v5158, %v4931
    %v5163 = vadd.f32 %v5159, %v4957
    %v5164 = vadd.f32 %v5160, %v4983
    %v5165 = vxor.u32 %v5161, 2147483648
    %v5166 = vxor.u32 %v5162, 2147483648
    %v5167 = vxor.u32 %v5163, 2147483648
    %v5168 = vmul.f32 %v5165, 1.442695
    %v5169 = vpow.pop %v5168
    %v5170 = vmul.f32 %v5166, 1.442695
    %v5171 = vpow.pop %v5170
    %v5172 = vmul.f32 %v5167, 1.442695
    %v5173 = vpow.pop %v5172
    %v5174 = vadd.f32 %v5169, 1.0
    %v5175 = vadd.f32 %v5171, 1.0
    %v5176 = vadd.f32 %v5173, 1.0
    %v5177 = vrcp.pop %v5174
    %v5178 = vmul.f32 %v5174, %v5177
    %v5179 = vsub.f32 1.0, %v5178
    %v5180 = vmul.f32 %v5177, %v5179
    %v5181 = vadd.f32 %v5177, %v5180
    %vm5182 = vweird.f32 %v5174
    %vm5183 = vweird.f32 %v5177
    %vm5184 = vmor %vm5182, %vm5183
    %v5185 = vsel %vm5184, %v5177, %v5181
    %v5186 = vand.u32 2147483647, %v5174
    %vm5187 = vcmp.eq.f32.partialorder %v5186, 8.507059e+37
    %v5188 = vand.u32 %v5174, 2147483648
    %v5189 = vor.u32 1.1754944e-38, %v5188
    %v5190 = vsel %vm5187, %v5189, %v5185
    %v5191 = vmul.f32 1.0, %v5190
    %v5192 = vrcp.pop %v5175
    %v5193 = vmul.f32 %v5175, %v5192
    %v5194 = vsub.f32 1.0, %v5193
    %v5195 = vmul.f32 %v5192, %v5194
    %v5196 = vadd.f32 %v5192, %v5195
    %vm5197 = vweird.f32 %v5175
    %vm5198 = vweird.f32 %v5192
    %vm5199 = vmor %vm5197, %vm5198
    %v5200 = vsel %vm5199, %v5192, %v5196
    %v5201 = vand.u32 2147483647, %v5175
    %vm5202 = vcmp.eq.f32.partialorder %v5201, 8.507059e+37
    %v5203 = vand.u32 %v5175, 2147483648
    %v5204 = vor.u32 1.1754944e-38, %v5203
    %v5205 = vsel %vm5202, %v5204, %v5200
    %v5206 = vmul.f32 1.0, %v5205
    %v5207 = vrcp.pop %v5176
    %v5208 = vmul.f32 %v5176, %v5207
    %v5209 = vsub.f32 1.0, %v5208
    %v5210 = vmul.f32 %v5207, %v5209
    %v5211 = vadd.f32 %v5207, %v5210
    %vm5212 = vweird.f32 %v5176
    %vm5213 = vweird.f32 %v5207
    %vm5214 = vmor %vm5212, %vm5213
    %v5215 = vsel %vm5214, %v5207, %v5211
    %v5216 = vand.u32 2147483647, %v5176
    %vm5217 = vcmp.eq.f32.partialorder %v5216, 8.507059e+37
    %v5218 = vand.u32 %v5176, 2147483648
    %v5219 = vor.u32 1.1754944e-38, %v5218
    %v5220 = vsel %vm5217, %v5219, %v5215
    %v5221 = vmul.f32 1.0, %v5220
    %v5222 = vtanh.pop %v5164
    %v5223 = vmul.f32 %v5206, %v4877
    %v5224 = vmul.f32 %v5191, %v5222
    %v5225 = vadd.f32 %v5223, %v5224
    %v5226 = vtanh.pop %v5225
    %v5227 = vmul.f32 %v5221, %v5226
    %v5228 = vpack.c.bf16 %v5227, %v5227
    %v5229 = vpack.c.bf16 %v5156, %v5156
    %5230 = vmatpush.bf16.msra.mxu0 %v2246
    %5231 = vmatpush.bf16.msra.mxu0 %v2238
    %5232 = vmatpush.bf16.msra.mxu0 %v2230
    %5233 = vmatpush.bf16.msra.mxu0 %v2222
    %5234 = vmatpush.bf16.msra.mxu0 %v2214
    %5235 = vmatpush.bf16.msra.mxu0 %v2206
    %5236 = vmatpush.bf16.msra.mxu0 %v2198
    %5237 = vmatpush.bf16.msra.mxu0 %v2190
    %5238 = vmatmul.bf16.gmra.mxu0 %v5228
    %v5239 = vpop.f32.mrf.mxu0
    %v5240 = vadd.f32 0.0, %v5239
    %v5241 = vpop.f32.mrf.mxu0
    %5242 = vdwg.mxu0
    %5243 = vmatpush.bf16.msra.mxu0 %v2310
    %5244 = vmatpush.bf16.msra.mxu0 %v2302
    %5245 = vmatpush.bf16.msra.mxu0 %v2294
    %5246 = vmatpush.bf16.msra.mxu0 %v2286
    %5247 = vmatpush.bf16.msra.mxu0 %v2278
    %5248 = vmatpush.bf16.msra.mxu0 %v2270
    %5249 = vmatpush.bf16.msra.mxu0 %v2262
    %5250 = vmatpush.bf16.msra.mxu0 %v2254
    %5251 = vmatmul.bf16.gmra.mxu0 %v5229
    %v5252 = vpop.f32.mrf.mxu0
    %v5253 = vadd.f32 %v5240, %v5252
    %v5254 = vpop.f32.mrf.mxu0
    %5255 = vdwg.mxu0
    %5256 = vmatpush.bf16.msra.mxu0 %v2247
    %5257 = vmatpush.bf16.msra.mxu0 %v2239
    %5258 = vmatpush.bf16.msra.mxu0 %v2231
    %5259 = vmatpush.bf16.msra.mxu0 %v2223
    %5260 = vmatpush.bf16.msra.mxu0 %v2215
    %5261 = vmatpush.bf16.msra.mxu0 %v2207
    %5262 = vmatpush.bf16.msra.mxu0 %v2199
    %5263 = vmatpush.bf16.msra.mxu0 %v2191
    %5264 = vmatmul.bf16.gmra.mxu0 %v5228
    %v5265 = vpop.f32.mrf.mxu0
    %v5266 = vadd.f32 0.0, %v5265
    %v5267 = vpop.f32.mrf.mxu0
    %5268 = vdwg.mxu0
    %5269 = vmatpush.bf16.msra.mxu0 %v2311
    %5270 = vmatpush.bf16.msra.mxu0 %v2303
    %5271 = vmatpush.bf16.msra.mxu0 %v2295
    %5272 = vmatpush.bf16.msra.mxu0 %v2287
    %5273 = vmatpush.bf16.msra.mxu0 %v2279
    %5274 = vmatpush.bf16.msra.mxu0 %v2271
    %5275 = vmatpush.bf16.msra.mxu0 %v2263
    %5276 = vmatpush.bf16.msra.mxu0 %v2255
    %5277 = vmatmul.bf16.gmra.mxu0 %v5229
    %v5278 = vpop.f32.mrf.mxu0
    %v5279 = vadd.f32 %v5266, %v5278
    %v5280 = vpop.f32.mrf.mxu0
    %5281 = vdwg.mxu0
    %5282 = vmatpush.bf16.msra.mxu0 %v2248
    %5283 = vmatpush.bf16.msra.mxu0 %v2240
    %5284 = vmatpush.bf16.msra.mxu0 %v2232
    %5285 = vmatpush.bf16.msra.mxu0 %v2224
    %5286 = vmatpush.bf16.msra.mxu0 %v2216
    %5287 = vmatpush.bf16.msra.mxu0 %v2208
    %5288 = vmatpush.bf16.msra.mxu0 %v2200
    %5289 = vmatpush.bf16.msra.mxu0 %v2192
    %5290 = vmatmul.bf16.gmra.mxu0 %v5228
    %v5291 = vpop.f32.mrf.mxu0
    %v5292 = vadd.f32 0.0, %v5291
    %v5293 = vpop.f32.mrf.mxu0
    %5294 = vdwg.mxu0
    %5295 = vmatpush.bf16.msra.mxu0 %v2312
    %5296 = vmatpush.bf16.msra.mxu0 %v2304
    %5297 = vmatpush.bf16.msra.mxu0 %v2296
    %5298 = vmatpush.bf16.msra.mxu0 %v2288
    %5299 = vmatpush.bf16.msra.mxu0 %v2280
    %5300 = vmatpush.bf16.msra.mxu0 %v2272
    %5301 = vmatpush.bf16.msra.mxu0 %v2264
    %5302 = vmatpush.bf16.msra.mxu0 %v2256
    %5303 = vmatmul.bf16.gmra.mxu0 %v5229
    %v5304 = vpop.f32.mrf.mxu0
    %v5305 = vadd.f32 %v5292, %v5304
    %v5306 = vpop.f32.mrf.mxu0
    %5307 = vdwg.mxu0
    %5308 = vmatpush.bf16.msra.mxu0 %v2249
    %5309 = vmatpush.bf16.msra.mxu0 %v2241
    %5310 = vmatpush.bf16.msra.mxu0 %v2233
    %5311 = vmatpush.bf16.msra.mxu0 %v2225
    %5312 = vmatpush.bf16.msra.mxu0 %v2217
    %5313 = vmatpush.bf16.msra.mxu0 %v2209
    %5314 = vmatpush.bf16.msra.mxu0 %v2201
    %5315 = vmatpush.bf16.msra.mxu0 %v2193
    %5316 = vmatmul.bf16.gmra.mxu0 %v5228
    %v5317 = vpop.f32.mrf.mxu0
    %v5318 = vadd.f32 0.0, %v5317
    %v5319 = vpop.f32.mrf.mxu0
    %5320 = vdwg.mxu0
    %5321 = vmatpush.bf16.msra.mxu0 %v2313
    %5322 = vmatpush.bf16.msra.mxu0 %v2305
    %5323 = vmatpush.bf16.msra.mxu0 %v2297
    %5324 = vmatpush.bf16.msra.mxu0 %v2289
    %5325 = vmatpush.bf16.msra.mxu0 %v2281
    %5326 = vmatpush.bf16.msra.mxu0 %v2273
    %5327 = vmatpush.bf16.msra.mxu0 %v2265
    %5328 = vmatpush.bf16.msra.mxu0 %v2257
    %5329 = vmatmul.bf16.gmra.mxu0 %v5229
    %v5330 = vpop.f32.mrf.mxu0
    %v5331 = vadd.f32 %v5318, %v5330
    %v5332 = vpop.f32.mrf.mxu0
    %5333 = vdwg.mxu0
    %5334 = vmatpush.bf16.msra.mxu0 %v2250
    %5335 = vmatpush.bf16.msra.mxu0 %v2242
    %5336 = vmatpush.bf16.msra.mxu0 %v2234
    %5337 = vmatpush.bf16.msra.mxu0 %v2226
    %5338 = vmatpush.bf16.msra.mxu0 %v2218
    %5339 = vmatpush.bf16.msra.mxu0 %v2210
    %5340 = vmatpush.bf16.msra.mxu0 %v2202
    %5341 = vmatpush.bf16.msra.mxu0 %v2194
    %5342 = vmatmul.bf16.gmra.mxu0 %v5228
    %v5343 = vpop.f32.mrf.mxu0
    %v5344 = vadd.f32 0.0, %v5343
    %v5345 = vpop.f32.mrf.mxu0
    %5346 = vdwg.mxu0
    %5347 = vmatpush.bf16.msra.mxu0 %v2314
    %5348 = vmatpush.bf16.msra.mxu0 %v2306
    %5349 = vmatpush.bf16.msra.mxu0 %v2298
    %5350 = vmatpush.bf16.msra.mxu0 %v2290
    %5351 = vmatpush.bf16.msra.mxu0 %v2282
    %5352 = vmatpush.bf16.msra.mxu0 %v2274
    %5353 = vmatpush.bf16.msra.mxu0 %v2266
    %5354 = vmatpush.bf16.msra.mxu0 %v2258
    %5355 = vmatmul.bf16.gmra.mxu0 %v5229
    %v5356 = vpop.f32.mrf.mxu0
    %v5357 = vadd.f32 %v5344, %v5356
    %v5358 = vpop.f32.mrf.mxu0
    %5359 = vdwg.mxu0
    %5360 = vmatpush.bf16.msra.mxu0 %v2251
    %5361 = vmatpush.bf16.msra.mxu0 %v2243
    %5362 = vmatpush.bf16.msra.mxu0 %v2235
    %5363 = vmatpush.bf16.msra.mxu0 %v2227
    %5364 = vmatpush.bf16.msra.mxu0 %v2219
    %5365 = vmatpush.bf16.msra.mxu0 %v2211
    %5366 = vmatpush.bf16.msra.mxu0 %v2203
    %5367 = vmatpush.bf16.msra.mxu0 %v2195
    %5368 = vmatmul.bf16.gmra.mxu0 %v5228
    %v5369 = vpop.f32.mrf.mxu0
    %v5370 = vadd.f32 0.0, %v5369
    %v5371 = vpop.f32.mrf.mxu0
    %5372 = vdwg.mxu0
    %5373 = vmatpush.bf16.msra.mxu0 %v2315
    %5374 = vmatpush.bf16.msra.mxu0 %v2307
    %5375 = vmatpush.bf16.msra.mxu0 %v2299
    %5376 = vmatpush.bf16.msra.mxu0 %v2291
    %5377 = vmatpush.bf16.msra.mxu0 %v2283
    %5378 = vmatpush.bf16.msra.mxu0 %v2275
    %5379 = vmatpush.bf16.msra.mxu0 %v2267
    %5380 = vmatpush.bf16.msra.mxu0 %v2259
    %5381 = vmatmul.bf16.gmra.mxu0 %v5229
    %v5382 = vpop.f32.mrf.mxu0
    %v5383 = vadd.f32 %v5370, %v5382
    %v5384 = vpop.f32.mrf.mxu0
    %5385 = vdwg.mxu0
    %5386 = vmatpush.bf16.msra.mxu0 %v2252
    %5387 = vmatpush.bf16.msra.mxu0 %v2244
    %5388 = vmatpush.bf16.msra.mxu0 %v2236
    %5389 = vmatpush.bf16.msra.mxu0 %v2228
    %5390 = vmatpush.bf16.msra.mxu0 %v2220
    %5391 = vmatpush.bf16.msra.mxu0 %v2212
    %5392 = vmatpush.bf16.msra.mxu0 %v2204
    %5393 = vmatpush.bf16.msra.mxu0 %v2196
    %5394 = vmatmul.bf16.gmra.mxu0 %v5228
    %v5395 = vpop.f32.mrf.mxu0
    %v5396 = vadd.f32 0.0, %v5395
    %v5397 = vpop.f32.mrf.mxu0
    %5398 = vdwg.mxu0
    %5399 = vmatpush.bf16.msra.mxu0 %v2316
    %5400 = vmatpush.bf16.msra.mxu0 %v2308
    %5401 = vmatpush.bf16.msra.mxu0 %v2300
    %5402 = vmatpush.bf16.msra.mxu0 %v2292
    %5403 = vmatpush.bf16.msra.mxu0 %v2284
    %5404 = vmatpush.bf16.msra.mxu0 %v2276
    %5405 = vmatpush.bf16.msra.mxu0 %v2268
    %5406 = vmatpush.bf16.msra.mxu0 %v2260
    %5407 = vmatmul.bf16.gmra.mxu0 %v5229
    %v5408 = vpop.f32.mrf.mxu0
    %v5409 = vadd.f32 %v5396, %v5408
    %v5410 = vpop.f32.mrf.mxu0
    %5411 = vdwg.mxu0
    %5412 = vmatpush.bf16.msra.mxu0 %v2253
    %5413 = vmatpush.bf16.msra.mxu0 %v2245
    %5414 = vmatpush.bf16.msra.mxu0 %v2237
    %5415 = vmatpush.bf16.msra.mxu0 %v2229
    %5416 = vmatpush.bf16.msra.mxu0 %v2221
    %5417 = vmatpush.bf16.msra.mxu0 %v2213
    %5418 = vmatpush.bf16.msra.mxu0 %v2205
    %5419 = vmatpush.bf16.msra.mxu0 %v2197
    %5420 = vmatmul.bf16.gmra.mxu0 %v5228
    %v5421 = vpop.f32.mrf.mxu0
    %v5422 = vadd.f32 0.0, %v5421
    %v5423 = vpop.f32.mrf.mxu0
    %5424 = vdwg.mxu0
    %5425 = vmatpush.bf16.msra.mxu0 %v2317
    %5426 = vmatpush.bf16.msra.mxu0 %v2309
    %5427 = vmatpush.bf16.msra.mxu0 %v2301
    %5428 = vmatpush.bf16.msra.mxu0 %v2293
    %5429 = vmatpush.bf16.msra.mxu0 %v2285
    %5430 = vmatpush.bf16.msra.mxu0 %v2277
    %5431 = vmatpush.bf16.msra.mxu0 %v2269
    %5432 = vmatpush.bf16.msra.mxu0 %v2261
    %5433 = vmatmul.bf16.gmra.mxu0 %v5229
    %v5434 = vpop.f32.mrf.mxu0
    %v5435 = vadd.f32 %v5422, %v5434
    %v5436 = vpop.f32.mrf.mxu0
    %5437 = vdwg.mxu0
    %v5438 = vadd.f32 %v5357, %v1597
    %v5439 = vadd.f32 %v5383, %v1598
    %v5440 = vadd.f32 %v5409, %v1599
    %v5441 = vadd.f32 %v5435, %v1600
    %v5442 = vxor.u32 %v5438, 2147483648
    %v5443 = vxor.u32 %v5439, 2147483648
    %v5444 = vxor.u32 %v5440, 2147483648
    %v5445 = vmul.f32 %v5442, 1.442695
    %v5446 = vpow.pop %v5445
    %v5447 = vmul.f32 %v5443, 1.442695
    %v5448 = vpow.pop %v5447
    %v5449 = vmul.f32 %v5444, 1.442695
    %v5450 = vpow.pop %v5449
    %v5451 = vadd.f32 %v5446, 1.0
    %v5452 = vadd.f32 %v5448, 1.0
    %v5453 = vadd.f32 %v5450, 1.0
    %v5454 = vrcp.pop %v5451
    %v5455 = vmul.f32 %v5451, %v5454
    %v5456 = vsub.f32 1.0, %v5455
    %v5457 = vmul.f32 %v5454, %v5456
    %v5458 = vadd.f32 %v5454, %v5457
    %vm5459 = vweird.f32 %v5451
    %vm5460 = vweird.f32 %v5454
    %vm5461 = vmor %vm5459, %vm5460
    %v5462 = vsel %vm5461, %v5454, %v5458
    %v5463 = vand.u32 2147483647, %v5451
    %vm5464 = vcmp.eq.f32.partialorder %v5463, 8.507059e+37
    %v5465 = vand.u32 %v5451, 2147483648
    %v5466 = vor.u32 1.1754944e-38, %v5465
    %v5467 = vsel %vm5464, %v5466, %v5462
    %v5468 = vmul.f32 1.0, %v5467
    %v5469 = vrcp.pop %v5452
    %v5470 = vmul.f32 %v5452, %v5469
    %v5471 = vsub.f32 1.0, %v5470
    %v5472 = vmul.f32 %v5469, %v5471
    %v5473 = vadd.f32 %v5469, %v5472
    %vm5474 = vweird.f32 %v5452
    %vm5475 = vweird.f32 %v5469
    %vm5476 = vmor %vm5474, %vm5475
    %v5477 = vsel %vm5476, %v5469, %v5473
    %v5478 = vand.u32 2147483647, %v5452
    %vm5479 = vcmp.eq.f32.partialorder %v5478, 8.507059e+37
    %v5480 = vand.u32 %v5452, 2147483648
    %v5481 = vor.u32 1.1754944e-38, %v5480
    %v5482 = vsel %vm5479, %v5481, %v5477
    %v5483 = vmul.f32 1.0, %v5482
    %v5484 = vrcp.pop %v5453
    %v5485 = vmul.f32 %v5453, %v5484
    %v5486 = vsub.f32 1.0, %v5485
    %v5487 = vmul.f32 %v5484, %v5486
    %v5488 = vadd.f32 %v5484, %v5487
    %vm5489 = vweird.f32 %v5453
    %vm5490 = vweird.f32 %v5484
    %vm5491 = vmor %vm5489, %vm5490
    %v5492 = vsel %vm5491, %v5484, %v5488
    %v5493 = vand.u32 2147483647, %v5453
    %vm5494 = vcmp.eq.f32.partialorder %v5493, 8.507059e+37
    %v5495 = vand.u32 %v5453, 2147483648
    %v5496 = vor.u32 1.1754944e-38, %v5495
    %v5497 = vsel %vm5494, %v5496, %v5492
    %v5498 = vmul.f32 1.0, %v5497
    %v5499 = vtanh.pop %v5441
    %v5500 = vmul.f32 %v5483, %v5154
    %v5501 = vmul.f32 %v5468, %v5499
    %v5502 = vadd.f32 %v5500, %v5501
    %v5503 = vtanh.pop %v5502
    %v5504 = vmul.f32 %v5498, %v5503
    %v5505 = vld [vmem:[#allocation4 + $0x120] sm:$0xff]
    %v5506 = vld [vmem:[#allocation4 + $0x128] sm:$0xff]
    %v5507 = vld [vmem:[#allocation4 + $0x130] sm:$0xff]
    %v5508 = vld [vmem:[#allocation4 + $0x138] sm:$0xff]
    %v5509 = vadd.f32 %v5505, %v5253
    %v5510 = vadd.f32 %v5506, %v5279
    %v5511 = vadd.f32 %v5507, %v5305
    %v5512 = vadd.f32 %v5508, %v5331
    %v5513 = vxor.u32 %v5509, 2147483648
    %v5514 = vxor.u32 %v5510, 2147483648
    %v5515 = vxor.u32 %v5511, 2147483648
    %v5516 = vmul.f32 %v5513, 1.442695
    %v5517 = vpow.pop %v5516
    %v5518 = vmul.f32 %v5514, 1.442695
    %v5519 = vpow.pop %v5518
    %v5520 = vmul.f32 %v5515, 1.442695
    %v5521 = vpow.pop %v5520
    %v5522 = vadd.f32 %v5517, 1.0
    %v5523 = vadd.f32 %v5519, 1.0
    %v5524 = vadd.f32 %v5521, 1.0
    %v5525 = vrcp.pop %v5522
    %v5526 = vmul.f32 %v5522, %v5525
    %v5527 = vsub.f32 1.0, %v5526
    %v5528 = vmul.f32 %v5525, %v5527
    %v5529 = vadd.f32 %v5525, %v5528
    %vm5530 = vweird.f32 %v5522
    %vm5531 = vweird.f32 %v5525
    %vm5532 = vmor %vm5530, %vm5531
    %v5533 = vsel %vm5532, %v5525, %v5529
    %v5534 = vand.u32 2147483647, %v5522
    %vm5535 = vcmp.eq.f32.partialorder %v5534, 8.507059e+37
    %v5536 = vand.u32 %v5522, 2147483648
    %v5537 = vor.u32 1.1754944e-38, %v5536
    %v5538 = vsel %vm5535, %v5537, %v5533
    %v5539 = vmul.f32 1.0, %v5538
    %v5540 = vrcp.pop %v5523
    %v5541 = vmul.f32 %v5523, %v5540
    %v5542 = vsub.f32 1.0, %v5541
    %v5543 = vmul.f32 %v5540, %v5542
    %v5544 = vadd.f32 %v5540, %v5543
    %vm5545 = vweird.f32 %v5523
    %vm5546 = vweird.f32 %v5540
    %vm5547 = vmor %vm5545, %vm5546
    %v5548 = vsel %vm5547, %v5540, %v5544
    %v5549 = vand.u32 2147483647, %v5523
    %vm5550 = vcmp.eq.f32.partialorder %v5549, 8.507059e+37
    %v5551 = vand.u32 %v5523, 2147483648
    %v5552 = vor.u32 1.1754944e-38, %v5551
    %v5553 = vsel %vm5550, %v5552, %v5548
    %v5554 = vmul.f32 1.0, %v5553
    %v5555 = vrcp.pop %v5524
    %v5556 = vmul.f32 %v5524, %v5555
    %v5557 = vsub.f32 1.0, %v5556
    %v5558 = vmul.f32 %v5555, %v5557
    %v5559 = vadd.f32 %v5555, %v5558
    %vm5560 = vweird.f32 %v5524
    %vm5561 = vweird.f32 %v5555
    %vm5562 = vmor %vm5560, %vm5561
    %v5563 = vsel %vm5562, %v5555, %v5559
    %v5564 = vand.u32 2147483647, %v5524
    %vm5565 = vcmp.eq.f32.partialorder %v5564, 8.507059e+37
    %v5566 = vand.u32 %v5524, 2147483648
    %v5567 = vor.u32 1.1754944e-38, %v5566
    %v5568 = vsel %vm5565, %v5567, %v5563
    %v5569 = vmul.f32 1.0, %v5568
    %v5570 = vtanh.pop %v5512
    %v5571 = vmul.f32 %v5554, %v5225
    %v5572 = vmul.f32 %v5539, %v5570
    %v5573 = vadd.f32 %v5571, %v5572
    %v5574 = vtanh.pop %v5573
    %v5575 = vmul.f32 %v5569, %v5574
    %v5576 = vpack.c.bf16 %v5575, %v5575
    %v5577 = vpack.c.bf16 %v5504, %v5504
    %5578 = vmatpush.bf16.msra.mxu0 %v2250
    %5579 = vmatpush.bf16.msra.mxu0 %v2242
    %5580 = vmatpush.bf16.msra.mxu0 %v2234
    %5581 = vmatpush.bf16.msra.mxu0 %v2226
    %5582 = vmatpush.bf16.msra.mxu0 %v2218
    %5583 = vmatpush.bf16.msra.mxu0 %v2210
    %5584 = vmatpush.bf16.msra.mxu0 %v2202
    %5585 = vmatpush.bf16.msra.mxu0 %v2194
    %5586 = vmatmul.bf16.gmra.mxu0 %v5576
    %v5587 = vpop.f32.mrf.mxu0
    %v5588 = vadd.f32 0.0, %v5587
    %v5589 = vpop.f32.mrf.mxu0
    %5590 = vdwg.mxu0
    %5591 = vmatpush.bf16.msra.mxu0 %v2314
    %5592 = vmatpush.bf16.msra.mxu0 %v2306
    %5593 = vmatpush.bf16.msra.mxu0 %v2298
    %5594 = vmatpush.bf16.msra.mxu0 %v2290
    %5595 = vmatpush.bf16.msra.mxu0 %v2282
    %5596 = vmatpush.bf16.msra.mxu0 %v2274
    %5597 = vmatpush.bf16.msra.mxu0 %v2266
    %5598 = vmatpush.bf16.msra.mxu0 %v2258
    %5599 = vmatmul.bf16.gmra.mxu0 %v5577
    %v5600 = vpop.f32.mrf.mxu0
    %v5601 = vadd.f32 %v5588, %v5600
    %v5602 = vpop.f32.mrf.mxu0
    %5603 = vdwg.mxu0
    %5604 = vmatpush.bf16.msra.mxu0 %v2251
    %5605 = vmatpush.bf16.msra.mxu0 %v2243
    %5606 = vmatpush.bf16.msra.mxu0 %v2235
    %5607 = vmatpush.bf16.msra.mxu0 %v2227
    %5608 = vmatpush.bf16.msra.mxu0 %v2219
    %5609 = vmatpush.bf16.msra.mxu0 %v2211
    %5610 = vmatpush.bf16.msra.mxu0 %v2203
    %5611 = vmatpush.bf16.msra.mxu0 %v2195
    %5612 = vmatmul.bf16.gmra.mxu0 %v5576
    %v5613 = vpop.f32.mrf.mxu0
    %v5614 = vadd.f32 0.0, %v5613
    %v5615 = vpop.f32.mrf.mxu0
    %5616 = vdwg.mxu0
    %5617 = vmatpush.bf16.msra.mxu0 %v2315
    %5618 = vmatpush.bf16.msra.mxu0 %v2307
    %5619 = vmatpush.bf16.msra.mxu0 %v2299
    %5620 = vmatpush.bf16.msra.mxu0 %v2291
    %5621 = vmatpush.bf16.msra.mxu0 %v2283
    %5622 = vmatpush.bf16.msra.mxu0 %v2275
    %5623 = vmatpush.bf16.msra.mxu0 %v2267
    %5624 = vmatpush.bf16.msra.mxu0 %v2259
    %5625 = vmatmul.bf16.gmra.mxu0 %v5577
    %v5626 = vpop.f32.mrf.mxu0
    %v5627 = vadd.f32 %v5614, %v5626
    %v5628 = vpop.f32.mrf.mxu0
    %5629 = vdwg.mxu0
    %5630 = vmatpush.bf16.msra.mxu0 %v2252
    %5631 = vmatpush.bf16.msra.mxu0 %v2244
    %5632 = vmatpush.bf16.msra.mxu0 %v2236
    %5633 = vmatpush.bf16.msra.mxu0 %v2228
    %5634 = vmatpush.bf16.msra.mxu0 %v2220
    %5635 = vmatpush.bf16.msra.mxu0 %v2212
    %5636 = vmatpush.bf16.msra.mxu0 %v2204
    %5637 = vmatpush.bf16.msra.mxu0 %v2196
    %5638 = vmatmul.bf16.gmra.mxu0 %v5576
    %v5639 = vpop.f32.mrf.mxu0
    %v5640 = vadd.f32 0.0, %v5639
    %v5641 = vpop.f32.mrf.mxu0
    %5642 = vdwg.mxu0
    %5643 = vmatpush.bf16.msra.mxu0 %v2316
    %5644 = vmatpush.bf16.msra.mxu0 %v2308
    %5645 = vmatpush.bf16.msra.mxu0 %v2300
    %5646 = vmatpush.bf16.msra.mxu0 %v2292
    %5647 = vmatpush.bf16.msra.mxu0 %v2284
    %5648 = vmatpush.bf16.msra.mxu0 %v2276
    %5649 = vmatpush.bf16.msra.mxu0 %v2268
    %5650 = vmatpush.bf16.msra.mxu0 %v2260
    %5651 = vmatmul.bf16.gmra.mxu0 %v5577
    %v5652 = vpop.f32.mrf.mxu0
    %v5653 = vadd.f32 %v5640, %v5652
    %v5654 = vpop.f32.mrf.mxu0
    %5655 = vdwg.mxu0
    %5656 = vmatpush.bf16.msra.mxu0 %v2253
    %5657 = vmatpush.bf16.msra.mxu0 %v2245
    %5658 = vmatpush.bf16.msra.mxu0 %v2237
    %5659 = vmatpush.bf16.msra.mxu0 %v2229
    %5660 = vmatpush.bf16.msra.mxu0 %v2221
    %5661 = vmatpush.bf16.msra.mxu0 %v2213
    %5662 = vmatpush.bf16.msra.mxu0 %v2205
    %5663 = vmatpush.bf16.msra.mxu0 %v2197
    %5664 = vmatmul.bf16.gmra.mxu0 %v5576
    %v5665 = vpop.f32.mrf.mxu0
    %v5666 = vadd.f32 0.0, %v5665
    %v5667 = vpop.f32.mrf.mxu0
    %5668 = vdwg.mxu0
    %5669 = vmatpush.bf16.msra.mxu0 %v2317
    %5670 = vmatpush.bf16.msra.mxu0 %v2309
    %5671 = vmatpush.bf16.msra.mxu0 %v2301
    %5672 = vmatpush.bf16.msra.mxu0 %v2293
    %5673 = vmatpush.bf16.msra.mxu0 %v2285
    %5674 = vmatpush.bf16.msra.mxu0 %v2277
    %5675 = vmatpush.bf16.msra.mxu0 %v2269
    %5676 = vmatpush.bf16.msra.mxu0 %v2261
    %5677 = vmatmul.bf16.gmra.mxu0 %v5577
    %v5678 = vpop.f32.mrf.mxu0
    %v5679 = vadd.f32 %v5666, %v5678
    %v5680 = vpop.f32.mrf.mxu0
    %5681 = vdwg.mxu0
    %v5682 = vadd.f32 %v5601, %v1597
    %v5683 = vadd.f32 %v5627, %v1598
    %v5684 = vadd.f32 %v5653, %v1599
    %v5685 = vadd.f32 %v5679, %v1600
    %v5686 = vxor.u32 %v5682, 2147483648
    %v5687 = vxor.u32 %v5683, 2147483648
    %v5688 = vxor.u32 %v5684, 2147483648
    %v5689 = vmul.f32 %v5686, 1.442695
    %v5690 = vpow.pop %v5689
    %v5691 = vmul.f32 %v5687, 1.442695
    %v5692 = vpow.pop %v5691
    %v5693 = vmul.f32 %v5688, 1.442695
    %v5694 = vpow.pop %v5693
    %v5695 = vadd.f32 %v5690, 1.0
    %v5696 = vadd.f32 %v5692, 1.0
    %v5697 = vadd.f32 %v5694, 1.0
    %v5698 = vrcp.pop %v5695
    %v5699 = vmul.f32 %v5695, %v5698
    %v5700 = vsub.f32 1.0, %v5699
    %v5701 = vmul.f32 %v5698, %v5700
    %v5702 = vadd.f32 %v5698, %v5701
    %vm5703 = vweird.f32 %v5695
    %vm5704 = vweird.f32 %v5698
    %vm5705 = vmor %vm5703, %vm5704
    %v5706 = vsel %vm5705, %v5698, %v5702
    %v5707 = vand.u32 2147483647, %v5695
    %vm5708 = vcmp.eq.f32.partialorder %v5707, 8.507059e+37
    %v5709 = vand.u32 %v5695, 2147483648
    %v5710 = vor.u32 1.1754944e-38, %v5709
    %v5711 = vsel %vm5708, %v5710, %v5706
    %v5712 = vmul.f32 1.0, %v5711
    %v5713 = vrcp.pop %v5696
    %v5714 = vmul.f32 %v5696, %v5713
    %v5715 = vsub.f32 1.0, %v5714
    %v5716 = vmul.f32 %v5713, %v5715
    %v5717 = vadd.f32 %v5713, %v5716
    %vm5718 = vweird.f32 %v5696
    %vm5719 = vweird.f32 %v5713
    %vm5720 = vmor %vm5718, %vm5719
    %v5721 = vsel %vm5720, %v5713, %v5717
    %v5722 = vand.u32 2147483647, %v5696
    %vm5723 = vcmp.eq.f32.partialorder %v5722, 8.507059e+37
    %v5724 = vand.u32 %v5696, 2147483648
    %v5725 = vor.u32 1.1754944e-38, %v5724
    %v5726 = vsel %vm5723, %v5725, %v5721
    %v5727 = vmul.f32 1.0, %v5726
    %v5728 = vrcp.pop %v5697
    %v5729 = vmul.f32 %v5697, %v5728
    %v5730 = vsub.f32 1.0, %v5729
    %v5731 = vmul.f32 %v5728, %v5730
    %v5732 = vadd.f32 %v5728, %v5731
    %vm5733 = vweird.f32 %v5697
    %vm5734 = vweird.f32 %v5728
    %vm5735 = vmor %vm5733, %vm5734
    %v5736 = vsel %vm5735, %v5728, %v5732
    %v5737 = vand.u32 2147483647, %v5697
    %vm5738 = vcmp.eq.f32.partialorder %v5737, 8.507059e+37
    %v5739 = vand.u32 %v5697, 2147483648
    %v5740 = vor.u32 1.1754944e-38, %v5739
    %v5741 = vsel %vm5738, %v5740, %v5736
    %v5742 = vmul.f32 1.0, %v5741
    %v5743 = vtanh.pop %v5685
    %v5744 = vmul.f32 %v5727, %v5502
    %v5745 = vmul.f32 %v5712, %v5743
    %v5746 = vadd.f32 %v5744, %v5745
    %v5747 = vtanh.pop %v5746
    %v5748 = vmul.f32 %v5742, %v5747
    %s5749 = smul.u32 4, 16
    %s5750 = smul.u32 %s5749, 1
    %s5751 = sshll.u32 %s5750, 4
    %5752 = dma.done %s99, %s5751
    %v5753 = vpack.c.bf16 %v5748, %v5748
    %v5754 = vld [vmem:[#allocation3] sm:$0xf]
    %v5755 = vld [vmem:[#allocation3 + $0x4] sm:$0xf]
    %v5756 = vld [vmem:[#allocation3 + $0x8] sm:$0xf]
    %v5757 = vld [vmem:[#allocation3 + $0xc] sm:$0xf]
    %v5758 = vld [vmem:[#allocation3 + $0x10] sm:$0xf]
    %v5759 = vld [vmem:[#allocation3 + $0x14] sm:$0xf]
    %v5760 = vld [vmem:[#allocation3 + $0x18] sm:$0xf]
    %v5761 = vld [vmem:[#allocation3 + $0x1c] sm:$0xf]
    %v5762 = vld [vmem:[#allocation3 + $0x20] sm:$0xf]
    %v5763 = vld [vmem:[#allocation3 + $0x24] sm:$0xf]
    %v5764 = vld [vmem:[#allocation3 + $0x28] sm:$0xf]
    %v5765 = vld [vmem:[#allocation3 + $0x2c] sm:$0xf]
    %v5766 = vld [vmem:[#allocation3 + $0x30] sm:$0xf]
    %v5767 = vld [vmem:[#allocation3 + $0x34] sm:$0xf]
    %v5768 = vld [vmem:[#allocation3 + $0x38] sm:$0xf]
    %v5769 = vld [vmem:[#allocation3 + $0x3c] sm:$0xf]
    %v5770 = vld [vmem:[%s6] sm:$0x1]
    %v5772 = vperm.slane %v5770, 0
    %v5790 = vunpack.c.l.b16 %v5754
    %v5791 = vunpack.c.l.b16 %v5755
    %v5792 = vunpack.c.l.b16 %v5756
    %v5793 = vunpack.c.l.b16 %v5757
    %v5794 = vunpack.c.l.b16 %v5758
    %v5795 = vunpack.c.l.b16 %v5759
    %v5796 = vunpack.c.l.b16 %v5760
    %v5797 = vunpack.c.l.b16 %v5761
    %v5798 = vunpack.c.l.b16 %v5762
    %v5799 = vunpack.c.l.b16 %v5763
    %v5800 = vunpack.c.l.b16 %v5764
    %v5801 = vunpack.c.l.b16 %v5765
    %v5802 = vunpack.c.l.b16 %v5766
    %v5803 = vunpack.c.l.b16 %v5767
    %v5804 = vunpack.c.l.b16 %v5768
    %v5805 = vunpack.c.l.b16 %v5769
    %v5806 = vpack.c.b16 %v5791, %v5790
    %v5807 = vpack.c.b16 %v5793, %v5792
    %v5808 = vpack.c.b16 %v5795, %v5794
    %v5809 = vpack.c.b16 %v5797, %v5796
    %v5810 = vpack.c.b16 %v5799, %v5798
    %v5811 = vpack.c.b16 %v5801, %v5800
    %v5812 = vpack.c.b16 %v5803, %v5802
    %v5813 = vpack.c.b16 %v5805, %v5804
    %5822 = vmatpush.bf16.msra.mxu0 %v5813
    %5823 = vmatpush.bf16.msra.mxu0 %v5812
    %5824 = vmatpush.bf16.msra.mxu0 %v5811
    %5825 = vmatpush.bf16.msra.mxu0 %v5810
    %5826 = vmatpush.bf16.msra.mxu0 %v5809
    %5827 = vmatpush.bf16.msra.mxu0 %v5808
    %5828 = vmatpush.bf16.msra.mxu0 %v5807
    %5829 = vmatpush.bf16.msra.mxu0 %v5806
    %5830 = vmatmul.bf16.gmra.mxu0 %v5753
    %v5831 = vpop.f32.mrf.mxu0
    %v5832 = vadd.f32 %v5772, %v5831
    %v5833 = vpop.f32.mrf.mxu0
    %5834 = vdwg.mxu0
    %5835 = vst [vmem:[#allocation14] sm:$0xff] %v5832
    %5836 = vst [vmem:[#allocation15] sm:$0xff] %v5575
    %s5837 = scalar_lea.vmem [#allocation15], 8
    %5838 = vst [vmem:[%s5837] sm:$0xff] %v5748
    %5839 = vst [vmem:[#allocation17] sm:$0xff] %v5573
    %s5840 = scalar_lea.vmem [#allocation17], 8
    %5841 = vst [vmem:[%s5840] sm:$0xff] %v5746
    // Predicated region
    $region46: #{tpu_custom_call.1} parent=1 // pred_check
      _
    $region47: #{tpu_custom_call.1} parent=1 // pred_check_branch
      %5843 = sbr.rel (0) target = $region49
    $region48: #{tpu_custom_call.1} parent=1 // pred_region
      %5845 = vsyncadd [#allocation8], 0
      %s5847 = sshll.u32 [#allocation14], 4
      %s5848 = int_to_ptr.vmem [resolvable:$true] %s5847
      %s5849 = sshll.u32 %s7, 4
      %s5850 = int_to_ptr.hbm [resolvable:$true] %s5849
      %5852 = dma.vmem_to_hbm [thread:$0]  %s5848, 128, %s5850, [#allocation8]
    $region49: #{tpu_custom_call.1} parent=1 // pred_fallthru
      _
    // Predicated region
    $region50: #{tpu_custom_call.1} parent=1 // pred_check
      _
    $region51: #{tpu_custom_call.1} parent=1 // pred_check_branch
      %5854 = sbr.rel (0) target = $region53
    $region52: #{tpu_custom_call.1} parent=1 // pred_region
      %5856 = vsyncadd [#allocation16], 0
      %s5857 = sshll.u32 [#allocation15], 4
      %s5858 = int_to_ptr.vmem [resolvable:$true] %s5857
      %s5859 = sshll.u32 %s8, 4
      %s5860 = int_to_ptr.hbm [resolvable:$true] %s5859
      %5865 = dma.vmem_to_hbm [thread:$0]  %s5858, 256, %s5860, [#allocation16], 128, 128, 8
    $region53: #{tpu_custom_call.1} parent=1 // pred_fallthru
      _
    // Predicated region
    $region54: #{tpu_custom_call.1} parent=1 // pred_check
      _
    $region55: #{tpu_custom_call.1} parent=1 // pred_check_branch
      %5867 = sbr.rel (0) target = $region57
    $region56: #{tpu_custom_call.1} parent=1 // pred_region
      %5869 = vsyncadd [#allocation16], 0
      %s5870 = sshll.u32 [#allocation17], 4
      %s5871 = int_to_ptr.vmem [resolvable:$true] %s5870
      %s5872 = sshll.u32 %s9, 4
      %s5873 = int_to_ptr.hbm [resolvable:$true] %s5872
      %5878 = dma.vmem_to_hbm [thread:$0]  %s5871, 256, %s5873, [#allocation16], 128, 128, 8
    $region57: #{tpu_custom_call.1} parent=1 // pred_fallthru
      _
    // Predicated region
    $region58: #{tpu_custom_call.1} parent=1 // pred_check
      _
    $region59: #{tpu_custom_call.1} parent=1 // pred_check_branch
      %5880 = sbr.rel (0) target = $region61
    $region60: #{tpu_custom_call.1} parent=1 // pred_region
      %5882 = dma.done [#allocation8], 128
    $region61: #{tpu_custom_call.1} parent=1 // pred_fallthru
      _
    // Predicated region
    $region62: #{tpu_custom_call.1} parent=1 // pred_check
      _
    $region63: #{tpu_custom_call.1} parent=1 // pred_check_branch
      %5884 = sbr.rel (0) target = $region65
    $region64: #{tpu_custom_call.1} parent=1 // pred_region
      %5886 = dma.done [#allocation16], 256
    $region65: #{tpu_custom_call.1} parent=1 // pred_fallthru
      _
    // Predicated region
    $region66: #{tpu_custom_call.1} parent=1 // pred_check
      _
    $region67: #{tpu_custom_call.1} parent=1 // pred_check_branch
      %5888 = sbr.rel (0) target = $region69
    $region68: #{tpu_custom_call.1} parent=1 // pred_region
      %5890 = dma.done [#allocation16], 256
    $region69: #{tpu_custom_call.1} parent=1 // pred_fallthru
      _
    %5891 = vsyncpa [#allocation7], 1
    %5892 = vsyncpa [#allocation10], 1
    %5893 = vsyncpa [#allocation13], 1
    %5894 = vsyncpa [#allocation8], 1
    %5895 = vsyncpa [#allocation16], 1
  %5896 = vsyncmov [#allocation5]
  %s5897 = vpop.sfrf %5896
  %p5898 = scmp.eq.s32.totalorder %s5897, 0
  %p5899 = pneg %p5898
  %5901 = shalt.err (%p5899)
  %s5902 = scalar_lea.sflag [#allocation5], 1
  %5903 = vsyncmov %s5902
  %s5904 = vpop.sfrf %5903
  %p5905 = scmp.eq.s32.totalorder %s5904, 0
  %p5906 = pneg %p5905
  %5908 = shalt.err (%p5906)

</llo_original>
